<compile_context>
chip_gen: v7x
topology: tpu7x:2x2x1
jax: 0.10.0
libtpu: 0.0.40
codegen_flags: <defaults>
</compile_context>

<pallas_src>
import math
import functools

import jax
import jax.numpy as jnp
from jax.experimental import pallas as pl
from jax.experimental.pallas import tpu as pltpu

GN_EPS = 1e-6   # nn.GroupNorm(..., eps=1e-06) in the module
LN_EPS = 1e-5   # torch.nn.LayerNorm default


# ----------------------------------------------------------------------------
# in-kernel helpers
# ----------------------------------------------------------------------------
def _layer_norm(x, w, b, eps=LN_EPS):
    mu = jnp.mean(x, axis=-1, keepdims=True)
    var = jnp.mean((x - mu) ** 2, axis=-1, keepdims=True)
    return (x - mu) * jax.lax.rsqrt(var + eps) * w + b


def _group_norm(x, gmat, w, b, eps=GN_EPS):
    """Vectorized GroupNorm on a (N, C) tile.

    gmat: (C, C) with gmat[c1, c2] = 1/group_size if c1, c2 share a group else 0,
    so x @ gmat gives per-row within-group means (all on the MXU, no loops/concats).
    """
    xm = jnp.dot(x, gmat, preferred_element_type=jnp.float32)
    x2m = jnp.dot(x * x, gmat, preferred_element_type=jnp.float32)
    mean = jnp.mean(xm, axis=0, keepdims=True)                  # (1, C) per-group mean
    var = jnp.mean(x2m, axis=0, keepdims=True) - mean * mean    # biased var (torch)
    return (x - mean) * jax.lax.rsqrt(var + eps) * w + b


def _gelu_exact(x):
    # matches torch.nn.functional.gelu (erf formulation)
    return 0.5 * x * (1.0 + jax.lax.erf(x * (1.0 / math.sqrt(2.0))))


def _attention(x_q, x_kv, wq_ref, wk_ref, wv_ref, wo_ref, out_b, n_heads):
    """Multi-head attention.

    x_q: (Nq, Cq), x_kv: (Nk, Ck); per-head weights pre-split in the wrapper:
    wq_ref/wk_ref/wv_ref: (h, Cin, dh), wo_ref: (h, dh, C), out_b: (1, C).
    Heads are unrolled: no concatenate, no transposes (scores contract the head dim
    directly), per-head results accumulated through the output projection.
    """
    dh = wq_ref.shape[-1]
    scale = 1.0 / math.sqrt(dh)
    dims_nt = (((1,), (1,)), ((), ()))   # contract last dims (q @ k^T, MXU-native)
    out = out_b
    for h in range(n_heads):
        q = jnp.dot(x_q, wq_ref[h], preferred_element_type=jnp.float32)   # (Nq, dh)
        k = jnp.dot(x_kv, wk_ref[h], preferred_element_type=jnp.float32)  # (Nk, dh)
        v = jnp.dot(x_kv, wv_ref[h], preferred_element_type=jnp.float32)  # (Nk, dh)
        s = jax.lax.dot_general(q, k, dims_nt,
                                preferred_element_type=jnp.float32) * scale
        s = s - jnp.max(s, axis=-1, keepdims=True)
        p = jnp.exp(s)
        # reciprocal on the EUP slot (essentially free)
        p = p * pl.reciprocal(jnp.sum(p, axis=-1, keepdims=True), approx=True)
        o = jnp.dot(p, v, preferred_element_type=jnp.float32)             # (Nq, dh)
        out = out + jnp.dot(o, wo_ref[h], preferred_element_type=jnp.float32)
    return out


# ----------------------------------------------------------------------------
# kernel A: conv_in + GN + conv_c + GN_c + full transformer block, per sample
# ----------------------------------------------------------------------------
def make_fused_kernel(n_heads):
    def kernel(xp_ref, cp_ref, *refs):
        (ci_w, ci_b, gn_gm, gn_w, gn_b,
         cc_w, cc_b, gc_gm, gc_w, gc_b,
         ln1_w, ln1_b, saq, sak, sav, sao, saob,
         ln2_w, ln2_b, caq, cak, cav, cao, caob,
         ln3_w, ln3_b, g1w, g1b, g2w, g2b,
         o_ref) = refs

        # conv_input as ONE im2col matmul (K = 9*C), then GroupNorm
        x = jnp.dot(xp_ref[0], ci_w[...],
                    preferred_element_type=jnp.float32) + ci_b[...]       # (N, C)
        x = _group_norm(x, gn_gm[...], gn_w[...], gn_b[...])

        # conv_input_c as ONE im2col matmul (K = 9*Cc), then GroupNorm_c
        c = jnp.dot(cp_ref[0], cc_w[...],
                    preferred_element_type=jnp.float32) + cc_b[...]       # (M, Cc)
        c = _group_norm(c, gc_gm[...], gc_w[...], gc_b[...])

        # layer_norm_1 + self attention + residual
        h = _layer_norm(x, ln1_w[...], ln1_b[...])
        x = x + _attention(h, h, saq, sak, sav, sao, saob[...], n_heads)

        # layer_norm_2 + cross attention + residual
        h = _layer_norm(x, ln2_w[...], ln2_b[...])
        x = x + _attention(h, c, caq, cak, cav, cao, caob[...], n_heads)

        # layer_norm_3 + GEGLU + residual
        h = _layer_norm(x, ln3_w[...], ln3_b[...])
        g = jnp.dot(h, g1w[...], preferred_element_type=jnp.float32) + g1b[...]
        hidden = g.shape[-1] // 2                                  # 128-lane aligned split
        a, gate = g[:, :hidden], g[:, hidden:]
        h = a * _gelu_exact(gate)
        x = x + jnp.dot(h, g2w[...], preferred_element_type=jnp.float32) + g2b[...]

        o_ref[0] = x.astype(o_ref.dtype)
    return kernel


# ----------------------------------------------------------------------------
# kernel B: conv_output (im2col matmul) + long residual
# ----------------------------------------------------------------------------
def conv_out_kernel(xtp_ref, res_ref, w_ref, b_ref, o_ref):
    y = jnp.dot(xtp_ref[0], w_ref[...], preferred_element_type=jnp.float32) + b_ref[...]
    o_ref[0] = (y + res_ref[0].astype(jnp.float32)).astype(o_ref.dtype)


# ----------------------------------------------------------------------------
# wrapper-side helpers (all free / XLA-side, traced once under jit)
# ----------------------------------------------------------------------------
def _full_spec(shape):
    nd = len(shape)
    return pl.BlockSpec(shape, lambda b, _nd=nd: (0,) * _nd)


def _im2col_3x3(x):
    """x: (B, H, W, C) NHWC -> (B, H*W, 9*C), taps (dy, dx) row-major, channel minor."""
    B, H, W, C = x.shape
    xp = jnp.pad(x, ((0, 0), (1, 1), (1, 1), (0, 0)))
    taps = [xp[:, dy:dy + H, dx:dx + W, :] for dy in range(3) for dx in range(3)]
    return jnp.concatenate(taps, axis=-1).reshape(B, H * W, 9 * C)


def _group_matrix(C, G):
    """(C, C) matrix: 1/group_size where channels share a group, else 0."""
    c = jnp.arange(C)
    same = (c[:, None] // (C // G)) == (c[None, :] // (C // G))
    return same.astype(jnp.float32) / float(C // G)


def fused_transformer_block(xp, cp, weights, n_heads):
    B, N, K9 = xp.shape
    _, M, K9c = cp.shape
    C = weights[0].shape[-1]       # conv_in weight is (9*C, C)
    in_specs = [pl.BlockSpec((1, N, K9), lambda b: (b, 0, 0)),
                pl.BlockSpec((1, M, K9c), lambda b: (b, 0, 0))]
    in_specs += [_full_spec(w.shape) for w in weights]
    return pl.pallas_call(
        make_fused_kernel(n_heads),
        out_shape=jax.ShapeDtypeStruct((B, N, C), jnp.float32),
        grid=(B,),
        in_specs=in_specs,
        out_specs=pl.BlockSpec((1, N, C), lambda b: (b, 0, 0)),
        compiler_params=pltpu.CompilerParams(dimension_semantics=("parallel",)),
    )(xp, cp, *weights)


def conv_out_residual(xtp, res_seq, w9, bias):
    B, N, K9 = xtp.shape
    C = w9.shape[-1]
    return pl.pallas_call(
        conv_out_kernel,
        out_shape=jax.ShapeDtypeStruct((B, N, C), res_seq.dtype),
        grid=(B,),
        in_specs=[pl.BlockSpec((1, N, K9), lambda b: (b, 0, 0)),
                  pl.BlockSpec((1, N, C), lambda b: (b, 0, 0)),
                  _full_spec(w9.shape), _full_spec(bias.shape)],
        out_specs=pl.BlockSpec((1, N, C), lambda b: (b, 0, 0)),
        compiler_params=pltpu.CompilerParams(dimension_semantics=("parallel",)),
    )(xtp, res_seq, w9, bias)


# ----------------------------------------------------------------------------
# full SDAttentionBlock forward
# ----------------------------------------------------------------------------
def sd_attention_block(x_nchw, cond_nchw, params, *, n_heads, num_groups,
                       num_condition_groups):
    """x_nchw: (B, in_ch, H, W); cond_nchw: (B, d_cond, Hc, Wc). Returns NCHW."""
    B, C, H, W = x_nchw.shape
    _, Cc, Hc, Wc = cond_nchw.shape
    dh = C // n_heads

    x_nhwc = jnp.transpose(x_nchw, (0, 2, 3, 1))       # (B, H, W, C)
    c_nhwc = jnp.transpose(cond_nchw, (0, 2, 3, 1))    # (B, Hc, Wc, Cc)
    x_seq = x_nhwc.reshape(B, H * W, C)                # residue_long, sequence layout

    # wrapper-side im2col for the two input convs (single K=9*Cin matmul in-kernel)
    xp = _im2col_3x3(x_nhwc)                           # (B, HW, 9*C)
    cp = _im2col_3x3(c_nhwc)                           # (B, HcWc, 9*Cc)

    # wrapper-side weight prep (pure layout ops, traced once)
    # NOTE: conv weights are stored (3,3,Cin,Cout) and linear weights (in,out);
    #       real PyTorch checkpoints ((Cout,Cin,3,3), (out,in)) must be transposed on load.
    p = params
    split_h = lambda w: w.reshape(w.shape[0], n_heads, dh).transpose(1, 0, 2)  # (in,C)->(h,in,dh)
    split_o = lambda w: w.reshape(n_heads, dh, w.shape[-1])                    # (C,C)->(h,dh,C)
    weights = [
        p['conv_in_w'].reshape(9 * C, C), p['conv_in_b'],
        _group_matrix(C, num_groups), p['gn_w'], p['gn_b'],
        p['conv_c_w'].reshape(9 * Cc, Cc), p['conv_c_b'],
        _group_matrix(Cc, num_condition_groups), p['gnc_w'], p['gnc_b'],
        p['ln1_w'], p['ln1_b'],
        split_h(p['sa_q_w']), split_h(p['sa_k_w']), split_h(p['sa_v_w']),
        split_o(p['sa_out_w']), p['sa_out_b'],
        p['ln2_w'], p['ln2_b'],
        split_h(p['ca_q_w']), split_h(p['ca_k_w']), split_h(p['ca_v_w']),
        split_o(p['ca_out_w']), p['ca_out_b'],
        p['ln3_w'], p['ln3_b'],
        p['g1_w'], p['g1_b'], p['g2_w'], p['g2_b'],
    ]

    # ONE fused kernel: conv_in + GN + conv_c + GN_c + full transformer block
    xt = fused_transformer_block(xp, cp, weights, n_heads)       # (B, HW, C)

    # conv_output on the transformer result + long residual
    xtp = _im2col_3x3(xt.reshape(B, H, W, C))
    out_seq = conv_out_residual(xtp, x_seq,
                                p['conv_out_w'].reshape(9 * C, C), p['conv_out_b'])
    return jnp.transpose(out_seq.reshape(B, H, W, C), (0, 3, 1, 2))


# ----------------------------------------------------------------------------
# deterministic synthetic parameter init
# ----------------------------------------------------------------------------
def init_params(key, in_ch, d_cond):
    ks = jax.random.split(key, 40)
    it = iter(range(40))
    n = lambda shape, s=0.05: jax.random.normal(ks[next(it)], shape, jnp.float32) * s
    C, Cc = in_ch, d_cond
    return {
        'conv_in_w': n((3, 3, C, C)),    'conv_in_b': n((1, C), 0.01),
        'gn_w': 1.0 + n((1, C), 0.01),   'gn_b': n((1, C), 0.01),
        'conv_c_w': n((3, 3, Cc, Cc)),   'conv_c_b': n((1, Cc), 0.01),
        'gnc_w': 1.0 + n((1, Cc), 0.01), 'gnc_b': n((1, Cc), 0.01),
        'ln1_w': 1.0 + n((1, C), 0.01),  'ln1_b': n((1, C), 0.01),
        'sa_q_w': n((C, C)), 'sa_k_w': n((C, C)), 'sa_v_w': n((C, C)),
        'sa_out_w': n((C, C)),           'sa_out_b': n((1, C), 0.01),
        'ln2_w': 1.0 + n((1, C), 0.01),  'ln2_b': n((1, C), 0.01),
        'ca_q_w': n((C, C)), 'ca_k_w': n((Cc, C)), 'ca_v_w': n((Cc, C)),
        'ca_out_w': n((C, C)),           'ca_out_b': n((1, C), 0.01),
        'ln3_w': 1.0 + n((1, C), 0.01),  'ln3_b': n((1, C), 0.01),
        'g1_w': n((C, 8 * C)),           'g1_b': n((1, 8 * C), 0.01),
        'g2_w': n((4 * C, C)),           'g2_b': n((1, C), 0.01),
        'conv_out_w': n((3, 3, C, C)),   'conv_out_b': n((1, C), 0.01),
    }


# ----------------------------------------------------------------------------
if __name__ == "__main__":
    # hyper-params: d_condition % n_heads == 0  ->  cond_change == False branch
    n_heads = 2
    d_embed = 16
    in_ch = n_heads * d_embed          # 32
    d_condition = 8
    num_groups = 8
    num_condition_groups = 4

    B, H, W = 2, 8, 8
    Hc, Wc = 8, 8

    key = jax.random.PRNGKey(0)
    kx, kc, kp = jax.random.split(key, 3)
    x = jax.random.normal(kx, (B, in_ch, H, W), jnp.float32)
    condition = jax.random.normal(kc, (B, d_condition, Hc, Wc), jnp.float32)
    params = init_params(kp, in_ch, d_condition)

    fwd = functools.partial(sd_attention_block, n_heads=n_heads,
                            num_groups=num_groups,
                            num_condition_groups=num_condition_groups)
    out = jax.jit(fwd)(x, condition, params)
    jax.block_until_ready(out)
    assert out.shape == (B, in_ch, H, W)
    print("KERNEL_OK")
</pallas_src>

<mosaic_0001>
module attributes {stable_mosaic.version = 11 : i64} {
  func.func @kernel(%arg0: i32, %arg1: memref<1x64x288xf32, #tpu.memory_space<vmem>>, %arg2: memref<1x64x72xf32, #tpu.memory_space<vmem>>, %arg3: memref<288x32xf32, #tpu.memory_space<vmem>>, %arg4: memref<1x32xf32, #tpu.memory_space<vmem>>, %arg5: memref<32x32xf32, #tpu.memory_space<vmem>>, %arg6: memref<1x32xf32, #tpu.memory_space<vmem>>, %arg7: memref<1x32xf32, #tpu.memory_space<vmem>>, %arg8: memref<72x8xf32, #tpu.memory_space<vmem>>, %arg9: memref<1x8xf32, #tpu.memory_space<vmem>>, %arg10: memref<8x8xf32, #tpu.memory_space<vmem>>, %arg11: memref<1x8xf32, #tpu.memory_space<vmem>>, %arg12: memref<1x8xf32, #tpu.memory_space<vmem>>, %arg13: memref<1x32xf32, #tpu.memory_space<vmem>>, %arg14: memref<1x32xf32, #tpu.memory_space<vmem>>, %arg15: memref<2x32x16xf32, #tpu.memory_space<vmem>>, %arg16: memref<2x32x16xf32, #tpu.memory_space<vmem>>, %arg17: memref<2x32x16xf32, #tpu.memory_space<vmem>>, %arg18: memref<2x16x32xf32, #tpu.memory_space<vmem>>, %arg19: memref<1x32xf32, #tpu.memory_space<vmem>>, %arg20: memref<1x32xf32, #tpu.memory_space<vmem>>, %arg21: memref<1x32xf32, #tpu.memory_space<vmem>>, %arg22: memref<2x32x16xf32, #tpu.memory_space<vmem>>, %arg23: memref<2x8x16xf32, #tpu.memory_space<vmem>>, %arg24: memref<2x8x16xf32, #tpu.memory_space<vmem>>, %arg25: memref<2x16x32xf32, #tpu.memory_space<vmem>>, %arg26: memref<1x32xf32, #tpu.memory_space<vmem>>, %arg27: memref<1x32xf32, #tpu.memory_space<vmem>>, %arg28: memref<1x32xf32, #tpu.memory_space<vmem>>, %arg29: memref<32x256xf32, #tpu.memory_space<vmem>>, %arg30: memref<1x256xf32, #tpu.memory_space<vmem>>, %arg31: memref<128x32xf32, #tpu.memory_space<vmem>>, %arg32: memref<1x32xf32, #tpu.memory_space<vmem>>, %arg33: memref<1x64x32xf32, #tpu.memory_space<vmem>>) attributes {dimension_semantics = [#tpu.dimension_semantics<parallel>], iteration_bounds = array<i64: 2>, scalar_prefetch = 0 : i64, scratch_operands = 0 : i64, tpu.core_type = #tpu.core_type<tc>, window_params = [{transform_indices = @transform_0, window_bounds = array<i64: 1, 64, 288>}, {transform_indices = @transform_1, window_bounds = array<i64: 1, 64, 72>}, {pipeline_mode = #tpu.pipeline_mode<synchronous>, transform_indices = @transform_2, window_bounds = array<i64: 288, 32>}, {pipeline_mode = #tpu.pipeline_mode<synchronous>, transform_indices = @transform_3, window_bounds = array<i64: 1, 32>}, {pipeline_mode = #tpu.pipeline_mode<synchronous>, transform_indices = @transform_4, window_bounds = array<i64: 32, 32>}, {pipeline_mode = #tpu.pipeline_mode<synchronous>, transform_indices = @transform_5, window_bounds = array<i64: 1, 32>}, {pipeline_mode = #tpu.pipeline_mode<synchronous>, transform_indices = @transform_6, window_bounds = array<i64: 1, 32>}, {pipeline_mode = #tpu.pipeline_mode<synchronous>, transform_indices = @transform_7, window_bounds = array<i64: 72, 8>}, {pipeline_mode = #tpu.pipeline_mode<synchronous>, transform_indices = @transform_8, window_bounds = array<i64: 1, 8>}, {pipeline_mode = #tpu.pipeline_mode<synchronous>, transform_indices = @transform_9, window_bounds = array<i64: 8, 8>}, {pipeline_mode = #tpu.pipeline_mode<synchronous>, transform_indices = @transform_10, window_bounds = array<i64: 1, 8>}, {pipeline_mode = #tpu.pipeline_mode<synchronous>, transform_indices = @transform_11, window_bounds = array<i64: 1, 8>}, {pipeline_mode = #tpu.pipeline_mode<synchronous>, transform_indices = @transform_12, window_bounds = array<i64: 1, 32>}, {pipeline_mode = #tpu.pipeline_mode<synchronous>, transform_indices = @transform_13, window_bounds = array<i64: 1, 32>}, {pipeline_mode = #tpu.pipeline_mode<synchronous>, transform_indices = @transform_14, window_bounds = array<i64: 2, 32, 16>}, {pipeline_mode = #tpu.pipeline_mode<synchronous>, transform_indices = @transform_15, window_bounds = array<i64: 2, 32, 16>}, {pipeline_mode = #tpu.pipeline_mode<synchronous>, transform_indices = @transform_16, window_bounds = array<i64: 2, 32, 16>}, {pipeline_mode = #tpu.pipeline_mode<synchronous>, transform_indices = @transform_17, window_bounds = array<i64: 2, 16, 32>}, {pipeline_mode = #tpu.pipeline_mode<synchronous>, transform_indices = @transform_18, window_bounds = array<i64: 1, 32>}, {pipeline_mode = #tpu.pipeline_mode<synchronous>, transform_indices = @transform_19, window_bounds = array<i64: 1, 32>}, {pipeline_mode = #tpu.pipeline_mode<synchronous>, transform_indices = @transform_20, window_bounds = array<i64: 1, 32>}, {pipeline_mode = #tpu.pipeline_mode<synchronous>, transform_indices = @transform_21, window_bounds = array<i64: 2, 32, 16>}, {pipeline_mode = #tpu.pipeline_mode<synchronous>, transform_indices = @transform_22, window_bounds = array<i64: 2, 8, 16>}, {pipeline_mode = #tpu.pipeline_mode<synchronous>, transform_indices = @transform_23, window_bounds = array<i64: 2, 8, 16>}, {pipeline_mode = #tpu.pipeline_mode<synchronous>, transform_indices = @transform_24, window_bounds = array<i64: 2, 16, 32>}, {pipeline_mode = #tpu.pipeline_mode<synchronous>, transform_indices = @transform_25, window_bounds = array<i64: 1, 32>}, {pipeline_mode = #tpu.pipeline_mode<synchronous>, transform_indices = @transform_26, window_bounds = array<i64: 1, 32>}, {pipeline_mode = #tpu.pipeline_mode<synchronous>, transform_indices = @transform_27, window_bounds = array<i64: 1, 32>}, {pipeline_mode = #tpu.pipeline_mode<synchronous>, transform_indices = @transform_28, window_bounds = array<i64: 32, 256>}, {pipeline_mode = #tpu.pipeline_mode<synchronous>, transform_indices = @transform_29, window_bounds = array<i64: 1, 256>}, {pipeline_mode = #tpu.pipeline_mode<synchronous>, transform_indices = @transform_30, window_bounds = array<i64: 128, 32>}, {pipeline_mode = #tpu.pipeline_mode<synchronous>, transform_indices = @transform_31, window_bounds = array<i64: 1, 32>}, {transform_indices = @transform_32, window_bounds = array<i64: 1, 64, 32>}]} {
    %c0 = arith.constant 0 : index
    %c0_0 = arith.constant 0 : index
    %c0_1 = arith.constant 0 : index
    %0 = vector.load %arg1[%c0, %c0_0, %c0_1] : memref<1x64x288xf32, #tpu.memory_space<vmem>>, vector<1x64x288xf32>
    %1 = vector.shape_cast %0 : vector<1x64x288xf32> to vector<64x288xf32>
    %c0_2 = arith.constant 0 : index
    %c0_3 = arith.constant 0 : index
    %2 = vector.load %arg3[%c0_2, %c0_3] : memref<288x32xf32, #tpu.memory_space<vmem>>, vector<288x32xf32>
    %cst = arith.constant dense<0.000000e+00> : vector<64x32xf32>
    %3 = tpu.matmul %1, %2, %cst {dimension_numbers = #tpu.dot_dimension_numbers<[1], [0], [0], [1], [0, 0, 1, 1], [], []>} : vector<64x288xf32>, vector<288x32xf32>, vector<64x32xf32> -> vector<64x32xf32>
    %c0_4 = arith.constant 0 : index
    %c0_5 = arith.constant 0 : index
    %4 = vector.load %arg4[%c0_4, %c0_5] : memref<1x32xf32, #tpu.memory_space<vmem>>, vector<1x32xf32>
    %5 = vector.broadcast %4 : vector<1x32xf32> to vector<64x32xf32>
    %6 = arith.addf %3, %5 : vector<64x32xf32>
    %c0_6 = arith.constant 0 : index
    %c0_7 = arith.constant 0 : index
    %7 = vector.load %arg5[%c0_6, %c0_7] : memref<32x32xf32, #tpu.memory_space<vmem>>, vector<32x32xf32>
    %c0_8 = arith.constant 0 : index
    %c0_9 = arith.constant 0 : index
    %8 = vector.load %arg6[%c0_8, %c0_9] : memref<1x32xf32, #tpu.memory_space<vmem>>, vector<1x32xf32>
    %c0_10 = arith.constant 0 : index
    %c0_11 = arith.constant 0 : index
    %9 = vector.load %arg7[%c0_10, %c0_11] : memref<1x32xf32, #tpu.memory_space<vmem>>, vector<1x32xf32>
    %cst_12 = arith.constant dense<0.000000e+00> : vector<64x32xf32>
    %10 = tpu.matmul %6, %7, %cst_12 {dimension_numbers = #tpu.dot_dimension_numbers<[1], [0], [0], [1], [0, 0, 1, 1], [], []>} : vector<64x32xf32>, vector<32x32xf32>, vector<64x32xf32> -> vector<64x32xf32>
    %11 = arith.mulf %6, %6 : vector<64x32xf32>
    %cst_13 = arith.constant dense<0.000000e+00> : vector<64x32xf32>
    %12 = tpu.matmul %11, %7, %cst_13 {dimension_numbers = #tpu.dot_dimension_numbers<[1], [0], [0], [1], [0, 0, 1, 1], [], []>} : vector<64x32xf32>, vector<32x32xf32>, vector<64x32xf32> -> vector<64x32xf32>
    %cst_14 = arith.constant dense<0.000000e+00> : vector<32xf32>
    %13 = vector.multi_reduction <add>, %10, %cst_14 [0] : vector<64x32xf32> to vector<32xf32>
    %14 = vector.shape_cast %13 : vector<32xf32> to vector<1x32xf32>
    %cst_15 = arith.constant 6.400000e+01 : f32
    %15 = vector.broadcast %cst_15 : f32 to vector<1x32xf32>
    %16 = arith.divf %14, %15 : vector<1x32xf32>
    %cst_16 = arith.constant dense<0.000000e+00> : vector<32xf32>
    %17 = vector.multi_reduction <add>, %12, %cst_16 [0] : vector<64x32xf32> to vector<32xf32>
    %18 = vector.shape_cast %17 : vector<32xf32> to vector<1x32xf32>
    %cst_17 = arith.constant 6.400000e+01 : f32
    %19 = vector.broadcast %cst_17 : f32 to vector<1x32xf32>
    %20 = arith.divf %18, %19 : vector<1x32xf32>
    %21 = arith.mulf %16, %16 : vector<1x32xf32>
    %22 = arith.subf %20, %21 : vector<1x32xf32>
    %23 = vector.broadcast %16 : vector<1x32xf32> to vector<64x32xf32>
    %24 = arith.subf %6, %23 : vector<64x32xf32>
    %cst_18 = arith.constant 9.99999997E-7 : f32
    %25 = vector.broadcast %cst_18 : f32 to vector<1x32xf32>
    %26 = arith.addf %22, %25 : vector<1x32xf32>
    %27 = math.rsqrt %26 : vector<1x32xf32>
    %28 = vector.broadcast %27 : vector<1x32xf32> to vector<64x32xf32>
    %29 = arith.mulf %24, %28 : vector<64x32xf32>
    %30 = vector.broadcast %8 : vector<1x32xf32> to vector<64x32xf32>
    %31 = arith.mulf %29, %30 : vector<64x32xf32>
    %32 = vector.broadcast %9 : vector<1x32xf32> to vector<64x32xf32>
    %33 = arith.addf %31, %32 : vector<64x32xf32>
    %c0_19 = arith.constant 0 : index
    %c0_20 = arith.constant 0 : index
    %c0_21 = arith.constant 0 : index
    %34 = vector.load %arg2[%c0_19, %c0_20, %c0_21] : memref<1x64x72xf32, #tpu.memory_space<vmem>>, vector<1x64x72xf32>
    %35 = vector.shape_cast %34 : vector<1x64x72xf32> to vector<64x72xf32>
    %c0_22 = arith.constant 0 : index
    %c0_23 = arith.constant 0 : index
    %36 = vector.load %arg8[%c0_22, %c0_23] : memref<72x8xf32, #tpu.memory_space<vmem>>, vector<72x8xf32>
    %cst_24 = arith.constant dense<0.000000e+00> : vector<64x8xf32>
    %37 = tpu.matmul %35, %36, %cst_24 {dimension_numbers = #tpu.dot_dimension_numbers<[1], [0], [0], [1], [0, 0, 1, 1], [], []>} : vector<64x72xf32>, vector<72x8xf32>, vector<64x8xf32> -> vector<64x8xf32>
    %c0_25 = arith.constant 0 : index
    %c0_26 = arith.constant 0 : index
    %38 = vector.load %arg9[%c0_25, %c0_26] : memref<1x8xf32, #tpu.memory_space<vmem>>, vector<1x8xf32>
    %39 = vector.broadcast %38 : vector<1x8xf32> to vector<64x8xf32>
    %40 = arith.addf %37, %39 : vector<64x8xf32>
    %c0_27 = arith.constant 0 : index
    %c0_28 = arith.constant 0 : index
    %41 = vector.load %arg10[%c0_27, %c0_28] : memref<8x8xf32, #tpu.memory_space<vmem>>, vector<8x8xf32>
    %c0_29 = arith.constant 0 : index
    %c0_30 = arith.constant 0 : index
    %42 = vector.load %arg11[%c0_29, %c0_30] : memref<1x8xf32, #tpu.memory_space<vmem>>, vector<1x8xf32>
    %c0_31 = arith.constant 0 : index
    %c0_32 = arith.constant 0 : index
    %43 = vector.load %arg12[%c0_31, %c0_32] : memref<1x8xf32, #tpu.memory_space<vmem>>, vector<1x8xf32>
    %cst_33 = arith.constant dense<0.000000e+00> : vector<64x8xf32>
    %44 = tpu.matmul %40, %41, %cst_33 {dimension_numbers = #tpu.dot_dimension_numbers<[1], [0], [0], [1], [0, 0, 1, 1], [], []>} : vector<64x8xf32>, vector<8x8xf32>, vector<64x8xf32> -> vector<64x8xf32>
    %45 = arith.mulf %40, %40 : vector<64x8xf32>
    %cst_34 = arith.constant dense<0.000000e+00> : vector<64x8xf32>
    %46 = tpu.matmul %45, %41, %cst_34 {dimension_numbers = #tpu.dot_dimension_numbers<[1], [0], [0], [1], [0, 0, 1, 1], [], []>} : vector<64x8xf32>, vector<8x8xf32>, vector<64x8xf32> -> vector<64x8xf32>
    %cst_35 = arith.constant dense<0.000000e+00> : vector<8xf32>
    %47 = vector.multi_reduction <add>, %44, %cst_35 [0] : vector<64x8xf32> to vector<8xf32>
    %48 = vector.shape_cast %47 : vector<8xf32> to vector<1x8xf32>
    %cst_36 = arith.constant 6.400000e+01 : f32
    %49 = vector.broadcast %cst_36 : f32 to vector<1x8xf32>
    %50 = arith.divf %48, %49 : vector<1x8xf32>
    %cst_37 = arith.constant dense<0.000000e+00> : vector<8xf32>
    %51 = vector.multi_reduction <add>, %46, %cst_37 [0] : vector<64x8xf32> to vector<8xf32>
    %52 = vector.shape_cast %51 : vector<8xf32> to vector<1x8xf32>
    %cst_38 = arith.constant 6.400000e+01 : f32
    %53 = vector.broadcast %cst_38 : f32 to vector<1x8xf32>
    %54 = arith.divf %52, %53 : vector<1x8xf32>
    %55 = arith.mulf %50, %50 : vector<1x8xf32>
    %56 = arith.subf %54, %55 : vector<1x8xf32>
    %57 = vector.broadcast %50 : vector<1x8xf32> to vector<64x8xf32>
    %58 = arith.subf %40, %57 : vector<64x8xf32>
    %cst_39 = arith.constant 9.99999997E-7 : f32
    %59 = vector.broadcast %cst_39 : f32 to vector<1x8xf32>
    %60 = arith.addf %56, %59 : vector<1x8xf32>
    %61 = math.rsqrt %60 : vector<1x8xf32>
    %62 = vector.broadcast %61 : vector<1x8xf32> to vector<64x8xf32>
    %63 = arith.mulf %58, %62 : vector<64x8xf32>
    %64 = vector.broadcast %42 : vector<1x8xf32> to vector<64x8xf32>
    %65 = arith.mulf %63, %64 : vector<64x8xf32>
    %66 = vector.broadcast %43 : vector<1x8xf32> to vector<64x8xf32>
    %67 = arith.addf %65, %66 : vector<64x8xf32>
    %c0_40 = arith.constant 0 : index
    %c0_41 = arith.constant 0 : index
    %68 = vector.load %arg13[%c0_40, %c0_41] : memref<1x32xf32, #tpu.memory_space<vmem>>, vector<1x32xf32>
    %c0_42 = arith.constant 0 : index
    %c0_43 = arith.constant 0 : index
    %69 = vector.load %arg14[%c0_42, %c0_43] : memref<1x32xf32, #tpu.memory_space<vmem>>, vector<1x32xf32>
    %cst_44 = arith.constant dense<0.000000e+00> : vector<64xf32>
    %70 = vector.multi_reduction <add>, %33, %cst_44 [1] : vector<64x32xf32> to vector<64xf32>
    %71 = vector.shape_cast %70 : vector<64xf32> to vector<64x1xf32>
    %cst_45 = arith.constant 3.200000e+01 : f32
    %72 = vector.broadcast %cst_45 : f32 to vector<64x1xf32>
    %73 = arith.divf %71, %72 : vector<64x1xf32>
    %74 = vector.broadcast %73 : vector<64x1xf32> to vector<64x32xf32>
    %75 = arith.subf %33, %74 : vector<64x32xf32>
    %76 = arith.mulf %75, %75 : vector<64x32xf32>
    %cst_46 = arith.constant dense<0.000000e+00> : vector<64xf32>
    %77 = vector.multi_reduction <add>, %76, %cst_46 [1] : vector<64x32xf32> to vector<64xf32>
    %78 = vector.shape_cast %77 : vector<64xf32> to vector<64x1xf32>
    %cst_47 = arith.constant 3.200000e+01 : f32
    %79 = vector.broadcast %cst_47 : f32 to vector<64x1xf32>
    %80 = arith.divf %78, %79 : vector<64x1xf32>
    %81 = vector.broadcast %73 : vector<64x1xf32> to vector<64x32xf32>
    %82 = arith.subf %33, %81 : vector<64x32xf32>
    %cst_48 = arith.constant 9.99999974E-6 : f32
    %83 = vector.broadcast %cst_48 : f32 to vector<64x1xf32>
    %84 = arith.addf %80, %83 : vector<64x1xf32>
    %85 = math.rsqrt %84 : vector<64x1xf32>
    %86 = vector.broadcast %85 : vector<64x1xf32> to vector<64x32xf32>
    %87 = arith.mulf %82, %86 : vector<64x32xf32>
    %88 = vector.broadcast %68 : vector<1x32xf32> to vector<64x32xf32>
    %89 = arith.mulf %87, %88 : vector<64x32xf32>
    %90 = vector.broadcast %69 : vector<1x32xf32> to vector<64x32xf32>
    %91 = arith.addf %89, %90 : vector<64x32xf32>
    %c0_49 = arith.constant 0 : index
    %c0_50 = arith.constant 0 : index
    %92 = vector.load %arg19[%c0_49, %c0_50] : memref<1x32xf32, #tpu.memory_space<vmem>>, vector<1x32xf32>
    %c0_51 = arith.constant 0 : index
    %c0_52 = arith.constant 0 : index
    %c0_53 = arith.constant 0 : index
    %93 = vector.load %arg15[%c0_51, %c0_52, %c0_53] : memref<2x32x16xf32, #tpu.memory_space<vmem>>, vector<1x32x16xf32>
    %94 = vector.shape_cast %93 : vector<1x32x16xf32> to vector<32x16xf32>
    %cst_54 = arith.constant dense<0.000000e+00> : vector<64x16xf32>
    %95 = tpu.matmul %91, %94, %cst_54 {dimension_numbers = #tpu.dot_dimension_numbers<[1], [0], [0], [1], [0, 0, 1, 1], [], []>} : vector<64x32xf32>, vector<32x16xf32>, vector<64x16xf32> -> vector<64x16xf32>
    %c0_55 = arith.constant 0 : index
    %c0_56 = arith.constant 0 : index
    %c0_57 = arith.constant 0 : index
    %96 = vector.load %arg16[%c0_55, %c0_56, %c0_57] : memref<2x32x16xf32, #tpu.memory_space<vmem>>, vector<1x32x16xf32>
    %97 = vector.shape_cast %96 : vector<1x32x16xf32> to vector<32x16xf32>
    %cst_58 = arith.constant dense<0.000000e+00> : vector<64x16xf32>
    %98 = tpu.matmul %91, %97, %cst_58 {dimension_numbers = #tpu.dot_dimension_numbers<[1], [0], [0], [1], [0, 0, 1, 1], [], []>} : vector<64x32xf32>, vector<32x16xf32>, vector<64x16xf32> -> vector<64x16xf32>
    %c0_59 = arith.constant 0 : index
    %c0_60 = arith.constant 0 : index
    %c0_61 = arith.constant 0 : index
    %99 = vector.load %arg17[%c0_59, %c0_60, %c0_61] : memref<2x32x16xf32, #tpu.memory_space<vmem>>, vector<1x32x16xf32>
    %100 = vector.shape_cast %99 : vector<1x32x16xf32> to vector<32x16xf32>
    %cst_62 = arith.constant dense<0.000000e+00> : vector<64x16xf32>
    %101 = tpu.matmul %91, %100, %cst_62 {dimension_numbers = #tpu.dot_dimension_numbers<[1], [0], [0], [1], [0, 0, 1, 1], [], []>} : vector<64x32xf32>, vector<32x16xf32>, vector<64x16xf32> -> vector<64x16xf32>
    %cst_63 = arith.constant dense<0.000000e+00> : vector<64x64xf32>
    %102 = tpu.matmul %95, %98, %cst_63 {dimension_numbers = #tpu.dot_dimension_numbers<[1], [1], [0], [0], [0, 0, 1, 0], [], []>} : vector<64x16xf32>, vector<64x16xf32>, vector<64x64xf32> -> vector<64x64xf32>
    %cst_64 = arith.constant 2.500000e-01 : f32
    %103 = vector.broadcast %cst_64 : f32 to vector<64x64xf32>
    %104 = arith.mulf %102, %103 : vector<64x64xf32>
    %cst_65 = arith.constant dense<0xFF800000> : vector<64xf32>
    %105 = vector.multi_reduction <maximumf>, %104, %cst_65 [1] : vector<64x64xf32> to vector<64xf32>
    %106 = vector.shape_cast %105 : vector<64xf32> to vector<64x1xf32>
    %107 = vector.broadcast %106 : vector<64x1xf32> to vector<64x64xf32>
    %108 = arith.subf %104, %107 : vector<64x64xf32>
    %109 = math.exp %108 : vector<64x64xf32>
    %cst_66 = arith.constant dense<0.000000e+00> : vector<64xf32>
    %110 = vector.multi_reduction <add>, %109, %cst_66 [1] : vector<64x64xf32> to vector<64xf32>
    %111 = vector.shape_cast %110 : vector<64xf32> to vector<64x1xf32>
    %112 = tpu.reciprocal %111 {approx = true} : vector<64x1xf32> -> vector<64x1xf32>
    %113 = vector.broadcast %112 : vector<64x1xf32> to vector<64x64xf32>
    %114 = arith.mulf %109, %113 : vector<64x64xf32>
    %cst_67 = arith.constant dense<0.000000e+00> : vector<64x16xf32>
    %115 = tpu.matmul %114, %101, %cst_67 {dimension_numbers = #tpu.dot_dimension_numbers<[1], [0], [0], [1], [0, 0, 1, 1], [], []>} : vector<64x64xf32>, vector<64x16xf32>, vector<64x16xf32> -> vector<64x16xf32>
    %c0_68 = arith.constant 0 : index
    %c0_69 = arith.constant 0 : index
    %c0_70 = arith.constant 0 : index
    %116 = vector.load %arg18[%c0_68, %c0_69, %c0_70] : memref<2x16x32xf32, #tpu.memory_space<vmem>>, vector<1x16x32xf32>
    %117 = vector.shape_cast %116 : vector<1x16x32xf32> to vector<16x32xf32>
    %cst_71 = arith.constant dense<0.000000e+00> : vector<64x32xf32>
    %118 = tpu.matmul %115, %117, %cst_71 {dimension_numbers = #tpu.dot_dimension_numbers<[1], [0], [0], [1], [0, 0, 1, 1], [], []>} : vector<64x16xf32>, vector<16x32xf32>, vector<64x32xf32> -> vector<64x32xf32>
    %119 = vector.broadcast %92 : vector<1x32xf32> to vector<64x32xf32>
    %120 = arith.addf %119, %118 : vector<64x32xf32>
    %c1 = arith.constant 1 : index
    %c0_72 = arith.constant 0 : index
    %c0_73 = arith.constant 0 : index
    %121 = vector.load %arg15[%c1, %c0_72, %c0_73] : memref<2x32x16xf32, #tpu.memory_space<vmem>>, vector<1x32x16xf32>
    %122 = vector.shape_cast %121 : vector<1x32x16xf32> to vector<32x16xf32>
    %cst_74 = arith.constant dense<0.000000e+00> : vector<64x16xf32>
    %123 = tpu.matmul %91, %122, %cst_74 {dimension_numbers = #tpu.dot_dimension_numbers<[1], [0], [0], [1], [0, 0, 1, 1], [], []>} : vector<64x32xf32>, vector<32x16xf32>, vector<64x16xf32> -> vector<64x16xf32>
    %c1_75 = arith.constant 1 : index
    %c0_76 = arith.constant 0 : index
    %c0_77 = arith.constant 0 : index
    %124 = vector.load %arg16[%c1_75, %c0_76, %c0_77] : memref<2x32x16xf32, #tpu.memory_space<vmem>>, vector<1x32x16xf32>
    %125 = vector.shape_cast %124 : vector<1x32x16xf32> to vector<32x16xf32>
    %cst_78 = arith.constant dense<0.000000e+00> : vector<64x16xf32>
    %126 = tpu.matmul %91, %125, %cst_78 {dimension_numbers = #tpu.dot_dimension_numbers<[1], [0], [0], [1], [0, 0, 1, 1], [], []>} : vector<64x32xf32>, vector<32x16xf32>, vector<64x16xf32> -> vector<64x16xf32>
    %c1_79 = arith.constant 1 : index
    %c0_80 = arith.constant 0 : index
    %c0_81 = arith.constant 0 : index
    %127 = vector.load %arg17[%c1_79, %c0_80, %c0_81] : memref<2x32x16xf32, #tpu.memory_space<vmem>>, vector<1x32x16xf32>
    %128 = vector.shape_cast %127 : vector<1x32x16xf32> to vector<32x16xf32>
    %cst_82 = arith.constant dense<0.000000e+00> : vector<64x16xf32>
    %129 = tpu.matmul %91, %128, %cst_82 {dimension_numbers = #tpu.dot_dimension_numbers<[1], [0], [0], [1], [0, 0, 1, 1], [], []>} : vector<64x32xf32>, vector<32x16xf32>, vector<64x16xf32> -> vector<64x16xf32>
    %cst_83 = arith.constant dense<0.000000e+00> : vector<64x64xf32>
    %130 = tpu.matmul %123, %126, %cst_83 {dimension_numbers = #tpu.dot_dimension_numbers<[1], [1], [0], [0], [0, 0, 1, 0], [], []>} : vector<64x16xf32>, vector<64x16xf32>, vector<64x64xf32> -> vector<64x64xf32>
    %cst_84 = arith.constant 2.500000e-01 : f32
    %131 = vector.broadcast %cst_84 : f32 to vector<64x64xf32>
    %132 = arith.mulf %130, %131 : vector<64x64xf32>
    %cst_85 = arith.constant dense<0xFF800000> : vector<64xf32>
    %133 = vector.multi_reduction <maximumf>, %132, %cst_85 [1] : vector<64x64xf32> to vector<64xf32>
    %134 = vector.shape_cast %133 : vector<64xf32> to vector<64x1xf32>
    %135 = vector.broadcast %134 : vector<64x1xf32> to vector<64x64xf32>
    %136 = arith.subf %132, %135 : vector<64x64xf32>
    %137 = math.exp %136 : vector<64x64xf32>
    %cst_86 = arith.constant dense<0.000000e+00> : vector<64xf32>
    %138 = vector.multi_reduction <add>, %137, %cst_86 [1] : vector<64x64xf32> to vector<64xf32>
    %139 = vector.shape_cast %138 : vector<64xf32> to vector<64x1xf32>
    %140 = tpu.reciprocal %139 {approx = true} : vector<64x1xf32> -> vector<64x1xf32>
    %141 = vector.broadcast %140 : vector<64x1xf32> to vector<64x64xf32>
    %142 = arith.mulf %137, %141 : vector<64x64xf32>
    %cst_87 = arith.constant dense<0.000000e+00> : vector<64x16xf32>
    %143 = tpu.matmul %142, %129, %cst_87 {dimension_numbers = #tpu.dot_dimension_numbers<[1], [0], [0], [1], [0, 0, 1, 1], [], []>} : vector<64x64xf32>, vector<64x16xf32>, vector<64x16xf32> -> vector<64x16xf32>
    %c1_88 = arith.constant 1 : index
    %c0_89 = arith.constant 0 : index
    %c0_90 = arith.constant 0 : index
    %144 = vector.load %arg18[%c1_88, %c0_89, %c0_90] : memref<2x16x32xf32, #tpu.memory_space<vmem>>, vector<1x16x32xf32>
    %145 = vector.shape_cast %144 : vector<1x16x32xf32> to vector<16x32xf32>
    %cst_91 = arith.constant dense<0.000000e+00> : vector<64x32xf32>
    %146 = tpu.matmul %143, %145, %cst_91 {dimension_numbers = #tpu.dot_dimension_numbers<[1], [0], [0], [1], [0, 0, 1, 1], [], []>} : vector<64x16xf32>, vector<16x32xf32>, vector<64x32xf32> -> vector<64x32xf32>
    %147 = arith.addf %120, %146 : vector<64x32xf32>
    %148 = arith.addf %33, %147 : vector<64x32xf32>
    %c0_92 = arith.constant 0 : index
    %c0_93 = arith.constant 0 : index
    %149 = vector.load %arg20[%c0_92, %c0_93] : memref<1x32xf32, #tpu.memory_space<vmem>>, vector<1x32xf32>
    %c0_94 = arith.constant 0 : index
    %c0_95 = arith.constant 0 : index
    %150 = vector.load %arg21[%c0_94, %c0_95] : memref<1x32xf32, #tpu.memory_space<vmem>>, vector<1x32xf32>
    %cst_96 = arith.constant dense<0.000000e+00> : vector<64xf32>
    %151 = vector.multi_reduction <add>, %148, %cst_96 [1] : vector<64x32xf32> to vector<64xf32>
    %152 = vector.shape_cast %151 : vector<64xf32> to vector<64x1xf32>
    %cst_97 = arith.constant 3.200000e+01 : f32
    %153 = vector.broadcast %cst_97 : f32 to vector<64x1xf32>
    %154 = arith.divf %152, %153 : vector<64x1xf32>
    %155 = vector.broadcast %154 : vector<64x1xf32> to vector<64x32xf32>
    %156 = arith.subf %148, %155 : vector<64x32xf32>
    %157 = arith.mulf %156, %156 : vector<64x32xf32>
    %cst_98 = arith.constant dense<0.000000e+00> : vector<64xf32>
    %158 = vector.multi_reduction <add>, %157, %cst_98 [1] : vector<64x32xf32> to vector<64xf32>
    %159 = vector.shape_cast %158 : vector<64xf32> to vector<64x1xf32>
    %cst_99 = arith.constant 3.200000e+01 : f32
    %160 = vector.broadcast %cst_99 : f32 to vector<64x1xf32>
    %161 = arith.divf %159, %160 : vector<64x1xf32>
    %162 = vector.broadcast %154 : vector<64x1xf32> to vector<64x32xf32>
    %163 = arith.subf %148, %162 : vector<64x32xf32>
    %cst_100 = arith.constant 9.99999974E-6 : f32
    %164 = vector.broadcast %cst_100 : f32 to vector<64x1xf32>
    %165 = arith.addf %161, %164 : vector<64x1xf32>
    %166 = math.rsqrt %165 : vector<64x1xf32>
    %167 = vector.broadcast %166 : vector<64x1xf32> to vector<64x32xf32>
    %168 = arith.mulf %163, %167 : vector<64x32xf32>
    %169 = vector.broadcast %149 : vector<1x32xf32> to vector<64x32xf32>
    %170 = arith.mulf %168, %169 : vector<64x32xf32>
    %171 = vector.broadcast %150 : vector<1x32xf32> to vector<64x32xf32>
    %172 = arith.addf %170, %171 : vector<64x32xf32>
    %c0_101 = arith.constant 0 : index
    %c0_102 = arith.constant 0 : index
    %173 = vector.load %arg26[%c0_101, %c0_102] : memref<1x32xf32, #tpu.memory_space<vmem>>, vector<1x32xf32>
    %c0_103 = arith.constant 0 : index
    %c0_104 = arith.constant 0 : index
    %c0_105 = arith.constant 0 : index
    %174 = vector.load %arg22[%c0_103, %c0_104, %c0_105] : memref<2x32x16xf32, #tpu.memory_space<vmem>>, vector<1x32x16xf32>
    %175 = vector.shape_cast %174 : vector<1x32x16xf32> to vector<32x16xf32>
    %cst_106 = arith.constant dense<0.000000e+00> : vector<64x16xf32>
    %176 = tpu.matmul %172, %175, %cst_106 {dimension_numbers = #tpu.dot_dimension_numbers<[1], [0], [0], [1], [0, 0, 1, 1], [], []>} : vector<64x32xf32>, vector<32x16xf32>, vector<64x16xf32> -> vector<64x16xf32>
    %c0_107 = arith.constant 0 : index
    %c0_108 = arith.constant 0 : index
    %c0_109 = arith.constant 0 : index
    %177 = vector.load %arg23[%c0_107, %c0_108, %c0_109] : memref<2x8x16xf32, #tpu.memory_space<vmem>>, vector<1x8x16xf32>
    %178 = vector.shape_cast %177 : vector<1x8x16xf32> to vector<8x16xf32>
    %cst_110 = arith.constant dense<0.000000e+00> : vector<64x16xf32>
    %179 = tpu.matmul %67, %178, %cst_110 {dimension_numbers = #tpu.dot_dimension_numbers<[1], [0], [0], [1], [0, 0, 1, 1], [], []>} : vector<64x8xf32>, vector<8x16xf32>, vector<64x16xf32> -> vector<64x16xf32>
    %c0_111 = arith.constant 0 : index
    %c0_112 = arith.constant 0 : index
    %c0_113 = arith.constant 0 : index
    %180 = vector.load %arg24[%c0_111, %c0_112, %c0_113] : memref<2x8x16xf32, #tpu.memory_space<vmem>>, vector<1x8x16xf32>
    %181 = vector.shape_cast %180 : vector<1x8x16xf32> to vector<8x16xf32>
    %cst_114 = arith.constant dense<0.000000e+00> : vector<64x16xf32>
    %182 = tpu.matmul %67, %181, %cst_114 {dimension_numbers = #tpu.dot_dimension_numbers<[1], [0], [0], [1], [0, 0, 1, 1], [], []>} : vector<64x8xf32>, vector<8x16xf32>, vector<64x16xf32> -> vector<64x16xf32>
    %cst_115 = arith.constant dense<0.000000e+00> : vector<64x64xf32>
    %183 = tpu.matmul %176, %179, %cst_115 {dimension_numbers = #tpu.dot_dimension_numbers<[1], [1], [0], [0], [0, 0, 1, 0], [], []>} : vector<64x16xf32>, vector<64x16xf32>, vector<64x64xf32> -> vector<64x64xf32>
    %cst_116 = arith.constant 2.500000e-01 : f32
    %184 = vector.broadcast %cst_116 : f32 to vector<64x64xf32>
    %185 = arith.mulf %183, %184 : vector<64x64xf32>
    %cst_117 = arith.constant dense<0xFF800000> : vector<64xf32>
    %186 = vector.multi_reduction <maximumf>, %185, %cst_117 [1] : vector<64x64xf32> to vector<64xf32>
    %187 = vector.shape_cast %186 : vector<64xf32> to vector<64x1xf32>
    %188 = vector.broadcast %187 : vector<64x1xf32> to vector<64x64xf32>
    %189 = arith.subf %185, %188 : vector<64x64xf32>
    %190 = math.exp %189 : vector<64x64xf32>
    %cst_118 = arith.constant dense<0.000000e+00> : vector<64xf32>
    %191 = vector.multi_reduction <add>, %190, %cst_118 [1] : vector<64x64xf32> to vector<64xf32>
    %192 = vector.shape_cast %191 : vector<64xf32> to vector<64x1xf32>
    %193 = tpu.reciprocal %192 {approx = true} : vector<64x1xf32> -> vector<64x1xf32>
    %194 = vector.broadcast %193 : vector<64x1xf32> to vector<64x64xf32>
    %195 = arith.mulf %190, %194 : vector<64x64xf32>
    %cst_119 = arith.constant dense<0.000000e+00> : vector<64x16xf32>
    %196 = tpu.matmul %195, %182, %cst_119 {dimension_numbers = #tpu.dot_dimension_numbers<[1], [0], [0], [1], [0, 0, 1, 1], [], []>} : vector<64x64xf32>, vector<64x16xf32>, vector<64x16xf32> -> vector<64x16xf32>
    %c0_120 = arith.constant 0 : index
    %c0_121 = arith.constant 0 : index
    %c0_122 = arith.constant 0 : index
    %197 = vector.load %arg25[%c0_120, %c0_121, %c0_122] : memref<2x16x32xf32, #tpu.memory_space<vmem>>, vector<1x16x32xf32>
    %198 = vector.shape_cast %197 : vector<1x16x32xf32> to vector<16x32xf32>
    %cst_123 = arith.constant dense<0.000000e+00> : vector<64x32xf32>
    %199 = tpu.matmul %196, %198, %cst_123 {dimension_numbers = #tpu.dot_dimension_numbers<[1], [0], [0], [1], [0, 0, 1, 1], [], []>} : vector<64x16xf32>, vector<16x32xf32>, vector<64x32xf32> -> vector<64x32xf32>
    %200 = vector.broadcast %173 : vector<1x32xf32> to vector<64x32xf32>
    %201 = arith.addf %200, %199 : vector<64x32xf32>
    %c1_124 = arith.constant 1 : index
    %c0_125 = arith.constant 0 : index
    %c0_126 = arith.constant 0 : index
    %202 = vector.load %arg22[%c1_124, %c0_125, %c0_126] : memref<2x32x16xf32, #tpu.memory_space<vmem>>, vector<1x32x16xf32>
    %203 = vector.shape_cast %202 : vector<1x32x16xf32> to vector<32x16xf32>
    %cst_127 = arith.constant dense<0.000000e+00> : vector<64x16xf32>
    %204 = tpu.matmul %172, %203, %cst_127 {dimension_numbers = #tpu.dot_dimension_numbers<[1], [0], [0], [1], [0, 0, 1, 1], [], []>} : vector<64x32xf32>, vector<32x16xf32>, vector<64x16xf32> -> vector<64x16xf32>
    %c1_128 = arith.constant 1 : index
    %c0_129 = arith.constant 0 : index
    %c0_130 = arith.constant 0 : index
    %205 = vector.load %arg23[%c1_128, %c0_129, %c0_130] : memref<2x8x16xf32, #tpu.memory_space<vmem>>, vector<1x8x16xf32>
    %206 = vector.shape_cast %205 : vector<1x8x16xf32> to vector<8x16xf32>
    %cst_131 = arith.constant dense<0.000000e+00> : vector<64x16xf32>
    %207 = tpu.matmul %67, %206, %cst_131 {dimension_numbers = #tpu.dot_dimension_numbers<[1], [0], [0], [1], [0, 0, 1, 1], [], []>} : vector<64x8xf32>, vector<8x16xf32>, vector<64x16xf32> -> vector<64x16xf32>
    %c1_132 = arith.constant 1 : index
    %c0_133 = arith.constant 0 : index
    %c0_134 = arith.constant 0 : index
    %208 = vector.load %arg24[%c1_132, %c0_133, %c0_134] : memref<2x8x16xf32, #tpu.memory_space<vmem>>, vector<1x8x16xf32>
    %209 = vector.shape_cast %208 : vector<1x8x16xf32> to vector<8x16xf32>
    %cst_135 = arith.constant dense<0.000000e+00> : vector<64x16xf32>
    %210 = tpu.matmul %67, %209, %cst_135 {dimension_numbers = #tpu.dot_dimension_numbers<[1], [0], [0], [1], [0, 0, 1, 1], [], []>} : vector<64x8xf32>, vector<8x16xf32>, vector<64x16xf32> -> vector<64x16xf32>
    %cst_136 = arith.constant dense<0.000000e+00> : vector<64x64xf32>
    %211 = tpu.matmul %204, %207, %cst_136 {dimension_numbers = #tpu.dot_dimension_numbers<[1], [1], [0], [0], [0, 0, 1, 0], [], []>} : vector<64x16xf32>, vector<64x16xf32>, vector<64x64xf32> -> vector<64x64xf32>
    %cst_137 = arith.constant 2.500000e-01 : f32
    %212 = vector.broadcast %cst_137 : f32 to vector<64x64xf32>
    %213 = arith.mulf %211, %212 : vector<64x64xf32>
    %cst_138 = arith.constant dense<0xFF800000> : vector<64xf32>
    %214 = vector.multi_reduction <maximumf>, %213, %cst_138 [1] : vector<64x64xf32> to vector<64xf32>
    %215 = vector.shape_cast %214 : vector<64xf32> to vector<64x1xf32>
    %216 = vector.broadcast %215 : vector<64x1xf32> to vector<64x64xf32>
    %217 = arith.subf %213, %216 : vector<64x64xf32>
    %218 = math.exp %217 : vector<64x64xf32>
    %cst_139 = arith.constant dense<0.000000e+00> : vector<64xf32>
    %219 = vector.multi_reduction <add>, %218, %cst_139 [1] : vector<64x64xf32> to vector<64xf32>
    %220 = vector.shape_cast %219 : vector<64xf32> to vector<64x1xf32>
    %221 = tpu.reciprocal %220 {approx = true} : vector<64x1xf32> -> vector<64x1xf32>
    %222 = vector.broadcast %221 : vector<64x1xf32> to vector<64x64xf32>
    %223 = arith.mulf %218, %222 : vector<64x64xf32>
    %cst_140 = arith.constant dense<0.000000e+00> : vector<64x16xf32>
    %224 = tpu.matmul %223, %210, %cst_140 {dimension_numbers = #tpu.dot_dimension_numbers<[1], [0], [0], [1], [0, 0, 1, 1], [], []>} : vector<64x64xf32>, vector<64x16xf32>, vector<64x16xf32> -> vector<64x16xf32>
    %c1_141 = arith.constant 1 : index
    %c0_142 = arith.constant 0 : index
    %c0_143 = arith.constant 0 : index
    %225 = vector.load %arg25[%c1_141, %c0_142, %c0_143] : memref<2x16x32xf32, #tpu.memory_space<vmem>>, vector<1x16x32xf32>
    %226 = vector.shape_cast %225 : vector<1x16x32xf32> to vector<16x32xf32>
    %cst_144 = arith.constant dense<0.000000e+00> : vector<64x32xf32>
    %227 = tpu.matmul %224, %226, %cst_144 {dimension_numbers = #tpu.dot_dimension_numbers<[1], [0], [0], [1], [0, 0, 1, 1], [], []>} : vector<64x16xf32>, vector<16x32xf32>, vector<64x32xf32> -> vector<64x32xf32>
    %228 = arith.addf %201, %227 : vector<64x32xf32>
    %229 = arith.addf %148, %228 : vector<64x32xf32>
    %c0_145 = arith.constant 0 : index
    %c0_146 = arith.constant 0 : index
    %230 = vector.load %arg27[%c0_145, %c0_146] : memref<1x32xf32, #tpu.memory_space<vmem>>, vector<1x32xf32>
    %c0_147 = arith.constant 0 : index
    %c0_148 = arith.constant 0 : index
    %231 = vector.load %arg28[%c0_147, %c0_148] : memref<1x32xf32, #tpu.memory_space<vmem>>, vector<1x32xf32>
    %cst_149 = arith.constant dense<0.000000e+00> : vector<64xf32>
    %232 = vector.multi_reduction <add>, %229, %cst_149 [1] : vector<64x32xf32> to vector<64xf32>
    %233 = vector.shape_cast %232 : vector<64xf32> to vector<64x1xf32>
    %cst_150 = arith.constant 3.200000e+01 : f32
    %234 = vector.broadcast %cst_150 : f32 to vector<64x1xf32>
    %235 = arith.divf %233, %234 : vector<64x1xf32>
    %236 = vector.broadcast %235 : vector<64x1xf32> to vector<64x32xf32>
    %237 = arith.subf %229, %236 : vector<64x32xf32>
    %238 = arith.mulf %237, %237 : vector<64x32xf32>
    %cst_151 = arith.constant dense<0.000000e+00> : vector<64xf32>
    %239 = vector.multi_reduction <add>, %238, %cst_151 [1] : vector<64x32xf32> to vector<64xf32>
    %240 = vector.shape_cast %239 : vector<64xf32> to vector<64x1xf32>
    %cst_152 = arith.constant 3.200000e+01 : f32
    %241 = vector.broadcast %cst_152 : f32 to vector<64x1xf32>
    %242 = arith.divf %240, %241 : vector<64x1xf32>
    %243 = vector.broadcast %235 : vector<64x1xf32> to vector<64x32xf32>
    %244 = arith.subf %229, %243 : vector<64x32xf32>
    %cst_153 = arith.constant 9.99999974E-6 : f32
    %245 = vector.broadcast %cst_153 : f32 to vector<64x1xf32>
    %246 = arith.addf %242, %245 : vector<64x1xf32>
    %247 = math.rsqrt %246 : vector<64x1xf32>
    %248 = vector.broadcast %247 : vector<64x1xf32> to vector<64x32xf32>
    %249 = arith.mulf %244, %248 : vector<64x32xf32>
    %250 = vector.broadcast %230 : vector<1x32xf32> to vector<64x32xf32>
    %251 = arith.mulf %249, %250 : vector<64x32xf32>
    %252 = vector.broadcast %231 : vector<1x32xf32> to vector<64x32xf32>
    %253 = arith.addf %251, %252 : vector<64x32xf32>
    %c0_154 = arith.constant 0 : index
    %c0_155 = arith.constant 0 : index
    %254 = vector.load %arg29[%c0_154, %c0_155] : memref<32x256xf32, #tpu.memory_space<vmem>>, vector<32x256xf32>
    %cst_156 = arith.constant dense<0.000000e+00> : vector<64x256xf32>
    %255 = tpu.matmul %253, %254, %cst_156 {dimension_numbers = #tpu.dot_dimension_numbers<[1], [0], [0], [1], [0, 0, 1, 1], [], []>} : vector<64x32xf32>, vector<32x256xf32>, vector<64x256xf32> -> vector<64x256xf32>
    %c0_157 = arith.constant 0 : index
    %c0_158 = arith.constant 0 : index
    %256 = vector.load %arg30[%c0_157, %c0_158] : memref<1x256xf32, #tpu.memory_space<vmem>>, vector<1x256xf32>
    %257 = vector.broadcast %256 : vector<1x256xf32> to vector<64x256xf32>
    %258 = arith.addf %255, %257 : vector<64x256xf32>
    %259 = vector.extract_strided_slice %258 {offsets = [0, 0], sizes = [64, 128], strides = [1, 1]} : vector<64x256xf32> to vector<64x128xf32>
    %260 = vector.extract_strided_slice %258 {offsets = [0, 128], sizes = [64, 128], strides = [1, 1]} : vector<64x256xf32> to vector<64x128xf32>
    %cst_159 = arith.constant 5.000000e-01 : f32
    %261 = vector.broadcast %cst_159 : f32 to vector<64x128xf32>
    %262 = arith.mulf %261, %260 : vector<64x128xf32>
    %cst_160 = arith.constant 0.707106769 : f32
    %263 = vector.broadcast %cst_160 : f32 to vector<64x128xf32>
    %264 = arith.mulf %260, %263 : vector<64x128xf32>
    %265 = math.erf %264 : vector<64x128xf32>
    %cst_161 = arith.constant 1.000000e+00 : f32
    %266 = vector.broadcast %cst_161 : f32 to vector<64x128xf32>
    %267 = arith.addf %266, %265 : vector<64x128xf32>
    %268 = arith.mulf %262, %267 : vector<64x128xf32>
    %269 = arith.mulf %259, %268 : vector<64x128xf32>
    %c0_162 = arith.constant 0 : index
    %c0_163 = arith.constant 0 : index
    %270 = vector.load %arg31[%c0_162, %c0_163] : memref<128x32xf32, #tpu.memory_space<vmem>>, vector<128x32xf32>
    %cst_164 = arith.constant dense<0.000000e+00> : vector<64x32xf32>
    %271 = tpu.matmul %269, %270, %cst_164 {dimension_numbers = #tpu.dot_dimension_numbers<[1], [0], [0], [1], [0, 0, 1, 1], [], []>} : vector<64x128xf32>, vector<128x32xf32>, vector<64x32xf32> -> vector<64x32xf32>
    %272 = arith.addf %229, %271 : vector<64x32xf32>
    %c0_165 = arith.constant 0 : index
    %c0_166 = arith.constant 0 : index
    %273 = vector.load %arg32[%c0_165, %c0_166] : memref<1x32xf32, #tpu.memory_space<vmem>>, vector<1x32xf32>
    %274 = vector.broadcast %273 : vector<1x32xf32> to vector<64x32xf32>
    %275 = arith.addf %272, %274 : vector<64x32xf32>
    %c0_167 = arith.constant 0 : index
    %c0_168 = arith.constant 0 : index
    %c0_169 = arith.constant 0 : index
    %276 = vector.load %arg33[%c0_167, %c0_168, %c0_169] : memref<1x64x32xf32, #tpu.memory_space<vmem>>, vector<1x64x32xf32>
    %277 = vector.shape_cast %276 : vector<1x64x32xf32> to vector<64x32xf32>
    %278 = vector.shape_cast %275 : vector<64x32xf32> to vector<1x64x32xf32>
    tpu.vector_store %arg33[%c0_167, %c0_168, %c0_169], %278 {strides = array<i32>} : memref<1x64x32xf32, #tpu.memory_space<vmem>>, vector<1x64x32xf32>,
    return
  }
  func.func @transform_0(%arg0: i32) -> (i32, i32, i32) {
    %c0_i32 = arith.constant 0 : i32
    %c0_i32_0 = arith.constant 0 : i32
    %c0_i32_1 = arith.constant 0 : i32
    return %arg0, %c0_i32, %c0_i32_0 : i32, i32, i32
  }
  func.func @transform_1(%arg0: i32) -> (i32, i32, i32) {
    %c0_i32 = arith.constant 0 : i32
    %c0_i32_0 = arith.constant 0 : i32
    %c0_i32_1 = arith.constant 0 : i32
    return %arg0, %c0_i32, %c0_i32_0 : i32, i32, i32
  }
  func.func @transform_2(%arg0: i32) -> (i32, i32) {
    %c0_i32 = arith.constant 0 : i32
    %c0_i32_0 = arith.constant 0 : i32
    %c0_i32_1 = arith.constant 0 : i32
    return %c0_i32, %c0_i32_0 : i32, i32
  }
  func.func @transform_3(%arg0: i32) -> (i32, i32) {
    %c0_i32 = arith.constant 0 : i32
    %c0_i32_0 = arith.constant 0 : i32
    %c0_i32_1 = arith.constant 0 : i32
    return %c0_i32, %c0_i32_0 : i32, i32
  }
  func.func @transform_4(%arg0: i32) -> (i32, i32) {
    %c0_i32 = arith.constant 0 : i32
    %c0_i32_0 = arith.constant 0 : i32
    %c0_i32_1 = arith.constant 0 : i32
    return %c0_i32, %c0_i32_0 : i32, i32
  }
  func.func @transform_5(%arg0: i32) -> (i32, i32) {
    %c0_i32 = arith.constant 0 : i32
    %c0_i32_0 = arith.constant 0 : i32
    %c0_i32_1 = arith.constant 0 : i32
    return %c0_i32, %c0_i32_0 : i32, i32
  }
  func.func @transform_6(%arg0: i32) -> (i32, i32) {
    %c0_i32 = arith.constant 0 : i32
    %c0_i32_0 = arith.constant 0 : i32
    %c0_i32_1 = arith.constant 0 : i32
    return %c0_i32, %c0_i32_0 : i32, i32
  }
  func.func @transform_7(%arg0: i32) -> (i32, i32) {
    %c0_i32 = arith.constant 0 : i32
    %c0_i32_0 = arith.constant 0 : i32
    %c0_i32_1 = arith.constant 0 : i32
    return %c0_i32, %c0_i32_0 : i32, i32
  }
  func.func @transform_8(%arg0: i32) -> (i32, i32) {
    %c0_i32 = arith.constant 0 : i32
    %c0_i32_0 = arith.constant 0 : i32
    %c0_i32_1 = arith.constant 0 : i32
    return %c0_i32, %c0_i32_0 : i32, i32
  }
  func.func @transform_9(%arg0: i32) -> (i32, i32) {
    %c0_i32 = arith.constant 0 : i32
    %c0_i32_0 = arith.constant 0 : i32
    %c0_i32_1 = arith.constant 0 : i32
    return %c0_i32, %c0_i32_0 : i32, i32
  }
  func.func @transform_10(%arg0: i32) -> (i32, i32) {
    %c0_i32 = arith.constant 0 : i32
    %c0_i32_0 = arith.constant 0 : i32
    %c0_i32_1 = arith.constant 0 : i32
    return %c0_i32, %c0_i32_0 : i32, i32
  }
  func.func @transform_11(%arg0: i32) -> (i32, i32) {
    %c0_i32 = arith.constant 0 : i32
    %c0_i32_0 = arith.constant 0 : i32
    %c0_i32_1 = arith.constant 0 : i32
    return %c0_i32, %c0_i32_0 : i32, i32
  }
  func.func @transform_12(%arg0: i32) -> (i32, i32) {
    %c0_i32 = arith.constant 0 : i32
    %c0_i32_0 = arith.constant 0 : i32
    %c0_i32_1 = arith.constant 0 : i32
    return %c0_i32, %c0_i32_0 : i32, i32
  }
  func.func @transform_13(%arg0: i32) -> (i32, i32) {
    %c0_i32 = arith.constant 0 : i32
    %c0_i32_0 = arith.constant 0 : i32
    %c0_i32_1 = arith.constant 0 : i32
    return %c0_i32, %c0_i32_0 : i32, i32
  }
  func.func @transform_14(%arg0: i32) -> (i32, i32, i32) {
    %c0_i32 = arith.constant 0 : i32
    %c0_i32_0 = arith.constant 0 : i32
    %c0_i32_1 = arith.constant 0 : i32
    %c0_i32_2 = arith.constant 0 : i32
    return %c0_i32, %c0_i32_0, %c0_i32_1 : i32, i32, i32
  }
  func.func @transform_15(%arg0: i32) -> (i32, i32, i32) {
    %c0_i32 = arith.constant 0 : i32
    %c0_i32_0 = arith.constant 0 : i32
    %c0_i32_1 = arith.constant 0 : i32
    %c0_i32_2 = arith.constant 0 : i32
    return %c0_i32, %c0_i32_0, %c0_i32_1 : i32, i32, i32
  }
  func.func @transform_16(%arg0: i32) -> (i32, i32, i32) {
    %c0_i32 = arith.constant 0 : i32
    %c0_i32_0 = arith.constant 0 : i32
    %c0_i32_1 = arith.constant 0 : i32
    %c0_i32_2 = arith.constant 0 : i32
    return %c0_i32, %c0_i32_0, %c0_i32_1 : i32, i32, i32
  }
  func.func @transform_17(%arg0: i32) -> (i32, i32, i32) {
    %c0_i32 = arith.constant 0 : i32
    %c0_i32_0 = arith.constant 0 : i32
    %c0_i32_1 = arith.constant 0 : i32
    %c0_i32_2 = arith.constant 0 : i32
    return %c0_i32, %c0_i32_0, %c0_i32_1 : i32, i32, i32
  }
  func.func @transform_18(%arg0: i32) -> (i32, i32) {
    %c0_i32 = arith.constant 0 : i32
    %c0_i32_0 = arith.constant 0 : i32
    %c0_i32_1 = arith.constant 0 : i32
    return %c0_i32, %c0_i32_0 : i32, i32
  }
  func.func @transform_19(%arg0: i32) -> (i32, i32) {
    %c0_i32 = arith.constant 0 : i32
    %c0_i32_0 = arith.constant 0 : i32
    %c0_i32_1 = arith.constant 0 : i32
    return %c0_i32, %c0_i32_0 : i32, i32
  }
  func.func @transform_20(%arg0: i32) -> (i32, i32) {
    %c0_i32 = arith.constant 0 : i32
    %c0_i32_0 = arith.constant 0 : i32
    %c0_i32_1 = arith.constant 0 : i32
    return %c0_i32, %c0_i32_0 : i32, i32
  }
  func.func @transform_21(%arg0: i32) -> (i32, i32, i32) {
    %c0_i32 = arith.constant 0 : i32
    %c0_i32_0 = arith.constant 0 : i32
    %c0_i32_1 = arith.constant 0 : i32
    %c0_i32_2 = arith.constant 0 : i32
    return %c0_i32, %c0_i32_0, %c0_i32_1 : i32, i32, i32
  }
  func.func @transform_22(%arg0: i32) -> (i32, i32, i32) {
    %c0_i32 = arith.constant 0 : i32
    %c0_i32_0 = arith.constant 0 : i32
    %c0_i32_1 = arith.constant 0 : i32
    %c0_i32_2 = arith.constant 0 : i32
    return %c0_i32, %c0_i32_0, %c0_i32_1 : i32, i32, i32
  }
  func.func @transform_23(%arg0: i32) -> (i32, i32, i32) {
    %c0_i32 = arith.constant 0 : i32
    %c0_i32_0 = arith.constant 0 : i32
    %c0_i32_1 = arith.constant 0 : i32
    %c0_i32_2 = arith.constant 0 : i32
    return %c0_i32, %c0_i32_0, %c0_i32_1 : i32, i32, i32
  }
  func.func @transform_24(%arg0: i32) -> (i32, i32, i32) {
    %c0_i32 = arith.constant 0 : i32
    %c0_i32_0 = arith.constant 0 : i32
    %c0_i32_1 = arith.constant 0 : i32
    %c0_i32_2 = arith.constant 0 : i32
    return %c0_i32, %c0_i32_0, %c0_i32_1 : i32, i32, i32
  }
  func.func @transform_25(%arg0: i32) -> (i32, i32) {
    %c0_i32 = arith.constant 0 : i32
    %c0_i32_0 = arith.constant 0 : i32
    %c0_i32_1 = arith.constant 0 : i32
    return %c0_i32, %c0_i32_0 : i32, i32
  }
  func.func @transform_26(%arg0: i32) -> (i32, i32) {
    %c0_i32 = arith.constant 0 : i32
    %c0_i32_0 = arith.constant 0 : i32
    %c0_i32_1 = arith.constant 0 : i32
    return %c0_i32, %c0_i32_0 : i32, i32
  }
  func.func @transform_27(%arg0: i32) -> (i32, i32) {
    %c0_i32 = arith.constant 0 : i32
    %c0_i32_0 = arith.constant 0 : i32
    %c0_i32_1 = arith.constant 0 : i32
    return %c0_i32, %c0_i32_0 : i32, i32
  }
  func.func @transform_28(%arg0: i32) -> (i32, i32) {
    %c0_i32 = arith.constant 0 : i32
    %c0_i32_0 = arith.constant 0 : i32
    %c0_i32_1 = arith.constant 0 : i32
    return %c0_i32, %c0_i32_0 : i32, i32
  }
  func.func @transform_29(%arg0: i32) -> (i32, i32) {
    %c0_i32 = arith.constant 0 : i32
    %c0_i32_0 = arith.constant 0 : i32
    %c0_i32_1 = arith.constant 0 : i32
    return %c0_i32, %c0_i32_0 : i32, i32
  }
  func.func @transform_30(%arg0: i32) -> (i32, i32) {
    %c0_i32 = arith.constant 0 : i32
    %c0_i32_0 = arith.constant 0 : i32
    %c0_i32_1 = arith.constant 0 : i32
    return %c0_i32, %c0_i32_0 : i32, i32
  }
  func.func @transform_31(%arg0: i32) -> (i32, i32) {
    %c0_i32 = arith.constant 0 : i32
    %c0_i32_0 = arith.constant 0 : i32
    %c0_i32_1 = arith.constant 0 : i32
    return %c0_i32, %c0_i32_0 : i32, i32
  }
  func.func @transform_32(%arg0: i32) -> (i32, i32, i32) {
    %c0_i32 = arith.constant 0 : i32
    %c0_i32_0 = arith.constant 0 : i32
    %c0_i32_1 = arith.constant 0 : i32
    return %arg0, %c0_i32, %c0_i32_0 : i32, i32, i32
  }
}

module attributes {stable_mosaic.version = 11 : i64} {
  func.func @conv_out_kernel(%arg0: i32, %arg1: memref<1x64x288xf32, #tpu.memory_space<vmem>>, %arg2: memref<1x64x32xf32, #tpu.memory_space<vmem>>, %arg3: memref<288x32xf32, #tpu.memory_space<vmem>>, %arg4: memref<1x32xf32, #tpu.memory_space<vmem>>, %arg5: memref<1x64x32xf32, #tpu.memory_space<vmem>>) attributes {dimension_semantics = [#tpu.dimension_semantics<parallel>], iteration_bounds = array<i64: 2>, scalar_prefetch = 0 : i64, scratch_operands = 0 : i64, tpu.core_type = #tpu.core_type<tc>, window_params = [{transform_indices = @transform_0, window_bounds = array<i64: 1, 64, 288>}, {transform_indices = @transform_1, window_bounds = array<i64: 1, 64, 32>}, {pipeline_mode = #tpu.pipeline_mode<synchronous>, transform_indices = @transform_2, window_bounds = array<i64: 288, 32>}, {pipeline_mode = #tpu.pipeline_mode<synchronous>, transform_indices = @transform_3, window_bounds = array<i64: 1, 32>}, {transform_indices = @transform_4, window_bounds = array<i64: 1, 64, 32>}]} {
    %c0 = arith.constant 0 : index
    %c0_0 = arith.constant 0 : index
    %c0_1 = arith.constant 0 : index
    %0 = vector.load %arg1[%c0, %c0_0, %c0_1] : memref<1x64x288xf32, #tpu.memory_space<vmem>>, vector<1x64x288xf32>
    %1 = vector.shape_cast %0 : vector<1x64x288xf32> to vector<64x288xf32>
    %c0_2 = arith.constant 0 : index
    %c0_3 = arith.constant 0 : index
    %2 = vector.load %arg3[%c0_2, %c0_3] : memref<288x32xf32, #tpu.memory_space<vmem>>, vector<288x32xf32>
    %cst = arith.constant dense<0.000000e+00> : vector<64x32xf32>
    %3 = tpu.matmul %1, %2, %cst {dimension_numbers = #tpu.dot_dimension_numbers<[1], [0], [0], [1], [0, 0, 1, 1], [], []>} : vector<64x288xf32>, vector<288x32xf32>, vector<64x32xf32> -> vector<64x32xf32>
    %c0_4 = arith.constant 0 : index
    %c0_5 = arith.constant 0 : index
    %4 = vector.load %arg4[%c0_4, %c0_5] : memref<1x32xf32, #tpu.memory_space<vmem>>, vector<1x32xf32>
    %5 = vector.broadcast %4 : vector<1x32xf32> to vector<64x32xf32>
    %6 = arith.addf %3, %5 : vector<64x32xf32>
    %c0_6 = arith.constant 0 : index
    %c0_7 = arith.constant 0 : index
    %c0_8 = arith.constant 0 : index
    %7 = vector.load %arg2[%c0_6, %c0_7, %c0_8] : memref<1x64x32xf32, #tpu.memory_space<vmem>>, vector<1x64x32xf32>
    %8 = vector.shape_cast %7 : vector<1x64x32xf32> to vector<64x32xf32>
    %9 = arith.addf %6, %8 : vector<64x32xf32>
    %c0_9 = arith.constant 0 : index
    %c0_10 = arith.constant 0 : index
    %c0_11 = arith.constant 0 : index
    %10 = vector.load %arg5[%c0_9, %c0_10, %c0_11] : memref<1x64x32xf32, #tpu.memory_space<vmem>>, vector<1x64x32xf32>
    %11 = vector.shape_cast %10 : vector<1x64x32xf32> to vector<64x32xf32>
    %12 = vector.shape_cast %9 : vector<64x32xf32> to vector<1x64x32xf32>
    tpu.vector_store %arg5[%c0_9, %c0_10, %c0_11], %12 {strides = array<i32>} : memref<1x64x32xf32, #tpu.memory_space<vmem>>, vector<1x64x32xf32>,
    return
  }
  func.func @transform_0(%arg0: i32) -> (i32, i32, i32) {
    %c0_i32 = arith.constant 0 : i32
    %c0_i32_0 = arith.constant 0 : i32
    %c0_i32_1 = arith.constant 0 : i32
    return %arg0, %c0_i32, %c0_i32_0 : i32, i32, i32
  }
  func.func @transform_1(%arg0: i32) -> (i32, i32, i32) {
    %c0_i32 = arith.constant 0 : i32
    %c0_i32_0 = arith.constant 0 : i32
    %c0_i32_1 = arith.constant 0 : i32
    return %arg0, %c0_i32, %c0_i32_0 : i32, i32, i32
  }
  func.func @transform_2(%arg0: i32) -> (i32, i32) {
    %c0_i32 = arith.constant 0 : i32
    %c0_i32_0 = arith.constant 0 : i32
    %c0_i32_1 = arith.constant 0 : i32
    return %c0_i32, %c0_i32_0 : i32, i32
  }
  func.func @transform_3(%arg0: i32) -> (i32, i32) {
    %c0_i32 = arith.constant 0 : i32
    %c0_i32_0 = arith.constant 0 : i32
    %c0_i32_1 = arith.constant 0 : i32
    return %c0_i32, %c0_i32_0 : i32, i32
  }
  func.func @transform_4(%arg0: i32) -> (i32, i32, i32) {
    %c0_i32 = arith.constant 0 : i32
    %c0_i32_0 = arith.constant 0 : i32
    %c0_i32_1 = arith.constant 0 : i32
    return %arg0, %c0_i32, %c0_i32_0 : i32, i32, i32
  }
}

</mosaic_0001>

<llo_original>
// kernel: sd_attention_block.3
$region0: #{sd_attention_block.3}
  #allocation0 [shape = 'u32[]', space=smem, size = 0x4, offset = 0x4, fixed_abs, tag = 'smem constant byte address 0x4 - core index']
  #allocation1 [shape = 'u32[144,128]{1,0:T(1,128)}', space=vmem, size = 0x12000, scoped, tag = 'internal scratch']
  %s0 = inlined_call_operand.vmem [shape: f32[2,64,288], index: 0, kind: input, shape index: {}]
  %s1 = inlined_call_operand.vmem [shape: f32[2,64,32], index: 1, kind: input, shape index: {}]
  %s2 = inlined_call_operand.vmem [shape: f32[288,32], index: 2, kind: input, shape index: {}]
  %s3 = inlined_call_operand.vmem [shape: f32[1,32], index: 3, kind: input, shape index: {}]
  %s4 = inlined_call_operand.hbm [shape: f32[2,64,32], index: 4, kind: output, shape index: {}]
  %s5 = sld [smem:[#allocation0]]
  $region49: #{sd_attention_block.3} parent=0
    _
  %s7 = ssub.s32 1, %s5
  %s8 = scalar_select 0, %s7, %s5
  $region1: #{sd_attention_block.3} parent=0
    #allocation2 [shape = 'u8[65536]{0}', space=vmem, size = 0x10000, scoped, tag = 'output window, operand 0']
    #allocation3 [shape = 's32[2]{0}', space=sflag, size = 0x8, scoped, tag = 'scoped memory for sd_attention_block.3']
    %9 = vsyncpa [#allocation3], 0
    %s10 = scalar_lea.sflag [#allocation3], 1
    %11 = vsyncpa %s10, 0
    loop: start=0, step=1, limit=4
    $region2: #{sd_attention_block.3} parent=1 // loop_pre_header
      _
    $region3: #{sd_attention_block.3} parent=1 // loop_header
      %s13 = sphi 0, %s17
      %p14 = scmp.ge.s32.totalorder %s13, 4
      %s23 = sphi 0, %s25
      %s26 = sphi 0, %s23
      %s27 = sphi 0, %s26
      %s43 = sphi 0, %s27
      %s49 = sphi 0, %s51
      %s52 = sphi 0, %s49
      %s53 = sphi 0, %s52
      %s69 = sphi 0, %s53
      %s73 = sphi 0, %s73
      %s75 = sphi 0, %s73
      %s76 = sphi 0, %s75
      %s90 = sphi 0, %s76
      %s94 = sphi 0, %s94
      %s96 = sphi 0, %s94
      %s97 = sphi 0, %s96
      %s111 = sphi 0, %s97
      %s117 = sphi 0, %s119
      %s120 = sphi 0, %s117
      %s121 = sphi 0, %s120
      %s137 = sphi 0, %s121
    $region4: #{sd_attention_block.3} parent=1 // loop_header_branch
      %16 = sbr.rel (%p14) target = $region8
    $region5: #{sd_attention_block.3} parent=1 // loop_body
      %s18 = ssub.s32 %s13, 1
      %s19 = ssub.s32 %s13, 2
      %s20 = sadd.s32 %s13, 1
      %s21 = ssub.s32 %s13, %s20
      %p22 = scmp.eq.s32.totalorder %s21, 0
      %s24 = sadd.s32 %s23, 1
      %s25 = scalar_select %p22, %s23, %s24
      %p28 = pneg %p22
      %p29 = scmp.eq.s32.totalorder %s13, 1
      %p30 = por %p28, %p29
      %p31 = scmp.ne.s32.totalorder %s23, %s26
      %p32 = scmp.eq.s32.totalorder %s13, 0
      %p33 = por %p31, %p32
      %p34 = scmp.ne.s32.totalorder %s23, %s26
      %p35 = scmp.eq.s32.totalorder %s18, 1
      %p36 = por %p34, %p35
      %p37 = scmp.ne.s32.totalorder %s26, %s27
      %p38 = scmp.eq.s32.totalorder %s18, 0
      %p39 = por %p37, %p38
      %p40 = scmp.ne.s32.totalorder %s26, %s27
      %p41 = scmp.eq.s32.totalorder %s19, 1
      %p42 = por %p40, %p41
      %p44 = scmp.ne.s32.totalorder %s27, %s43
      %p45 = scmp.eq.s32.totalorder %s19, 0
      %p46 = por %p44, %p45
      %s47 = ssub.s32 %s13, %s20
      %p48 = scmp.eq.s32.totalorder %s47, 0
      %s50 = sadd.s32 %s49, 1
      %s51 = scalar_select %p48, %s49, %s50
      %p54 = pneg %p48
      %p55 = scmp.eq.s32.totalorder %s13, 1
      %p56 = por %p54, %p55
      %p57 = scmp.ne.s32.totalorder %s49, %s52
      %p58 = scmp.eq.s32.totalorder %s13, 0
      %p59 = por %p57, %p58
      %p60 = scmp.ne.s32.totalorder %s49, %s52
      %p61 = scmp.eq.s32.totalorder %s18, 1
      %p62 = por %p60, %p61
      %p63 = scmp.ne.s32.totalorder %s52, %s53
      %p64 = scmp.eq.s32.totalorder %s18, 0
      %p65 = por %p63, %p64
      %p66 = scmp.ne.s32.totalorder %s52, %s53
      %p67 = scmp.eq.s32.totalorder %s19, 1
      %p68 = por %p66, %p67
      %p70 = scmp.ne.s32.totalorder %s53, %s69
      %p71 = scmp.eq.s32.totalorder %s19, 0
      %p72 = por %p70, %p71
      %s74 = sadd.s32 %s73, 1
      %p77 = scmp.eq.s32.totalorder %s13, 1
      %p78 = scmp.ne.s32.totalorder %s73, %s75
      %p79 = scmp.eq.s32.totalorder %s13, 0
      %p80 = por %p78, %p79
      %p81 = scmp.ne.s32.totalorder %s73, %s75
      %p82 = scmp.eq.s32.totalorder %s18, 1
      %p83 = por %p81, %p82
      %p84 = scmp.ne.s32.totalorder %s75, %s76
      %p85 = scmp.eq.s32.totalorder %s18, 0
      %p86 = por %p84, %p85
      %p87 = scmp.ne.s32.totalorder %s75, %s76
      %p88 = scmp.eq.s32.totalorder %s19, 1
      %p89 = por %p87, %p88
      %p91 = scmp.ne.s32.totalorder %s76, %s90
      %p92 = scmp.eq.s32.totalorder %s19, 0
      %p93 = por %p91, %p92
      %s95 = sadd.s32 %s94, 1
      %p98 = scmp.eq.s32.totalorder %s13, 1
      %p99 = scmp.ne.s32.totalorder %s94, %s96
      %p100 = scmp.eq.s32.totalorder %s13, 0
      %p101 = por %p99, %p100
      %p102 = scmp.ne.s32.totalorder %s94, %s96
      %p103 = scmp.eq.s32.totalorder %s18, 1
      %p104 = por %p102, %p103
      %p105 = scmp.ne.s32.totalorder %s96, %s97
      %p106 = scmp.eq.s32.totalorder %s18, 0
      %p107 = por %p105, %p106
      %p108 = scmp.ne.s32.totalorder %s96, %s97
      %p109 = scmp.eq.s32.totalorder %s19, 1
      %p110 = por %p108, %p109
      %p112 = scmp.ne.s32.totalorder %s97, %s111
      %p113 = scmp.eq.s32.totalorder %s19, 0
      %p114 = por %p112, %p113
      %s115 = ssub.s32 %s13, %s20
      %p116 = scmp.eq.s32.totalorder %s115, 0
      %s118 = sadd.s32 %s117, 1
      %s119 = scalar_select %p116, %s117, %s118
      %p122 = pneg %p116
      %p123 = scmp.eq.s32.totalorder %s13, 1
      %p124 = por %p122, %p123
      %p125 = scmp.ne.s32.totalorder %s117, %s120
      %p126 = scmp.eq.s32.totalorder %s13, 0
      %p127 = por %p125, %p126
      %p128 = scmp.ne.s32.totalorder %s117, %s120
      %p129 = scmp.eq.s32.totalorder %s18, 1
      %p130 = por %p128, %p129
      %p131 = scmp.ne.s32.totalorder %s120, %s121
      %p132 = scmp.eq.s32.totalorder %s18, 0
      %p133 = por %p131, %p132
      %p134 = scmp.ne.s32.totalorder %s120, %s121
      %p135 = scmp.eq.s32.totalorder %s19, 1
      %p136 = por %p134, %p135
      %p138 = scmp.ne.s32.totalorder %s121, %s137
      %p139 = scmp.eq.s32.totalorder %s19, 0
      %p140 = por %p138, %p139
      %p141 = scmp.le.s32.totalorder 1, %s13
      %p142 = scmp.lt.s32.totalorder %s13, 3
      %p143 = pnand %p141, %p142
      %p144 = pneg %p143
      // Predicated region
      $region9: #{sd_attention_block.3} parent=5 // pred_check
        _
      $region10: #{sd_attention_block.3} parent=5 // pred_check_branch
        %146 = sbr.rel (%p143) target = $region12
      $region11: #{sd_attention_block.3} parent=5 // pred_region
        %s147 = ssub.s32 %s13, 1
        // Predicated region
        $region13: #{sd_attention_block.3} parent=11 // pred_check
          %p148 = pneg %p86
        $region14: #{sd_attention_block.3} parent=11 // pred_check_branch
          %150 = sbr.rel (%p148) target = $region16
        $region15: #{sd_attention_block.3} parent=11 // pred_region
          _
        $region16: #{sd_attention_block.3} parent=11 // pred_fallthru
          _
        // Predicated region
        $region17: #{sd_attention_block.3} parent=11 // pred_check
          %p151 = pneg %p107
        $region18: #{sd_attention_block.3} parent=11 // pred_check_branch
          %153 = sbr.rel (%p151) target = $region20
        $region19: #{sd_attention_block.3} parent=11 // pred_region
          _
        $region20: #{sd_attention_block.3} parent=11 // pred_fallthru
          _
      $region12: #{sd_attention_block.3} parent=5 // pred_fallthru
        _
      %p154 = scmp.lt.s32.totalorder %s13, 2
      // Predicated region
      $region21: #{sd_attention_block.3} parent=5 // pred_check
        %p155 = pneg %p154
      $region22: #{sd_attention_block.3} parent=5 // pred_check_branch
        %157 = sbr.rel (%p155) target = $region24
      $region23: #{sd_attention_block.3} parent=5 // pred_region
        // Predicated region
        $region25: #{sd_attention_block.3} parent=23 // pred_check
          %p158 = pneg %p33
        $region26: #{sd_attention_block.3} parent=23 // pred_check_branch
          %160 = sbr.rel (%p158) target = $region28
        $region27: #{sd_attention_block.3} parent=23 // pred_region
          %p161 = scmp.lt.s32.totalorder %s13, 1
          %s162 = scalar_select %p161, %s13, 1
          %s163 = smul.addr %s162, 24
          %s164 = smul.addr %s163, 8
          %s165 = scalar_lea.vmem %s0, %s164
        $region28: #{sd_attention_block.3} parent=23 // pred_fallthru
          _
        // Predicated region
        $region29: #{sd_attention_block.3} parent=23 // pred_check
          %p166 = pneg %p59
        $region30: #{sd_attention_block.3} parent=23 // pred_check_branch
          %168 = sbr.rel (%p166) target = $region32
        $region31: #{sd_attention_block.3} parent=23 // pred_region
          %p169 = scmp.lt.s32.totalorder %s13, 1
          %s170 = scalar_select %p169, %s13, 1
          %s171 = smul.addr %s170, 8
          %s172 = smul.addr %s171, 8
          %s173 = scalar_lea.vmem %s1, %s172
        $region32: #{sd_attention_block.3} parent=23 // pred_fallthru
          _
      $region24: #{sd_attention_block.3} parent=5 // pred_fallthru
        _
      %p174 = scmp.le.s32.totalorder 1, %s13
      %p175 = scmp.lt.s32.totalorder %s13, 3
      %p176 = pnand %p174, %p175
      %p177 = pneg %p176
      // Predicated region
      $region33: #{sd_attention_block.3} parent=5 // pred_check
        _
      $region34: #{sd_attention_block.3} parent=5 // pred_check_branch
        %179 = sbr.rel (%p176) target = $region36
      $region35: #{sd_attention_block.3} parent=5 // pred_region
        %s180 = ssub.s32 %s13, 1
        %p181 = scmp.lt.s32.totalorder %s18, 1
        %s182 = scalar_select %p181, %s18, 1
        %s183 = smul.addr %s182, 24
        %s184 = smul.addr %s183, 8
        %s185 = scalar_lea.vmem %s0, %s184
        %p186 = pneg %p39
        %p187 = pneg %p36
        %p188 = scmp.lt.s32.totalorder %s18, 1
        %s189 = scalar_select %p188, %s18, 1
        %s190 = smul.addr %s189, 8
        %s191 = smul.addr %s190, 8
        %s192 = scalar_lea.vmem %s1, %s191
        %p193 = pneg %p65
        %p194 = pneg %p62
        %p195 = pneg %p86
        %p196 = pneg %p83
        %p197 = pneg %p107
        %p198 = pneg %p104
        %p199 = pneg %p133
        %p200 = pneg %p130
        %s201 = sand.u32 %s120, 1
        %s202 = scalar_lea.sflag [#allocation3], %s201
        %s203 = sand.u32 %s120, 1
        %s204 = smul.addr %s203, 64
        %s205 = scalar_lea.vmem [#allocation2], %s204
        %p206 = scmp.lt.s32.totalorder %s18, 1
        %s207 = scalar_select %p206, %s18, 1
        %s208 = smul.addr %s207, 24
        %s209 = smul.addr %s208, 8
        %s210 = scalar_lea.vmem %s0, %s209
        %p211 = scmp.lt.s32.totalorder %s18, 1
        %s212 = scalar_select %p211, %s18, 1
        %s213 = smul.addr %s212, 8
        %s214 = smul.addr %s213, 8
        %s215 = scalar_lea.vmem %s1, %s214
        %v216 = vld [vmem:[%s210] sm:$0xff]
        %v217 = vld [vmem:[%s210 + $0x8] sm:$0xff]
        %v218 = vld [vmem:[%s210 + $0x10] sm:$0xff]
        %v219 = vld [vmem:[%s210 + $0x18] sm:$0xff]
        %v220 = vld [vmem:[%s210 + $0x20] sm:$0xff]
        %v221 = vld [vmem:[%s210 + $0x28] sm:$0xff]
        %v222 = vld [vmem:[%s210 + $0x30] sm:$0xff]
        %v223 = vld [vmem:[%s210 + $0x38] sm:$0xff]
        %v224 = vld [vmem:[%s210 + $0x40] sm:$0xff]
        %v225 = vld [vmem:[%s210 + $0x48] sm:$0xff]
        %v226 = vld [vmem:[%s210 + $0x50] sm:$0xff]
        %v227 = vld [vmem:[%s210 + $0x58] sm:$0xff]
        %v228 = vld [vmem:[%s210 + $0x60] sm:$0xff]
        %v229 = vld [vmem:[%s210 + $0x68] sm:$0xff]
        %v230 = vld [vmem:[%s210 + $0x70] sm:$0xff]
        %v231 = vld [vmem:[%s210 + $0x78] sm:$0xff]
        %v232 = vld [vmem:[%s210 + $0x80] sm:$0xff]
        %v233 = vld [vmem:[%s210 + $0x88] sm:$0xff]
        %v234 = vld [vmem:[%s210 + $0x90] sm:$0xff]
        %v235 = vld [vmem:[%s210 + $0x98] sm:$0xff]
        %v236 = vld [vmem:[%s210 + $0xa0] sm:$0xff]
        %v237 = vld [vmem:[%s210 + $0xa8] sm:$0xff]
        %v238 = vld [vmem:[%s210 + $0xb0] sm:$0xff]
        %v239 = vld [vmem:[%s210 + $0xb8] sm:$0xff]
        %v240 = vld [vmem:[%s2] sm:$0xff]
        %v241 = vld [vmem:[%s2 + $0x8] sm:$0xff]
        %v242 = vld [vmem:[%s2 + $0x10] sm:$0xff]
        %v243 = vld [vmem:[%s2 + $0x18] sm:$0xff]
        %v244 = vld [vmem:[%s2 + $0x20] sm:$0xff]
        %v245 = vld [vmem:[%s2 + $0x28] sm:$0xff]
        %v246 = vld [vmem:[%s2 + $0x30] sm:$0xff]
        %v247 = vld [vmem:[%s2 + $0x38] sm:$0xff]
        %v248 = vld [vmem:[%s2 + $0x40] sm:$0xff]
        %v249 = vld [vmem:[%s2 + $0x48] sm:$0xff]
        %v250 = vld [vmem:[%s2 + $0x50] sm:$0xff]
        %v251 = vld [vmem:[%s2 + $0x58] sm:$0xff]
        %v252 = vld [vmem:[%s2 + $0x60] sm:$0xff]
        %v253 = vld [vmem:[%s2 + $0x68] sm:$0xff]
        %v254 = vld [vmem:[%s2 + $0x70] sm:$0xff]
        %v255 = vld [vmem:[%s2 + $0x78] sm:$0xff]
        %v256 = vld [vmem:[%s2 + $0x80] sm:$0xff]
        %v257 = vld [vmem:[%s2 + $0x88] sm:$0xff]
        %v258 = vld [vmem:[%s2 + $0x90] sm:$0xff]
        %v259 = vld [vmem:[%s2 + $0x98] sm:$0xff]
        %v260 = vld [vmem:[%s2 + $0xa0] sm:$0xff]
        %v261 = vld [vmem:[%s2 + $0xa8] sm:$0xff]
        %v262 = vld [vmem:[%s2 + $0xb0] sm:$0xff]
        %v263 = vld [vmem:[%s2 + $0xb8] sm:$0xff]
        %v264 = vld [vmem:[%s2 + $0xc0] sm:$0xff]
        %v265 = vld [vmem:[%s2 + $0xc8] sm:$0xff]
        %v266 = vld [vmem:[%s2 + $0xd0] sm:$0xff]
        %v267 = vld [vmem:[%s2 + $0xd8] sm:$0xff]
        %v268 = vld [vmem:[%s2 + $0xe0] sm:$0xff]
        %v269 = vld [vmem:[%s2 + $0xe8] sm:$0xff]
        %v270 = vld [vmem:[%s2 + $0xf0] sm:$0xff]
        %v271 = vld [vmem:[%s2 + $0xf8] sm:$0xff]
        %v272 = vld [vmem:[%s2 + $0x100] sm:$0xff]
        %v273 = vld [vmem:[%s2 + $0x108] sm:$0xff]
        %v274 = vld [vmem:[%s2 + $0x110] sm:$0xff]
        %v275 = vld [vmem:[%s2 + $0x118] sm:$0xff]
        %v276 = vld [vmem:[%s3] sm:$0x1]
        %v278 = vlaneseq
        %v279 = vshrl.u32 %v278, 7
        %v280 = vsub.s32 0, %v279
        %v281 = vrot.slane %v276, %v280
        %vm283 = vcmask 261120
        %v285 = vsel %vm283, %v218, 0
        %v288 = vsel %vm283, %v221, 0
        %v291 = vsel %vm283, %v224, 0
        %v294 = vsel %vm283, %v227, 0
        %v297 = vsel %vm283, %v230, 0
        %v300 = vsel %vm283, %v233, 0
        %v303 = vsel %vm283, %v236, 0
        %v306 = vsel %vm283, %v239, 0
        %308 = vmatprep.subr.mxu0 0.0
        %309 = vmatpush1.msra.mxu0 %v240
        %310 = vmatprep.subr.mxu0 0.0
        %311 = vmatpush1.msra.mxu0 %v241
        %312 = vmatprep.subr.mxu0 0.0
        %313 = vmatpush1.msra.mxu0 %v242
        %314 = vmatprep.subr.mxu0 0.0
        %315 = vmatpush1.msra.mxu0 %v243
        %316 = vmatprep.subr.mxu0 0.0
        %317 = vmatpush1.msra.mxu0 %v244
        %318 = vmatprep.subr.mxu0 0.0
        %319 = vmatpush1.msra.mxu0 %v245
        %320 = vmatprep.subr.mxu0 0.0
        %321 = vmatpush1.msra.mxu0 %v246
        %322 = vmatprep.subr.mxu0 0.0
        %323 = vmatpush1.msra.mxu0 %v247
        %324 = vmatprep.subr.mxu0 0.0
        %325 = vmatpush1.msra.mxu0 %v248
        %326 = vmatprep.subr.mxu0 0.0
        %327 = vmatpush1.msra.mxu0 %v249
        %328 = vmatprep.subr.mxu0 0.0
        %329 = vmatpush1.msra.mxu0 %v250
        %330 = vmatprep.subr.mxu0 0.0
        %331 = vmatpush1.msra.mxu0 %v251
        %332 = vmatprep.subr.mxu0 0.0
        %333 = vmatpush1.msra.mxu0 %v252
        %334 = vmatprep.subr.mxu0 0.0
        %335 = vmatpush1.msra.mxu0 %v253
        %336 = vmatprep.subr.mxu0 0.0
        %337 = vmatpush1.msra.mxu0 %v254
        %338 = vmatprep.subr.mxu0 0.0
        %339 = vmatpush1.msra.mxu0 %v255
        %340 = vmatprep.subr.mxu0 0.0
        %341 = vmatpush1.msra.mxu0 %v256
        %342 = vmatprep.subr.mxu0 0.0
        %343 = vmatpush1.msra.mxu0 %v257
        %344 = vmatprep.subr.mxu0 0.0
        %345 = vmatpush1.msra.mxu0 %v258
        %346 = vmatprep.subr.mxu0 0.0
        %347 = vmatpush1.msra.mxu0 %v259
        %348 = vmatprep.subr.mxu0 0.0
        %349 = vmatpush1.msra.mxu0 %v260
        %350 = vmatprep.subr.mxu0 0.0
        %351 = vmatpush1.msra.mxu0 %v261
        %352 = vmatprep.subr.mxu0 0.0
        %353 = vmatpush1.msra.mxu0 %v262
        %354 = vmatprep.subr.mxu0 0.0
        %355 = vmatpush1.msra.mxu0 %v263
        %356 = vmatprep.subr.mxu0 0.0
        %357 = vmatpush1.msra.mxu0 %v264
        %358 = vmatprep.subr.mxu0 0.0
        %359 = vmatpush1.msra.mxu0 %v265
        %360 = vmatprep.subr.mxu0 0.0
        %361 = vmatpush1.msra.mxu0 %v266
        %362 = vmatprep.subr.mxu0 0.0
        %363 = vmatpush1.msra.mxu0 %v267
        %364 = vmatprep.subr.mxu0 0.0
        %365 = vmatpush1.msra.mxu0 %v268
        %366 = vmatprep.subr.mxu0 0.0
        %367 = vmatpush1.msra.mxu0 %v269
        %368 = vmatprep.subr.mxu0 0.0
        %369 = vmatpush1.msra.mxu0 %v270
        %370 = vmatprep.subr.mxu0 0.0
        %371 = vmatpush1.msra.mxu0 %v271
        %372 = vmatprep.mubr.f32.mxu0 %v217
        %373 = vmatmul.mubr.f32.gmra.mrb[0].mxu0 %v216
        %v374 = vpop.f32.mrb[0].mxu0
        %v375 = vadd.f32 %v281, %v374
        %v376 = vpop.f32.mrb[0].mxu0
        %377 = vmatprep.mubr.f32.mxu0 %v220
        %378 = vmatmul.mubr.f32.gmra.mrb[0].mxu0 %v219
        %v379 = vpop.f32.mrb[0].mxu0
        %v380 = vadd.f32 %v281, %v379
        %v381 = vpop.f32.mrb[0].mxu0
        %382 = vmatprep.mubr.f32.mxu0 %v223
        %383 = vmatmul.mubr.f32.gmra.mrb[0].mxu0 %v222
        %v384 = vpop.f32.mrb[0].mxu0
        %v385 = vadd.f32 %v281, %v384
        %v386 = vpop.f32.mrb[0].mxu0
        %387 = vmatprep.mubr.f32.mxu0 %v226
        %388 = vmatmul.mubr.f32.gmra.mrb[0].mxu0 %v225
        %v389 = vpop.f32.mrb[0].mxu0
        %v390 = vadd.f32 %v281, %v389
        %v391 = vpop.f32.mrb[0].mxu0
        %392 = vmatprep.mubr.f32.mxu0 %v229
        %393 = vmatmul.mubr.f32.gmra.mrb[0].mxu0 %v228
        %v394 = vpop.f32.mrb[0].mxu0
        %v395 = vadd.f32 %v281, %v394
        %v396 = vpop.f32.mrb[0].mxu0
        %397 = vmatprep.mubr.f32.mxu0 %v232
        %398 = vmatmul.mubr.f32.gmra.mrb[0].mxu0 %v231
        %v399 = vpop.f32.mrb[0].mxu0
        %v400 = vadd.f32 %v281, %v399
        %v401 = vpop.f32.mrb[0].mxu0
        %402 = vmatprep.mubr.f32.mxu0 %v235
        %403 = vmatmul.mubr.f32.gmra.mrb[0].mxu0 %v234
        %v404 = vpop.f32.mrb[0].mxu0
        %v405 = vadd.f32 %v281, %v404
        %v406 = vpop.f32.mrb[0].mxu0
        %407 = vmatprep.mubr.f32.mxu0 %v238
        %408 = vmatmul.mubr.f32.gmra.mrb[0].mxu0 %v237
        %v409 = vpop.f32.mrb[0].mxu0
        %v410 = vadd.f32 %v281, %v409
        %v411 = vpop.f32.mrb[0].mxu0
        %412 = vdwg.mxu0
        %413 = vmatprep.subr.mxu0 0.0
        %414 = vmatpush1.msra.mxu0 %v272
        %415 = vmatprep.subr.mxu0 0.0
        %416 = vmatpush1.msra.mxu0 %v273
        %417 = vmatprep.subr.mxu0 0.0
        %418 = vmatpush1.msra.mxu0 %v274
        %419 = vmatprep.subr.mxu0 0.0
        %420 = vmatpush1.msra.mxu0 %v275
        %421 = vmatprep.subr.mxu0 0.0
        %422 = vmatpush1.msra.mxu0 0.0
        %423 = vmatprep.subr.mxu0 0.0
        %424 = vmatpush1.msra.mxu0 0.0
        %425 = vmatprep.subr.mxu0 0.0
        %426 = vmatpush1.msra.mxu0 0.0
        %427 = vmatprep.subr.mxu0 0.0
        %428 = vmatpush1.msra.mxu0 0.0
        %429 = vmatprep.subr.mxu0 0.0
        %430 = vmatpush1.msra.mxu0 0.0
        %431 = vmatprep.subr.mxu0 0.0
        %432 = vmatpush1.msra.mxu0 0.0
        %433 = vmatprep.subr.mxu0 0.0
        %434 = vmatpush1.msra.mxu0 0.0
        %435 = vmatprep.subr.mxu0 0.0
        %436 = vmatpush1.msra.mxu0 0.0
        %437 = vmatprep.subr.mxu0 0.0
        %438 = vmatpush1.msra.mxu0 0.0
        %439 = vmatprep.subr.mxu0 0.0
        %440 = vmatpush1.msra.mxu0 0.0
        %441 = vmatprep.subr.mxu0 0.0
        %442 = vmatpush1.msra.mxu0 0.0
        %443 = vmatprep.subr.mxu0 0.0
        %444 = vmatpush1.msra.mxu0 0.0
        %445 = vmatprep.subr.mxu0 0.0
        %446 = vmatpush1.msra.mxu0 0.0
        %447 = vmatprep.subr.mxu0 0.0
        %448 = vmatpush1.msra.mxu0 0.0
        %449 = vmatprep.subr.mxu0 0.0
        %450 = vmatpush1.msra.mxu0 0.0
        %451 = vmatprep.subr.mxu0 0.0
        %452 = vmatpush1.msra.mxu0 0.0
        %453 = vmatprep.subr.mxu0 0.0
        %454 = vmatpush1.msra.mxu0 0.0
        %455 = vmatprep.subr.mxu0 0.0
        %456 = vmatpush1.msra.mxu0 0.0
        %457 = vmatprep.subr.mxu0 0.0
        %458 = vmatpush1.msra.mxu0 0.0
        %459 = vmatprep.subr.mxu0 0.0
        %460 = vmatpush1.msra.mxu0 0.0
        %461 = vmatprep.subr.mxu0 0.0
        %462 = vmatpush1.msra.mxu0 0.0
        %463 = vmatprep.subr.mxu0 0.0
        %464 = vmatpush1.msra.mxu0 0.0
        %465 = vmatprep.subr.mxu0 0.0
        %466 = vmatpush1.msra.mxu0 0.0
        %467 = vmatprep.subr.mxu0 0.0
        %468 = vmatpush1.msra.mxu0 0.0
        %469 = vmatprep.subr.mxu0 0.0
        %470 = vmatpush1.msra.mxu0 0.0
        %471 = vmatprep.subr.mxu0 0.0
        %472 = vmatpush1.msra.mxu0 0.0
        %473 = vmatprep.subr.mxu0 0.0
        %474 = vmatpush1.msra.mxu0 0.0
        %475 = vmatprep.subr.mxu0 0.0
        %476 = vmatpush1.msra.mxu0 0.0
        %477 = vmatprep.mubr.f32.mxu0 0.0
        %478 = vmatmul.mubr.f32.gmra.mrb[0].mxu0 %v285
        %v479 = vpop.f32.mrb[0].mxu0
        %v480 = vadd.f32 %v375, %v479
        %v481 = vpop.f32.mrb[0].mxu0
        %482 = vmatprep.mubr.f32.mxu0 0.0
        %483 = vmatmul.mubr.f32.gmra.mrb[0].mxu0 %v288
        %v484 = vpop.f32.mrb[0].mxu0
        %v485 = vadd.f32 %v380, %v484
        %v486 = vpop.f32.mrb[0].mxu0
        %487 = vmatprep.mubr.f32.mxu0 0.0
        %488 = vmatmul.mubr.f32.gmra.mrb[0].mxu0 %v291
        %v489 = vpop.f32.mrb[0].mxu0
        %v490 = vadd.f32 %v385, %v489
        %v491 = vpop.f32.mrb[0].mxu0
        %492 = vmatprep.mubr.f32.mxu0 0.0
        %493 = vmatmul.mubr.f32.gmra.mrb[0].mxu0 %v294
        %v494 = vpop.f32.mrb[0].mxu0
        %v495 = vadd.f32 %v390, %v494
        %v496 = vpop.f32.mrb[0].mxu0
        %497 = vmatprep.mubr.f32.mxu0 0.0
        %498 = vmatmul.mubr.f32.gmra.mrb[0].mxu0 %v297
        %v499 = vpop.f32.mrb[0].mxu0
        %v500 = vadd.f32 %v395, %v499
        %v501 = vpop.f32.mrb[0].mxu0
        %502 = vmatprep.mubr.f32.mxu0 0.0
        %503 = vmatmul.mubr.f32.gmra.mrb[0].mxu0 %v300
        %v504 = vpop.f32.mrb[0].mxu0
        %v505 = vadd.f32 %v400, %v504
        %v506 = vpop.f32.mrb[0].mxu0
        %507 = vmatprep.mubr.f32.mxu0 0.0
        %508 = vmatmul.mubr.f32.gmra.mrb[0].mxu0 %v303
        %v509 = vpop.f32.mrb[0].mxu0
        %v510 = vadd.f32 %v405, %v509
        %v511 = vpop.f32.mrb[0].mxu0
        %512 = vmatprep.mubr.f32.mxu0 0.0
        %513 = vmatmul.mubr.f32.gmra.mrb[0].mxu0 %v306
        %v514 = vpop.f32.mrb[0].mxu0
        %v515 = vadd.f32 %v410, %v514
        %v516 = vpop.f32.mrb[0].mxu0
        %517 = vdwg.mxu0
        %v518 = vld [vmem:[%s215] sm:$0xff]
        %v519 = vld [vmem:[%s215 + $0x8] sm:$0xff]
        %v520 = vld [vmem:[%s215 + $0x10] sm:$0xff]
        %v521 = vld [vmem:[%s215 + $0x18] sm:$0xff]
        %v522 = vld [vmem:[%s215 + $0x20] sm:$0xff]
        %v523 = vld [vmem:[%s215 + $0x28] sm:$0xff]
        %v524 = vld [vmem:[%s215 + $0x30] sm:$0xff]
        %v525 = vld [vmem:[%s215 + $0x38] sm:$0xff]
        %v526 = vadd.f32 %v480, %v518
        %v527 = vadd.f32 %v485, %v519
        %v528 = vadd.f32 %v490, %v520
        %v529 = vadd.f32 %v495, %v521
        %v530 = vadd.f32 %v500, %v522
        %v531 = vadd.f32 %v505, %v523
        %v532 = vadd.f32 %v510, %v524
        %v533 = vadd.f32 %v515, %v525
        %534 = vst.msk [vmem:[%s205] sm:$0xff] %vm283, %v526
        %535 = vst.msk [vmem:[%s205 + $0x8] sm:$0xff] %vm283, %v527
        %536 = vst.msk [vmem:[%s205 + $0x10] sm:$0xff] %vm283, %v528
        %537 = vst.msk [vmem:[%s205 + $0x18] sm:$0xff] %vm283, %v529
        %538 = vst.msk [vmem:[%s205 + $0x20] sm:$0xff] %vm283, %v530
        %539 = vst.msk [vmem:[%s205 + $0x28] sm:$0xff] %vm283, %v531
        %540 = vst.msk [vmem:[%s205 + $0x30] sm:$0xff] %vm283, %v532
        %541 = vst.msk [vmem:[%s205 + $0x38] sm:$0xff] %vm283, %v533
        %s542 = sand.u32 %s120, 1
        %s543 = scalar_lea.sflag [#allocation3], %s542
        %s544 = sand.u32 %s120, 1
        %s545 = smul.addr %s544, 64
        %s546 = scalar_lea.vmem [#allocation2], %s545
        // Predicated region
        $region37: #{sd_attention_block.3} parent=35 // pred_check
          %p547 = pneg %p130
        $region38: #{sd_attention_block.3} parent=35 // pred_check_branch
          %549 = sbr.rel (%p547) target = $region40
        $region39: #{sd_attention_block.3} parent=35 // pred_region
          %s551 = ssub.s32 1024, 1024
          %552 = vsyncadd %s543, %s551
          %s553 = smul.addr %s18, 8
          %s554 = smul.addr %s553, 128
          %s555 = scalar_lea.hbm %s4, %s554
          %s556 = sshll.u32 %s546, 4
          %s557 = int_to_ptr.vmem [resolvable:$true] %s556
          %562 = dma.vmem_to_hbm [thread:$0]  %s557, 1024, %s555, %s543, 128, 128, 8
        $region40: #{sd_attention_block.3} parent=35 // pred_fallthru
          _
      $region36: #{sd_attention_block.3} parent=5 // pred_fallthru
        _
      %p563 = scmp.le.s32.totalorder 2, %s13
      // Predicated region
      $region41: #{sd_attention_block.3} parent=5 // pred_check
        %p564 = pneg %p563
      $region42: #{sd_attention_block.3} parent=5 // pred_check_branch
        %566 = sbr.rel (%p564) target = $region44
      $region43: #{sd_attention_block.3} parent=5 // pred_region
        %s567 = ssub.s32 %s13, 2
        // Predicated region
        $region45: #{sd_attention_block.3} parent=43 // pred_check
          %p568 = pneg %p136
        $region46: #{sd_attention_block.3} parent=43 // pred_check_branch
          %570 = sbr.rel (%p568) target = $region48
        $region47: #{sd_attention_block.3} parent=43 // pred_region
          %s571 = sand.u32 %s121, 1
          %s572 = scalar_lea.sflag [#allocation3], %s571
          %s573 = sand.u32 %s121, 1
          %s574 = smul.addr %s573, 64
          %s575 = scalar_lea.vmem [#allocation2], %s574
          %576 = dma.done %s572, 1024
        $region48: #{sd_attention_block.3} parent=43 // pred_fallthru
          _
      $region44: #{sd_attention_block.3} parent=5 // pred_fallthru
        _
    $region6: #{sd_attention_block.3} parent=1 // loop_footer
      %s17 = sadd.s32 1, %s13
    $region7: #{sd_attention_block.3} parent=1 // loop_footer_branch
      %12 = sbr.rel target = $region3
    $region8: #{sd_attention_block.3} parent=1 // loop_exit
      _
    %577 = vsyncpa [#allocation3], 1
    %s578 = scalar_lea.sflag [#allocation3], 1
    %579 = vsyncpa %s578, 1

// kernel: sd_attention_block.2
$region0: #{sd_attention_block.2}
  #allocation0 [shape = 'u32[]', space=smem, size = 0x4, offset = 0x4, fixed_abs, tag = 'smem constant byte address 0x4 - core index']
  #allocation1 [shape = 'u32[144,128]{1,0:T(1,128)}', space=vmem, size = 0x12000, scoped, tag = 'internal scratch']
  %s0 = inlined_call_operand.smem [shape: u32[33], index: -1, kind: input, shape index: {}]
  %s1 = sld [smem:[%s0]]
  %s2 = scalar_lea.smem %s0, 1
  %s3 = sld [smem:[%s2]]
  %s4 = scalar_lea.smem %s0, 2
  %s5 = sld [smem:[%s4]]
  %s6 = scalar_lea.smem %s0, 3
  %s7 = sld [smem:[%s6]]
  %s8 = scalar_lea.smem %s0, 4
  %s9 = sld [smem:[%s8]]
  %s10 = scalar_lea.smem %s0, 5
  %s11 = sld [smem:[%s10]]
  %s12 = scalar_lea.smem %s0, 6
  %s13 = sld [smem:[%s12]]
  %s14 = scalar_lea.smem %s0, 7
  %s15 = sld [smem:[%s14]]
  %s16 = scalar_lea.smem %s0, 8
  %s17 = sld [smem:[%s16]]
  %s18 = scalar_lea.smem %s0, 9
  %s19 = sld [smem:[%s18]]
  %s20 = scalar_lea.smem %s0, 10
  %s21 = sld [smem:[%s20]]
  %s22 = scalar_lea.smem %s0, 11
  %s23 = sld [smem:[%s22]]
  %s24 = scalar_lea.smem %s0, 12
  %s25 = sld [smem:[%s24]]
  %s26 = scalar_lea.smem %s0, 13
  %s27 = sld [smem:[%s26]]
  %s28 = scalar_lea.smem %s0, 14
  %s29 = sld [smem:[%s28]]
  %s30 = scalar_lea.smem %s0, 15
  %s31 = sld [smem:[%s30]]
  %s32 = scalar_lea.smem %s0, 16
  %s33 = sld [smem:[%s32]]
  %s34 = scalar_lea.smem %s0, 17
  %s35 = sld [smem:[%s34]]
  %s36 = scalar_lea.smem %s0, 18
  %s37 = sld [smem:[%s36]]
  %s38 = scalar_lea.smem %s0, 19
  %s39 = sld [smem:[%s38]]
  %s40 = scalar_lea.smem %s0, 20
  %s41 = sld [smem:[%s40]]
  %s42 = scalar_lea.smem %s0, 21
  %s43 = sld [smem:[%s42]]
  %s44 = scalar_lea.smem %s0, 22
  %s45 = sld [smem:[%s44]]
  %s46 = scalar_lea.smem %s0, 23
  %s47 = sld [smem:[%s46]]
  %s48 = scalar_lea.smem %s0, 24
  %s49 = sld [smem:[%s48]]
  %s50 = scalar_lea.smem %s0, 25
  %s51 = sld [smem:[%s50]]
  %s52 = scalar_lea.smem %s0, 26
  %s53 = sld [smem:[%s52]]
  %s54 = scalar_lea.smem %s0, 27
  %s55 = sld [smem:[%s54]]
  %s56 = scalar_lea.smem %s0, 28
  %s57 = sld [smem:[%s56]]
  %s58 = scalar_lea.smem %s0, 29
  %s59 = sld [smem:[%s58]]
  %s60 = scalar_lea.smem %s0, 30
  %s61 = sld [smem:[%s60]]
  %s62 = scalar_lea.smem %s0, 31
  %s63 = sld [smem:[%s62]]
  %s64 = scalar_lea.smem %s0, 32
  %s65 = sld [smem:[%s64]]
  %s66 = sld [smem:[#allocation0]]
  $region161: #{sd_attention_block.2} parent=0
    _
  %s68 = ssub.s32 1, %s66
  %s69 = scalar_select 0, %s68, %s66
  loop: start=0, step=1, limit=4
  $region2: #{sd_attention_block.2} parent=0 // loop_pre_header
    _
  $region3: #{sd_attention_block.2} parent=0 // loop_header
    %s71 = sphi 0, %s75
    %p72 = scmp.ge.s32.totalorder %s71, 4
    %s81 = sphi 0, %s83
    %s84 = sphi 0, %s81
    %s85 = sphi 0, %s84
    %s101 = sphi 0, %s85
    %s107 = sphi 0, %s109
    %s110 = sphi 0, %s107
    %s111 = sphi 0, %s110
    %s127 = sphi 0, %s111
    %s131 = sphi 0, %s131
    %s133 = sphi 0, %s131
    %s134 = sphi 0, %s133
    %s148 = sphi 0, %s134
    %s152 = sphi 0, %s152
    %s154 = sphi 0, %s152
    %s155 = sphi 0, %s154
    %s169 = sphi 0, %s155
    %s173 = sphi 0, %s173
    %s175 = sphi 0, %s173
    %s176 = sphi 0, %s175
    %s190 = sphi 0, %s176
    %s194 = sphi 0, %s194
    %s196 = sphi 0, %s194
    %s197 = sphi 0, %s196
    %s211 = sphi 0, %s197
    %s215 = sphi 0, %s215
    %s217 = sphi 0, %s215
    %s218 = sphi 0, %s217
    %s232 = sphi 0, %s218
    %s236 = sphi 0, %s236
    %s238 = sphi 0, %s236
    %s239 = sphi 0, %s238
    %s253 = sphi 0, %s239
    %s257 = sphi 0, %s257
    %s259 = sphi 0, %s257
    %s260 = sphi 0, %s259
    %s274 = sphi 0, %s260
    %s278 = sphi 0, %s278
    %s280 = sphi 0, %s278
    %s281 = sphi 0, %s280
    %s295 = sphi 0, %s281
    %s299 = sphi 0, %s299
    %s301 = sphi 0, %s299
    %s302 = sphi 0, %s301
    %s316 = sphi 0, %s302
    %s320 = sphi 0, %s320
    %s322 = sphi 0, %s320
    %s323 = sphi 0, %s322
    %s337 = sphi 0, %s323
    %s341 = sphi 0, %s341
    %s343 = sphi 0, %s341
    %s344 = sphi 0, %s343
    %s358 = sphi 0, %s344
    %s362 = sphi 0, %s362
    %s364 = sphi 0, %s362
    %s365 = sphi 0, %s364
    %s379 = sphi 0, %s365
    %s383 = sphi 0, %s383
    %s385 = sphi 0, %s383
    %s386 = sphi 0, %s385
    %s400 = sphi 0, %s386
    %s404 = sphi 0, %s404
    %s406 = sphi 0, %s404
    %s407 = sphi 0, %s406
    %s421 = sphi 0, %s407
    %s425 = sphi 0, %s425
    %s427 = sphi 0, %s425
    %s428 = sphi 0, %s427
    %s442 = sphi 0, %s428
    %s446 = sphi 0, %s446
    %s448 = sphi 0, %s446
    %s449 = sphi 0, %s448
    %s463 = sphi 0, %s449
    %s467 = sphi 0, %s467
    %s469 = sphi 0, %s467
    %s470 = sphi 0, %s469
    %s484 = sphi 0, %s470
    %s488 = sphi 0, %s488
    %s490 = sphi 0, %s488
    %s491 = sphi 0, %s490
    %s505 = sphi 0, %s491
    %s509 = sphi 0, %s509
    %s511 = sphi 0, %s509
    %s512 = sphi 0, %s511
    %s526 = sphi 0, %s512
    %s530 = sphi 0, %s530
    %s532 = sphi 0, %s530
    %s533 = sphi 0, %s532
    %s547 = sphi 0, %s533
    %s551 = sphi 0, %s551
    %s553 = sphi 0, %s551
    %s554 = sphi 0, %s553
    %s568 = sphi 0, %s554
    %s572 = sphi 0, %s572
    %s574 = sphi 0, %s572
    %s575 = sphi 0, %s574
    %s589 = sphi 0, %s575
    %s593 = sphi 0, %s593
    %s595 = sphi 0, %s593
    %s596 = sphi 0, %s595
    %s610 = sphi 0, %s596
    %s614 = sphi 0, %s614
    %s616 = sphi 0, %s614
    %s617 = sphi 0, %s616
    %s631 = sphi 0, %s617
    %s635 = sphi 0, %s635
    %s637 = sphi 0, %s635
    %s638 = sphi 0, %s637
    %s652 = sphi 0, %s638
    %s656 = sphi 0, %s656
    %s658 = sphi 0, %s656
    %s659 = sphi 0, %s658
    %s673 = sphi 0, %s659
    %s677 = sphi 0, %s677
    %s679 = sphi 0, %s677
    %s680 = sphi 0, %s679
    %s694 = sphi 0, %s680
    %s698 = sphi 0, %s698
    %s700 = sphi 0, %s698
    %s701 = sphi 0, %s700
    %s715 = sphi 0, %s701
    %s719 = sphi 0, %s719
    %s721 = sphi 0, %s719
    %s722 = sphi 0, %s721
    %s736 = sphi 0, %s722
    %s740 = sphi 0, %s740
    %s742 = sphi 0, %s740
    %s743 = sphi 0, %s742
    %s757 = sphi 0, %s743
    %s763 = sphi 0, %s765
    %s766 = sphi 0, %s763
    %s767 = sphi 0, %s766
    %s783 = sphi 0, %s767
  $region4: #{sd_attention_block.2} parent=0 // loop_header_branch
    %74 = sbr.rel (%p72) target = $region8
  $region5: #{sd_attention_block.2} parent=0 // loop_body
    %s76 = ssub.s32 %s71, 1
    %s77 = ssub.s32 %s71, 2
    %s78 = sadd.s32 %s71, 1
    %s79 = ssub.s32 %s71, %s78
    %p80 = scmp.eq.s32.totalorder %s79, 0
    %s82 = sadd.s32 %s81, 1
    %s83 = scalar_select %p80, %s81, %s82
    %p86 = pneg %p80
    %p87 = scmp.eq.s32.totalorder %s71, 1
    %p88 = por %p86, %p87
    %p89 = scmp.ne.s32.totalorder %s81, %s84
    %p90 = scmp.eq.s32.totalorder %s71, 0
    %p91 = por %p89, %p90
    %p92 = scmp.ne.s32.totalorder %s81, %s84
    %p93 = scmp.eq.s32.totalorder %s76, 1
    %p94 = por %p92, %p93
    %p95 = scmp.ne.s32.totalorder %s84, %s85
    %p96 = scmp.eq.s32.totalorder %s76, 0
    %p97 = por %p95, %p96
    %p98 = scmp.ne.s32.totalorder %s84, %s85
    %p99 = scmp.eq.s32.totalorder %s77, 1
    %p100 = por %p98, %p99
    %p102 = scmp.ne.s32.totalorder %s85, %s101
    %p103 = scmp.eq.s32.totalorder %s77, 0
    %p104 = por %p102, %p103
    %s105 = ssub.s32 %s71, %s78
    %p106 = scmp.eq.s32.totalorder %s105, 0
    %s108 = sadd.s32 %s107, 1
    %s109 = scalar_select %p106, %s107, %s108
    %p112 = pneg %p106
    %p113 = scmp.eq.s32.totalorder %s71, 1
    %p114 = por %p112, %p113
    %p115 = scmp.ne.s32.totalorder %s107, %s110
    %p116 = scmp.eq.s32.totalorder %s71, 0
    %p117 = por %p115, %p116
    %p118 = scmp.ne.s32.totalorder %s107, %s110
    %p119 = scmp.eq.s32.totalorder %s76, 1
    %p120 = por %p118, %p119
    %p121 = scmp.ne.s32.totalorder %s110, %s111
    %p122 = scmp.eq.s32.totalorder %s76, 0
    %p123 = por %p121, %p122
    %p124 = scmp.ne.s32.totalorder %s110, %s111
    %p125 = scmp.eq.s32.totalorder %s77, 1
    %p126 = por %p124, %p125
    %p128 = scmp.ne.s32.totalorder %s111, %s127
    %p129 = scmp.eq.s32.totalorder %s77, 0
    %p130 = por %p128, %p129
    %s132 = sadd.s32 %s131, 1
    %p135 = scmp.eq.s32.totalorder %s71, 1
    %p136 = scmp.ne.s32.totalorder %s131, %s133
    %p137 = scmp.eq.s32.totalorder %s71, 0
    %p138 = por %p136, %p137
    %p139 = scmp.ne.s32.totalorder %s131, %s133
    %p140 = scmp.eq.s32.totalorder %s76, 1
    %p141 = por %p139, %p140
    %p142 = scmp.ne.s32.totalorder %s133, %s134
    %p143 = scmp.eq.s32.totalorder %s76, 0
    %p144 = por %p142, %p143
    %p145 = scmp.ne.s32.totalorder %s133, %s134
    %p146 = scmp.eq.s32.totalorder %s77, 1
    %p147 = por %p145, %p146
    %p149 = scmp.ne.s32.totalorder %s134, %s148
    %p150 = scmp.eq.s32.totalorder %s77, 0
    %p151 = por %p149, %p150
    %s153 = sadd.s32 %s152, 1
    %p156 = scmp.eq.s32.totalorder %s71, 1
    %p157 = scmp.ne.s32.totalorder %s152, %s154
    %p158 = scmp.eq.s32.totalorder %s71, 0
    %p159 = por %p157, %p158
    %p160 = scmp.ne.s32.totalorder %s152, %s154
    %p161 = scmp.eq.s32.totalorder %s76, 1
    %p162 = por %p160, %p161
    %p163 = scmp.ne.s32.totalorder %s154, %s155
    %p164 = scmp.eq.s32.totalorder %s76, 0
    %p165 = por %p163, %p164
    %p166 = scmp.ne.s32.totalorder %s154, %s155
    %p167 = scmp.eq.s32.totalorder %s77, 1
    %p168 = por %p166, %p167
    %p170 = scmp.ne.s32.totalorder %s155, %s169
    %p171 = scmp.eq.s32.totalorder %s77, 0
    %p172 = por %p170, %p171
    %s174 = sadd.s32 %s173, 1
    %p177 = scmp.eq.s32.totalorder %s71, 1
    %p178 = scmp.ne.s32.totalorder %s173, %s175
    %p179 = scmp.eq.s32.totalorder %s71, 0
    %p180 = por %p178, %p179
    %p181 = scmp.ne.s32.totalorder %s173, %s175
    %p182 = scmp.eq.s32.totalorder %s76, 1
    %p183 = por %p181, %p182
    %p184 = scmp.ne.s32.totalorder %s175, %s176
    %p185 = scmp.eq.s32.totalorder %s76, 0
    %p186 = por %p184, %p185
    %p187 = scmp.ne.s32.totalorder %s175, %s176
    %p188 = scmp.eq.s32.totalorder %s77, 1
    %p189 = por %p187, %p188
    %p191 = scmp.ne.s32.totalorder %s176, %s190
    %p192 = scmp.eq.s32.totalorder %s77, 0
    %p193 = por %p191, %p192
    %s195 = sadd.s32 %s194, 1
    %p198 = scmp.eq.s32.totalorder %s71, 1
    %p199 = scmp.ne.s32.totalorder %s194, %s196
    %p200 = scmp.eq.s32.totalorder %s71, 0
    %p201 = por %p199, %p200
    %p202 = scmp.ne.s32.totalorder %s194, %s196
    %p203 = scmp.eq.s32.totalorder %s76, 1
    %p204 = por %p202, %p203
    %p205 = scmp.ne.s32.totalorder %s196, %s197
    %p206 = scmp.eq.s32.totalorder %s76, 0
    %p207 = por %p205, %p206
    %p208 = scmp.ne.s32.totalorder %s196, %s197
    %p209 = scmp.eq.s32.totalorder %s77, 1
    %p210 = por %p208, %p209
    %p212 = scmp.ne.s32.totalorder %s197, %s211
    %p213 = scmp.eq.s32.totalorder %s77, 0
    %p214 = por %p212, %p213
    %s216 = sadd.s32 %s215, 1
    %p219 = scmp.eq.s32.totalorder %s71, 1
    %p220 = scmp.ne.s32.totalorder %s215, %s217
    %p221 = scmp.eq.s32.totalorder %s71, 0
    %p222 = por %p220, %p221
    %p223 = scmp.ne.s32.totalorder %s215, %s217
    %p224 = scmp.eq.s32.totalorder %s76, 1
    %p225 = por %p223, %p224
    %p226 = scmp.ne.s32.totalorder %s217, %s218
    %p227 = scmp.eq.s32.totalorder %s76, 0
    %p228 = por %p226, %p227
    %p229 = scmp.ne.s32.totalorder %s217, %s218
    %p230 = scmp.eq.s32.totalorder %s77, 1
    %p231 = por %p229, %p230
    %p233 = scmp.ne.s32.totalorder %s218, %s232
    %p234 = scmp.eq.s32.totalorder %s77, 0
    %p235 = por %p233, %p234
    %s237 = sadd.s32 %s236, 1
    %p240 = scmp.eq.s32.totalorder %s71, 1
    %p241 = scmp.ne.s32.totalorder %s236, %s238
    %p242 = scmp.eq.s32.totalorder %s71, 0
    %p243 = por %p241, %p242
    %p244 = scmp.ne.s32.totalorder %s236, %s238
    %p245 = scmp.eq.s32.totalorder %s76, 1
    %p246 = por %p244, %p245
    %p247 = scmp.ne.s32.totalorder %s238, %s239
    %p248 = scmp.eq.s32.totalorder %s76, 0
    %p249 = por %p247, %p248
    %p250 = scmp.ne.s32.totalorder %s238, %s239
    %p251 = scmp.eq.s32.totalorder %s77, 1
    %p252 = por %p250, %p251
    %p254 = scmp.ne.s32.totalorder %s239, %s253
    %p255 = scmp.eq.s32.totalorder %s77, 0
    %p256 = por %p254, %p255
    %s258 = sadd.s32 %s257, 1
    %p261 = scmp.eq.s32.totalorder %s71, 1
    %p262 = scmp.ne.s32.totalorder %s257, %s259
    %p263 = scmp.eq.s32.totalorder %s71, 0
    %p264 = por %p262, %p263
    %p265 = scmp.ne.s32.totalorder %s257, %s259
    %p266 = scmp.eq.s32.totalorder %s76, 1
    %p267 = por %p265, %p266
    %p268 = scmp.ne.s32.totalorder %s259, %s260
    %p269 = scmp.eq.s32.totalorder %s76, 0
    %p270 = por %p268, %p269
    %p271 = scmp.ne.s32.totalorder %s259, %s260
    %p272 = scmp.eq.s32.totalorder %s77, 1
    %p273 = por %p271, %p272
    %p275 = scmp.ne.s32.totalorder %s260, %s274
    %p276 = scmp.eq.s32.totalorder %s77, 0
    %p277 = por %p275, %p276
    %s279 = sadd.s32 %s278, 1
    %p282 = scmp.eq.s32.totalorder %s71, 1
    %p283 = scmp.ne.s32.totalorder %s278, %s280
    %p284 = scmp.eq.s32.totalorder %s71, 0
    %p285 = por %p283, %p284
    %p286 = scmp.ne.s32.totalorder %s278, %s280
    %p287 = scmp.eq.s32.totalorder %s76, 1
    %p288 = por %p286, %p287
    %p289 = scmp.ne.s32.totalorder %s280, %s281
    %p290 = scmp.eq.s32.totalorder %s76, 0
    %p291 = por %p289, %p290
    %p292 = scmp.ne.s32.totalorder %s280, %s281
    %p293 = scmp.eq.s32.totalorder %s77, 1
    %p294 = por %p292, %p293
    %p296 = scmp.ne.s32.totalorder %s281, %s295
    %p297 = scmp.eq.s32.totalorder %s77, 0
    %p298 = por %p296, %p297
    %s300 = sadd.s32 %s299, 1
    %p303 = scmp.eq.s32.totalorder %s71, 1
    %p304 = scmp.ne.s32.totalorder %s299, %s301
    %p305 = scmp.eq.s32.totalorder %s71, 0
    %p306 = por %p304, %p305
    %p307 = scmp.ne.s32.totalorder %s299, %s301
    %p308 = scmp.eq.s32.totalorder %s76, 1
    %p309 = por %p307, %p308
    %p310 = scmp.ne.s32.totalorder %s301, %s302
    %p311 = scmp.eq.s32.totalorder %s76, 0
    %p312 = por %p310, %p311
    %p313 = scmp.ne.s32.totalorder %s301, %s302
    %p314 = scmp.eq.s32.totalorder %s77, 1
    %p315 = por %p313, %p314
    %p317 = scmp.ne.s32.totalorder %s302, %s316
    %p318 = scmp.eq.s32.totalorder %s77, 0
    %p319 = por %p317, %p318
    %s321 = sadd.s32 %s320, 1
    %p324 = scmp.eq.s32.totalorder %s71, 1
    %p325 = scmp.ne.s32.totalorder %s320, %s322
    %p326 = scmp.eq.s32.totalorder %s71, 0
    %p327 = por %p325, %p326
    %p328 = scmp.ne.s32.totalorder %s320, %s322
    %p329 = scmp.eq.s32.totalorder %s76, 1
    %p330 = por %p328, %p329
    %p331 = scmp.ne.s32.totalorder %s322, %s323
    %p332 = scmp.eq.s32.totalorder %s76, 0
    %p333 = por %p331, %p332
    %p334 = scmp.ne.s32.totalorder %s322, %s323
    %p335 = scmp.eq.s32.totalorder %s77, 1
    %p336 = por %p334, %p335
    %p338 = scmp.ne.s32.totalorder %s323, %s337
    %p339 = scmp.eq.s32.totalorder %s77, 0
    %p340 = por %p338, %p339
    %s342 = sadd.s32 %s341, 1
    %p345 = scmp.eq.s32.totalorder %s71, 1
    %p346 = scmp.ne.s32.totalorder %s341, %s343
    %p347 = scmp.eq.s32.totalorder %s71, 0
    %p348 = por %p346, %p347
    %p349 = scmp.ne.s32.totalorder %s341, %s343
    %p350 = scmp.eq.s32.totalorder %s76, 1
    %p351 = por %p349, %p350
    %p352 = scmp.ne.s32.totalorder %s343, %s344
    %p353 = scmp.eq.s32.totalorder %s76, 0
    %p354 = por %p352, %p353
    %p355 = scmp.ne.s32.totalorder %s343, %s344
    %p356 = scmp.eq.s32.totalorder %s77, 1
    %p357 = por %p355, %p356
    %p359 = scmp.ne.s32.totalorder %s344, %s358
    %p360 = scmp.eq.s32.totalorder %s77, 0
    %p361 = por %p359, %p360
    %s363 = sadd.s32 %s362, 1
    %p366 = scmp.eq.s32.totalorder %s71, 1
    %p367 = scmp.ne.s32.totalorder %s362, %s364
    %p368 = scmp.eq.s32.totalorder %s71, 0
    %p369 = por %p367, %p368
    %p370 = scmp.ne.s32.totalorder %s362, %s364
    %p371 = scmp.eq.s32.totalorder %s76, 1
    %p372 = por %p370, %p371
    %p373 = scmp.ne.s32.totalorder %s364, %s365
    %p374 = scmp.eq.s32.totalorder %s76, 0
    %p375 = por %p373, %p374
    %p376 = scmp.ne.s32.totalorder %s364, %s365
    %p377 = scmp.eq.s32.totalorder %s77, 1
    %p378 = por %p376, %p377
    %p380 = scmp.ne.s32.totalorder %s365, %s379
    %p381 = scmp.eq.s32.totalorder %s77, 0
    %p382 = por %p380, %p381
    %s384 = sadd.s32 %s383, 1
    %p387 = scmp.eq.s32.totalorder %s71, 1
    %p388 = scmp.ne.s32.totalorder %s383, %s385
    %p389 = scmp.eq.s32.totalorder %s71, 0
    %p390 = por %p388, %p389
    %p391 = scmp.ne.s32.totalorder %s383, %s385
    %p392 = scmp.eq.s32.totalorder %s76, 1
    %p393 = por %p391, %p392
    %p394 = scmp.ne.s32.totalorder %s385, %s386
    %p395 = scmp.eq.s32.totalorder %s76, 0
    %p396 = por %p394, %p395
    %p397 = scmp.ne.s32.totalorder %s385, %s386
    %p398 = scmp.eq.s32.totalorder %s77, 1
    %p399 = por %p397, %p398
    %p401 = scmp.ne.s32.totalorder %s386, %s400
    %p402 = scmp.eq.s32.totalorder %s77, 0
    %p403 = por %p401, %p402
    %s405 = sadd.s32 %s404, 1
    %p408 = scmp.eq.s32.totalorder %s71, 1
    %p409 = scmp.ne.s32.totalorder %s404, %s406
    %p410 = scmp.eq.s32.totalorder %s71, 0
    %p411 = por %p409, %p410
    %p412 = scmp.ne.s32.totalorder %s404, %s406
    %p413 = scmp.eq.s32.totalorder %s76, 1
    %p414 = por %p412, %p413
    %p415 = scmp.ne.s32.totalorder %s406, %s407
    %p416 = scmp.eq.s32.totalorder %s76, 0
    %p417 = por %p415, %p416
    %p418 = scmp.ne.s32.totalorder %s406, %s407
    %p419 = scmp.eq.s32.totalorder %s77, 1
    %p420 = por %p418, %p419
    %p422 = scmp.ne.s32.totalorder %s407, %s421
    %p423 = scmp.eq.s32.totalorder %s77, 0
    %p424 = por %p422, %p423
    %s426 = sadd.s32 %s425, 1
    %p429 = scmp.eq.s32.totalorder %s71, 1
    %p430 = scmp.ne.s32.totalorder %s425, %s427
    %p431 = scmp.eq.s32.totalorder %s71, 0
    %p432 = por %p430, %p431
    %p433 = scmp.ne.s32.totalorder %s425, %s427
    %p434 = scmp.eq.s32.totalorder %s76, 1
    %p435 = por %p433, %p434
    %p436 = scmp.ne.s32.totalorder %s427, %s428
    %p437 = scmp.eq.s32.totalorder %s76, 0
    %p438 = por %p436, %p437
    %p439 = scmp.ne.s32.totalorder %s427, %s428
    %p440 = scmp.eq.s32.totalorder %s77, 1
    %p441 = por %p439, %p440
    %p443 = scmp.ne.s32.totalorder %s428, %s442
    %p444 = scmp.eq.s32.totalorder %s77, 0
    %p445 = por %p443, %p444
    %s447 = sadd.s32 %s446, 1
    %p450 = scmp.eq.s32.totalorder %s71, 1
    %p451 = scmp.ne.s32.totalorder %s446, %s448
    %p452 = scmp.eq.s32.totalorder %s71, 0
    %p453 = por %p451, %p452
    %p454 = scmp.ne.s32.totalorder %s446, %s448
    %p455 = scmp.eq.s32.totalorder %s76, 1
    %p456 = por %p454, %p455
    %p457 = scmp.ne.s32.totalorder %s448, %s449
    %p458 = scmp.eq.s32.totalorder %s76, 0
    %p459 = por %p457, %p458
    %p460 = scmp.ne.s32.totalorder %s448, %s449
    %p461 = scmp.eq.s32.totalorder %s77, 1
    %p462 = por %p460, %p461
    %p464 = scmp.ne.s32.totalorder %s449, %s463
    %p465 = scmp.eq.s32.totalorder %s77, 0
    %p466 = por %p464, %p465
    %s468 = sadd.s32 %s467, 1
    %p471 = scmp.eq.s32.totalorder %s71, 1
    %p472 = scmp.ne.s32.totalorder %s467, %s469
    %p473 = scmp.eq.s32.totalorder %s71, 0
    %p474 = por %p472, %p473
    %p475 = scmp.ne.s32.totalorder %s467, %s469
    %p476 = scmp.eq.s32.totalorder %s76, 1
    %p477 = por %p475, %p476
    %p478 = scmp.ne.s32.totalorder %s469, %s470
    %p479 = scmp.eq.s32.totalorder %s76, 0
    %p480 = por %p478, %p479
    %p481 = scmp.ne.s32.totalorder %s469, %s470
    %p482 = scmp.eq.s32.totalorder %s77, 1
    %p483 = por %p481, %p482
    %p485 = scmp.ne.s32.totalorder %s470, %s484
    %p486 = scmp.eq.s32.totalorder %s77, 0
    %p487 = por %p485, %p486
    %s489 = sadd.s32 %s488, 1
    %p492 = scmp.eq.s32.totalorder %s71, 1
    %p493 = scmp.ne.s32.totalorder %s488, %s490
    %p494 = scmp.eq.s32.totalorder %s71, 0
    %p495 = por %p493, %p494
    %p496 = scmp.ne.s32.totalorder %s488, %s490
    %p497 = scmp.eq.s32.totalorder %s76, 1
    %p498 = por %p496, %p497
    %p499 = scmp.ne.s32.totalorder %s490, %s491
    %p500 = scmp.eq.s32.totalorder %s76, 0
    %p501 = por %p499, %p500
    %p502 = scmp.ne.s32.totalorder %s490, %s491
    %p503 = scmp.eq.s32.totalorder %s77, 1
    %p504 = por %p502, %p503
    %p506 = scmp.ne.s32.totalorder %s491, %s505
    %p507 = scmp.eq.s32.totalorder %s77, 0
    %p508 = por %p506, %p507
    %s510 = sadd.s32 %s509, 1
    %p513 = scmp.eq.s32.totalorder %s71, 1
    %p514 = scmp.ne.s32.totalorder %s509, %s511
    %p515 = scmp.eq.s32.totalorder %s71, 0
    %p516 = por %p514, %p515
    %p517 = scmp.ne.s32.totalorder %s509, %s511
    %p518 = scmp.eq.s32.totalorder %s76, 1
    %p519 = por %p517, %p518
    %p520 = scmp.ne.s32.totalorder %s511, %s512
    %p521 = scmp.eq.s32.totalorder %s76, 0
    %p522 = por %p520, %p521
    %p523 = scmp.ne.s32.totalorder %s511, %s512
    %p524 = scmp.eq.s32.totalorder %s77, 1
    %p525 = por %p523, %p524
    %p527 = scmp.ne.s32.totalorder %s512, %s526
    %p528 = scmp.eq.s32.totalorder %s77, 0
    %p529 = por %p527, %p528
    %s531 = sadd.s32 %s530, 1
    %p534 = scmp.eq.s32.totalorder %s71, 1
    %p535 = scmp.ne.s32.totalorder %s530, %s532
    %p536 = scmp.eq.s32.totalorder %s71, 0
    %p537 = por %p535, %p536
    %p538 = scmp.ne.s32.totalorder %s530, %s532
    %p539 = scmp.eq.s32.totalorder %s76, 1
    %p540 = por %p538, %p539
    %p541 = scmp.ne.s32.totalorder %s532, %s533
    %p542 = scmp.eq.s32.totalorder %s76, 0
    %p543 = por %p541, %p542
    %p544 = scmp.ne.s32.totalorder %s532, %s533
    %p545 = scmp.eq.s32.totalorder %s77, 1
    %p546 = por %p544, %p545
    %p548 = scmp.ne.s32.totalorder %s533, %s547
    %p549 = scmp.eq.s32.totalorder %s77, 0
    %p550 = por %p548, %p549
    %s552 = sadd.s32 %s551, 1
    %p555 = scmp.eq.s32.totalorder %s71, 1
    %p556 = scmp.ne.s32.totalorder %s551, %s553
    %p557 = scmp.eq.s32.totalorder %s71, 0
    %p558 = por %p556, %p557
    %p559 = scmp.ne.s32.totalorder %s551, %s553
    %p560 = scmp.eq.s32.totalorder %s76, 1
    %p561 = por %p559, %p560
    %p562 = scmp.ne.s32.totalorder %s553, %s554
    %p563 = scmp.eq.s32.totalorder %s76, 0
    %p564 = por %p562, %p563
    %p565 = scmp.ne.s32.totalorder %s553, %s554
    %p566 = scmp.eq.s32.totalorder %s77, 1
    %p567 = por %p565, %p566
    %p569 = scmp.ne.s32.totalorder %s554, %s568
    %p570 = scmp.eq.s32.totalorder %s77, 0
    %p571 = por %p569, %p570
    %s573 = sadd.s32 %s572, 1
    %p576 = scmp.eq.s32.totalorder %s71, 1
    %p577 = scmp.ne.s32.totalorder %s572, %s574
    %p578 = scmp.eq.s32.totalorder %s71, 0
    %p579 = por %p577, %p578
    %p580 = scmp.ne.s32.totalorder %s572, %s574
    %p581 = scmp.eq.s32.totalorder %s76, 1
    %p582 = por %p580, %p581
    %p583 = scmp.ne.s32.totalorder %s574, %s575
    %p584 = scmp.eq.s32.totalorder %s76, 0
    %p585 = por %p583, %p584
    %p586 = scmp.ne.s32.totalorder %s574, %s575
    %p587 = scmp.eq.s32.totalorder %s77, 1
    %p588 = por %p586, %p587
    %p590 = scmp.ne.s32.totalorder %s575, %s589
    %p591 = scmp.eq.s32.totalorder %s77, 0
    %p592 = por %p590, %p591
    %s594 = sadd.s32 %s593, 1
    %p597 = scmp.eq.s32.totalorder %s71, 1
    %p598 = scmp.ne.s32.totalorder %s593, %s595
    %p599 = scmp.eq.s32.totalorder %s71, 0
    %p600 = por %p598, %p599
    %p601 = scmp.ne.s32.totalorder %s593, %s595
    %p602 = scmp.eq.s32.totalorder %s76, 1
    %p603 = por %p601, %p602
    %p604 = scmp.ne.s32.totalorder %s595, %s596
    %p605 = scmp.eq.s32.totalorder %s76, 0
    %p606 = por %p604, %p605
    %p607 = scmp.ne.s32.totalorder %s595, %s596
    %p608 = scmp.eq.s32.totalorder %s77, 1
    %p609 = por %p607, %p608
    %p611 = scmp.ne.s32.totalorder %s596, %s610
    %p612 = scmp.eq.s32.totalorder %s77, 0
    %p613 = por %p611, %p612
    %s615 = sadd.s32 %s614, 1
    %p618 = scmp.eq.s32.totalorder %s71, 1
    %p619 = scmp.ne.s32.totalorder %s614, %s616
    %p620 = scmp.eq.s32.totalorder %s71, 0
    %p621 = por %p619, %p620
    %p622 = scmp.ne.s32.totalorder %s614, %s616
    %p623 = scmp.eq.s32.totalorder %s76, 1
    %p624 = por %p622, %p623
    %p625 = scmp.ne.s32.totalorder %s616, %s617
    %p626 = scmp.eq.s32.totalorder %s76, 0
    %p627 = por %p625, %p626
    %p628 = scmp.ne.s32.totalorder %s616, %s617
    %p629 = scmp.eq.s32.totalorder %s77, 1
    %p630 = por %p628, %p629
    %p632 = scmp.ne.s32.totalorder %s617, %s631
    %p633 = scmp.eq.s32.totalorder %s77, 0
    %p634 = por %p632, %p633
    %s636 = sadd.s32 %s635, 1
    %p639 = scmp.eq.s32.totalorder %s71, 1
    %p640 = scmp.ne.s32.totalorder %s635, %s637
    %p641 = scmp.eq.s32.totalorder %s71, 0
    %p642 = por %p640, %p641
    %p643 = scmp.ne.s32.totalorder %s635, %s637
    %p644 = scmp.eq.s32.totalorder %s76, 1
    %p645 = por %p643, %p644
    %p646 = scmp.ne.s32.totalorder %s637, %s638
    %p647 = scmp.eq.s32.totalorder %s76, 0
    %p648 = por %p646, %p647
    %p649 = scmp.ne.s32.totalorder %s637, %s638
    %p650 = scmp.eq.s32.totalorder %s77, 1
    %p651 = por %p649, %p650
    %p653 = scmp.ne.s32.totalorder %s638, %s652
    %p654 = scmp.eq.s32.totalorder %s77, 0
    %p655 = por %p653, %p654
    %s657 = sadd.s32 %s656, 1
    %p660 = scmp.eq.s32.totalorder %s71, 1
    %p661 = scmp.ne.s32.totalorder %s656, %s658
    %p662 = scmp.eq.s32.totalorder %s71, 0
    %p663 = por %p661, %p662
    %p664 = scmp.ne.s32.totalorder %s656, %s658
    %p665 = scmp.eq.s32.totalorder %s76, 1
    %p666 = por %p664, %p665
    %p667 = scmp.ne.s32.totalorder %s658, %s659
    %p668 = scmp.eq.s32.totalorder %s76, 0
    %p669 = por %p667, %p668
    %p670 = scmp.ne.s32.totalorder %s658, %s659
    %p671 = scmp.eq.s32.totalorder %s77, 1
    %p672 = por %p670, %p671
    %p674 = scmp.ne.s32.totalorder %s659, %s673
    %p675 = scmp.eq.s32.totalorder %s77, 0
    %p676 = por %p674, %p675
    %s678 = sadd.s32 %s677, 1
    %p681 = scmp.eq.s32.totalorder %s71, 1
    %p682 = scmp.ne.s32.totalorder %s677, %s679
    %p683 = scmp.eq.s32.totalorder %s71, 0
    %p684 = por %p682, %p683
    %p685 = scmp.ne.s32.totalorder %s677, %s679
    %p686 = scmp.eq.s32.totalorder %s76, 1
    %p687 = por %p685, %p686
    %p688 = scmp.ne.s32.totalorder %s679, %s680
    %p689 = scmp.eq.s32.totalorder %s76, 0
    %p690 = por %p688, %p689
    %p691 = scmp.ne.s32.totalorder %s679, %s680
    %p692 = scmp.eq.s32.totalorder %s77, 1
    %p693 = por %p691, %p692
    %p695 = scmp.ne.s32.totalorder %s680, %s694
    %p696 = scmp.eq.s32.totalorder %s77, 0
    %p697 = por %p695, %p696
    %s699 = sadd.s32 %s698, 1
    %p702 = scmp.eq.s32.totalorder %s71, 1
    %p703 = scmp.ne.s32.totalorder %s698, %s700
    %p704 = scmp.eq.s32.totalorder %s71, 0
    %p705 = por %p703, %p704
    %p706 = scmp.ne.s32.totalorder %s698, %s700
    %p707 = scmp.eq.s32.totalorder %s76, 1
    %p708 = por %p706, %p707
    %p709 = scmp.ne.s32.totalorder %s700, %s701
    %p710 = scmp.eq.s32.totalorder %s76, 0
    %p711 = por %p709, %p710
    %p712 = scmp.ne.s32.totalorder %s700, %s701
    %p713 = scmp.eq.s32.totalorder %s77, 1
    %p714 = por %p712, %p713
    %p716 = scmp.ne.s32.totalorder %s701, %s715
    %p717 = scmp.eq.s32.totalorder %s77, 0
    %p718 = por %p716, %p717
    %s720 = sadd.s32 %s719, 1
    %p723 = scmp.eq.s32.totalorder %s71, 1
    %p724 = scmp.ne.s32.totalorder %s719, %s721
    %p725 = scmp.eq.s32.totalorder %s71, 0
    %p726 = por %p724, %p725
    %p727 = scmp.ne.s32.totalorder %s719, %s721
    %p728 = scmp.eq.s32.totalorder %s76, 1
    %p729 = por %p727, %p728
    %p730 = scmp.ne.s32.totalorder %s721, %s722
    %p731 = scmp.eq.s32.totalorder %s76, 0
    %p732 = por %p730, %p731
    %p733 = scmp.ne.s32.totalorder %s721, %s722
    %p734 = scmp.eq.s32.totalorder %s77, 1
    %p735 = por %p733, %p734
    %p737 = scmp.ne.s32.totalorder %s722, %s736
    %p738 = scmp.eq.s32.totalorder %s77, 0
    %p739 = por %p737, %p738
    %s741 = sadd.s32 %s740, 1
    %p744 = scmp.eq.s32.totalorder %s71, 1
    %p745 = scmp.ne.s32.totalorder %s740, %s742
    %p746 = scmp.eq.s32.totalorder %s71, 0
    %p747 = por %p745, %p746
    %p748 = scmp.ne.s32.totalorder %s740, %s742
    %p749 = scmp.eq.s32.totalorder %s76, 1
    %p750 = por %p748, %p749
    %p751 = scmp.ne.s32.totalorder %s742, %s743
    %p752 = scmp.eq.s32.totalorder %s76, 0
    %p753 = por %p751, %p752
    %p754 = scmp.ne.s32.totalorder %s742, %s743
    %p755 = scmp.eq.s32.totalorder %s77, 1
    %p756 = por %p754, %p755
    %p758 = scmp.ne.s32.totalorder %s743, %s757
    %p759 = scmp.eq.s32.totalorder %s77, 0
    %p760 = por %p758, %p759
    %s761 = ssub.s32 %s71, %s78
    %p762 = scmp.eq.s32.totalorder %s761, 0
    %s764 = sadd.s32 %s763, 1
    %s765 = scalar_select %p762, %s763, %s764
    %p768 = pneg %p762
    %p769 = scmp.eq.s32.totalorder %s71, 1
    %p770 = por %p768, %p769
    %p771 = scmp.ne.s32.totalorder %s763, %s766
    %p772 = scmp.eq.s32.totalorder %s71, 0
    %p773 = por %p771, %p772
    %p774 = scmp.ne.s32.totalorder %s763, %s766
    %p775 = scmp.eq.s32.totalorder %s76, 1
    %p776 = por %p774, %p775
    %p777 = scmp.ne.s32.totalorder %s766, %s767
    %p778 = scmp.eq.s32.totalorder %s76, 0
    %p779 = por %p777, %p778
    %p780 = scmp.ne.s32.totalorder %s766, %s767
    %p781 = scmp.eq.s32.totalorder %s77, 1
    %p782 = por %p780, %p781
    %p784 = scmp.ne.s32.totalorder %s767, %s783
    %p785 = scmp.eq.s32.totalorder %s77, 0
    %p786 = por %p784, %p785
    %p787 = scmp.le.s32.totalorder 1, %s71
    %p788 = scmp.lt.s32.totalorder %s71, 3
    %p789 = pnand %p787, %p788
    %p790 = pneg %p789
    // Predicated region
    $region9: #{sd_attention_block.2} parent=5 // pred_check
      _
    $region10: #{sd_attention_block.2} parent=5 // pred_check_branch
      %792 = sbr.rel (%p789) target = $region12
    $region11: #{sd_attention_block.2} parent=5 // pred_region
      %s793 = ssub.s32 %s71, 1
      // Predicated region
      $region13: #{sd_attention_block.2} parent=11 // pred_check
        %p794 = pneg %p144
      $region14: #{sd_attention_block.2} parent=11 // pred_check_branch
        %796 = sbr.rel (%p794) target = $region16
      $region15: #{sd_attention_block.2} parent=11 // pred_region
        _
      $region16: #{sd_attention_block.2} parent=11 // pred_fallthru
        _
      // Predicated region
      $region17: #{sd_attention_block.2} parent=11 // pred_check
        %p797 = pneg %p165
      $region18: #{sd_attention_block.2} parent=11 // pred_check_branch
        %799 = sbr.rel (%p797) target = $region20
      $region19: #{sd_attention_block.2} parent=11 // pred_region
        _
      $region20: #{sd_attention_block.2} parent=11 // pred_fallthru
        _
      // Predicated region
      $region21: #{sd_attention_block.2} parent=11 // pred_check
        %p800 = pneg %p186
      $region22: #{sd_attention_block.2} parent=11 // pred_check_branch
        %802 = sbr.rel (%p800) target = $region24
      $region23: #{sd_attention_block.2} parent=11 // pred_region
        _
      $region24: #{sd_attention_block.2} parent=11 // pred_fallthru
        _
      // Predicated region
      $region25: #{sd_attention_block.2} parent=11 // pred_check
        %p803 = pneg %p207
      $region26: #{sd_attention_block.2} parent=11 // pred_check_branch
        %805 = sbr.rel (%p803) target = $region28
      $region27: #{sd_attention_block.2} parent=11 // pred_region
        _
      $region28: #{sd_attention_block.2} parent=11 // pred_fallthru
        _
      // Predicated region
      $region29: #{sd_attention_block.2} parent=11 // pred_check
        %p806 = pneg %p228
      $region30: #{sd_attention_block.2} parent=11 // pred_check_branch
        %808 = sbr.rel (%p806) target = $region32
      $region31: #{sd_attention_block.2} parent=11 // pred_region
        _
      $region32: #{sd_attention_block.2} parent=11 // pred_fallthru
        _
      // Predicated region
      $region33: #{sd_attention_block.2} parent=11 // pred_check
        %p809 = pneg %p249
      $region34: #{sd_attention_block.2} parent=11 // pred_check_branch
        %811 = sbr.rel (%p809) target = $region36
      $region35: #{sd_attention_block.2} parent=11 // pred_region
        _
      $region36: #{sd_attention_block.2} parent=11 // pred_fallthru
        _
      // Predicated region
      $region37: #{sd_attention_block.2} parent=11 // pred_check
        %p812 = pneg %p270
      $region38: #{sd_attention_block.2} parent=11 // pred_check_branch
        %814 = sbr.rel (%p812) target = $region40
      $region39: #{sd_attention_block.2} parent=11 // pred_region
        _
      $region40: #{sd_attention_block.2} parent=11 // pred_fallthru
        _
      // Predicated region
      $region41: #{sd_attention_block.2} parent=11 // pred_check
        %p815 = pneg %p291
      $region42: #{sd_attention_block.2} parent=11 // pred_check_branch
        %817 = sbr.rel (%p815) target = $region44
      $region43: #{sd_attention_block.2} parent=11 // pred_region
        _
      $region44: #{sd_attention_block.2} parent=11 // pred_fallthru
        _
      // Predicated region
      $region45: #{sd_attention_block.2} parent=11 // pred_check
        %p818 = pneg %p312
      $region46: #{sd_attention_block.2} parent=11 // pred_check_branch
        %820 = sbr.rel (%p818) target = $region48
      $region47: #{sd_attention_block.2} parent=11 // pred_region
        _
      $region48: #{sd_attention_block.2} parent=11 // pred_fallthru
        _
      // Predicated region
      $region49: #{sd_attention_block.2} parent=11 // pred_check
        %p821 = pneg %p333
      $region50: #{sd_attention_block.2} parent=11 // pred_check_branch
        %823 = sbr.rel (%p821) target = $region52
      $region51: #{sd_attention_block.2} parent=11 // pred_region
        _
      $region52: #{sd_attention_block.2} parent=11 // pred_fallthru
        _
      // Predicated region
      $region53: #{sd_attention_block.2} parent=11 // pred_check
        %p824 = pneg %p354
      $region54: #{sd_attention_block.2} parent=11 // pred_check_branch
        %826 = sbr.rel (%p824) target = $region56
      $region55: #{sd_attention_block.2} parent=11 // pred_region
        _
      $region56: #{sd_attention_block.2} parent=11 // pred_fallthru
        _
      // Predicated region
      $region57: #{sd_attention_block.2} parent=11 // pred_check
        %p827 = pneg %p375
      $region58: #{sd_attention_block.2} parent=11 // pred_check_branch
        %829 = sbr.rel (%p827) target = $region60
      $region59: #{sd_attention_block.2} parent=11 // pred_region
        _
      $region60: #{sd_attention_block.2} parent=11 // pred_fallthru
        _
      // Predicated region
      $region61: #{sd_attention_block.2} parent=11 // pred_check
        %p830 = pneg %p396
      $region62: #{sd_attention_block.2} parent=11 // pred_check_branch
        %832 = sbr.rel (%p830) target = $region64
      $region63: #{sd_attention_block.2} parent=11 // pred_region
        _
      $region64: #{sd_attention_block.2} parent=11 // pred_fallthru
        _
      // Predicated region
      $region65: #{sd_attention_block.2} parent=11 // pred_check
        %p833 = pneg %p417
      $region66: #{sd_attention_block.2} parent=11 // pred_check_branch
        %835 = sbr.rel (%p833) target = $region68
      $region67: #{sd_attention_block.2} parent=11 // pred_region
        _
      $region68: #{sd_attention_block.2} parent=11 // pred_fallthru
        _
      // Predicated region
      $region69: #{sd_attention_block.2} parent=11 // pred_check
        %p836 = pneg %p438
      $region70: #{sd_attention_block.2} parent=11 // pred_check_branch
        %838 = sbr.rel (%p836) target = $region72
      $region71: #{sd_attention_block.2} parent=11 // pred_region
        _
      $region72: #{sd_attention_block.2} parent=11 // pred_fallthru
        _
      // Predicated region
      $region73: #{sd_attention_block.2} parent=11 // pred_check
        %p839 = pneg %p459
      $region74: #{sd_attention_block.2} parent=11 // pred_check_branch
        %841 = sbr.rel (%p839) target = $region76
      $region75: #{sd_attention_block.2} parent=11 // pred_region
        _
      $region76: #{sd_attention_block.2} parent=11 // pred_fallthru
        _
      // Predicated region
      $region77: #{sd_attention_block.2} parent=11 // pred_check
        %p842 = pneg %p480
      $region78: #{sd_attention_block.2} parent=11 // pred_check_branch
        %844 = sbr.rel (%p842) target = $region80
      $region79: #{sd_attention_block.2} parent=11 // pred_region
        _
      $region80: #{sd_attention_block.2} parent=11 // pred_fallthru
        _
      // Predicated region
      $region81: #{sd_attention_block.2} parent=11 // pred_check
        %p845 = pneg %p501
      $region82: #{sd_attention_block.2} parent=11 // pred_check_branch
        %847 = sbr.rel (%p845) target = $region84
      $region83: #{sd_attention_block.2} parent=11 // pred_region
        _
      $region84: #{sd_attention_block.2} parent=11 // pred_fallthru
        _
      // Predicated region
      $region85: #{sd_attention_block.2} parent=11 // pred_check
        %p848 = pneg %p522
      $region86: #{sd_attention_block.2} parent=11 // pred_check_branch
        %850 = sbr.rel (%p848) target = $region88
      $region87: #{sd_attention_block.2} parent=11 // pred_region
        _
      $region88: #{sd_attention_block.2} parent=11 // pred_fallthru
        _
      // Predicated region
      $region89: #{sd_attention_block.2} parent=11 // pred_check
        %p851 = pneg %p543
      $region90: #{sd_attention_block.2} parent=11 // pred_check_branch
        %853 = sbr.rel (%p851) target = $region92
      $region91: #{sd_attention_block.2} parent=11 // pred_region
        _
      $region92: #{sd_attention_block.2} parent=11 // pred_fallthru
        _
      // Predicated region
      $region93: #{sd_attention_block.2} parent=11 // pred_check
        %p854 = pneg %p564
      $region94: #{sd_attention_block.2} parent=11 // pred_check_branch
        %856 = sbr.rel (%p854) target = $region96
      $region95: #{sd_attention_block.2} parent=11 // pred_region
        _
      $region96: #{sd_attention_block.2} parent=11 // pred_fallthru
        _
      // Predicated region
      $region97: #{sd_attention_block.2} parent=11 // pred_check
        %p857 = pneg %p585
      $region98: #{sd_attention_block.2} parent=11 // pred_check_branch
        %859 = sbr.rel (%p857) target = $region100
      $region99: #{sd_attention_block.2} parent=11 // pred_region
        _
      $region100: #{sd_attention_block.2} parent=11 // pred_fallthru
        _
      // Predicated region
      $region101: #{sd_attention_block.2} parent=11 // pred_check
        %p860 = pneg %p606
      $region102: #{sd_attention_block.2} parent=11 // pred_check_branch
        %862 = sbr.rel (%p860) target = $region104
      $region103: #{sd_attention_block.2} parent=11 // pred_region
        _
      $region104: #{sd_attention_block.2} parent=11 // pred_fallthru
        _
      // Predicated region
      $region105: #{sd_attention_block.2} parent=11 // pred_check
        %p863 = pneg %p627
      $region106: #{sd_attention_block.2} parent=11 // pred_check_branch
        %865 = sbr.rel (%p863) target = $region108
      $region107: #{sd_attention_block.2} parent=11 // pred_region
        _
      $region108: #{sd_attention_block.2} parent=11 // pred_fallthru
        _
      // Predicated region
      $region109: #{sd_attention_block.2} parent=11 // pred_check
        %p866 = pneg %p648
      $region110: #{sd_attention_block.2} parent=11 // pred_check_branch
        %868 = sbr.rel (%p866) target = $region112
      $region111: #{sd_attention_block.2} parent=11 // pred_region
        _
      $region112: #{sd_attention_block.2} parent=11 // pred_fallthru
        _
      // Predicated region
      $region113: #{sd_attention_block.2} parent=11 // pred_check
        %p869 = pneg %p669
      $region114: #{sd_attention_block.2} parent=11 // pred_check_branch
        %871 = sbr.rel (%p869) target = $region116
      $region115: #{sd_attention_block.2} parent=11 // pred_region
        _
      $region116: #{sd_attention_block.2} parent=11 // pred_fallthru
        _
      // Predicated region
      $region117: #{sd_attention_block.2} parent=11 // pred_check
        %p872 = pneg %p690
      $region118: #{sd_attention_block.2} parent=11 // pred_check_branch
        %874 = sbr.rel (%p872) target = $region120
      $region119: #{sd_attention_block.2} parent=11 // pred_region
        _
      $region120: #{sd_attention_block.2} parent=11 // pred_fallthru
        _
      // Predicated region
      $region121: #{sd_attention_block.2} parent=11 // pred_check
        %p875 = pneg %p711
      $region122: #{sd_attention_block.2} parent=11 // pred_check_branch
        %877 = sbr.rel (%p875) target = $region124
      $region123: #{sd_attention_block.2} parent=11 // pred_region
        _
      $region124: #{sd_attention_block.2} parent=11 // pred_fallthru
        _
      // Predicated region
      $region125: #{sd_attention_block.2} parent=11 // pred_check
        %p878 = pneg %p732
      $region126: #{sd_attention_block.2} parent=11 // pred_check_branch
        %880 = sbr.rel (%p878) target = $region128
      $region127: #{sd_attention_block.2} parent=11 // pred_region
        _
      $region128: #{sd_attention_block.2} parent=11 // pred_fallthru
        _
      // Predicated region
      $region129: #{sd_attention_block.2} parent=11 // pred_check
        %p881 = pneg %p753
      $region130: #{sd_attention_block.2} parent=11 // pred_check_branch
        %883 = sbr.rel (%p881) target = $region132
      $region131: #{sd_attention_block.2} parent=11 // pred_region
        _
      $region132: #{sd_attention_block.2} parent=11 // pred_fallthru
        _
    $region12: #{sd_attention_block.2} parent=5 // pred_fallthru
      _
    %p884 = scmp.lt.s32.totalorder %s71, 2
    // Predicated region
    $region133: #{sd_attention_block.2} parent=5 // pred_check
      %p885 = pneg %p884
    $region134: #{sd_attention_block.2} parent=5 // pred_check_branch
      %887 = sbr.rel (%p885) target = $region136
    $region135: #{sd_attention_block.2} parent=5 // pred_region
      // Predicated region
      $region137: #{sd_attention_block.2} parent=135 // pred_check
        %p888 = pneg %p91
      $region138: #{sd_attention_block.2} parent=135 // pred_check_branch
        %890 = sbr.rel (%p888) target = $region140
      $region139: #{sd_attention_block.2} parent=135 // pred_region
        %p891 = scmp.lt.s32.totalorder %s71, 1
        %s892 = scalar_select %p891, %s71, 1
        %s893 = smul.addr %s892, 24
        %s894 = smul.addr %s893, 8
        %s895 = scalar_lea.vmem %s1, %s894
      $region140: #{sd_attention_block.2} parent=135 // pred_fallthru
        _
      // Predicated region
      $region141: #{sd_attention_block.2} parent=135 // pred_check
        %p896 = pneg %p117
      $region142: #{sd_attention_block.2} parent=135 // pred_check_branch
        %898 = sbr.rel (%p896) target = $region144
      $region143: #{sd_attention_block.2} parent=135 // pred_region
        %p899 = scmp.lt.s32.totalorder %s71, 1
        %s900 = scalar_select %p899, %s71, 1
        %s901 = smul.addr %s900, 8
        %s902 = smul.addr %s901, 8
        %s903 = scalar_lea.vmem %s3, %s902
      $region144: #{sd_attention_block.2} parent=135 // pred_fallthru
        _
    $region136: #{sd_attention_block.2} parent=5 // pred_fallthru
      _
    %p904 = scmp.le.s32.totalorder 1, %s71
    %p905 = scmp.lt.s32.totalorder %s71, 3
    %p906 = pnand %p904, %p905
    %p907 = pneg %p906
    // Predicated region
    $region145: #{sd_attention_block.2} parent=5 // pred_check
      _
    $region146: #{sd_attention_block.2} parent=5 // pred_check_branch
      %909 = sbr.rel (%p906) target = $region148
    $region147: #{sd_attention_block.2} parent=5 // pred_region
      %s910 = ssub.s32 %s71, 1
      %p911 = scmp.lt.s32.totalorder %s76, 1
      %s912 = scalar_select %p911, %s76, 1
      %s913 = smul.addr %s912, 24
      %s914 = smul.addr %s913, 8
      %s915 = scalar_lea.vmem %s1, %s914
      %p916 = pneg %p97
      %p917 = pneg %p94
      %p918 = scmp.lt.s32.totalorder %s76, 1
      %s919 = scalar_select %p918, %s76, 1
      %s920 = smul.addr %s919, 8
      %s921 = smul.addr %s920, 8
      %s922 = scalar_lea.vmem %s3, %s921
      %p923 = pneg %p123
      %p924 = pneg %p120
      %p925 = pneg %p144
      %p926 = pneg %p141
      %p927 = pneg %p165
      %p928 = pneg %p162
      %p929 = pneg %p186
      %p930 = pneg %p183
      %p931 = pneg %p207
      %p932 = pneg %p204
      %p933 = pneg %p228
      %p934 = pneg %p225
      %p935 = pneg %p249
      %p936 = pneg %p246
      %p937 = pneg %p270
      %p938 = pneg %p267
      %p939 = pneg %p291
      %p940 = pneg %p288
      %p941 = pneg %p312
      %p942 = pneg %p309
      %p943 = pneg %p333
      %p944 = pneg %p330
      %p945 = pneg %p354
      %p946 = pneg %p351
      %p947 = pneg %p375
      %p948 = pneg %p372
      %p949 = pneg %p396
      %p950 = pneg %p393
      %p951 = pneg %p417
      %p952 = pneg %p414
      %p953 = pneg %p438
      %p954 = pneg %p435
      %p955 = pneg %p459
      %p956 = pneg %p456
      %p957 = pneg %p480
      %p958 = pneg %p477
      %p959 = pneg %p501
      %p960 = pneg %p498
      %p961 = pneg %p522
      %p962 = pneg %p519
      %p963 = pneg %p543
      %p964 = pneg %p540
      %p965 = pneg %p564
      %p966 = pneg %p561
      %p967 = pneg %p585
      %p968 = pneg %p582
      %p969 = pneg %p606
      %p970 = pneg %p603
      %p971 = pneg %p627
      %p972 = pneg %p624
      %p973 = pneg %p648
      %p974 = pneg %p645
      %p975 = pneg %p669
      %p976 = pneg %p666
      %p977 = pneg %p690
      %p978 = pneg %p687
      %p979 = pneg %p711
      %p980 = pneg %p708
      %p981 = pneg %p732
      %p982 = pneg %p729
      %p983 = pneg %p753
      %p984 = pneg %p750
      %p985 = pneg %p779
      %p986 = pneg %p776
      %p987 = scmp.lt.s32.totalorder %s76, 1
      %s988 = scalar_select %p987, %s76, 1
      %s989 = smul.addr %s988, 8
      %s990 = smul.addr %s989, 8
      %s991 = scalar_lea.vmem %s65, %s990
      %p992 = scmp.lt.s32.totalorder %s76, 1
      %s993 = scalar_select %p992, %s76, 1
      %s994 = smul.addr %s993, 24
      %s995 = smul.addr %s994, 8
      %s996 = scalar_lea.vmem %s1, %s995
      %p997 = scmp.lt.s32.totalorder %s76, 1
      %s998 = scalar_select %p997, %s76, 1
      %s999 = smul.addr %s998, 8
      %s1000 = smul.addr %s999, 8
      %s1001 = scalar_lea.vmem %s3, %s1000
      %p1002 = scmp.lt.s32.totalorder %s76, 1
      %s1003 = scalar_select %p1002, %s76, 1
      %s1004 = smul.addr %s1003, 8
      %s1005 = smul.addr %s1004, 8
      %s1006 = scalar_lea.vmem %s65, %s1005
      %v1007 = vld [vmem:[%s996] sm:$0xff]
      %v1008 = vld [vmem:[%s996 + $0x8] sm:$0xff]
      %v1009 = vld [vmem:[%s996 + $0x10] sm:$0xff]
      %v1010 = vld [vmem:[%s996 + $0x18] sm:$0xff]
      %v1011 = vld [vmem:[%s996 + $0x20] sm:$0xff]
      %v1012 = vld [vmem:[%s996 + $0x28] sm:$0xff]
      %v1013 = vld [vmem:[%s996 + $0x30] sm:$0xff]
      %v1014 = vld [vmem:[%s996 + $0x38] sm:$0xff]
      %v1015 = vld [vmem:[%s996 + $0x40] sm:$0xff]
      %v1016 = vld [vmem:[%s996 + $0x48] sm:$0xff]
      %v1017 = vld [vmem:[%s996 + $0x50] sm:$0xff]
      %v1018 = vld [vmem:[%s996 + $0x58] sm:$0xff]
      %v1019 = vld [vmem:[%s996 + $0x60] sm:$0xff]
      %v1020 = vld [vmem:[%s996 + $0x68] sm:$0xff]
      %v1021 = vld [vmem:[%s996 + $0x70] sm:$0xff]
      %v1022 = vld [vmem:[%s996 + $0x78] sm:$0xff]
      %v1023 = vld [vmem:[%s996 + $0x80] sm:$0xff]
      %v1024 = vld [vmem:[%s996 + $0x88] sm:$0xff]
      %v1025 = vld [vmem:[%s996 + $0x90] sm:$0xff]
      %v1026 = vld [vmem:[%s996 + $0x98] sm:$0xff]
      %v1027 = vld [vmem:[%s996 + $0xa0] sm:$0xff]
      %v1028 = vld [vmem:[%s996 + $0xa8] sm:$0xff]
      %v1029 = vld [vmem:[%s996 + $0xb0] sm:$0xff]
      %v1030 = vld [vmem:[%s996 + $0xb8] sm:$0xff]
      %v1031 = vld [vmem:[%s5] sm:$0xff]
      %v1032 = vld [vmem:[%s5 + $0x8] sm:$0xff]
      %v1033 = vld [vmem:[%s5 + $0x10] sm:$0xff]
      %v1034 = vld [vmem:[%s5 + $0x18] sm:$0xff]
      %v1035 = vld [vmem:[%s5 + $0x20] sm:$0xff]
      %v1036 = vld [vmem:[%s5 + $0x28] sm:$0xff]
      %v1037 = vld [vmem:[%s5 + $0x30] sm:$0xff]
      %v1038 = vld [vmem:[%s5 + $0x38] sm:$0xff]
      %v1039 = vld [vmem:[%s5 + $0x40] sm:$0xff]
      %v1040 = vld [vmem:[%s5 + $0x48] sm:$0xff]
      %v1041 = vld [vmem:[%s5 + $0x50] sm:$0xff]
      %v1042 = vld [vmem:[%s5 + $0x58] sm:$0xff]
      %v1043 = vld [vmem:[%s5 + $0x60] sm:$0xff]
      %v1044 = vld [vmem:[%s5 + $0x68] sm:$0xff]
      %v1045 = vld [vmem:[%s5 + $0x70] sm:$0xff]
      %v1046 = vld [vmem:[%s5 + $0x78] sm:$0xff]
      %v1047 = vld [vmem:[%s5 + $0x80] sm:$0xff]
      %v1048 = vld [vmem:[%s5 + $0x88] sm:$0xff]
      %v1049 = vld [vmem:[%s5 + $0x90] sm:$0xff]
      %v1050 = vld [vmem:[%s5 + $0x98] sm:$0xff]
      %v1051 = vld [vmem:[%s5 + $0xa0] sm:$0xff]
      %v1052 = vld [vmem:[%s5 + $0xa8] sm:$0xff]
      %v1053 = vld [vmem:[%s5 + $0xb0] sm:$0xff]
      %v1054 = vld [vmem:[%s5 + $0xb8] sm:$0xff]
      %v1055 = vld [vmem:[%s5 + $0xc0] sm:$0xff]
      %v1056 = vld [vmem:[%s5 + $0xc8] sm:$0xff]
      %v1057 = vld [vmem:[%s5 + $0xd0] sm:$0xff]
      %v1058 = vld [vmem:[%s5 + $0xd8] sm:$0xff]
      %v1059 = vld [vmem:[%s5 + $0xe0] sm:$0xff]
      %v1060 = vld [vmem:[%s5 + $0xe8] sm:$0xff]
      %v1061 = vld [vmem:[%s5 + $0xf0] sm:$0xff]
      %v1062 = vld [vmem:[%s5 + $0xf8] sm:$0xff]
      %v1063 = vld [vmem:[%s5 + $0x100] sm:$0xff]
      %v1064 = vld [vmem:[%s5 + $0x108] sm:$0xff]
      %v1065 = vld [vmem:[%s5 + $0x110] sm:$0xff]
      %v1066 = vld [vmem:[%s5 + $0x118] sm:$0xff]
      %v1067 = vld [vmem:[%s7] sm:$0x1]
      %v1069 = vlaneseq
      %v1070 = vshrl.u32 %v1069, 7
      %v1071 = vsub.s32 0, %v1070
      %v1072 = vrot.slane %v1067, %v1071
      %vm1074 = vcmask 261120
      %v1076 = vsel %vm1074, %v1009, 0
      %v1079 = vsel %vm1074, %v1012, 0
      %v1082 = vsel %vm1074, %v1015, 0
      %v1085 = vsel %vm1074, %v1018, 0
      %v1088 = vsel %vm1074, %v1021, 0
      %v1091 = vsel %vm1074, %v1024, 0
      %v1094 = vsel %vm1074, %v1027, 0
      %v1097 = vsel %vm1074, %v1030, 0
      %1099 = vmatprep.subr.mxu0 0.0
      %1100 = vmatpush1.msra.mxu0 %v1031
      %1101 = vmatprep.subr.mxu0 0.0
      %1102 = vmatpush1.msra.mxu0 %v1032
      %1103 = vmatprep.subr.mxu0 0.0
      %1104 = vmatpush1.msra.mxu0 %v1033
      %1105 = vmatprep.subr.mxu0 0.0
      %1106 = vmatpush1.msra.mxu0 %v1034
      %1107 = vmatprep.subr.mxu0 0.0
      %1108 = vmatpush1.msra.mxu0 %v1035
      %1109 = vmatprep.subr.mxu0 0.0
      %1110 = vmatpush1.msra.mxu0 %v1036
      %1111 = vmatprep.subr.mxu0 0.0
      %1112 = vmatpush1.msra.mxu0 %v1037
      %1113 = vmatprep.subr.mxu0 0.0
      %1114 = vmatpush1.msra.mxu0 %v1038
      %1115 = vmatprep.subr.mxu0 0.0
      %1116 = vmatpush1.msra.mxu0 %v1039
      %1117 = vmatprep.subr.mxu0 0.0
      %1118 = vmatpush1.msra.mxu0 %v1040
      %1119 = vmatprep.subr.mxu0 0.0
      %1120 = vmatpush1.msra.mxu0 %v1041
      %1121 = vmatprep.subr.mxu0 0.0
      %1122 = vmatpush1.msra.mxu0 %v1042
      %1123 = vmatprep.subr.mxu0 0.0
      %1124 = vmatpush1.msra.mxu0 %v1043
      %1125 = vmatprep.subr.mxu0 0.0
      %1126 = vmatpush1.msra.mxu0 %v1044
      %1127 = vmatprep.subr.mxu0 0.0
      %1128 = vmatpush1.msra.mxu0 %v1045
      %1129 = vmatprep.subr.mxu0 0.0
      %1130 = vmatpush1.msra.mxu0 %v1046
      %1131 = vmatprep.subr.mxu0 0.0
      %1132 = vmatpush1.msra.mxu0 %v1047
      %1133 = vmatprep.subr.mxu0 0.0
      %1134 = vmatpush1.msra.mxu0 %v1048
      %1135 = vmatprep.subr.mxu0 0.0
      %1136 = vmatpush1.msra.mxu0 %v1049
      %1137 = vmatprep.subr.mxu0 0.0
      %1138 = vmatpush1.msra.mxu0 %v1050
      %1139 = vmatprep.subr.mxu0 0.0
      %1140 = vmatpush1.msra.mxu0 %v1051
      %1141 = vmatprep.subr.mxu0 0.0
      %1142 = vmatpush1.msra.mxu0 %v1052
      %1143 = vmatprep.subr.mxu0 0.0
      %1144 = vmatpush1.msra.mxu0 %v1053
      %1145 = vmatprep.subr.mxu0 0.0
      %1146 = vmatpush1.msra.mxu0 %v1054
      %1147 = vmatprep.subr.mxu0 0.0
      %1148 = vmatpush1.msra.mxu0 %v1055
      %1149 = vmatprep.subr.mxu0 0.0
      %1150 = vmatpush1.msra.mxu0 %v1056
      %1151 = vmatprep.subr.mxu0 0.0
      %1152 = vmatpush1.msra.mxu0 %v1057
      %1153 = vmatprep.subr.mxu0 0.0
      %1154 = vmatpush1.msra.mxu0 %v1058
      %1155 = vmatprep.subr.mxu0 0.0
      %1156 = vmatpush1.msra.mxu0 %v1059
      %1157 = vmatprep.subr.mxu0 0.0
      %1158 = vmatpush1.msra.mxu0 %v1060
      %1159 = vmatprep.subr.mxu0 0.0
      %1160 = vmatpush1.msra.mxu0 %v1061
      %1161 = vmatprep.subr.mxu0 0.0
      %1162 = vmatpush1.msra.mxu0 %v1062
      %1163 = vmatprep.mubr.f32.mxu0 %v1008
      %1164 = vmatmul.mubr.f32.gmra.mrb[0].mxu0 %v1007
      %v1165 = vpop.f32.mrb[0].mxu0
      %v1166 = vadd.f32 %v1072, %v1165
      %v1167 = vpop.f32.mrb[0].mxu0
      %1168 = vmatprep.mubr.f32.mxu0 %v1011
      %1169 = vmatmul.mubr.f32.gmra.mrb[0].mxu0 %v1010
      %v1170 = vpop.f32.mrb[0].mxu0
      %v1171 = vadd.f32 %v1072, %v1170
      %v1172 = vpop.f32.mrb[0].mxu0
      %1173 = vmatprep.mubr.f32.mxu0 %v1014
      %1174 = vmatmul.mubr.f32.gmra.mrb[0].mxu0 %v1013
      %v1175 = vpop.f32.mrb[0].mxu0
      %v1176 = vadd.f32 %v1072, %v1175
      %v1177 = vpop.f32.mrb[0].mxu0
      %1178 = vmatprep.mubr.f32.mxu0 %v1017
      %1179 = vmatmul.mubr.f32.gmra.mrb[0].mxu0 %v1016
      %v1180 = vpop.f32.mrb[0].mxu0
      %v1181 = vadd.f32 %v1072, %v1180
      %v1182 = vpop.f32.mrb[0].mxu0
      %1183 = vmatprep.mubr.f32.mxu0 %v1020
      %1184 = vmatmul.mubr.f32.gmra.mrb[0].mxu0 %v1019
      %v1185 = vpop.f32.mrb[0].mxu0
      %v1186 = vadd.f32 %v1072, %v1185
      %v1187 = vpop.f32.mrb[0].mxu0
      %1188 = vmatprep.mubr.f32.mxu0 %v1023
      %1189 = vmatmul.mubr.f32.gmra.mrb[0].mxu0 %v1022
      %v1190 = vpop.f32.mrb[0].mxu0
      %v1191 = vadd.f32 %v1072, %v1190
      %v1192 = vpop.f32.mrb[0].mxu0
      %1193 = vmatprep.mubr.f32.mxu0 %v1026
      %1194 = vmatmul.mubr.f32.gmra.mrb[0].mxu0 %v1025
      %v1195 = vpop.f32.mrb[0].mxu0
      %v1196 = vadd.f32 %v1072, %v1195
      %v1197 = vpop.f32.mrb[0].mxu0
      %1198 = vmatprep.mubr.f32.mxu0 %v1029
      %1199 = vmatmul.mubr.f32.gmra.mrb[0].mxu0 %v1028
      %v1200 = vpop.f32.mrb[0].mxu0
      %v1201 = vadd.f32 %v1072, %v1200
      %v1202 = vpop.f32.mrb[0].mxu0
      %1203 = vdwg.mxu0
      %1204 = vmatprep.subr.mxu0 0.0
      %1205 = vmatpush1.msra.mxu0 %v1063
      %1206 = vmatprep.subr.mxu0 0.0
      %1207 = vmatpush1.msra.mxu0 %v1064
      %1208 = vmatprep.subr.mxu0 0.0
      %1209 = vmatpush1.msra.mxu0 %v1065
      %1210 = vmatprep.subr.mxu0 0.0
      %1211 = vmatpush1.msra.mxu0 %v1066
      %1212 = vmatprep.subr.mxu0 0.0
      %1213 = vmatpush1.msra.mxu0 0.0
      %1214 = vmatprep.subr.mxu0 0.0
      %1215 = vmatpush1.msra.mxu0 0.0
      %1216 = vmatprep.subr.mxu0 0.0
      %1217 = vmatpush1.msra.mxu0 0.0
      %1218 = vmatprep.subr.mxu0 0.0
      %1219 = vmatpush1.msra.mxu0 0.0
      %1220 = vmatprep.subr.mxu0 0.0
      %1221 = vmatpush1.msra.mxu0 0.0
      %1222 = vmatprep.subr.mxu0 0.0
      %1223 = vmatpush1.msra.mxu0 0.0
      %1224 = vmatprep.subr.mxu0 0.0
      %1225 = vmatpush1.msra.mxu0 0.0
      %1226 = vmatprep.subr.mxu0 0.0
      %1227 = vmatpush1.msra.mxu0 0.0
      %1228 = vmatprep.subr.mxu0 0.0
      %1229 = vmatpush1.msra.mxu0 0.0
      %1230 = vmatprep.subr.mxu0 0.0
      %1231 = vmatpush1.msra.mxu0 0.0
      %1232 = vmatprep.subr.mxu0 0.0
      %1233 = vmatpush1.msra.mxu0 0.0
      %1234 = vmatprep.subr.mxu0 0.0
      %1235 = vmatpush1.msra.mxu0 0.0
      %1236 = vmatprep.subr.mxu0 0.0
      %1237 = vmatpush1.msra.mxu0 0.0
      %1238 = vmatprep.subr.mxu0 0.0
      %1239 = vmatpush1.msra.mxu0 0.0
      %1240 = vmatprep.subr.mxu0 0.0
      %1241 = vmatpush1.msra.mxu0 0.0
      %1242 = vmatprep.subr.mxu0 0.0
      %1243 = vmatpush1.msra.mxu0 0.0
      %1244 = vmatprep.subr.mxu0 0.0
      %1245 = vmatpush1.msra.mxu0 0.0
      %1246 = vmatprep.subr.mxu0 0.0
      %1247 = vmatpush1.msra.mxu0 0.0
      %1248 = vmatprep.subr.mxu0 0.0
      %1249 = vmatpush1.msra.mxu0 0.0
      %1250 = vmatprep.subr.mxu0 0.0
      %1251 = vmatpush1.msra.mxu0 0.0
      %1252 = vmatprep.subr.mxu0 0.0
      %1253 = vmatpush1.msra.mxu0 0.0
      %1254 = vmatprep.subr.mxu0 0.0
      %1255 = vmatpush1.msra.mxu0 0.0
      %1256 = vmatprep.subr.mxu0 0.0
      %1257 = vmatpush1.msra.mxu0 0.0
      %1258 = vmatprep.subr.mxu0 0.0
      %1259 = vmatpush1.msra.mxu0 0.0
      %1260 = vmatprep.subr.mxu0 0.0
      %1261 = vmatpush1.msra.mxu0 0.0
      %1262 = vmatprep.subr.mxu0 0.0
      %1263 = vmatpush1.msra.mxu0 0.0
      %1264 = vmatprep.subr.mxu0 0.0
      %1265 = vmatpush1.msra.mxu0 0.0
      %1266 = vmatprep.subr.mxu0 0.0
      %1267 = vmatpush1.msra.mxu0 0.0
      %1268 = vmatprep.mubr.f32.mxu0 0.0
      %1269 = vmatmul.mubr.f32.gmra.mrb[0].mxu0 %v1076
      %v1270 = vpop.f32.mrb[0].mxu0
      %v1271 = vadd.f32 %v1166, %v1270
      %v1272 = vpop.f32.mrb[0].mxu0
      %1273 = vmatprep.mubr.f32.mxu0 0.0
      %1274 = vmatmul.mubr.f32.gmra.mrb[0].mxu0 %v1079
      %v1275 = vpop.f32.mrb[0].mxu0
      %v1276 = vadd.f32 %v1171, %v1275
      %v1277 = vpop.f32.mrb[0].mxu0
      %1278 = vmatprep.mubr.f32.mxu0 0.0
      %1279 = vmatmul.mubr.f32.gmra.mrb[0].mxu0 %v1082
      %v1280 = vpop.f32.mrb[0].mxu0
      %v1281 = vadd.f32 %v1176, %v1280
      %v1282 = vpop.f32.mrb[0].mxu0
      %1283 = vmatprep.mubr.f32.mxu0 0.0
      %1284 = vmatmul.mubr.f32.gmra.mrb[0].mxu0 %v1085
      %v1285 = vpop.f32.mrb[0].mxu0
      %v1286 = vadd.f32 %v1181, %v1285
      %v1287 = vpop.f32.mrb[0].mxu0
      %1288 = vmatprep.mubr.f32.mxu0 0.0
      %1289 = vmatmul.mubr.f32.gmra.mrb[0].mxu0 %v1088
      %v1290 = vpop.f32.mrb[0].mxu0
      %v1291 = vadd.f32 %v1186, %v1290
      %v1292 = vpop.f32.mrb[0].mxu0
      %1293 = vmatprep.mubr.f32.mxu0 0.0
      %1294 = vmatmul.mubr.f32.gmra.mrb[0].mxu0 %v1091
      %v1295 = vpop.f32.mrb[0].mxu0
      %v1296 = vadd.f32 %v1191, %v1295
      %v1297 = vpop.f32.mrb[0].mxu0
      %1298 = vmatprep.mubr.f32.mxu0 0.0
      %1299 = vmatmul.mubr.f32.gmra.mrb[0].mxu0 %v1094
      %v1300 = vpop.f32.mrb[0].mxu0
      %v1301 = vadd.f32 %v1196, %v1300
      %v1302 = vpop.f32.mrb[0].mxu0
      %1303 = vmatprep.mubr.f32.mxu0 0.0
      %1304 = vmatmul.mubr.f32.gmra.mrb[0].mxu0 %v1097
      %v1305 = vpop.f32.mrb[0].mxu0
      %v1306 = vadd.f32 %v1201, %v1305
      %v1307 = vpop.f32.mrb[0].mxu0
      %1308 = vdwg.mxu0
      %v1309 = vld [vmem:[%s9] sm:$0xff]
      %v1310 = vld [vmem:[%s9 + $0x8] sm:$0xff]
      %v1311 = vld [vmem:[%s9 + $0x10] sm:$0xff]
      %v1312 = vld [vmem:[%s9 + $0x18] sm:$0xff]
      %v1313 = vld [vmem:[%s11] sm:$0x1]
      %v1314 = vld [vmem:[%s13] sm:$0x1]
      %v1316 = vsel %vm1074, %v1271, 0
      %v1319 = vsel %vm1074, %v1276, 0
      %v1322 = vsel %vm1074, %v1281, 0
      %v1325 = vsel %vm1074, %v1286, 0
      %v1328 = vsel %vm1074, %v1291, 0
      %v1331 = vsel %vm1074, %v1296, 0
      %v1334 = vsel %vm1074, %v1301, 0
      %v1337 = vsel %vm1074, %v1306, 0
      %1339 = vmatprep.subr.mxu0 0.0
      %1340 = vmatpush1.msra.mxu0 %v1309
      %1341 = vmatprep.subr.mxu0 0.0
      %1342 = vmatpush1.msra.mxu0 %v1310
      %1343 = vmatprep.subr.mxu0 0.0
      %1344 = vmatpush1.msra.mxu0 %v1311
      %1345 = vmatprep.subr.mxu0 0.0
      %1346 = vmatpush1.msra.mxu0 %v1312
      %1347 = vmatprep.subr.mxu0 0.0
      %1348 = vmatpush1.msra.mxu0 0.0
      %1349 = vmatprep.subr.mxu0 0.0
      %1350 = vmatpush1.msra.mxu0 0.0
      %1351 = vmatprep.subr.mxu0 0.0
      %1352 = vmatpush1.msra.mxu0 0.0
      %1353 = vmatprep.subr.mxu0 0.0
      %1354 = vmatpush1.msra.mxu0 0.0
      %1355 = vmatprep.subr.mxu0 0.0
      %1356 = vmatpush1.msra.mxu0 0.0
      %1357 = vmatprep.subr.mxu0 0.0
      %1358 = vmatpush1.msra.mxu0 0.0
      %1359 = vmatprep.subr.mxu0 0.0
      %1360 = vmatpush1.msra.mxu0 0.0
      %1361 = vmatprep.subr.mxu0 0.0
      %1362 = vmatpush1.msra.mxu0 0.0
      %1363 = vmatprep.subr.mxu0 0.0
      %1364 = vmatpush1.msra.mxu0 0.0
      %1365 = vmatprep.subr.mxu0 0.0
      %1366 = vmatpush1.msra.mxu0 0.0
      %1367 = vmatprep.subr.mxu0 0.0
      %1368 = vmatpush1.msra.mxu0 0.0
      %1369 = vmatprep.subr.mxu0 0.0
      %1370 = vmatpush1.msra.mxu0 0.0
      %1371 = vmatprep.subr.mxu0 0.0
      %1372 = vmatpush1.msra.mxu0 0.0
      %1373 = vmatprep.subr.mxu0 0.0
      %1374 = vmatpush1.msra.mxu0 0.0
      %1375 = vmatprep.subr.mxu0 0.0
      %1376 = vmatpush1.msra.mxu0 0.0
      %1377 = vmatprep.subr.mxu0 0.0
      %1378 = vmatpush1.msra.mxu0 0.0
      %1379 = vmatprep.subr.mxu0 0.0
      %1380 = vmatpush1.msra.mxu0 0.0
      %1381 = vmatprep.subr.mxu0 0.0
      %1382 = vmatpush1.msra.mxu0 0.0
      %1383 = vmatprep.subr.mxu0 0.0
      %1384 = vmatpush1.msra.mxu0 0.0
      %1385 = vmatprep.subr.mxu0 0.0
      %1386 = vmatpush1.msra.mxu0 0.0
      %1387 = vmatprep.subr.mxu0 0.0
      %1388 = vmatpush1.msra.mxu0 0.0
      %1389 = vmatprep.subr.mxu0 0.0
      %1390 = vmatpush1.msra.mxu0 0.0
      %1391 = vmatprep.subr.mxu0 0.0
      %1392 = vmatpush1.msra.mxu0 0.0
      %1393 = vmatprep.subr.mxu0 0.0
      %1394 = vmatpush1.msra.mxu0 0.0
      %1395 = vmatprep.subr.mxu0 0.0
      %1396 = vmatpush1.msra.mxu0 0.0
      %1397 = vmatprep.subr.mxu0 0.0
      %1398 = vmatpush1.msra.mxu0 0.0
      %1399 = vmatprep.subr.mxu0 0.0
      %1400 = vmatpush1.msra.mxu0 0.0
      %1401 = vmatprep.subr.mxu0 0.0
      %1402 = vmatpush1.msra.mxu0 0.0
      %1403 = vmatprep.mubr.f32.mxu0 0.0
      %1404 = vmatmul.mubr.f32.gmra.mrb[0].mxu0 %v1316
      %v1405 = vpop.f32.mrb[0].mxu0
      %v1406 = vadd.f32 0.0, %v1405
      %v1407 = vpop.f32.mrb[0].mxu0
      %1408 = vmatprep.mubr.f32.mxu0 0.0
      %1409 = vmatmul.mubr.f32.gmra.mrb[0].mxu0 %v1319
      %v1410 = vpop.f32.mrb[0].mxu0
      %v1411 = vadd.f32 0.0, %v1410
      %v1412 = vpop.f32.mrb[0].mxu0
      %1413 = vmatprep.mubr.f32.mxu0 0.0
      %1414 = vmatmul.mubr.f32.gmra.mrb[0].mxu0 %v1322
      %v1415 = vpop.f32.mrb[0].mxu0
      %v1416 = vadd.f32 0.0, %v1415
      %v1417 = vpop.f32.mrb[0].mxu0
      %1418 = vmatprep.mubr.f32.mxu0 0.0
      %1419 = vmatmul.mubr.f32.gmra.mrb[0].mxu0 %v1325
      %v1420 = vpop.f32.mrb[0].mxu0
      %v1421 = vadd.f32 0.0, %v1420
      %v1422 = vpop.f32.mrb[0].mxu0
      %1423 = vmatprep.mubr.f32.mxu0 0.0
      %1424 = vmatmul.mubr.f32.gmra.mrb[0].mxu0 %v1328
      %v1425 = vpop.f32.mrb[0].mxu0
      %v1426 = vadd.f32 0.0, %v1425
      %v1427 = vpop.f32.mrb[0].mxu0
      %1428 = vmatprep.mubr.f32.mxu0 0.0
      %1429 = vmatmul.mubr.f32.gmra.mrb[0].mxu0 %v1331
      %v1430 = vpop.f32.mrb[0].mxu0
      %v1431 = vadd.f32 0.0, %v1430
      %v1432 = vpop.f32.mrb[0].mxu0
      %1433 = vmatprep.mubr.f32.mxu0 0.0
      %1434 = vmatmul.mubr.f32.gmra.mrb[0].mxu0 %v1334
      %v1435 = vpop.f32.mrb[0].mxu0
      %v1436 = vadd.f32 0.0, %v1435
      %v1437 = vpop.f32.mrb[0].mxu0
      %1438 = vmatprep.mubr.f32.mxu0 0.0
      %1439 = vmatmul.mubr.f32.gmra.mrb[0].mxu0 %v1337
      %v1440 = vpop.f32.mrb[0].mxu0
      %v1441 = vadd.f32 0.0, %v1440
      %v1442 = vpop.f32.mrb[0].mxu0
      %1443 = vdwg.mxu0
      %v1444 = vmul.f32 %v1271, %v1271
      %v1445 = vmul.f32 %v1276, %v1276
      %v1446 = vmul.f32 %v1281, %v1281
      %v1447 = vmul.f32 %v1286, %v1286
      %v1448 = vmul.f32 %v1291, %v1291
      %v1449 = vmul.f32 %v1296, %v1296
      %v1450 = vmul.f32 %v1301, %v1301
      %v1451 = vmul.f32 %v1306, %v1306
      %v1453 = vsel %vm1074, %v1444, 0
      %v1456 = vsel %vm1074, %v1445, 0
      %v1459 = vsel %vm1074, %v1446, 0
      %v1462 = vsel %vm1074, %v1447, 0
      %v1465 = vsel %vm1074, %v1448, 0
      %v1468 = vsel %vm1074, %v1449, 0
      %v1471 = vsel %vm1074, %v1450, 0
      %v1474 = vsel %vm1074, %v1451, 0
      %1476 = vmatprep.subr.mxu0 0.0
      %1477 = vmatpush1.msra.mxu0 %v1309
      %1478 = vmatprep.subr.mxu0 0.0
      %1479 = vmatpush1.msra.mxu0 %v1310
      %1480 = vmatprep.subr.mxu0 0.0
      %1481 = vmatpush1.msra.mxu0 %v1311
      %1482 = vmatprep.subr.mxu0 0.0
      %1483 = vmatpush1.msra.mxu0 %v1312
      %1484 = vmatprep.subr.mxu0 0.0
      %1485 = vmatpush1.msra.mxu0 0.0
      %1486 = vmatprep.subr.mxu0 0.0
      %1487 = vmatpush1.msra.mxu0 0.0
      %1488 = vmatprep.subr.mxu0 0.0
      %1489 = vmatpush1.msra.mxu0 0.0
      %1490 = vmatprep.subr.mxu0 0.0
      %1491 = vmatpush1.msra.mxu0 0.0
      %1492 = vmatprep.subr.mxu0 0.0
      %1493 = vmatpush1.msra.mxu0 0.0
      %1494 = vmatprep.subr.mxu0 0.0
      %1495 = vmatpush1.msra.mxu0 0.0
      %1496 = vmatprep.subr.mxu0 0.0
      %1497 = vmatpush1.msra.mxu0 0.0
      %1498 = vmatprep.subr.mxu0 0.0
      %1499 = vmatpush1.msra.mxu0 0.0
      %1500 = vmatprep.subr.mxu0 0.0
      %1501 = vmatpush1.msra.mxu0 0.0
      %1502 = vmatprep.subr.mxu0 0.0
      %1503 = vmatpush1.msra.mxu0 0.0
      %1504 = vmatprep.subr.mxu0 0.0
      %1505 = vmatpush1.msra.mxu0 0.0
      %1506 = vmatprep.subr.mxu0 0.0
      %1507 = vmatpush1.msra.mxu0 0.0
      %1508 = vmatprep.subr.mxu0 0.0
      %1509 = vmatpush1.msra.mxu0 0.0
      %1510 = vmatprep.subr.mxu0 0.0
      %1511 = vmatpush1.msra.mxu0 0.0
      %1512 = vmatprep.subr.mxu0 0.0
      %1513 = vmatpush1.msra.mxu0 0.0
      %1514 = vmatprep.subr.mxu0 0.0
      %1515 = vmatpush1.msra.mxu0 0.0
      %1516 = vmatprep.subr.mxu0 0.0
      %1517 = vmatpush1.msra.mxu0 0.0
      %1518 = vmatprep.subr.mxu0 0.0
      %1519 = vmatpush1.msra.mxu0 0.0
      %1520 = vmatprep.subr.mxu0 0.0
      %1521 = vmatpush1.msra.mxu0 0.0
      %1522 = vmatprep.subr.mxu0 0.0
      %1523 = vmatpush1.msra.mxu0 0.0
      %1524 = vmatprep.subr.mxu0 0.0
      %1525 = vmatpush1.msra.mxu0 0.0
      %1526 = vmatprep.subr.mxu0 0.0
      %1527 = vmatpush1.msra.mxu0 0.0
      %1528 = vmatprep.subr.mxu0 0.0
      %1529 = vmatpush1.msra.mxu0 0.0
      %1530 = vmatprep.subr.mxu0 0.0
      %1531 = vmatpush1.msra.mxu0 0.0
      %1532 = vmatprep.subr.mxu0 0.0
      %1533 = vmatpush1.msra.mxu0 0.0
      %1534 = vmatprep.subr.mxu0 0.0
      %1535 = vmatpush1.msra.mxu0 0.0
      %1536 = vmatprep.subr.mxu0 0.0
      %1537 = vmatpush1.msra.mxu0 0.0
      %1538 = vmatprep.subr.mxu0 0.0
      %1539 = vmatpush1.msra.mxu0 0.0
      %1540 = vmatprep.mubr.f32.mxu0 0.0
      %1541 = vmatmul.mubr.f32.gmra.mrb[0].mxu0 %v1453
      %v1542 = vpop.f32.mrb[0].mxu0
      %v1543 = vadd.f32 0.0, %v1542
      %v1544 = vpop.f32.mrb[0].mxu0
      %1545 = vmatprep.mubr.f32.mxu0 0.0
      %1546 = vmatmul.mubr.f32.gmra.mrb[0].mxu0 %v1456
      %v1547 = vpop.f32.mrb[0].mxu0
      %v1548 = vadd.f32 0.0, %v1547
      %v1549 = vpop.f32.mrb[0].mxu0
      %1550 = vmatprep.mubr.f32.mxu0 0.0
      %1551 = vmatmul.mubr.f32.gmra.mrb[0].mxu0 %v1459
      %v1552 = vpop.f32.mrb[0].mxu0
      %v1553 = vadd.f32 0.0, %v1552
      %v1554 = vpop.f32.mrb[0].mxu0
      %1555 = vmatprep.mubr.f32.mxu0 0.0
      %1556 = vmatmul.mubr.f32.gmra.mrb[0].mxu0 %v1462
      %v1557 = vpop.f32.mrb[0].mxu0
      %v1558 = vadd.f32 0.0, %v1557
      %v1559 = vpop.f32.mrb[0].mxu0
      %1560 = vmatprep.mubr.f32.mxu0 0.0
      %1561 = vmatmul.mubr.f32.gmra.mrb[0].mxu0 %v1465
      %v1562 = vpop.f32.mrb[0].mxu0
      %v1563 = vadd.f32 0.0, %v1562
      %v1564 = vpop.f32.mrb[0].mxu0
      %1565 = vmatprep.mubr.f32.mxu0 0.0
      %1566 = vmatmul.mubr.f32.gmra.mrb[0].mxu0 %v1468
      %v1567 = vpop.f32.mrb[0].mxu0
      %v1568 = vadd.f32 0.0, %v1567
      %v1569 = vpop.f32.mrb[0].mxu0
      %1570 = vmatprep.mubr.f32.mxu0 0.0
      %1571 = vmatmul.mubr.f32.gmra.mrb[0].mxu0 %v1471
      %v1572 = vpop.f32.mrb[0].mxu0
      %v1573 = vadd.f32 0.0, %v1572
      %v1574 = vpop.f32.mrb[0].mxu0
      %1575 = vmatprep.mubr.f32.mxu0 0.0
      %1576 = vmatmul.mubr.f32.gmra.mrb[0].mxu0 %v1474
      %v1577 = vpop.f32.mrb[0].mxu0
      %v1578 = vadd.f32 0.0, %v1577
      %v1579 = vpop.f32.mrb[0].mxu0
      %1580 = vdwg.mxu0
      %v1581 = vsel %vm1074, %v1406, 0.0
      %v1582 = vsel %vm1074, %v1411, 0.0
      %v1583 = vadd.f32 %v1581, %v1582
      %v1584 = vsel %vm1074, %v1416, 0.0
      %v1585 = vadd.f32 %v1583, %v1584
      %v1586 = vsel %vm1074, %v1421, 0.0
      %v1587 = vadd.f32 %v1585, %v1586
      %v1588 = vsel %vm1074, %v1426, 0.0
      %v1589 = vadd.f32 %v1587, %v1588
      %v1590 = vsel %vm1074, %v1431, 0.0
      %v1591 = vadd.f32 %v1589, %v1590
      %v1592 = vsel %vm1074, %v1436, 0.0
      %v1593 = vadd.f32 %v1591, %v1592
      %v1594 = vsel %vm1074, %v1441, 0.0
      %v1595 = vadd.f32 %v1593, %v1594
      %v1596 = vrot.slane %v1595, 4
      %v1597 = vadd.f32 %v1595, %v1596
      %v1598 = vrot.slane %v1597, 2
      %v1599 = vadd.f32 %v1597, %v1598
      %v1600 = vrot.slane %v1599, 1
      %v1601 = vadd.f32 %v1599, %v1600
      %v1602 = vrcp.pop 64.0
      %v1603 = vmul.f32 %v1601, %v1602
      %v1604 = vsel %vm1074, %v1543, 0.0
      %v1605 = vsel %vm1074, %v1548, 0.0
      %v1606 = vadd.f32 %v1604, %v1605
      %v1607 = vsel %vm1074, %v1553, 0.0
      %v1608 = vadd.f32 %v1606, %v1607
      %v1609 = vsel %vm1074, %v1558, 0.0
      %v1610 = vadd.f32 %v1608, %v1609
      %v1611 = vsel %vm1074, %v1563, 0.0
      %v1612 = vadd.f32 %v1610, %v1611
      %v1613 = vsel %vm1074, %v1568, 0.0
      %v1614 = vadd.f32 %v1612, %v1613
      %v1615 = vsel %vm1074, %v1573, 0.0
      %v1616 = vadd.f32 %v1614, %v1615
      %v1617 = vsel %vm1074, %v1578, 0.0
      %v1618 = vadd.f32 %v1616, %v1617
      %v1619 = vrot.slane %v1618, 4
      %v1620 = vadd.f32 %v1618, %v1619
      %v1621 = vrot.slane %v1620, 2
      %v1622 = vadd.f32 %v1620, %v1621
      %v1623 = vrot.slane %v1622, 1
      %v1624 = vadd.f32 %v1622, %v1623
      %v1625 = vmul.f32 %v1624, %v1602
      %v1626 = vmul.f32 %v1603, %v1603
      %v1627 = vsub.f32 %v1625, %v1626
      %v1628 = vsub.f32 %v1271, %v1603
      %v1629 = vsub.f32 %v1276, %v1603
      %v1630 = vsub.f32 %v1281, %v1603
      %v1631 = vsub.f32 %v1286, %v1603
      %v1632 = vsub.f32 %v1291, %v1603
      %v1633 = vsub.f32 %v1296, %v1603
      %v1634 = vsub.f32 %v1301, %v1603
      %v1635 = vsub.f32 %v1306, %v1603
      %v1636 = vadd.f32 %v1627, 1e-06
      %v1637 = vrsqrt.pop %v1636
      %v1638 = vmul.f32 %v1628, %v1637
      %v1639 = vmul.f32 %v1629, %v1637
      %v1640 = vmul.f32 %v1630, %v1637
      %v1641 = vmul.f32 %v1631, %v1637
      %v1642 = vmul.f32 %v1632, %v1637
      %v1643 = vmul.f32 %v1633, %v1637
      %v1644 = vmul.f32 %v1634, %v1637
      %v1645 = vmul.f32 %v1635, %v1637
      %v1647 = vlaneseq
      %v1648 = vshrl.u32 %v1647, 7
      %v1649 = vsub.s32 0, %v1648
      %v1650 = vrot.slane %v1313, %v1649
      %v1652 = vmul.f32 %v1638, %v1650
      %v1653 = vmul.f32 %v1639, %v1650
      %v1654 = vmul.f32 %v1640, %v1650
      %v1655 = vmul.f32 %v1641, %v1650
      %v1656 = vmul.f32 %v1642, %v1650
      %v1657 = vmul.f32 %v1643, %v1650
      %v1658 = vmul.f32 %v1644, %v1650
      %v1659 = vmul.f32 %v1645, %v1650
      %v1661 = vlaneseq
      %v1662 = vshrl.u32 %v1661, 7
      %v1663 = vsub.s32 0, %v1662
      %v1664 = vrot.slane %v1314, %v1663
      %v1666 = vadd.f32 %v1652, %v1664
      %v1667 = vadd.f32 %v1653, %v1664
      %v1668 = vadd.f32 %v1654, %v1664
      %v1669 = vadd.f32 %v1655, %v1664
      %v1670 = vadd.f32 %v1656, %v1664
      %v1671 = vadd.f32 %v1657, %v1664
      %v1672 = vadd.f32 %v1658, %v1664
      %v1673 = vadd.f32 %v1659, %v1664
      %v1674 = vld [vmem:[%s1001] sm:$0xff]
      %v1675 = vld [vmem:[%s1001 + $0x8] sm:$0xff]
      %v1676 = vld [vmem:[%s1001 + $0x10] sm:$0xff]
      %v1677 = vld [vmem:[%s1001 + $0x18] sm:$0xff]
      %v1678 = vld [vmem:[%s1001 + $0x20] sm:$0xff]
      %v1679 = vld [vmem:[%s1001 + $0x28] sm:$0xff]
      %v1680 = vld [vmem:[%s1001 + $0x30] sm:$0xff]
      %v1681 = vld [vmem:[%s1001 + $0x38] sm:$0xff]
      %v1682 = vld [vmem:[%s15] sm:$0xff]
      %v1683 = vld [vmem:[%s15 + $0x8] sm:$0xff]
      %v1684 = vld [vmem:[%s15 + $0x10] sm:$0xff]
      %v1685 = vld [vmem:[%s15 + $0x18] sm:$0xff]
      %v1686 = vld [vmem:[%s15 + $0x20] sm:$0xff]
      %v1687 = vld [vmem:[%s15 + $0x28] sm:$0xff]
      %v1688 = vld [vmem:[%s15 + $0x30] sm:$0xff]
      %v1689 = vld [vmem:[%s15 + $0x38] sm:$0xff]
      %v1690 = vld [vmem:[%s15 + $0x40] sm:$0xff]
      %v1691 = vld [vmem:[%s17] sm:$0x1]
      %v1693 = vlaneseq
      %v1694 = vshrl.u32 %v1693, 7
      %v1695 = vsub.s32 0, %v1694
      %v1696 = vrot.slane %v1691, %v1695
      %vm1698 = vcmask 588800
      %v1700 = vsel %vm1698, %v1674, 0
      %v1703 = vsel %vm1698, %v1675, 0
      %v1706 = vsel %vm1698, %v1676, 0
      %v1709 = vsel %vm1698, %v1677, 0
      %v1712 = vsel %vm1698, %v1678, 0
      %v1715 = vsel %vm1698, %v1679, 0
      %v1718 = vsel %vm1698, %v1680, 0
      %v1721 = vsel %vm1698, %v1681, 0
      %1723 = vmatprep.subr.mxu0 0.0
      %1724 = vmatpush1.msra.mxu0 %v1682
      %1725 = vmatprep.subr.mxu0 0.0
      %1726 = vmatpush1.msra.mxu0 %v1683
      %1727 = vmatprep.subr.mxu0 0.0
      %1728 = vmatpush1.msra.mxu0 %v1684
      %1729 = vmatprep.subr.mxu0 0.0
      %1730 = vmatpush1.msra.mxu0 %v1685
      %1731 = vmatprep.subr.mxu0 0.0
      %1732 = vmatpush1.msra.mxu0 %v1686
      %1733 = vmatprep.subr.mxu0 0.0
      %1734 = vmatpush1.msra.mxu0 %v1687
      %1735 = vmatprep.subr.mxu0 0.0
      %1736 = vmatpush1.msra.mxu0 %v1688
      %1737 = vmatprep.subr.mxu0 0.0
      %1738 = vmatpush1.msra.mxu0 %v1689
      %1739 = vmatprep.subr.mxu0 0.0
      %1740 = vmatpush1.msra.mxu0 %v1690
      %1741 = vmatprep.subr.mxu0 0.0
      %1742 = vmatpush1.msra.mxu0 0.0
      %1743 = vmatprep.subr.mxu0 0.0
      %1744 = vmatpush1.msra.mxu0 0.0
      %1745 = vmatprep.subr.mxu0 0.0
      %1746 = vmatpush1.msra.mxu0 0.0
      %1747 = vmatprep.subr.mxu0 0.0
      %1748 = vmatpush1.msra.mxu0 0.0
      %1749 = vmatprep.subr.mxu0 0.0
      %1750 = vmatpush1.msra.mxu0 0.0
      %1751 = vmatprep.subr.mxu0 0.0
      %1752 = vmatpush1.msra.mxu0 0.0
      %1753 = vmatprep.subr.mxu0 0.0
      %1754 = vmatpush1.msra.mxu0 0.0
      %1755 = vmatprep.subr.mxu0 0.0
      %1756 = vmatpush1.msra.mxu0 0.0
      %1757 = vmatprep.subr.mxu0 0.0
      %1758 = vmatpush1.msra.mxu0 0.0
      %1759 = vmatprep.subr.mxu0 0.0
      %1760 = vmatpush1.msra.mxu0 0.0
      %1761 = vmatprep.subr.mxu0 0.0
      %1762 = vmatpush1.msra.mxu0 0.0
      %1763 = vmatprep.subr.mxu0 0.0
      %1764 = vmatpush1.msra.mxu0 0.0
      %1765 = vmatprep.subr.mxu0 0.0
      %1766 = vmatpush1.msra.mxu0 0.0
      %1767 = vmatprep.subr.mxu0 0.0
      %1768 = vmatpush1.msra.mxu0 0.0
      %1769 = vmatprep.subr.mxu0 0.0
      %1770 = vmatpush1.msra.mxu0 0.0
      %1771 = vmatprep.subr.mxu0 0.0
      %1772 = vmatpush1.msra.mxu0 0.0
      %1773 = vmatprep.subr.mxu0 0.0
      %1774 = vmatpush1.msra.mxu0 0.0
      %1775 = vmatprep.subr.mxu0 0.0
      %1776 = vmatpush1.msra.mxu0 0.0
      %1777 = vmatprep.subr.mxu0 0.0
      %1778 = vmatpush1.msra.mxu0 0.0
      %1779 = vmatprep.subr.mxu0 0.0
      %1780 = vmatpush1.msra.mxu0 0.0
      %1781 = vmatprep.subr.mxu0 0.0
      %1782 = vmatpush1.msra.mxu0 0.0
      %1783 = vmatprep.subr.mxu0 0.0
      %1784 = vmatpush1.msra.mxu0 0.0
      %1785 = vmatprep.subr.mxu0 0.0
      %1786 = vmatpush1.msra.mxu0 0.0
      %1787 = vmatprep.mubr.f32.mxu0 0.0
      %1788 = vmatmul.mubr.f32.gmra.mrb[0].mxu0 %v1700
      %v1789 = vpop.f32.mrb[0].mxu0
      %v1790 = vadd.f32 %v1696, %v1789
      %v1791 = vpop.f32.mrb[0].mxu0
      %1792 = vmatprep.mubr.f32.mxu0 0.0
      %1793 = vmatmul.mubr.f32.gmra.mrb[0].mxu0 %v1703
      %v1794 = vpop.f32.mrb[0].mxu0
      %v1795 = vadd.f32 %v1696, %v1794
      %v1796 = vpop.f32.mrb[0].mxu0
      %1797 = vmatprep.mubr.f32.mxu0 0.0
      %1798 = vmatmul.mubr.f32.gmra.mrb[0].mxu0 %v1706
      %v1799 = vpop.f32.mrb[0].mxu0
      %v1800 = vadd.f32 %v1696, %v1799
      %v1801 = vpop.f32.mrb[0].mxu0
      %1802 = vmatprep.mubr.f32.mxu0 0.0
      %1803 = vmatmul.mubr.f32.gmra.mrb[0].mxu0 %v1709
      %v1804 = vpop.f32.mrb[0].mxu0
      %v1805 = vadd.f32 %v1696, %v1804
      %v1806 = vpop.f32.mrb[0].mxu0
      %1807 = vmatprep.mubr.f32.mxu0 0.0
      %1808 = vmatmul.mubr.f32.gmra.mrb[0].mxu0 %v1712
      %v1809 = vpop.f32.mrb[0].mxu0
      %v1810 = vadd.f32 %v1696, %v1809
      %v1811 = vpop.f32.mrb[0].mxu0
      %1812 = vmatprep.mubr.f32.mxu0 0.0
      %1813 = vmatmul.mubr.f32.gmra.mrb[0].mxu0 %v1715
      %v1814 = vpop.f32.mrb[0].mxu0
      %v1815 = vadd.f32 %v1696, %v1814
      %v1816 = vpop.f32.mrb[0].mxu0
      %1817 = vmatprep.mubr.f32.mxu0 0.0
      %1818 = vmatmul.mubr.f32.gmra.mrb[0].mxu0 %v1718
      %v1819 = vpop.f32.mrb[0].mxu0
      %v1820 = vadd.f32 %v1696, %v1819
      %v1821 = vpop.f32.mrb[0].mxu0
      %1822 = vmatprep.mubr.f32.mxu0 0.0
      %1823 = vmatmul.mubr.f32.gmra.mrb[0].mxu0 %v1721
      %v1824 = vpop.f32.mrb[0].mxu0
      %v1825 = vadd.f32 %v1696, %v1824
      %v1826 = vpop.f32.mrb[0].mxu0
      %1827 = vdwg.mxu0
      %v1828 = vld [vmem:[%s19] sm:$0xff]
      %v1829 = vld [vmem:[%s21] sm:$0x1]
      %v1830 = vld [vmem:[%s23] sm:$0x1]
      %vm1831 = vcmask 64512
      %v1833 = vsel %vm1831, %v1790, 0
      %v1836 = vsel %vm1831, %v1795, 0
      %v1839 = vsel %vm1831, %v1800, 0
      %v1842 = vsel %vm1831, %v1805, 0
      %v1845 = vsel %vm1831, %v1810, 0
      %v1848 = vsel %vm1831, %v1815, 0
      %v1851 = vsel %vm1831, %v1820, 0
      %v1854 = vsel %vm1831, %v1825, 0
      %1856 = vmatprep.subr.mxu0 0.0
      %1857 = vmatpush1.msra.mxu0 %v1828
      %1858 = vmatprep.subr.mxu0 0.0
      %1859 = vmatpush1.msra.mxu0 0.0
      %1860 = vmatprep.subr.mxu0 0.0
      %1861 = vmatpush1.msra.mxu0 0.0
      %1862 = vmatprep.subr.mxu0 0.0
      %1863 = vmatpush1.msra.mxu0 0.0
      %1864 = vmatprep.subr.mxu0 0.0
      %1865 = vmatpush1.msra.mxu0 0.0
      %1866 = vmatprep.subr.mxu0 0.0
      %1867 = vmatpush1.msra.mxu0 0.0
      %1868 = vmatprep.subr.mxu0 0.0
      %1869 = vmatpush1.msra.mxu0 0.0
      %1870 = vmatprep.subr.mxu0 0.0
      %1871 = vmatpush1.msra.mxu0 0.0
      %1872 = vmatprep.subr.mxu0 0.0
      %1873 = vmatpush1.msra.mxu0 0.0
      %1874 = vmatprep.subr.mxu0 0.0
      %1875 = vmatpush1.msra.mxu0 0.0
      %1876 = vmatprep.subr.mxu0 0.0
      %1877 = vmatpush1.msra.mxu0 0.0
      %1878 = vmatprep.subr.mxu0 0.0
      %1879 = vmatpush1.msra.mxu0 0.0
      %1880 = vmatprep.subr.mxu0 0.0
      %1881 = vmatpush1.msra.mxu0 0.0
      %1882 = vmatprep.subr.mxu0 0.0
      %1883 = vmatpush1.msra.mxu0 0.0
      %1884 = vmatprep.subr.mxu0 0.0
      %1885 = vmatpush1.msra.mxu0 0.0
      %1886 = vmatprep.subr.mxu0 0.0
      %1887 = vmatpush1.msra.mxu0 0.0
      %1888 = vmatprep.subr.mxu0 0.0
      %1889 = vmatpush1.msra.mxu0 0.0
      %1890 = vmatprep.subr.mxu0 0.0
      %1891 = vmatpush1.msra.mxu0 0.0
      %1892 = vmatprep.subr.mxu0 0.0
      %1893 = vmatpush1.msra.mxu0 0.0
      %1894 = vmatprep.subr.mxu0 0.0
      %1895 = vmatpush1.msra.mxu0 0.0
      %1896 = vmatprep.subr.mxu0 0.0
      %1897 = vmatpush1.msra.mxu0 0.0
      %1898 = vmatprep.subr.mxu0 0.0
      %1899 = vmatpush1.msra.mxu0 0.0
      %1900 = vmatprep.subr.mxu0 0.0
      %1901 = vmatpush1.msra.mxu0 0.0
      %1902 = vmatprep.subr.mxu0 0.0
      %1903 = vmatpush1.msra.mxu0 0.0
      %1904 = vmatprep.subr.mxu0 0.0
      %1905 = vmatpush1.msra.mxu0 0.0
      %1906 = vmatprep.subr.mxu0 0.0
      %1907 = vmatpush1.msra.mxu0 0.0
      %1908 = vmatprep.subr.mxu0 0.0
      %1909 = vmatpush1.msra.mxu0 0.0
      %1910 = vmatprep.subr.mxu0 0.0
      %1911 = vmatpush1.msra.mxu0 0.0
      %1912 = vmatprep.subr.mxu0 0.0
      %1913 = vmatpush1.msra.mxu0 0.0
      %1914 = vmatprep.subr.mxu0 0.0
      %1915 = vmatpush1.msra.mxu0 0.0
      %1916 = vmatprep.subr.mxu0 0.0
      %1917 = vmatpush1.msra.mxu0 0.0
      %1918 = vmatprep.subr.mxu0 0.0
      %1919 = vmatpush1.msra.mxu0 0.0
      %1920 = vmatprep.mubr.f32.mxu0 0.0
      %1921 = vmatmul.mubr.f32.gmra.mrb[0].mxu0 %v1833
      %v1922 = vpop.f32.mrb[0].mxu0
      %v1923 = vadd.f32 0.0, %v1922
      %v1924 = vpop.f32.mrb[0].mxu0
      %1925 = vmatprep.mubr.f32.mxu0 0.0
      %1926 = vmatmul.mubr.f32.gmra.mrb[0].mxu0 %v1836
      %v1927 = vpop.f32.mrb[0].mxu0
      %v1928 = vadd.f32 0.0, %v1927
      %v1929 = vpop.f32.mrb[0].mxu0
      %1930 = vmatprep.mubr.f32.mxu0 0.0
      %1931 = vmatmul.mubr.f32.gmra.mrb[0].mxu0 %v1839
      %v1932 = vpop.f32.mrb[0].mxu0
      %v1933 = vadd.f32 0.0, %v1932
      %v1934 = vpop.f32.mrb[0].mxu0
      %1935 = vmatprep.mubr.f32.mxu0 0.0
      %1936 = vmatmul.mubr.f32.gmra.mrb[0].mxu0 %v1842
      %v1937 = vpop.f32.mrb[0].mxu0
      %v1938 = vadd.f32 0.0, %v1937
      %v1939 = vpop.f32.mrb[0].mxu0
      %1940 = vmatprep.mubr.f32.mxu0 0.0
      %1941 = vmatmul.mubr.f32.gmra.mrb[0].mxu0 %v1845
      %v1942 = vpop.f32.mrb[0].mxu0
      %v1943 = vadd.f32 0.0, %v1942
      %v1944 = vpop.f32.mrb[0].mxu0
      %1945 = vmatprep.mubr.f32.mxu0 0.0
      %1946 = vmatmul.mubr.f32.gmra.mrb[0].mxu0 %v1848
      %v1947 = vpop.f32.mrb[0].mxu0
      %v1948 = vadd.f32 0.0, %v1947
      %v1949 = vpop.f32.mrb[0].mxu0
      %1950 = vmatprep.mubr.f32.mxu0 0.0
      %1951 = vmatmul.mubr.f32.gmra.mrb[0].mxu0 %v1851
      %v1952 = vpop.f32.mrb[0].mxu0
      %v1953 = vadd.f32 0.0, %v1952
      %v1954 = vpop.f32.mrb[0].mxu0
      %1955 = vmatprep.mubr.f32.mxu0 0.0
      %1956 = vmatmul.mubr.f32.gmra.mrb[0].mxu0 %v1854
      %v1957 = vpop.f32.mrb[0].mxu0
      %v1958 = vadd.f32 0.0, %v1957
      %v1959 = vpop.f32.mrb[0].mxu0
      %1960 = vdwg.mxu0
      %v1961 = vmul.f32 %v1790, %v1790
      %v1962 = vmul.f32 %v1795, %v1795
      %v1963 = vmul.f32 %v1800, %v1800
      %v1964 = vmul.f32 %v1805, %v1805
      %v1965 = vmul.f32 %v1810, %v1810
      %v1966 = vmul.f32 %v1815, %v1815
      %v1967 = vmul.f32 %v1820, %v1820
      %v1968 = vmul.f32 %v1825, %v1825
      %v1970 = vsel %vm1831, %v1961, 0
      %v1973 = vsel %vm1831, %v1962, 0
      %v1976 = vsel %vm1831, %v1963, 0
      %v1979 = vsel %vm1831, %v1964, 0
      %v1982 = vsel %vm1831, %v1965, 0
      %v1985 = vsel %vm1831, %v1966, 0
      %v1988 = vsel %vm1831, %v1967, 0
      %v1991 = vsel %vm1831, %v1968, 0
      %1993 = vmatprep.subr.mxu0 0.0
      %1994 = vmatpush1.msra.mxu0 %v1828
      %1995 = vmatprep.subr.mxu0 0.0
      %1996 = vmatpush1.msra.mxu0 0.0
      %1997 = vmatprep.subr.mxu0 0.0
      %1998 = vmatpush1.msra.mxu0 0.0
      %1999 = vmatprep.subr.mxu0 0.0
      %2000 = vmatpush1.msra.mxu0 0.0
      %2001 = vmatprep.subr.mxu0 0.0
      %2002 = vmatpush1.msra.mxu0 0.0
      %2003 = vmatprep.subr.mxu0 0.0
      %2004 = vmatpush1.msra.mxu0 0.0
      %2005 = vmatprep.subr.mxu0 0.0
      %2006 = vmatpush1.msra.mxu0 0.0
      %2007 = vmatprep.subr.mxu0 0.0
      %2008 = vmatpush1.msra.mxu0 0.0
      %2009 = vmatprep.subr.mxu0 0.0
      %2010 = vmatpush1.msra.mxu0 0.0
      %2011 = vmatprep.subr.mxu0 0.0
      %2012 = vmatpush1.msra.mxu0 0.0
      %2013 = vmatprep.subr.mxu0 0.0
      %2014 = vmatpush1.msra.mxu0 0.0
      %2015 = vmatprep.subr.mxu0 0.0
      %2016 = vmatpush1.msra.mxu0 0.0
      %2017 = vmatprep.subr.mxu0 0.0
      %2018 = vmatpush1.msra.mxu0 0.0
      %2019 = vmatprep.subr.mxu0 0.0
      %2020 = vmatpush1.msra.mxu0 0.0
      %2021 = vmatprep.subr.mxu0 0.0
      %2022 = vmatpush1.msra.mxu0 0.0
      %2023 = vmatprep.subr.mxu0 0.0
      %2024 = vmatpush1.msra.mxu0 0.0
      %2025 = vmatprep.subr.mxu0 0.0
      %2026 = vmatpush1.msra.mxu0 0.0
      %2027 = vmatprep.subr.mxu0 0.0
      %2028 = vmatpush1.msra.mxu0 0.0
      %2029 = vmatprep.subr.mxu0 0.0
      %2030 = vmatpush1.msra.mxu0 0.0
      %2031 = vmatprep.subr.mxu0 0.0
      %2032 = vmatpush1.msra.mxu0 0.0
      %2033 = vmatprep.subr.mxu0 0.0
      %2034 = vmatpush1.msra.mxu0 0.0
      %2035 = vmatprep.subr.mxu0 0.0
      %2036 = vmatpush1.msra.mxu0 0.0
      %2037 = vmatprep.subr.mxu0 0.0
      %2038 = vmatpush1.msra.mxu0 0.0
      %2039 = vmatprep.subr.mxu0 0.0
      %2040 = vmatpush1.msra.mxu0 0.0
      %2041 = vmatprep.subr.mxu0 0.0
      %2042 = vmatpush1.msra.mxu0 0.0
      %2043 = vmatprep.subr.mxu0 0.0
      %2044 = vmatpush1.msra.mxu0 0.0
      %2045 = vmatprep.subr.mxu0 0.0
      %2046 = vmatpush1.msra.mxu0 0.0
      %2047 = vmatprep.subr.mxu0 0.0
      %2048 = vmatpush1.msra.mxu0 0.0
      %2049 = vmatprep.subr.mxu0 0.0
      %2050 = vmatpush1.msra.mxu0 0.0
      %2051 = vmatprep.subr.mxu0 0.0
      %2052 = vmatpush1.msra.mxu0 0.0
      %2053 = vmatprep.subr.mxu0 0.0
      %2054 = vmatpush1.msra.mxu0 0.0
      %2055 = vmatprep.subr.mxu0 0.0
      %2056 = vmatpush1.msra.mxu0 0.0
      %2057 = vmatprep.mubr.f32.mxu0 0.0
      %2058 = vmatmul.mubr.f32.gmra.mrb[0].mxu0 %v1970
      %v2059 = vpop.f32.mrb[0].mxu0
      %v2060 = vadd.f32 0.0, %v2059
      %v2061 = vpop.f32.mrb[0].mxu0
      %2062 = vmatprep.mubr.f32.mxu0 0.0
      %2063 = vmatmul.mubr.f32.gmra.mrb[0].mxu0 %v1973
      %v2064 = vpop.f32.mrb[0].mxu0
      %v2065 = vadd.f32 0.0, %v2064
      %v2066 = vpop.f32.mrb[0].mxu0
      %2067 = vmatprep.mubr.f32.mxu0 0.0
      %2068 = vmatmul.mubr.f32.gmra.mrb[0].mxu0 %v1976
      %v2069 = vpop.f32.mrb[0].mxu0
      %v2070 = vadd.f32 0.0, %v2069
      %v2071 = vpop.f32.mrb[0].mxu0
      %2072 = vmatprep.mubr.f32.mxu0 0.0
      %2073 = vmatmul.mubr.f32.gmra.mrb[0].mxu0 %v1979
      %v2074 = vpop.f32.mrb[0].mxu0
      %v2075 = vadd.f32 0.0, %v2074
      %v2076 = vpop.f32.mrb[0].mxu0
      %2077 = vmatprep.mubr.f32.mxu0 0.0
      %2078 = vmatmul.mubr.f32.gmra.mrb[0].mxu0 %v1982
      %v2079 = vpop.f32.mrb[0].mxu0
      %v2080 = vadd.f32 0.0, %v2079
      %v2081 = vpop.f32.mrb[0].mxu0
      %2082 = vmatprep.mubr.f32.mxu0 0.0
      %2083 = vmatmul.mubr.f32.gmra.mrb[0].mxu0 %v1985
      %v2084 = vpop.f32.mrb[0].mxu0
      %v2085 = vadd.f32 0.0, %v2084
      %v2086 = vpop.f32.mrb[0].mxu0
      %2087 = vmatprep.mubr.f32.mxu0 0.0
      %2088 = vmatmul.mubr.f32.gmra.mrb[0].mxu0 %v1988
      %v2089 = vpop.f32.mrb[0].mxu0
      %v2090 = vadd.f32 0.0, %v2089
      %v2091 = vpop.f32.mrb[0].mxu0
      %2092 = vmatprep.mubr.f32.mxu0 0.0
      %2093 = vmatmul.mubr.f32.gmra.mrb[0].mxu0 %v1991
      %v2094 = vpop.f32.mrb[0].mxu0
      %v2095 = vadd.f32 0.0, %v2094
      %v2096 = vpop.f32.mrb[0].mxu0
      %2097 = vdwg.mxu0
      %v2098 = vsel %vm1831, %v1923, 0.0
      %v2099 = vsel %vm1831, %v1928, 0.0
      %v2100 = vadd.f32 %v2098, %v2099
      %v2101 = vsel %vm1831, %v1933, 0.0
      %v2102 = vadd.f32 %v2100, %v2101
      %v2103 = vsel %vm1831, %v1938, 0.0
      %v2104 = vadd.f32 %v2102, %v2103
      %v2105 = vsel %vm1831, %v1943, 0.0
      %v2106 = vadd.f32 %v2104, %v2105
      %v2107 = vsel %vm1831, %v1948, 0.0
      %v2108 = vadd.f32 %v2106, %v2107
      %v2109 = vsel %vm1831, %v1953, 0.0
      %v2110 = vadd.f32 %v2108, %v2109
      %v2111 = vsel %vm1831, %v1958, 0.0
      %v2112 = vadd.f32 %v2110, %v2111
      %v2113 = vrot.slane %v2112, 4
      %v2114 = vadd.f32 %v2112, %v2113
      %v2115 = vrot.slane %v2114, 2
      %v2116 = vadd.f32 %v2114, %v2115
      %v2117 = vrot.slane %v2116, 1
      %v2118 = vadd.f32 %v2116, %v2117
      %v2119 = vmul.f32 %v2118, %v1602
      %v2120 = vsel %vm1831, %v2060, 0.0
      %v2121 = vsel %vm1831, %v2065, 0.0
      %v2122 = vadd.f32 %v2120, %v2121
      %v2123 = vsel %vm1831, %v2070, 0.0
      %v2124 = vadd.f32 %v2122, %v2123
      %v2125 = vsel %vm1831, %v2075, 0.0
      %v2126 = vadd.f32 %v2124, %v2125
      %v2127 = vsel %vm1831, %v2080, 0.0
      %v2128 = vadd.f32 %v2126, %v2127
      %v2129 = vsel %vm1831, %v2085, 0.0
      %v2130 = vadd.f32 %v2128, %v2129
      %v2131 = vsel %vm1831, %v2090, 0.0
      %v2132 = vadd.f32 %v2130, %v2131
      %v2133 = vsel %vm1831, %v2095, 0.0
      %v2134 = vadd.f32 %v2132, %v2133
      %v2135 = vrot.slane %v2134, 4
      %v2136 = vadd.f32 %v2134, %v2135
      %v2137 = vrot.slane %v2136, 2
      %v2138 = vadd.f32 %v2136, %v2137
      %v2139 = vrot.slane %v2138, 1
      %v2140 = vadd.f32 %v2138, %v2139
      %v2141 = vmul.f32 %v2140, %v1602
      %v2142 = vmul.f32 %v2119, %v2119
      %v2143 = vsub.f32 %v2141, %v2142
      %v2144 = vsub.f32 %v1790, %v2119
      %v2145 = vsub.f32 %v1795, %v2119
      %v2146 = vsub.f32 %v1800, %v2119
      %v2147 = vsub.f32 %v1805, %v2119
      %v2148 = vsub.f32 %v1810, %v2119
      %v2149 = vsub.f32 %v1815, %v2119
      %v2150 = vsub.f32 %v1820, %v2119
      %v2151 = vsub.f32 %v1825, %v2119
      %v2152 = vadd.f32 %v2143, 1e-06
      %v2153 = vrsqrt.pop %v2152
      %v2154 = vmul.f32 %v2144, %v2153
      %v2155 = vmul.f32 %v2145, %v2153
      %v2156 = vmul.f32 %v2146, %v2153
      %v2157 = vmul.f32 %v2147, %v2153
      %v2158 = vmul.f32 %v2148, %v2153
      %v2159 = vmul.f32 %v2149, %v2153
      %v2160 = vmul.f32 %v2150, %v2153
      %v2161 = vmul.f32 %v2151, %v2153
      %v2163 = vlaneseq
      %v2164 = vshrl.u32 %v2163, 7
      %v2165 = vsub.s32 0, %v2164
      %v2166 = vrot.slane %v1829, %v2165
      %v2168 = vmul.f32 %v2154, %v2166
      %v2169 = vmul.f32 %v2155, %v2166
      %v2170 = vmul.f32 %v2156, %v2166
      %v2171 = vmul.f32 %v2157, %v2166
      %v2172 = vmul.f32 %v2158, %v2166
      %v2173 = vmul.f32 %v2159, %v2166
      %v2174 = vmul.f32 %v2160, %v2166
      %v2175 = vmul.f32 %v2161, %v2166
      %v2177 = vlaneseq
      %v2178 = vshrl.u32 %v2177, 7
      %v2179 = vsub.s32 0, %v2178
      %v2180 = vrot.slane %v1830, %v2179
      %v2182 = vadd.f32 %v2168, %v2180
      %v2183 = vadd.f32 %v2169, %v2180
      %v2184 = vadd.f32 %v2170, %v2180
      %v2185 = vadd.f32 %v2171, %v2180
      %v2186 = vadd.f32 %v2172, %v2180
      %v2187 = vadd.f32 %v2173, %v2180
      %v2188 = vadd.f32 %v2174, %v2180
      %v2189 = vadd.f32 %v2175, %v2180
      %v2190 = vld [vmem:[%s25] sm:$0x1]
      %v2191 = vld [vmem:[%s27] sm:$0x1]
      %v2192 = vsel %vm1074, %v1666, 0.0
      %2193 = vadd.xlane.f32.xlu0 %v2192
      %v2194 = vpop.xlane.xlu0 %2193
      %v2195 = vsel %vm1074, %v1667, 0.0
      %2196 = vadd.xlane.f32.xlu0 %v2195
      %v2197 = vpop.xlane.xlu0 %2196
      %v2198 = vsel %vm1074, %v1668, 0.0
      %2199 = vadd.xlane.f32.xlu0 %v2198
      %v2200 = vpop.xlane.xlu0 %2199
      %v2201 = vsel %vm1074, %v1669, 0.0
      %2202 = vadd.xlane.f32.xlu0 %v2201
      %v2203 = vpop.xlane.xlu0 %2202
      %v2204 = vsel %vm1074, %v1670, 0.0
      %2205 = vadd.xlane.f32.xlu0 %v2204
      %v2206 = vpop.xlane.xlu0 %2205
      %v2207 = vsel %vm1074, %v1671, 0.0
      %2208 = vadd.xlane.f32.xlu0 %v2207
      %v2209 = vpop.xlane.xlu0 %2208
      %v2210 = vsel %vm1074, %v1672, 0.0
      %2211 = vadd.xlane.f32.xlu0 %v2210
      %v2212 = vpop.xlane.xlu0 %2211
      %v2213 = vsel %vm1074, %v1673, 0.0
      %2214 = vadd.xlane.f32.xlu0 %v2213
      %v2215 = vpop.xlane.xlu0 %2214
      %v2216 = vrcp.pop 32.0
      %v2217 = vmul.f32 %v2194, %v2216
      %v2218 = vmul.f32 %v2197, %v2216
      %v2219 = vmul.f32 %v2200, %v2216
      %v2220 = vmul.f32 %v2203, %v2216
      %v2221 = vmul.f32 %v2206, %v2216
      %v2222 = vmul.f32 %v2209, %v2216
      %v2223 = vmul.f32 %v2212, %v2216
      %v2224 = vmul.f32 %v2215, %v2216
      %v2225 = vsub.f32 %v1666, %v2217
      %v2226 = vsub.f32 %v1667, %v2218
      %v2227 = vsub.f32 %v1668, %v2219
      %v2228 = vsub.f32 %v1669, %v2220
      %v2229 = vsub.f32 %v1670, %v2221
      %v2230 = vsub.f32 %v1671, %v2222
      %v2231 = vsub.f32 %v1672, %v2223
      %v2232 = vsub.f32 %v1673, %v2224
      %v2233 = vmul.f32 %v2225, %v2225
      %v2234 = vmul.f32 %v2226, %v2226
      %v2235 = vmul.f32 %v2227, %v2227
      %v2236 = vmul.f32 %v2228, %v2228
      %v2237 = vmul.f32 %v2229, %v2229
      %v2238 = vmul.f32 %v2230, %v2230
      %v2239 = vmul.f32 %v2231, %v2231
      %v2240 = vmul.f32 %v2232, %v2232
      %v2241 = vsel %vm1074, %v2233, 0.0
      %2242 = vadd.xlane.f32.xlu0 %v2241
      %v2243 = vpop.xlane.xlu0 %2242
      %v2244 = vsel %vm1074, %v2234, 0.0
      %2245 = vadd.xlane.f32.xlu0 %v2244
      %v2246 = vpop.xlane.xlu0 %2245
      %v2247 = vsel %vm1074, %v2235, 0.0
      %2248 = vadd.xlane.f32.xlu0 %v2247
      %v2249 = vpop.xlane.xlu0 %2248
      %v2250 = vsel %vm1074, %v2236, 0.0
      %2251 = vadd.xlane.f32.xlu0 %v2250
      %v2252 = vpop.xlane.xlu0 %2251
      %v2253 = vsel %vm1074, %v2237, 0.0
      %2254 = vadd.xlane.f32.xlu0 %v2253
      %v2255 = vpop.xlane.xlu0 %2254
      %v2256 = vsel %vm1074, %v2238, 0.0
      %2257 = vadd.xlane.f32.xlu0 %v2256
      %v2258 = vpop.xlane.xlu0 %2257
      %v2259 = vsel %vm1074, %v2239, 0.0
      %2260 = vadd.xlane.f32.xlu0 %v2259
      %v2261 = vpop.xlane.xlu0 %2260
      %v2262 = vsel %vm1074, %v2240, 0.0
      %2263 = vadd.xlane.f32.xlu0 %v2262
      %v2264 = vpop.xlane.xlu0 %2263
      %v2265 = vmul.f32 %v2243, %v2216
      %v2266 = vmul.f32 %v2246, %v2216
      %v2267 = vmul.f32 %v2249, %v2216
      %v2268 = vmul.f32 %v2252, %v2216
      %v2269 = vmul.f32 %v2255, %v2216
      %v2270 = vmul.f32 %v2258, %v2216
      %v2271 = vmul.f32 %v2261, %v2216
      %v2272 = vmul.f32 %v2264, %v2216
      %v2273 = vadd.f32 %v2265, 1e-05
      %v2274 = vadd.f32 %v2266, 1e-05
      %v2275 = vadd.f32 %v2267, 1e-05
      %v2276 = vadd.f32 %v2268, 1e-05
      %v2277 = vadd.f32 %v2269, 1e-05
      %v2278 = vadd.f32 %v2270, 1e-05
      %v2279 = vadd.f32 %v2271, 1e-05
      %v2280 = vadd.f32 %v2272, 1e-05
      %v2281 = vrsqrt.pop %v2273
      %v2282 = vrsqrt.pop %v2274
      %v2283 = vrsqrt.pop %v2275
      %v2284 = vrsqrt.pop %v2276
      %v2285 = vrsqrt.pop %v2277
      %v2286 = vrsqrt.pop %v2278
      %v2287 = vrsqrt.pop %v2279
      %v2288 = vrsqrt.pop %v2280
      %v2289 = vmul.f32 %v2225, %v2281
      %v2290 = vmul.f32 %v2226, %v2282
      %v2291 = vmul.f32 %v2227, %v2283
      %v2292 = vmul.f32 %v2228, %v2284
      %v2293 = vmul.f32 %v2229, %v2285
      %v2294 = vmul.f32 %v2230, %v2286
      %v2295 = vmul.f32 %v2231, %v2287
      %v2296 = vmul.f32 %v2232, %v2288
      %v2298 = vlaneseq
      %v2299 = vshrl.u32 %v2298, 7
      %v2300 = vsub.s32 0, %v2299
      %v2301 = vrot.slane %v2190, %v2300
      %v2303 = vmul.f32 %v2289, %v2301
      %v2304 = vmul.f32 %v2290, %v2301
      %v2305 = vmul.f32 %v2291, %v2301
      %v2306 = vmul.f32 %v2292, %v2301
      %v2307 = vmul.f32 %v2293, %v2301
      %v2308 = vmul.f32 %v2294, %v2301
      %v2309 = vmul.f32 %v2295, %v2301
      %v2310 = vmul.f32 %v2296, %v2301
      %v2312 = vlaneseq
      %v2313 = vshrl.u32 %v2312, 7
      %v2314 = vsub.s32 0, %v2313
      %v2315 = vrot.slane %v2191, %v2314
      %v2317 = vadd.f32 %v2303, %v2315
      %v2318 = vadd.f32 %v2304, %v2315
      %v2319 = vadd.f32 %v2305, %v2315
      %v2320 = vadd.f32 %v2306, %v2315
      %v2321 = vadd.f32 %v2307, %v2315
      %v2322 = vadd.f32 %v2308, %v2315
      %v2323 = vadd.f32 %v2309, %v2315
      %v2324 = vadd.f32 %v2310, %v2315
      %v2325 = vld [vmem:[%s37] sm:$0x1]
      %v2326 = vld [vmem:[%s29] sm:$0xff]
      %v2327 = vld [vmem:[%s29 + $0x8] sm:$0xff]
      %v2328 = vld [vmem:[%s29 + $0x10] sm:$0xff]
      %v2329 = vld [vmem:[%s29 + $0x18] sm:$0xff]
      %v2331 = vsel %vm1074, %v2317, 0
      %v2334 = vsel %vm1074, %v2318, 0
      %v2337 = vsel %vm1074, %v2319, 0
      %v2340 = vsel %vm1074, %v2320, 0
      %v2343 = vsel %vm1074, %v2321, 0
      %v2346 = vsel %vm1074, %v2322, 0
      %v2349 = vsel %vm1074, %v2323, 0
      %v2352 = vsel %vm1074, %v2324, 0
      %2354 = vmatprep.subr.mxu0 0.0
      %2355 = vmatpush1.msra.mxu0 %v2326
      %2356 = vmatprep.subr.mxu0 0.0
      %2357 = vmatpush1.msra.mxu0 %v2327
      %2358 = vmatprep.subr.mxu0 0.0
      %2359 = vmatpush1.msra.mxu0 %v2328
      %2360 = vmatprep.subr.mxu0 0.0
      %2361 = vmatpush1.msra.mxu0 %v2329
      %2362 = vmatprep.subr.mxu0 0.0
      %2363 = vmatpush1.msra.mxu0 0.0
      %2364 = vmatprep.subr.mxu0 0.0
      %2365 = vmatpush1.msra.mxu0 0.0
      %2366 = vmatprep.subr.mxu0 0.0
      %2367 = vmatpush1.msra.mxu0 0.0
      %2368 = vmatprep.subr.mxu0 0.0
      %2369 = vmatpush1.msra.mxu0 0.0
      %2370 = vmatprep.subr.mxu0 0.0
      %2371 = vmatpush1.msra.mxu0 0.0
      %2372 = vmatprep.subr.mxu0 0.0
      %2373 = vmatpush1.msra.mxu0 0.0
      %2374 = vmatprep.subr.mxu0 0.0
      %2375 = vmatpush1.msra.mxu0 0.0
      %2376 = vmatprep.subr.mxu0 0.0
      %2377 = vmatpush1.msra.mxu0 0.0
      %2378 = vmatprep.subr.mxu0 0.0
      %2379 = vmatpush1.msra.mxu0 0.0
      %2380 = vmatprep.subr.mxu0 0.0
      %2381 = vmatpush1.msra.mxu0 0.0
      %2382 = vmatprep.subr.mxu0 0.0
      %2383 = vmatpush1.msra.mxu0 0.0
      %2384 = vmatprep.subr.mxu0 0.0
      %2385 = vmatpush1.msra.mxu0 0.0
      %2386 = vmatprep.subr.mxu0 0.0
      %2387 = vmatpush1.msra.mxu0 0.0
      %2388 = vmatprep.subr.mxu0 0.0
      %2389 = vmatpush1.msra.mxu0 0.0
      %2390 = vmatprep.subr.mxu0 0.0
      %2391 = vmatpush1.msra.mxu0 0.0
      %2392 = vmatprep.subr.mxu0 0.0
      %2393 = vmatpush1.msra.mxu0 0.0
      %2394 = vmatprep.subr.mxu0 0.0
      %2395 = vmatpush1.msra.mxu0 0.0
      %2396 = vmatprep.subr.mxu0 0.0
      %2397 = vmatpush1.msra.mxu0 0.0
      %2398 = vmatprep.subr.mxu0 0.0
      %2399 = vmatpush1.msra.mxu0 0.0
      %2400 = vmatprep.subr.mxu0 0.0
      %2401 = vmatpush1.msra.mxu0 0.0
      %2402 = vmatprep.subr.mxu0 0.0
      %2403 = vmatpush1.msra.mxu0 0.0
      %2404 = vmatprep.subr.mxu0 0.0
      %2405 = vmatpush1.msra.mxu0 0.0
      %2406 = vmatprep.subr.mxu0 0.0
      %2407 = vmatpush1.msra.mxu0 0.0
      %2408 = vmatprep.subr.mxu0 0.0
      %2409 = vmatpush1.msra.mxu0 0.0
      %2410 = vmatprep.subr.mxu0 0.0
      %2411 = vmatpush1.msra.mxu0 0.0
      %2412 = vmatprep.subr.mxu0 0.0
      %2413 = vmatpush1.msra.mxu0 0.0
      %2414 = vmatprep.subr.mxu0 0.0
      %2415 = vmatpush1.msra.mxu0 0.0
      %2416 = vmatprep.subr.mxu0 0.0
      %2417 = vmatpush1.msra.mxu0 0.0
      %2418 = vmatprep.mubr.f32.mxu0 0.0
      %2419 = vmatmul.mubr.f32.gmra.mrb[0].mxu0 %v2331
      %v2420 = vpop.f32.mrb[0].mxu0
      %v2421 = vadd.f32 0.0, %v2420
      %v2422 = vpop.f32.mrb[0].mxu0
      %2423 = vmatprep.mubr.f32.mxu0 0.0
      %2424 = vmatmul.mubr.f32.gmra.mrb[0].mxu0 %v2334
      %v2425 = vpop.f32.mrb[0].mxu0
      %v2426 = vadd.f32 0.0, %v2425
      %v2427 = vpop.f32.mrb[0].mxu0
      %2428 = vmatprep.mubr.f32.mxu0 0.0
      %2429 = vmatmul.mubr.f32.gmra.mrb[0].mxu0 %v2337
      %v2430 = vpop.f32.mrb[0].mxu0
      %v2431 = vadd.f32 0.0, %v2430
      %v2432 = vpop.f32.mrb[0].mxu0
      %2433 = vmatprep.mubr.f32.mxu0 0.0
      %2434 = vmatmul.mubr.f32.gmra.mrb[0].mxu0 %v2340
      %v2435 = vpop.f32.mrb[0].mxu0
      %v2436 = vadd.f32 0.0, %v2435
      %v2437 = vpop.f32.mrb[0].mxu0
      %2438 = vmatprep.mubr.f32.mxu0 0.0
      %2439 = vmatmul.mubr.f32.gmra.mrb[0].mxu0 %v2343
      %v2440 = vpop.f32.mrb[0].mxu0
      %v2441 = vadd.f32 0.0, %v2440
      %v2442 = vpop.f32.mrb[0].mxu0
      %2443 = vmatprep.mubr.f32.mxu0 0.0
      %2444 = vmatmul.mubr.f32.gmra.mrb[0].mxu0 %v2346
      %v2445 = vpop.f32.mrb[0].mxu0
      %v2446 = vadd.f32 0.0, %v2445
      %v2447 = vpop.f32.mrb[0].mxu0
      %2448 = vmatprep.mubr.f32.mxu0 0.0
      %2449 = vmatmul.mubr.f32.gmra.mrb[0].mxu0 %v2349
      %v2450 = vpop.f32.mrb[0].mxu0
      %v2451 = vadd.f32 0.0, %v2450
      %v2452 = vpop.f32.mrb[0].mxu0
      %2453 = vmatprep.mubr.f32.mxu0 0.0
      %2454 = vmatmul.mubr.f32.gmra.mrb[0].mxu0 %v2352
      %v2455 = vpop.f32.mrb[0].mxu0
      %v2456 = vadd.f32 0.0, %v2455
      %v2457 = vpop.f32.mrb[0].mxu0
      %2458 = vdwg.mxu0
      %v2459 = vld [vmem:[%s31] sm:$0xff]
      %v2460 = vld [vmem:[%s31 + $0x8] sm:$0xff]
      %v2461 = vld [vmem:[%s31 + $0x10] sm:$0xff]
      %v2462 = vld [vmem:[%s31 + $0x18] sm:$0xff]
      %2463 = vmatprep.subr.mxu0 0.0
      %2464 = vmatpush1.msra.mxu0 %v2459
      %2465 = vmatprep.subr.mxu0 0.0
      %2466 = vmatpush1.msra.mxu0 %v2460
      %2467 = vmatprep.subr.mxu0 0.0
      %2468 = vmatpush1.msra.mxu0 %v2461
      %2469 = vmatprep.subr.mxu0 0.0
      %2470 = vmatpush1.msra.mxu0 %v2462
      %2471 = vmatprep.subr.mxu0 0.0
      %2472 = vmatpush1.msra.mxu0 0.0
      %2473 = vmatprep.subr.mxu0 0.0
      %2474 = vmatpush1.msra.mxu0 0.0
      %2475 = vmatprep.subr.mxu0 0.0
      %2476 = vmatpush1.msra.mxu0 0.0
      %2477 = vmatprep.subr.mxu0 0.0
      %2478 = vmatpush1.msra.mxu0 0.0
      %2479 = vmatprep.subr.mxu0 0.0
      %2480 = vmatpush1.msra.mxu0 0.0
      %2481 = vmatprep.subr.mxu0 0.0
      %2482 = vmatpush1.msra.mxu0 0.0
      %2483 = vmatprep.subr.mxu0 0.0
      %2484 = vmatpush1.msra.mxu0 0.0
      %2485 = vmatprep.subr.mxu0 0.0
      %2486 = vmatpush1.msra.mxu0 0.0
      %2487 = vmatprep.subr.mxu0 0.0
      %2488 = vmatpush1.msra.mxu0 0.0
      %2489 = vmatprep.subr.mxu0 0.0
      %2490 = vmatpush1.msra.mxu0 0.0
      %2491 = vmatprep.subr.mxu0 0.0
      %2492 = vmatpush1.msra.mxu0 0.0
      %2493 = vmatprep.subr.mxu0 0.0
      %2494 = vmatpush1.msra.mxu0 0.0
      %2495 = vmatprep.subr.mxu0 0.0
      %2496 = vmatpush1.msra.mxu0 0.0
      %2497 = vmatprep.subr.mxu0 0.0
      %2498 = vmatpush1.msra.mxu0 0.0
      %2499 = vmatprep.subr.mxu0 0.0
      %2500 = vmatpush1.msra.mxu0 0.0
      %2501 = vmatprep.subr.mxu0 0.0
      %2502 = vmatpush1.msra.mxu0 0.0
      %2503 = vmatprep.subr.mxu0 0.0
      %2504 = vmatpush1.msra.mxu0 0.0
      %2505 = vmatprep.subr.mxu0 0.0
      %2506 = vmatpush1.msra.mxu0 0.0
      %2507 = vmatprep.subr.mxu0 0.0
      %2508 = vmatpush1.msra.mxu0 0.0
      %2509 = vmatprep.subr.mxu0 0.0
      %2510 = vmatpush1.msra.mxu0 0.0
      %2511 = vmatprep.subr.mxu0 0.0
      %2512 = vmatpush1.msra.mxu0 0.0
      %2513 = vmatprep.subr.mxu0 0.0
      %2514 = vmatpush1.msra.mxu0 0.0
      %2515 = vmatprep.subr.mxu0 0.0
      %2516 = vmatpush1.msra.mxu0 0.0
      %2517 = vmatprep.subr.mxu0 0.0
      %2518 = vmatpush1.msra.mxu0 0.0
      %2519 = vmatprep.subr.mxu0 0.0
      %2520 = vmatpush1.msra.mxu0 0.0
      %2521 = vmatprep.subr.mxu0 0.0
      %2522 = vmatpush1.msra.mxu0 0.0
      %2523 = vmatprep.subr.mxu0 0.0
      %2524 = vmatpush1.msra.mxu0 0.0
      %2525 = vmatprep.subr.mxu0 0.0
      %2526 = vmatpush1.msra.mxu0 0.0
      %2527 = vmatprep.mubr.f32.mxu0 0.0
      %2528 = vmatmul.mubr.f32.gmra.mrb[0].mxu0 %v2331
      %v2529 = vpop.f32.mrb[0].mxu0
      %v2530 = vadd.f32 0.0, %v2529
      %v2531 = vpop.f32.mrb[0].mxu0
      %2532 = vmatprep.mubr.f32.mxu0 0.0
      %2533 = vmatmul.mubr.f32.gmra.mrb[0].mxu0 %v2334
      %v2534 = vpop.f32.mrb[0].mxu0
      %v2535 = vadd.f32 0.0, %v2534
      %v2536 = vpop.f32.mrb[0].mxu0
      %2537 = vmatprep.mubr.f32.mxu0 0.0
      %2538 = vmatmul.mubr.f32.gmra.mrb[0].mxu0 %v2337
      %v2539 = vpop.f32.mrb[0].mxu0
      %v2540 = vadd.f32 0.0, %v2539
      %v2541 = vpop.f32.mrb[0].mxu0
      %2542 = vmatprep.mubr.f32.mxu0 0.0
      %2543 = vmatmul.mubr.f32.gmra.mrb[0].mxu0 %v2340
      %v2544 = vpop.f32.mrb[0].mxu0
      %v2545 = vadd.f32 0.0, %v2544
      %v2546 = vpop.f32.mrb[0].mxu0
      %2547 = vmatprep.mubr.f32.mxu0 0.0
      %2548 = vmatmul.mubr.f32.gmra.mrb[0].mxu0 %v2343
      %v2549 = vpop.f32.mrb[0].mxu0
      %v2550 = vadd.f32 0.0, %v2549
      %v2551 = vpop.f32.mrb[0].mxu0
      %2552 = vmatprep.mubr.f32.mxu0 0.0
      %2553 = vmatmul.mubr.f32.gmra.mrb[0].mxu0 %v2346
      %v2554 = vpop.f32.mrb[0].mxu0
      %v2555 = vadd.f32 0.0, %v2554
      %v2556 = vpop.f32.mrb[0].mxu0
      %2557 = vmatprep.mubr.f32.mxu0 0.0
      %2558 = vmatmul.mubr.f32.gmra.mrb[0].mxu0 %v2349
      %v2559 = vpop.f32.mrb[0].mxu0
      %v2560 = vadd.f32 0.0, %v2559
      %v2561 = vpop.f32.mrb[0].mxu0
      %2562 = vmatprep.mubr.f32.mxu0 0.0
      %2563 = vmatmul.mubr.f32.gmra.mrb[0].mxu0 %v2352
      %v2564 = vpop.f32.mrb[0].mxu0
      %v2565 = vadd.f32 0.0, %v2564
      %v2566 = vpop.f32.mrb[0].mxu0
      %2567 = vdwg.mxu0
      %v2568 = vld [vmem:[%s33] sm:$0xff]
      %v2569 = vld [vmem:[%s33 + $0x8] sm:$0xff]
      %v2570 = vld [vmem:[%s33 + $0x10] sm:$0xff]
      %v2571 = vld [vmem:[%s33 + $0x18] sm:$0xff]
      %2572 = vmatprep.subr.mxu0 0.0
      %2573 = vmatpush1.msra.mxu0 %v2568
      %2574 = vmatprep.subr.mxu0 0.0
      %2575 = vmatpush1.msra.mxu0 %v2569
      %2576 = vmatprep.subr.mxu0 0.0
      %2577 = vmatpush1.msra.mxu0 %v2570
      %2578 = vmatprep.subr.mxu0 0.0
      %2579 = vmatpush1.msra.mxu0 %v2571
      %2580 = vmatprep.subr.mxu0 0.0
      %2581 = vmatpush1.msra.mxu0 0.0
      %2582 = vmatprep.subr.mxu0 0.0
      %2583 = vmatpush1.msra.mxu0 0.0
      %2584 = vmatprep.subr.mxu0 0.0
      %2585 = vmatpush1.msra.mxu0 0.0
      %2586 = vmatprep.subr.mxu0 0.0
      %2587 = vmatpush1.msra.mxu0 0.0
      %2588 = vmatprep.subr.mxu0 0.0
      %2589 = vmatpush1.msra.mxu0 0.0
      %2590 = vmatprep.subr.mxu0 0.0
      %2591 = vmatpush1.msra.mxu0 0.0
      %2592 = vmatprep.subr.mxu0 0.0
      %2593 = vmatpush1.msra.mxu0 0.0
      %2594 = vmatprep.subr.mxu0 0.0
      %2595 = vmatpush1.msra.mxu0 0.0
      %2596 = vmatprep.subr.mxu0 0.0
      %2597 = vmatpush1.msra.mxu0 0.0
      %2598 = vmatprep.subr.mxu0 0.0
      %2599 = vmatpush1.msra.mxu0 0.0
      %2600 = vmatprep.subr.mxu0 0.0
      %2601 = vmatpush1.msra.mxu0 0.0
      %2602 = vmatprep.subr.mxu0 0.0
      %2603 = vmatpush1.msra.mxu0 0.0
      %2604 = vmatprep.subr.mxu0 0.0
      %2605 = vmatpush1.msra.mxu0 0.0
      %2606 = vmatprep.subr.mxu0 0.0
      %2607 = vmatpush1.msra.mxu0 0.0
      %2608 = vmatprep.subr.mxu0 0.0
      %2609 = vmatpush1.msra.mxu0 0.0
      %2610 = vmatprep.subr.mxu0 0.0
      %2611 = vmatpush1.msra.mxu0 0.0
      %2612 = vmatprep.subr.mxu0 0.0
      %2613 = vmatpush1.msra.mxu0 0.0
      %2614 = vmatprep.subr.mxu0 0.0
      %2615 = vmatpush1.msra.mxu0 0.0
      %2616 = vmatprep.subr.mxu0 0.0
      %2617 = vmatpush1.msra.mxu0 0.0
      %2618 = vmatprep.subr.mxu0 0.0
      %2619 = vmatpush1.msra.mxu0 0.0
      %2620 = vmatprep.subr.mxu0 0.0
      %2621 = vmatpush1.msra.mxu0 0.0
      %2622 = vmatprep.subr.mxu0 0.0
      %2623 = vmatpush1.msra.mxu0 0.0
      %2624 = vmatprep.subr.mxu0 0.0
      %2625 = vmatpush1.msra.mxu0 0.0
      %2626 = vmatprep.subr.mxu0 0.0
      %2627 = vmatpush1.msra.mxu0 0.0
      %2628 = vmatprep.subr.mxu0 0.0
      %2629 = vmatpush1.msra.mxu0 0.0
      %2630 = vmatprep.subr.mxu0 0.0
      %2631 = vmatpush1.msra.mxu0 0.0
      %2632 = vmatprep.subr.mxu0 0.0
      %2633 = vmatpush1.msra.mxu0 0.0
      %2634 = vmatprep.subr.mxu0 0.0
      %2635 = vmatpush1.msra.mxu0 0.0
      %2636 = vmatprep.mubr.f32.mxu0 0.0
      %2637 = vmatmul.mubr.f32.gmra.mrb[0].mxu0 %v2331
      %v2638 = vpop.f32.mrb[0].mxu0
      %v2639 = vadd.f32 0.0, %v2638
      %v2640 = vpop.f32.mrb[0].mxu0
      %2641 = vmatprep.mubr.f32.mxu0 0.0
      %2642 = vmatmul.mubr.f32.gmra.mrb[0].mxu0 %v2334
      %v2643 = vpop.f32.mrb[0].mxu0
      %v2644 = vadd.f32 0.0, %v2643
      %v2645 = vpop.f32.mrb[0].mxu0
      %2646 = vmatprep.mubr.f32.mxu0 0.0
      %2647 = vmatmul.mubr.f32.gmra.mrb[0].mxu0 %v2337
      %v2648 = vpop.f32.mrb[0].mxu0
      %v2649 = vadd.f32 0.0, %v2648
      %v2650 = vpop.f32.mrb[0].mxu0
      %2651 = vmatprep.mubr.f32.mxu0 0.0
      %2652 = vmatmul.mubr.f32.gmra.mrb[0].mxu0 %v2340
      %v2653 = vpop.f32.mrb[0].mxu0
      %v2654 = vadd.f32 0.0, %v2653
      %v2655 = vpop.f32.mrb[0].mxu0
      %2656 = vmatprep.mubr.f32.mxu0 0.0
      %2657 = vmatmul.mubr.f32.gmra.mrb[0].mxu0 %v2343
      %v2658 = vpop.f32.mrb[0].mxu0
      %v2659 = vadd.f32 0.0, %v2658
      %v2660 = vpop.f32.mrb[0].mxu0
      %2661 = vmatprep.mubr.f32.mxu0 0.0
      %2662 = vmatmul.mubr.f32.gmra.mrb[0].mxu0 %v2346
      %v2663 = vpop.f32.mrb[0].mxu0
      %v2664 = vadd.f32 0.0, %v2663
      %v2665 = vpop.f32.mrb[0].mxu0
      %2666 = vmatprep.mubr.f32.mxu0 0.0
      %2667 = vmatmul.mubr.f32.gmra.mrb[0].mxu0 %v2349
      %v2668 = vpop.f32.mrb[0].mxu0
      %v2669 = vadd.f32 0.0, %v2668
      %v2670 = vpop.f32.mrb[0].mxu0
      %2671 = vmatprep.mubr.f32.mxu0 0.0
      %2672 = vmatmul.mubr.f32.gmra.mrb[0].mxu0 %v2352
      %v2673 = vpop.f32.mrb[0].mxu0
      %v2674 = vadd.f32 0.0, %v2673
      %v2675 = vpop.f32.mrb[0].mxu0
      %2676 = vdwg.mxu0
      %vm2677 = vcmask 130048
      %v2679 = vsel %vm2677, %v2421, 0
      %v2682 = vsel %vm2677, %v2426, 0
      %v2685 = vsel %vm2677, %v2431, 0
      %v2688 = vsel %vm2677, %v2436, 0
      %v2691 = vsel %vm2677, %v2441, 0
      %v2694 = vsel %vm2677, %v2446, 0
      %v2697 = vsel %vm2677, %v2451, 0
      %v2700 = vsel %vm2677, %v2456, 0
      %v2703 = vsel %vm2677, %v2530, 0
      %v2706 = vsel %vm2677, %v2535, 0
      %v2709 = vsel %vm2677, %v2540, 0
      %v2712 = vsel %vm2677, %v2545, 0
      %v2715 = vsel %vm2677, %v2550, 0
      %v2718 = vsel %vm2677, %v2555, 0
      %v2721 = vsel %vm2677, %v2560, 0
      %v2724 = vsel %vm2677, %v2565, 0
      %2726 = vmatprep.subr.mxu0 0.0
      %2727 = vmatpush1.xpose.msra.mxu0 %v2703
      %2728 = vmatprep.subr.mxu0 0.0
      %2729 = vmatpush1.xpose.msra.mxu0 %v2706
      %2730 = vmatprep.subr.mxu0 0.0
      %2731 = vmatpush1.xpose.msra.mxu0 %v2709
      %2732 = vmatprep.subr.mxu0 0.0
      %2733 = vmatpush1.xpose.msra.mxu0 %v2712
      %2734 = vmatprep.subr.mxu0 0.0
      %2735 = vmatpush1.xpose.msra.mxu0 %v2715
      %2736 = vmatprep.subr.mxu0 0.0
      %2737 = vmatpush1.xpose.msra.mxu0 %v2718
      %2738 = vmatprep.subr.mxu0 0.0
      %2739 = vmatpush1.xpose.msra.mxu0 %v2721
      %2740 = vmatprep.subr.mxu0 0.0
      %2741 = vmatpush1.xpose.msra.mxu0 %v2724
      %2742 = vmatprep.subr.mxu0 0.0
      %2743 = vmatpush1.xpose.msra.mxu0 0.0
      %2744 = vmatprep.subr.mxu0 0.0
      %2745 = vmatpush1.xpose.msra.mxu0 0.0
      %2746 = vmatprep.subr.mxu0 0.0
      %2747 = vmatpush1.xpose.msra.mxu0 0.0
      %2748 = vmatprep.subr.mxu0 0.0
      %2749 = vmatpush1.xpose.msra.mxu0 0.0
      %2750 = vmatprep.subr.mxu0 0.0
      %2751 = vmatpush1.xpose.msra.mxu0 0.0
      %2752 = vmatprep.subr.mxu0 0.0
      %2753 = vmatpush1.xpose.msra.mxu0 0.0
      %2754 = vmatprep.subr.mxu0 0.0
      %2755 = vmatpush1.xpose.msra.mxu0 0.0
      %2756 = vmatprep.subr.mxu0 0.0
      %2757 = vmatpush1.xpose.msra.mxu0 0.0
      %2758 = vmatprep.subr.mxu0 0.0
      %2759 = vmatpush1.xpose.msra.mxu0 0.0
      %2760 = vmatprep.subr.mxu0 0.0
      %2761 = vmatpush1.xpose.msra.mxu0 0.0
      %2762 = vmatprep.subr.mxu0 0.0
      %2763 = vmatpush1.xpose.msra.mxu0 0.0
      %2764 = vmatprep.subr.mxu0 0.0
      %2765 = vmatpush1.xpose.msra.mxu0 0.0
      %2766 = vmatprep.subr.mxu0 0.0
      %2767 = vmatpush1.xpose.msra.mxu0 0.0
      %2768 = vmatprep.subr.mxu0 0.0
      %2769 = vmatpush1.xpose.msra.mxu0 0.0
      %2770 = vmatprep.subr.mxu0 0.0
      %2771 = vmatpush1.xpose.msra.mxu0 0.0
      %2772 = vmatprep.subr.mxu0 0.0
      %2773 = vmatpush1.xpose.msra.mxu0 0.0
      %2774 = vmatprep.subr.mxu0 0.0
      %2775 = vmatpush1.xpose.msra.mxu0 0.0
      %2776 = vmatprep.subr.mxu0 0.0
      %2777 = vmatpush1.xpose.msra.mxu0 0.0
      %2778 = vmatprep.subr.mxu0 0.0
      %2779 = vmatpush1.xpose.msra.mxu0 0.0
      %2780 = vmatprep.subr.mxu0 0.0
      %2781 = vmatpush1.xpose.msra.mxu0 0.0
      %2782 = vmatprep.subr.mxu0 0.0
      %2783 = vmatpush1.xpose.msra.mxu0 0.0
      %2784 = vmatprep.subr.mxu0 0.0
      %2785 = vmatpush1.xpose.msra.mxu0 0.0
      %2786 = vmatprep.subr.mxu0 0.0
      %2787 = vmatpush1.xpose.msra.mxu0 0.0
      %2788 = vmatprep.subr.mxu0 0.0
      %2789 = vmatpush1.xpose.msra.mxu0 0.0
      %2790 = vmatprep.mubr.f32.mxu0 0.0
      %2791 = vmatmul.mubr.f32.gmra.mrb[0].mxu0 %v2679
      %v2792 = vpop.f32.mrb[0].mxu0
      %v2793 = vadd.f32 0.0, %v2792
      %v2794 = vpop.f32.mrb[0].mxu0
      %2795 = vmatprep.mubr.f32.mxu0 0.0
      %2796 = vmatmul.mubr.f32.gmra.mrb[0].mxu0 %v2682
      %v2797 = vpop.f32.mrb[0].mxu0
      %v2798 = vadd.f32 0.0, %v2797
      %v2799 = vpop.f32.mrb[0].mxu0
      %2800 = vmatprep.mubr.f32.mxu0 0.0
      %2801 = vmatmul.mubr.f32.gmra.mrb[0].mxu0 %v2685
      %v2802 = vpop.f32.mrb[0].mxu0
      %v2803 = vadd.f32 0.0, %v2802
      %v2804 = vpop.f32.mrb[0].mxu0
      %2805 = vmatprep.mubr.f32.mxu0 0.0
      %2806 = vmatmul.mubr.f32.gmra.mrb[0].mxu0 %v2688
      %v2807 = vpop.f32.mrb[0].mxu0
      %v2808 = vadd.f32 0.0, %v2807
      %v2809 = vpop.f32.mrb[0].mxu0
      %2810 = vmatprep.mubr.f32.mxu0 0.0
      %2811 = vmatmul.mubr.f32.gmra.mrb[0].mxu0 %v2691
      %v2812 = vpop.f32.mrb[0].mxu0
      %v2813 = vadd.f32 0.0, %v2812
      %v2814 = vpop.f32.mrb[0].mxu0
      %2815 = vmatprep.mubr.f32.mxu0 0.0
      %2816 = vmatmul.mubr.f32.gmra.mrb[0].mxu0 %v2694
      %v2817 = vpop.f32.mrb[0].mxu0
      %v2818 = vadd.f32 0.0, %v2817
      %v2819 = vpop.f32.mrb[0].mxu0
      %2820 = vmatprep.mubr.f32.mxu0 0.0
      %2821 = vmatmul.mubr.f32.gmra.mrb[0].mxu0 %v2697
      %v2822 = vpop.f32.mrb[0].mxu0
      %v2823 = vadd.f32 0.0, %v2822
      %v2824 = vpop.f32.mrb[0].mxu0
      %2825 = vmatprep.mubr.f32.mxu0 0.0
      %2826 = vmatmul.mubr.f32.gmra.mrb[0].mxu0 %v2700
      %v2827 = vpop.f32.mrb[0].mxu0
      %v2828 = vadd.f32 0.0, %v2827
      %v2829 = vpop.f32.mrb[0].mxu0
      %2830 = vdwg.mxu0
      %v2831 = vmul.f32 %v2793, 0.25
      %v2832 = vmul.f32 %v2798, 0.25
      %v2833 = vmul.f32 %v2803, 0.25
      %v2834 = vmul.f32 %v2808, 0.25
      %v2835 = vmul.f32 %v2813, 0.25
      %v2836 = vmul.f32 %v2818, 0.25
      %v2837 = vmul.f32 %v2823, 0.25
      %v2838 = vmul.f32 %v2828, 0.25
      %vm2839 = vcmask 523264
      %v2840 = vsel %vm2839, %v2831, -inf
      %2841 = vmax.xlane.f32.xlu0 %v2840
      %v2842 = vpop.xlane.xlu0 %2841
      %v2843 = vsel %vm2839, %v2832, -inf
      %2844 = vmax.xlane.f32.xlu0 %v2843
      %v2845 = vpop.xlane.xlu0 %2844
      %v2846 = vsel %vm2839, %v2833, -inf
      %2847 = vmax.xlane.f32.xlu0 %v2846
      %v2848 = vpop.xlane.xlu0 %2847
      %v2849 = vsel %vm2839, %v2834, -inf
      %2850 = vmax.xlane.f32.xlu0 %v2849
      %v2851 = vpop.xlane.xlu0 %2850
      %v2852 = vsel %vm2839, %v2835, -inf
      %2853 = vmax.xlane.f32.xlu0 %v2852
      %v2854 = vpop.xlane.xlu0 %2853
      %v2855 = vsel %vm2839, %v2836, -inf
      %2856 = vmax.xlane.f32.xlu0 %v2855
      %v2857 = vpop.xlane.xlu0 %2856
      %v2858 = vsel %vm2839, %v2837, -inf
      %2859 = vmax.xlane.f32.xlu0 %v2858
      %v2860 = vpop.xlane.xlu0 %2859
      %v2861 = vsel %vm2839, %v2838, -inf
      %2862 = vmax.xlane.f32.xlu0 %v2861
      %v2863 = vpop.xlane.xlu0 %2862
      %v2864 = vsub.f32 %v2831, %v2842
      %v2865 = vsub.f32 %v2832, %v2845
      %v2866 = vsub.f32 %v2833, %v2848
      %v2867 = vsub.f32 %v2834, %v2851
      %v2868 = vsub.f32 %v2835, %v2854
      %v2869 = vsub.f32 %v2836, %v2857
      %v2870 = vsub.f32 %v2837, %v2860
      %v2871 = vsub.f32 %v2838, %v2863
      %v2872 = vmul.f32 %v2864, 1.442695
      %v2873 = vpow.pop %v2872
      %v2874 = vmul.f32 %v2865, 1.442695
      %v2875 = vpow.pop %v2874
      %v2876 = vmul.f32 %v2866, 1.442695
      %v2877 = vpow.pop %v2876
      %v2878 = vmul.f32 %v2867, 1.442695
      %v2879 = vpow.pop %v2878
      %v2880 = vmul.f32 %v2868, 1.442695
      %v2881 = vpow.pop %v2880
      %v2882 = vmul.f32 %v2869, 1.442695
      %v2883 = vpow.pop %v2882
      %v2884 = vmul.f32 %v2870, 1.442695
      %v2885 = vpow.pop %v2884
      %v2886 = vmul.f32 %v2871, 1.442695
      %v2887 = vpow.pop %v2886
      %v2888 = vsel %vm2839, %v2873, 0.0
      %2889 = vadd.xlane.f32.xlu0 %v2888
      %v2890 = vpop.xlane.xlu0 %2889
      %v2891 = vsel %vm2839, %v2875, 0.0
      %2892 = vadd.xlane.f32.xlu0 %v2891
      %v2893 = vpop.xlane.xlu0 %2892
      %v2894 = vsel %vm2839, %v2877, 0.0
      %2895 = vadd.xlane.f32.xlu0 %v2894
      %v2896 = vpop.xlane.xlu0 %2895
      %v2897 = vsel %vm2839, %v2879, 0.0
      %2898 = vadd.xlane.f32.xlu0 %v2897
      %v2899 = vpop.xlane.xlu0 %2898
      %v2900 = vsel %vm2839, %v2881, 0.0
      %2901 = vadd.xlane.f32.xlu0 %v2900
      %v2902 = vpop.xlane.xlu0 %2901
      %v2903 = vsel %vm2839, %v2883, 0.0
      %2904 = vadd.xlane.f32.xlu0 %v2903
      %v2905 = vpop.xlane.xlu0 %2904
      %v2906 = vsel %vm2839, %v2885, 0.0
      %2907 = vadd.xlane.f32.xlu0 %v2906
      %v2908 = vpop.xlane.xlu0 %2907
      %v2909 = vsel %vm2839, %v2887, 0.0
      %2910 = vadd.xlane.f32.xlu0 %v2909
      %v2911 = vpop.xlane.xlu0 %2910
      %v2912 = vrcp.pop %v2890
      %v2913 = vrcp.pop %v2893
      %v2914 = vrcp.pop %v2896
      %v2915 = vrcp.pop %v2899
      %v2916 = vrcp.pop %v2902
      %v2917 = vrcp.pop %v2905
      %v2918 = vrcp.pop %v2908
      %v2919 = vrcp.pop %v2911
      %v2920 = vmul.f32 %v2873, %v2912
      %v2921 = vmul.f32 %v2875, %v2913
      %v2922 = vmul.f32 %v2877, %v2914
      %v2923 = vmul.f32 %v2879, %v2915
      %v2924 = vmul.f32 %v2881, %v2916
      %v2925 = vmul.f32 %v2883, %v2917
      %v2926 = vmul.f32 %v2885, %v2918
      %v2927 = vmul.f32 %v2887, %v2919
      %v2929 = vsel %vm2839, %v2920, 0
      %v2932 = vsel %vm2839, %v2921, 0
      %v2935 = vsel %vm2839, %v2922, 0
      %v2938 = vsel %vm2839, %v2923, 0
      %v2941 = vsel %vm2839, %v2924, 0
      %v2944 = vsel %vm2839, %v2925, 0
      %v2947 = vsel %vm2839, %v2926, 0
      %v2950 = vsel %vm2839, %v2927, 0
      %2952 = vmatprep.subr.mxu0 0.0
      %2953 = vmatpush1.msra.mxu0 %v2639
      %2954 = vmatprep.subr.mxu0 0.0
      %2955 = vmatpush1.msra.mxu0 %v2644
      %2956 = vmatprep.subr.mxu0 0.0
      %2957 = vmatpush1.msra.mxu0 %v2649
      %2958 = vmatprep.subr.mxu0 0.0
      %2959 = vmatpush1.msra.mxu0 %v2654
      %2960 = vmatprep.subr.mxu0 0.0
      %2961 = vmatpush1.msra.mxu0 %v2659
      %2962 = vmatprep.subr.mxu0 0.0
      %2963 = vmatpush1.msra.mxu0 %v2664
      %2964 = vmatprep.subr.mxu0 0.0
      %2965 = vmatpush1.msra.mxu0 %v2669
      %2966 = vmatprep.subr.mxu0 0.0
      %2967 = vmatpush1.msra.mxu0 %v2674
      %2968 = vmatprep.subr.mxu0 0.0
      %2969 = vmatpush1.msra.mxu0 0.0
      %2970 = vmatprep.subr.mxu0 0.0
      %2971 = vmatpush1.msra.mxu0 0.0
      %2972 = vmatprep.subr.mxu0 0.0
      %2973 = vmatpush1.msra.mxu0 0.0
      %2974 = vmatprep.subr.mxu0 0.0
      %2975 = vmatpush1.msra.mxu0 0.0
      %2976 = vmatprep.subr.mxu0 0.0
      %2977 = vmatpush1.msra.mxu0 0.0
      %2978 = vmatprep.subr.mxu0 0.0
      %2979 = vmatpush1.msra.mxu0 0.0
      %2980 = vmatprep.subr.mxu0 0.0
      %2981 = vmatpush1.msra.mxu0 0.0
      %2982 = vmatprep.subr.mxu0 0.0
      %2983 = vmatpush1.msra.mxu0 0.0
      %2984 = vmatprep.subr.mxu0 0.0
      %2985 = vmatpush1.msra.mxu0 0.0
      %2986 = vmatprep.subr.mxu0 0.0
      %2987 = vmatpush1.msra.mxu0 0.0
      %2988 = vmatprep.subr.mxu0 0.0
      %2989 = vmatpush1.msra.mxu0 0.0
      %2990 = vmatprep.subr.mxu0 0.0
      %2991 = vmatpush1.msra.mxu0 0.0
      %2992 = vmatprep.subr.mxu0 0.0
      %2993 = vmatpush1.msra.mxu0 0.0
      %2994 = vmatprep.subr.mxu0 0.0
      %2995 = vmatpush1.msra.mxu0 0.0
      %2996 = vmatprep.subr.mxu0 0.0
      %2997 = vmatpush1.msra.mxu0 0.0
      %2998 = vmatprep.subr.mxu0 0.0
      %2999 = vmatpush1.msra.mxu0 0.0
      %3000 = vmatprep.subr.mxu0 0.0
      %3001 = vmatpush1.msra.mxu0 0.0
      %3002 = vmatprep.subr.mxu0 0.0
      %3003 = vmatpush1.msra.mxu0 0.0
      %3004 = vmatprep.subr.mxu0 0.0
      %3005 = vmatpush1.msra.mxu0 0.0
      %3006 = vmatprep.subr.mxu0 0.0
      %3007 = vmatpush1.msra.mxu0 0.0
      %3008 = vmatprep.subr.mxu0 0.0
      %3009 = vmatpush1.msra.mxu0 0.0
      %3010 = vmatprep.subr.mxu0 0.0
      %3011 = vmatpush1.msra.mxu0 0.0
      %3012 = vmatprep.subr.mxu0 0.0
      %3013 = vmatpush1.msra.mxu0 0.0
      %3014 = vmatprep.subr.mxu0 0.0
      %3015 = vmatpush1.msra.mxu0 0.0
      %3016 = vmatprep.mubr.f32.mxu0 0.0
      %3017 = vmatmul.mubr.f32.gmra.mrb[0].mxu0 %v2929
      %v3018 = vpop.f32.mrb[0].mxu0
      %v3019 = vadd.f32 0.0, %v3018
      %v3020 = vpop.f32.mrb[0].mxu0
      %3021 = vmatprep.mubr.f32.mxu0 0.0
      %3022 = vmatmul.mubr.f32.gmra.mrb[0].mxu0 %v2932
      %v3023 = vpop.f32.mrb[0].mxu0
      %v3024 = vadd.f32 0.0, %v3023
      %v3025 = vpop.f32.mrb[0].mxu0
      %3026 = vmatprep.mubr.f32.mxu0 0.0
      %3027 = vmatmul.mubr.f32.gmra.mrb[0].mxu0 %v2935
      %v3028 = vpop.f32.mrb[0].mxu0
      %v3029 = vadd.f32 0.0, %v3028
      %v3030 = vpop.f32.mrb[0].mxu0
      %3031 = vmatprep.mubr.f32.mxu0 0.0
      %3032 = vmatmul.mubr.f32.gmra.mrb[0].mxu0 %v2938
      %v3033 = vpop.f32.mrb[0].mxu0
      %v3034 = vadd.f32 0.0, %v3033
      %v3035 = vpop.f32.mrb[0].mxu0
      %3036 = vmatprep.mubr.f32.mxu0 0.0
      %3037 = vmatmul.mubr.f32.gmra.mrb[0].mxu0 %v2941
      %v3038 = vpop.f32.mrb[0].mxu0
      %v3039 = vadd.f32 0.0, %v3038
      %v3040 = vpop.f32.mrb[0].mxu0
      %3041 = vmatprep.mubr.f32.mxu0 0.0
      %3042 = vmatmul.mubr.f32.gmra.mrb[0].mxu0 %v2944
      %v3043 = vpop.f32.mrb[0].mxu0
      %v3044 = vadd.f32 0.0, %v3043
      %v3045 = vpop.f32.mrb[0].mxu0
      %3046 = vmatprep.mubr.f32.mxu0 0.0
      %3047 = vmatmul.mubr.f32.gmra.mrb[0].mxu0 %v2947
      %v3048 = vpop.f32.mrb[0].mxu0
      %v3049 = vadd.f32 0.0, %v3048
      %v3050 = vpop.f32.mrb[0].mxu0
      %3051 = vmatprep.mubr.f32.mxu0 0.0
      %3052 = vmatmul.mubr.f32.gmra.mrb[0].mxu0 %v2950
      %v3053 = vpop.f32.mrb[0].mxu0
      %v3054 = vadd.f32 0.0, %v3053
      %v3055 = vpop.f32.mrb[0].mxu0
      %3056 = vdwg.mxu0
      %v3057 = vld [vmem:[%s35] sm:$0xff]
      %v3058 = vld [vmem:[%s35 + $0x8] sm:$0xff]
      %v3060 = vsel %vm2677, %v3019, 0
      %v3063 = vsel %vm2677, %v3024, 0
      %v3066 = vsel %vm2677, %v3029, 0
      %v3069 = vsel %vm2677, %v3034, 0
      %v3072 = vsel %vm2677, %v3039, 0
      %v3075 = vsel %vm2677, %v3044, 0
      %v3078 = vsel %vm2677, %v3049, 0
      %v3081 = vsel %vm2677, %v3054, 0
      %3083 = vmatprep.subr.mxu0 0.0
      %3084 = vmatpush1.msra.mxu0 %v3057
      %3085 = vmatprep.subr.mxu0 0.0
      %3086 = vmatpush1.msra.mxu0 %v3058
      %3087 = vmatprep.subr.mxu0 0.0
      %3088 = vmatpush1.msra.mxu0 0.0
      %3089 = vmatprep.subr.mxu0 0.0
      %3090 = vmatpush1.msra.mxu0 0.0
      %3091 = vmatprep.subr.mxu0 0.0
      %3092 = vmatpush1.msra.mxu0 0.0
      %3093 = vmatprep.subr.mxu0 0.0
      %3094 = vmatpush1.msra.mxu0 0.0
      %3095 = vmatprep.subr.mxu0 0.0
      %3096 = vmatpush1.msra.mxu0 0.0
      %3097 = vmatprep.subr.mxu0 0.0
      %3098 = vmatpush1.msra.mxu0 0.0
      %3099 = vmatprep.subr.mxu0 0.0
      %3100 = vmatpush1.msra.mxu0 0.0
      %3101 = vmatprep.subr.mxu0 0.0
      %3102 = vmatpush1.msra.mxu0 0.0
      %3103 = vmatprep.subr.mxu0 0.0
      %3104 = vmatpush1.msra.mxu0 0.0
      %3105 = vmatprep.subr.mxu0 0.0
      %3106 = vmatpush1.msra.mxu0 0.0
      %3107 = vmatprep.subr.mxu0 0.0
      %3108 = vmatpush1.msra.mxu0 0.0
      %3109 = vmatprep.subr.mxu0 0.0
      %3110 = vmatpush1.msra.mxu0 0.0
      %3111 = vmatprep.subr.mxu0 0.0
      %3112 = vmatpush1.msra.mxu0 0.0
      %3113 = vmatprep.subr.mxu0 0.0
      %3114 = vmatpush1.msra.mxu0 0.0
      %3115 = vmatprep.subr.mxu0 0.0
      %3116 = vmatpush1.msra.mxu0 0.0
      %3117 = vmatprep.subr.mxu0 0.0
      %3118 = vmatpush1.msra.mxu0 0.0
      %3119 = vmatprep.subr.mxu0 0.0
      %3120 = vmatpush1.msra.mxu0 0.0
      %3121 = vmatprep.subr.mxu0 0.0
      %3122 = vmatpush1.msra.mxu0 0.0
      %3123 = vmatprep.subr.mxu0 0.0
      %3124 = vmatpush1.msra.mxu0 0.0
      %3125 = vmatprep.subr.mxu0 0.0
      %3126 = vmatpush1.msra.mxu0 0.0
      %3127 = vmatprep.subr.mxu0 0.0
      %3128 = vmatpush1.msra.mxu0 0.0
      %3129 = vmatprep.subr.mxu0 0.0
      %3130 = vmatpush1.msra.mxu0 0.0
      %3131 = vmatprep.subr.mxu0 0.0
      %3132 = vmatpush1.msra.mxu0 0.0
      %3133 = vmatprep.subr.mxu0 0.0
      %3134 = vmatpush1.msra.mxu0 0.0
      %3135 = vmatprep.subr.mxu0 0.0
      %3136 = vmatpush1.msra.mxu0 0.0
      %3137 = vmatprep.subr.mxu0 0.0
      %3138 = vmatpush1.msra.mxu0 0.0
      %3139 = vmatprep.subr.mxu0 0.0
      %3140 = vmatpush1.msra.mxu0 0.0
      %3141 = vmatprep.subr.mxu0 0.0
      %3142 = vmatpush1.msra.mxu0 0.0
      %3143 = vmatprep.subr.mxu0 0.0
      %3144 = vmatpush1.msra.mxu0 0.0
      %3145 = vmatprep.subr.mxu0 0.0
      %3146 = vmatpush1.msra.mxu0 0.0
      %3147 = vmatprep.mubr.f32.mxu0 0.0
      %3148 = vmatmul.mubr.f32.gmra.mrb[0].mxu0 %v3060
      %v3149 = vpop.f32.mrb[0].mxu0
      %v3150 = vadd.f32 0.0, %v3149
      %v3151 = vpop.f32.mrb[0].mxu0
      %3152 = vmatprep.mubr.f32.mxu0 0.0
      %3153 = vmatmul.mubr.f32.gmra.mrb[0].mxu0 %v3063
      %v3154 = vpop.f32.mrb[0].mxu0
      %v3155 = vadd.f32 0.0, %v3154
      %v3156 = vpop.f32.mrb[0].mxu0
      %3157 = vmatprep.mubr.f32.mxu0 0.0
      %3158 = vmatmul.mubr.f32.gmra.mrb[0].mxu0 %v3066
      %v3159 = vpop.f32.mrb[0].mxu0
      %v3160 = vadd.f32 0.0, %v3159
      %v3161 = vpop.f32.mrb[0].mxu0
      %3162 = vmatprep.mubr.f32.mxu0 0.0
      %3163 = vmatmul.mubr.f32.gmra.mrb[0].mxu0 %v3069
      %v3164 = vpop.f32.mrb[0].mxu0
      %v3165 = vadd.f32 0.0, %v3164
      %v3166 = vpop.f32.mrb[0].mxu0
      %3167 = vmatprep.mubr.f32.mxu0 0.0
      %3168 = vmatmul.mubr.f32.gmra.mrb[0].mxu0 %v3072
      %v3169 = vpop.f32.mrb[0].mxu0
      %v3170 = vadd.f32 0.0, %v3169
      %v3171 = vpop.f32.mrb[0].mxu0
      %3172 = vmatprep.mubr.f32.mxu0 0.0
      %3173 = vmatmul.mubr.f32.gmra.mrb[0].mxu0 %v3075
      %v3174 = vpop.f32.mrb[0].mxu0
      %v3175 = vadd.f32 0.0, %v3174
      %v3176 = vpop.f32.mrb[0].mxu0
      %3177 = vmatprep.mubr.f32.mxu0 0.0
      %3178 = vmatmul.mubr.f32.gmra.mrb[0].mxu0 %v3078
      %v3179 = vpop.f32.mrb[0].mxu0
      %v3180 = vadd.f32 0.0, %v3179
      %v3181 = vpop.f32.mrb[0].mxu0
      %3182 = vmatprep.mubr.f32.mxu0 0.0
      %3183 = vmatmul.mubr.f32.gmra.mrb[0].mxu0 %v3081
      %v3184 = vpop.f32.mrb[0].mxu0
      %v3185 = vadd.f32 0.0, %v3184
      %v3186 = vpop.f32.mrb[0].mxu0
      %3187 = vdwg.mxu0
      %v3189 = vlaneseq
      %v3190 = vshrl.u32 %v3189, 7
      %v3191 = vsub.s32 0, %v3190
      %v3192 = vrot.slane %v2325, %v3191
      %v3194 = vadd.f32 %v3192, %v3150
      %v3195 = vadd.f32 %v3192, %v3155
      %v3196 = vadd.f32 %v3192, %v3160
      %v3197 = vadd.f32 %v3192, %v3165
      %v3198 = vadd.f32 %v3192, %v3170
      %v3199 = vadd.f32 %v3192, %v3175
      %v3200 = vadd.f32 %v3192, %v3180
      %v3201 = vadd.f32 %v3192, %v3185
      %s3202 = scalar_lea.vmem %s29, 32
      %v3203 = vld [vmem:[%s3202] sm:$0xff]
      %v3204 = vld [vmem:[%s3202 + $0x8] sm:$0xff]
      %v3205 = vld [vmem:[%s3202 + $0x10] sm:$0xff]
      %v3206 = vld [vmem:[%s3202 + $0x18] sm:$0xff]
      %3207 = vmatprep.subr.mxu0 0.0
      %3208 = vmatpush1.msra.mxu0 %v3203
      %3209 = vmatprep.subr.mxu0 0.0
      %3210 = vmatpush1.msra.mxu0 %v3204
      %3211 = vmatprep.subr.mxu0 0.0
      %3212 = vmatpush1.msra.mxu0 %v3205
      %3213 = vmatprep.subr.mxu0 0.0
      %3214 = vmatpush1.msra.mxu0 %v3206
      %3215 = vmatprep.subr.mxu0 0.0
      %3216 = vmatpush1.msra.mxu0 0.0
      %3217 = vmatprep.subr.mxu0 0.0
      %3218 = vmatpush1.msra.mxu0 0.0
      %3219 = vmatprep.subr.mxu0 0.0
      %3220 = vmatpush1.msra.mxu0 0.0
      %3221 = vmatprep.subr.mxu0 0.0
      %3222 = vmatpush1.msra.mxu0 0.0
      %3223 = vmatprep.subr.mxu0 0.0
      %3224 = vmatpush1.msra.mxu0 0.0
      %3225 = vmatprep.subr.mxu0 0.0
      %3226 = vmatpush1.msra.mxu0 0.0
      %3227 = vmatprep.subr.mxu0 0.0
      %3228 = vmatpush1.msra.mxu0 0.0
      %3229 = vmatprep.subr.mxu0 0.0
      %3230 = vmatpush1.msra.mxu0 0.0
      %3231 = vmatprep.subr.mxu0 0.0
      %3232 = vmatpush1.msra.mxu0 0.0
      %3233 = vmatprep.subr.mxu0 0.0
      %3234 = vmatpush1.msra.mxu0 0.0
      %3235 = vmatprep.subr.mxu0 0.0
      %3236 = vmatpush1.msra.mxu0 0.0
      %3237 = vmatprep.subr.mxu0 0.0
      %3238 = vmatpush1.msra.mxu0 0.0
      %3239 = vmatprep.subr.mxu0 0.0
      %3240 = vmatpush1.msra.mxu0 0.0
      %3241 = vmatprep.subr.mxu0 0.0
      %3242 = vmatpush1.msra.mxu0 0.0
      %3243 = vmatprep.subr.mxu0 0.0
      %3244 = vmatpush1.msra.mxu0 0.0
      %3245 = vmatprep.subr.mxu0 0.0
      %3246 = vmatpush1.msra.mxu0 0.0
      %3247 = vmatprep.subr.mxu0 0.0
      %3248 = vmatpush1.msra.mxu0 0.0
      %3249 = vmatprep.subr.mxu0 0.0
      %3250 = vmatpush1.msra.mxu0 0.0
      %3251 = vmatprep.subr.mxu0 0.0
      %3252 = vmatpush1.msra.mxu0 0.0
      %3253 = vmatprep.subr.mxu0 0.0
      %3254 = vmatpush1.msra.mxu0 0.0
      %3255 = vmatprep.subr.mxu0 0.0
      %3256 = vmatpush1.msra.mxu0 0.0
      %3257 = vmatprep.subr.mxu0 0.0
      %3258 = vmatpush1.msra.mxu0 0.0
      %3259 = vmatprep.subr.mxu0 0.0
      %3260 = vmatpush1.msra.mxu0 0.0
      %3261 = vmatprep.subr.mxu0 0.0
      %3262 = vmatpush1.msra.mxu0 0.0
      %3263 = vmatprep.subr.mxu0 0.0
      %3264 = vmatpush1.msra.mxu0 0.0
      %3265 = vmatprep.subr.mxu0 0.0
      %3266 = vmatpush1.msra.mxu0 0.0
      %3267 = vmatprep.subr.mxu0 0.0
      %3268 = vmatpush1.msra.mxu0 0.0
      %3269 = vmatprep.subr.mxu0 0.0
      %3270 = vmatpush1.msra.mxu0 0.0
      %3271 = vmatprep.mubr.f32.mxu0 0.0
      %3272 = vmatmul.mubr.f32.gmra.mrb[0].mxu0 %v2331
      %v3273 = vpop.f32.mrb[0].mxu0
      %v3274 = vadd.f32 0.0, %v3273
      %v3275 = vpop.f32.mrb[0].mxu0
      %3276 = vmatprep.mubr.f32.mxu0 0.0
      %3277 = vmatmul.mubr.f32.gmra.mrb[0].mxu0 %v2334
      %v3278 = vpop.f32.mrb[0].mxu0
      %v3279 = vadd.f32 0.0, %v3278
      %v3280 = vpop.f32.mrb[0].mxu0
      %3281 = vmatprep.mubr.f32.mxu0 0.0
      %3282 = vmatmul.mubr.f32.gmra.mrb[0].mxu0 %v2337
      %v3283 = vpop.f32.mrb[0].mxu0
      %v3284 = vadd.f32 0.0, %v3283
      %v3285 = vpop.f32.mrb[0].mxu0
      %3286 = vmatprep.mubr.f32.mxu0 0.0
      %3287 = vmatmul.mubr.f32.gmra.mrb[0].mxu0 %v2340
      %v3288 = vpop.f32.mrb[0].mxu0
      %v3289 = vadd.f32 0.0, %v3288
      %v3290 = vpop.f32.mrb[0].mxu0
      %3291 = vmatprep.mubr.f32.mxu0 0.0
      %3292 = vmatmul.mubr.f32.gmra.mrb[0].mxu0 %v2343
      %v3293 = vpop.f32.mrb[0].mxu0
      %v3294 = vadd.f32 0.0, %v3293
      %v3295 = vpop.f32.mrb[0].mxu0
      %3296 = vmatprep.mubr.f32.mxu0 0.0
      %3297 = vmatmul.mubr.f32.gmra.mrb[0].mxu0 %v2346
      %v3298 = vpop.f32.mrb[0].mxu0
      %v3299 = vadd.f32 0.0, %v3298
      %v3300 = vpop.f32.mrb[0].mxu0
      %3301 = vmatprep.mubr.f32.mxu0 0.0
      %3302 = vmatmul.mubr.f32.gmra.mrb[0].mxu0 %v2349
      %v3303 = vpop.f32.mrb[0].mxu0
      %v3304 = vadd.f32 0.0, %v3303
      %v3305 = vpop.f32.mrb[0].mxu0
      %3306 = vmatprep.mubr.f32.mxu0 0.0
      %3307 = vmatmul.mubr.f32.gmra.mrb[0].mxu0 %v2352
      %v3308 = vpop.f32.mrb[0].mxu0
      %v3309 = vadd.f32 0.0, %v3308
      %v3310 = vpop.f32.mrb[0].mxu0
      %3311 = vdwg.mxu0
      %s3312 = scalar_lea.vmem %s31, 32
      %v3313 = vld [vmem:[%s3312] sm:$0xff]
      %v3314 = vld [vmem:[%s3312 + $0x8] sm:$0xff]
      %v3315 = vld [vmem:[%s3312 + $0x10] sm:$0xff]
      %v3316 = vld [vmem:[%s3312 + $0x18] sm:$0xff]
      %3317 = vmatprep.subr.mxu0 0.0
      %3318 = vmatpush1.msra.mxu0 %v3313
      %3319 = vmatprep.subr.mxu0 0.0
      %3320 = vmatpush1.msra.mxu0 %v3314
      %3321 = vmatprep.subr.mxu0 0.0
      %3322 = vmatpush1.msra.mxu0 %v3315
      %3323 = vmatprep.subr.mxu0 0.0
      %3324 = vmatpush1.msra.mxu0 %v3316
      %3325 = vmatprep.subr.mxu0 0.0
      %3326 = vmatpush1.msra.mxu0 0.0
      %3327 = vmatprep.subr.mxu0 0.0
      %3328 = vmatpush1.msra.mxu0 0.0
      %3329 = vmatprep.subr.mxu0 0.0
      %3330 = vmatpush1.msra.mxu0 0.0
      %3331 = vmatprep.subr.mxu0 0.0
      %3332 = vmatpush1.msra.mxu0 0.0
      %3333 = vmatprep.subr.mxu0 0.0
      %3334 = vmatpush1.msra.mxu0 0.0
      %3335 = vmatprep.subr.mxu0 0.0
      %3336 = vmatpush1.msra.mxu0 0.0
      %3337 = vmatprep.subr.mxu0 0.0
      %3338 = vmatpush1.msra.mxu0 0.0
      %3339 = vmatprep.subr.mxu0 0.0
      %3340 = vmatpush1.msra.mxu0 0.0
      %3341 = vmatprep.subr.mxu0 0.0
      %3342 = vmatpush1.msra.mxu0 0.0
      %3343 = vmatprep.subr.mxu0 0.0
      %3344 = vmatpush1.msra.mxu0 0.0
      %3345 = vmatprep.subr.mxu0 0.0
      %3346 = vmatpush1.msra.mxu0 0.0
      %3347 = vmatprep.subr.mxu0 0.0
      %3348 = vmatpush1.msra.mxu0 0.0
      %3349 = vmatprep.subr.mxu0 0.0
      %3350 = vmatpush1.msra.mxu0 0.0
      %3351 = vmatprep.subr.mxu0 0.0
      %3352 = vmatpush1.msra.mxu0 0.0
      %3353 = vmatprep.subr.mxu0 0.0
      %3354 = vmatpush1.msra.mxu0 0.0
      %3355 = vmatprep.subr.mxu0 0.0
      %3356 = vmatpush1.msra.mxu0 0.0
      %3357 = vmatprep.subr.mxu0 0.0
      %3358 = vmatpush1.msra.mxu0 0.0
      %3359 = vmatprep.subr.mxu0 0.0
      %3360 = vmatpush1.msra.mxu0 0.0
      %3361 = vmatprep.subr.mxu0 0.0
      %3362 = vmatpush1.msra.mxu0 0.0
      %3363 = vmatprep.subr.mxu0 0.0
      %3364 = vmatpush1.msra.mxu0 0.0
      %3365 = vmatprep.subr.mxu0 0.0
      %3366 = vmatpush1.msra.mxu0 0.0
      %3367 = vmatprep.subr.mxu0 0.0
      %3368 = vmatpush1.msra.mxu0 0.0
      %3369 = vmatprep.subr.mxu0 0.0
      %3370 = vmatpush1.msra.mxu0 0.0
      %3371 = vmatprep.subr.mxu0 0.0
      %3372 = vmatpush1.msra.mxu0 0.0
      %3373 = vmatprep.subr.mxu0 0.0
      %3374 = vmatpush1.msra.mxu0 0.0
      %3375 = vmatprep.subr.mxu0 0.0
      %3376 = vmatpush1.msra.mxu0 0.0
      %3377 = vmatprep.subr.mxu0 0.0
      %3378 = vmatpush1.msra.mxu0 0.0
      %3379 = vmatprep.subr.mxu0 0.0
      %3380 = vmatpush1.msra.mxu0 0.0
      %3381 = vmatprep.mubr.f32.mxu0 0.0
      %3382 = vmatmul.mubr.f32.gmra.mrb[0].mxu0 %v2331
      %v3383 = vpop.f32.mrb[0].mxu0
      %v3384 = vadd.f32 0.0, %v3383
      %v3385 = vpop.f32.mrb[0].mxu0
      %3386 = vmatprep.mubr.f32.mxu0 0.0
      %3387 = vmatmul.mubr.f32.gmra.mrb[0].mxu0 %v2334
      %v3388 = vpop.f32.mrb[0].mxu0
      %v3389 = vadd.f32 0.0, %v3388
      %v3390 = vpop.f32.mrb[0].mxu0
      %3391 = vmatprep.mubr.f32.mxu0 0.0
      %3392 = vmatmul.mubr.f32.gmra.mrb[0].mxu0 %v2337
      %v3393 = vpop.f32.mrb[0].mxu0
      %v3394 = vadd.f32 0.0, %v3393
      %v3395 = vpop.f32.mrb[0].mxu0
      %3396 = vmatprep.mubr.f32.mxu0 0.0
      %3397 = vmatmul.mubr.f32.gmra.mrb[0].mxu0 %v2340
      %v3398 = vpop.f32.mrb[0].mxu0
      %v3399 = vadd.f32 0.0, %v3398
      %v3400 = vpop.f32.mrb[0].mxu0
      %3401 = vmatprep.mubr.f32.mxu0 0.0
      %3402 = vmatmul.mubr.f32.gmra.mrb[0].mxu0 %v2343
      %v3403 = vpop.f32.mrb[0].mxu0
      %v3404 = vadd.f32 0.0, %v3403
      %v3405 = vpop.f32.mrb[0].mxu0
      %3406 = vmatprep.mubr.f32.mxu0 0.0
      %3407 = vmatmul.mubr.f32.gmra.mrb[0].mxu0 %v2346
      %v3408 = vpop.f32.mrb[0].mxu0
      %v3409 = vadd.f32 0.0, %v3408
      %v3410 = vpop.f32.mrb[0].mxu0
      %3411 = vmatprep.mubr.f32.mxu0 0.0
      %3412 = vmatmul.mubr.f32.gmra.mrb[0].mxu0 %v2349
      %v3413 = vpop.f32.mrb[0].mxu0
      %v3414 = vadd.f32 0.0, %v3413
      %v3415 = vpop.f32.mrb[0].mxu0
      %3416 = vmatprep.mubr.f32.mxu0 0.0
      %3417 = vmatmul.mubr.f32.gmra.mrb[0].mxu0 %v2352
      %v3418 = vpop.f32.mrb[0].mxu0
      %v3419 = vadd.f32 0.0, %v3418
      %v3420 = vpop.f32.mrb[0].mxu0
      %3421 = vdwg.mxu0
      %s3422 = scalar_lea.vmem %s33, 32
      %v3423 = vld [vmem:[%s3422] sm:$0xff]
      %v3424 = vld [vmem:[%s3422 + $0x8] sm:$0xff]
      %v3425 = vld [vmem:[%s3422 + $0x10] sm:$0xff]
      %v3426 = vld [vmem:[%s3422 + $0x18] sm:$0xff]
      %3427 = vmatprep.subr.mxu0 0.0
      %3428 = vmatpush1.msra.mxu0 %v3423
      %3429 = vmatprep.subr.mxu0 0.0
      %3430 = vmatpush1.msra.mxu0 %v3424
      %3431 = vmatprep.subr.mxu0 0.0
      %3432 = vmatpush1.msra.mxu0 %v3425
      %3433 = vmatprep.subr.mxu0 0.0
      %3434 = vmatpush1.msra.mxu0 %v3426
      %3435 = vmatprep.subr.mxu0 0.0
      %3436 = vmatpush1.msra.mxu0 0.0
      %3437 = vmatprep.subr.mxu0 0.0
      %3438 = vmatpush1.msra.mxu0 0.0
      %3439 = vmatprep.subr.mxu0 0.0
      %3440 = vmatpush1.msra.mxu0 0.0
      %3441 = vmatprep.subr.mxu0 0.0
      %3442 = vmatpush1.msra.mxu0 0.0
      %3443 = vmatprep.subr.mxu0 0.0
      %3444 = vmatpush1.msra.mxu0 0.0
      %3445 = vmatprep.subr.mxu0 0.0
      %3446 = vmatpush1.msra.mxu0 0.0
      %3447 = vmatprep.subr.mxu0 0.0
      %3448 = vmatpush1.msra.mxu0 0.0
      %3449 = vmatprep.subr.mxu0 0.0
      %3450 = vmatpush1.msra.mxu0 0.0
      %3451 = vmatprep.subr.mxu0 0.0
      %3452 = vmatpush1.msra.mxu0 0.0
      %3453 = vmatprep.subr.mxu0 0.0
      %3454 = vmatpush1.msra.mxu0 0.0
      %3455 = vmatprep.subr.mxu0 0.0
      %3456 = vmatpush1.msra.mxu0 0.0
      %3457 = vmatprep.subr.mxu0 0.0
      %3458 = vmatpush1.msra.mxu0 0.0
      %3459 = vmatprep.subr.mxu0 0.0
      %3460 = vmatpush1.msra.mxu0 0.0
      %3461 = vmatprep.subr.mxu0 0.0
      %3462 = vmatpush1.msra.mxu0 0.0
      %3463 = vmatprep.subr.mxu0 0.0
      %3464 = vmatpush1.msra.mxu0 0.0
      %3465 = vmatprep.subr.mxu0 0.0
      %3466 = vmatpush1.msra.mxu0 0.0
      %3467 = vmatprep.subr.mxu0 0.0
      %3468 = vmatpush1.msra.mxu0 0.0
      %3469 = vmatprep.subr.mxu0 0.0
      %3470 = vmatpush1.msra.mxu0 0.0
      %3471 = vmatprep.subr.mxu0 0.0
      %3472 = vmatpush1.msra.mxu0 0.0
      %3473 = vmatprep.subr.mxu0 0.0
      %3474 = vmatpush1.msra.mxu0 0.0
      %3475 = vmatprep.subr.mxu0 0.0
      %3476 = vmatpush1.msra.mxu0 0.0
      %3477 = vmatprep.subr.mxu0 0.0
      %3478 = vmatpush1.msra.mxu0 0.0
      %3479 = vmatprep.subr.mxu0 0.0
      %3480 = vmatpush1.msra.mxu0 0.0
      %3481 = vmatprep.subr.mxu0 0.0
      %3482 = vmatpush1.msra.mxu0 0.0
      %3483 = vmatprep.subr.mxu0 0.0
      %3484 = vmatpush1.msra.mxu0 0.0
      %3485 = vmatprep.subr.mxu0 0.0
      %3486 = vmatpush1.msra.mxu0 0.0
      %3487 = vmatprep.subr.mxu0 0.0
      %3488 = vmatpush1.msra.mxu0 0.0
      %3489 = vmatprep.subr.mxu0 0.0
      %3490 = vmatpush1.msra.mxu0 0.0
      %3491 = vmatprep.mubr.f32.mxu0 0.0
      %3492 = vmatmul.mubr.f32.gmra.mrb[0].mxu0 %v2331
      %v3493 = vpop.f32.mrb[0].mxu0
      %v3494 = vadd.f32 0.0, %v3493
      %v3495 = vpop.f32.mrb[0].mxu0
      %3496 = vmatprep.mubr.f32.mxu0 0.0
      %3497 = vmatmul.mubr.f32.gmra.mrb[0].mxu0 %v2334
      %v3498 = vpop.f32.mrb[0].mxu0
      %v3499 = vadd.f32 0.0, %v3498
      %v3500 = vpop.f32.mrb[0].mxu0
      %3501 = vmatprep.mubr.f32.mxu0 0.0
      %3502 = vmatmul.mubr.f32.gmra.mrb[0].mxu0 %v2337
      %v3503 = vpop.f32.mrb[0].mxu0
      %v3504 = vadd.f32 0.0, %v3503
      %v3505 = vpop.f32.mrb[0].mxu0
      %3506 = vmatprep.mubr.f32.mxu0 0.0
      %3507 = vmatmul.mubr.f32.gmra.mrb[0].mxu0 %v2340
      %v3508 = vpop.f32.mrb[0].mxu0
      %v3509 = vadd.f32 0.0, %v3508
      %v3510 = vpop.f32.mrb[0].mxu0
      %3511 = vmatprep.mubr.f32.mxu0 0.0
      %3512 = vmatmul.mubr.f32.gmra.mrb[0].mxu0 %v2343
      %v3513 = vpop.f32.mrb[0].mxu0
      %v3514 = vadd.f32 0.0, %v3513
      %v3515 = vpop.f32.mrb[0].mxu0
      %3516 = vmatprep.mubr.f32.mxu0 0.0
      %3517 = vmatmul.mubr.f32.gmra.mrb[0].mxu0 %v2346
      %v3518 = vpop.f32.mrb[0].mxu0
      %v3519 = vadd.f32 0.0, %v3518
      %v3520 = vpop.f32.mrb[0].mxu0
      %3521 = vmatprep.mubr.f32.mxu0 0.0
      %3522 = vmatmul.mubr.f32.gmra.mrb[0].mxu0 %v2349
      %v3523 = vpop.f32.mrb[0].mxu0
      %v3524 = vadd.f32 0.0, %v3523
      %v3525 = vpop.f32.mrb[0].mxu0
      %3526 = vmatprep.mubr.f32.mxu0 0.0
      %3527 = vmatmul.mubr.f32.gmra.mrb[0].mxu0 %v2352
      %v3528 = vpop.f32.mrb[0].mxu0
      %v3529 = vadd.f32 0.0, %v3528
      %v3530 = vpop.f32.mrb[0].mxu0
      %3531 = vdwg.mxu0
      %v3533 = vsel %vm2677, %v3274, 0
      %v3536 = vsel %vm2677, %v3279, 0
      %v3539 = vsel %vm2677, %v3284, 0
      %v3542 = vsel %vm2677, %v3289, 0
      %v3545 = vsel %vm2677, %v3294, 0
      %v3548 = vsel %vm2677, %v3299, 0
      %v3551 = vsel %vm2677, %v3304, 0
      %v3554 = vsel %vm2677, %v3309, 0
      %v3557 = vsel %vm2677, %v3384, 0
      %v3560 = vsel %vm2677, %v3389, 0
      %v3563 = vsel %vm2677, %v3394, 0
      %v3566 = vsel %vm2677, %v3399, 0
      %v3569 = vsel %vm2677, %v3404, 0
      %v3572 = vsel %vm2677, %v3409, 0
      %v3575 = vsel %vm2677, %v3414, 0
      %v3578 = vsel %vm2677, %v3419, 0
      %3580 = vmatprep.subr.mxu0 0.0
      %3581 = vmatpush1.xpose.msra.mxu0 %v3557
      %3582 = vmatprep.subr.mxu0 0.0
      %3583 = vmatpush1.xpose.msra.mxu0 %v3560
      %3584 = vmatprep.subr.mxu0 0.0
      %3585 = vmatpush1.xpose.msra.mxu0 %v3563
      %3586 = vmatprep.subr.mxu0 0.0
      %3587 = vmatpush1.xpose.msra.mxu0 %v3566
      %3588 = vmatprep.subr.mxu0 0.0
      %3589 = vmatpush1.xpose.msra.mxu0 %v3569
      %3590 = vmatprep.subr.mxu0 0.0
      %3591 = vmatpush1.xpose.msra.mxu0 %v3572
      %3592 = vmatprep.subr.mxu0 0.0
      %3593 = vmatpush1.xpose.msra.mxu0 %v3575
      %3594 = vmatprep.subr.mxu0 0.0
      %3595 = vmatpush1.xpose.msra.mxu0 %v3578
      %3596 = vmatprep.subr.mxu0 0.0
      %3597 = vmatpush1.xpose.msra.mxu0 0.0
      %3598 = vmatprep.subr.mxu0 0.0
      %3599 = vmatpush1.xpose.msra.mxu0 0.0
      %3600 = vmatprep.subr.mxu0 0.0
      %3601 = vmatpush1.xpose.msra.mxu0 0.0
      %3602 = vmatprep.subr.mxu0 0.0
      %3603 = vmatpush1.xpose.msra.mxu0 0.0
      %3604 = vmatprep.subr.mxu0 0.0
      %3605 = vmatpush1.xpose.msra.mxu0 0.0
      %3606 = vmatprep.subr.mxu0 0.0
      %3607 = vmatpush1.xpose.msra.mxu0 0.0
      %3608 = vmatprep.subr.mxu0 0.0
      %3609 = vmatpush1.xpose.msra.mxu0 0.0
      %3610 = vmatprep.subr.mxu0 0.0
      %3611 = vmatpush1.xpose.msra.mxu0 0.0
      %3612 = vmatprep.subr.mxu0 0.0
      %3613 = vmatpush1.xpose.msra.mxu0 0.0
      %3614 = vmatprep.subr.mxu0 0.0
      %3615 = vmatpush1.xpose.msra.mxu0 0.0
      %3616 = vmatprep.subr.mxu0 0.0
      %3617 = vmatpush1.xpose.msra.mxu0 0.0
      %3618 = vmatprep.subr.mxu0 0.0
      %3619 = vmatpush1.xpose.msra.mxu0 0.0
      %3620 = vmatprep.subr.mxu0 0.0
      %3621 = vmatpush1.xpose.msra.mxu0 0.0
      %3622 = vmatprep.subr.mxu0 0.0
      %3623 = vmatpush1.xpose.msra.mxu0 0.0
      %3624 = vmatprep.subr.mxu0 0.0
      %3625 = vmatpush1.xpose.msra.mxu0 0.0
      %3626 = vmatprep.subr.mxu0 0.0
      %3627 = vmatpush1.xpose.msra.mxu0 0.0
      %3628 = vmatprep.subr.mxu0 0.0
      %3629 = vmatpush1.xpose.msra.mxu0 0.0
      %3630 = vmatprep.subr.mxu0 0.0
      %3631 = vmatpush1.xpose.msra.mxu0 0.0
      %3632 = vmatprep.subr.mxu0 0.0
      %3633 = vmatpush1.xpose.msra.mxu0 0.0
      %3634 = vmatprep.subr.mxu0 0.0
      %3635 = vmatpush1.xpose.msra.mxu0 0.0
      %3636 = vmatprep.subr.mxu0 0.0
      %3637 = vmatpush1.xpose.msra.mxu0 0.0
      %3638 = vmatprep.subr.mxu0 0.0
      %3639 = vmatpush1.xpose.msra.mxu0 0.0
      %3640 = vmatprep.subr.mxu0 0.0
      %3641 = vmatpush1.xpose.msra.mxu0 0.0
      %3642 = vmatprep.subr.mxu0 0.0
      %3643 = vmatpush1.xpose.msra.mxu0 0.0
      %3644 = vmatprep.mubr.f32.mxu0 0.0
      %3645 = vmatmul.mubr.f32.gmra.mrb[0].mxu0 %v3533
      %v3646 = vpop.f32.mrb[0].mxu0
      %v3647 = vadd.f32 0.0, %v3646
      %v3648 = vpop.f32.mrb[0].mxu0
      %3649 = vmatprep.mubr.f32.mxu0 0.0
      %3650 = vmatmul.mubr.f32.gmra.mrb[0].mxu0 %v3536
      %v3651 = vpop.f32.mrb[0].mxu0
      %v3652 = vadd.f32 0.0, %v3651
      %v3653 = vpop.f32.mrb[0].mxu0
      %3654 = vmatprep.mubr.f32.mxu0 0.0
      %3655 = vmatmul.mubr.f32.gmra.mrb[0].mxu0 %v3539
      %v3656 = vpop.f32.mrb[0].mxu0
      %v3657 = vadd.f32 0.0, %v3656
      %v3658 = vpop.f32.mrb[0].mxu0
      %3659 = vmatprep.mubr.f32.mxu0 0.0
      %3660 = vmatmul.mubr.f32.gmra.mrb[0].mxu0 %v3542
      %v3661 = vpop.f32.mrb[0].mxu0
      %v3662 = vadd.f32 0.0, %v3661
      %v3663 = vpop.f32.mrb[0].mxu0
      %3664 = vmatprep.mubr.f32.mxu0 0.0
      %3665 = vmatmul.mubr.f32.gmra.mrb[0].mxu0 %v3545
      %v3666 = vpop.f32.mrb[0].mxu0
      %v3667 = vadd.f32 0.0, %v3666
      %v3668 = vpop.f32.mrb[0].mxu0
      %3669 = vmatprep.mubr.f32.mxu0 0.0
      %3670 = vmatmul.mubr.f32.gmra.mrb[0].mxu0 %v3548
      %v3671 = vpop.f32.mrb[0].mxu0
      %v3672 = vadd.f32 0.0, %v3671
      %v3673 = vpop.f32.mrb[0].mxu0
      %3674 = vmatprep.mubr.f32.mxu0 0.0
      %3675 = vmatmul.mubr.f32.gmra.mrb[0].mxu0 %v3551
      %v3676 = vpop.f32.mrb[0].mxu0
      %v3677 = vadd.f32 0.0, %v3676
      %v3678 = vpop.f32.mrb[0].mxu0
      %3679 = vmatprep.mubr.f32.mxu0 0.0
      %3680 = vmatmul.mubr.f32.gmra.mrb[0].mxu0 %v3554
      %v3681 = vpop.f32.mrb[0].mxu0
      %v3682 = vadd.f32 0.0, %v3681
      %v3683 = vpop.f32.mrb[0].mxu0
      %3684 = vdwg.mxu0
      %v3685 = vmul.f32 %v3647, 0.25
      %v3686 = vmul.f32 %v3652, 0.25
      %v3687 = vmul.f32 %v3657, 0.25
      %v3688 = vmul.f32 %v3662, 0.25
      %v3689 = vmul.f32 %v3667, 0.25
      %v3690 = vmul.f32 %v3672, 0.25
      %v3691 = vmul.f32 %v3677, 0.25
      %v3692 = vmul.f32 %v3682, 0.25
      %v3693 = vsel %vm2839, %v3685, -inf
      %3694 = vmax.xlane.f32.xlu0 %v3693
      %v3695 = vpop.xlane.xlu0 %3694
      %v3696 = vsel %vm2839, %v3686, -inf
      %3697 = vmax.xlane.f32.xlu0 %v3696
      %v3698 = vpop.xlane.xlu0 %3697
      %v3699 = vsel %vm2839, %v3687, -inf
      %3700 = vmax.xlane.f32.xlu0 %v3699
      %v3701 = vpop.xlane.xlu0 %3700
      %v3702 = vsel %vm2839, %v3688, -inf
      %3703 = vmax.xlane.f32.xlu0 %v3702
      %v3704 = vpop.xlane.xlu0 %3703
      %v3705 = vsel %vm2839, %v3689, -inf
      %3706 = vmax.xlane.f32.xlu0 %v3705
      %v3707 = vpop.xlane.xlu0 %3706
      %v3708 = vsel %vm2839, %v3690, -inf
      %3709 = vmax.xlane.f32.xlu0 %v3708
      %v3710 = vpop.xlane.xlu0 %3709
      %v3711 = vsel %vm2839, %v3691, -inf
      %3712 = vmax.xlane.f32.xlu0 %v3711
      %v3713 = vpop.xlane.xlu0 %3712
      %v3714 = vsel %vm2839, %v3692, -inf
      %3715 = vmax.xlane.f32.xlu0 %v3714
      %v3716 = vpop.xlane.xlu0 %3715
      %v3717 = vsub.f32 %v3685, %v3695
      %v3718 = vsub.f32 %v3686, %v3698
      %v3719 = vsub.f32 %v3687, %v3701
      %v3720 = vsub.f32 %v3688, %v3704
      %v3721 = vsub.f32 %v3689, %v3707
      %v3722 = vsub.f32 %v3690, %v3710
      %v3723 = vsub.f32 %v3691, %v3713
      %v3724 = vsub.f32 %v3692, %v3716
      %v3725 = vmul.f32 %v3717, 1.442695
      %v3726 = vpow.pop %v3725
      %v3727 = vmul.f32 %v3718, 1.442695
      %v3728 = vpow.pop %v3727
      %v3729 = vmul.f32 %v3719, 1.442695
      %v3730 = vpow.pop %v3729
      %v3731 = vmul.f32 %v3720, 1.442695
      %v3732 = vpow.pop %v3731
      %v3733 = vmul.f32 %v3721, 1.442695
      %v3734 = vpow.pop %v3733
      %v3735 = vmul.f32 %v3722, 1.442695
      %v3736 = vpow.pop %v3735
      %v3737 = vmul.f32 %v3723, 1.442695
      %v3738 = vpow.pop %v3737
      %v3739 = vmul.f32 %v3724, 1.442695
      %v3740 = vpow.pop %v3739
      %v3741 = vsel %vm2839, %v3726, 0.0
      %3742 = vadd.xlane.f32.xlu0 %v3741
      %v3743 = vpop.xlane.xlu0 %3742
      %v3744 = vsel %vm2839, %v3728, 0.0
      %3745 = vadd.xlane.f32.xlu0 %v3744
      %v3746 = vpop.xlane.xlu0 %3745
      %v3747 = vsel %vm2839, %v3730, 0.0
      %3748 = vadd.xlane.f32.xlu0 %v3747
      %v3749 = vpop.xlane.xlu0 %3748
      %v3750 = vsel %vm2839, %v3732, 0.0
      %3751 = vadd.xlane.f32.xlu0 %v3750
      %v3752 = vpop.xlane.xlu0 %3751
      %v3753 = vsel %vm2839, %v3734, 0.0
      %3754 = vadd.xlane.f32.xlu0 %v3753
      %v3755 = vpop.xlane.xlu0 %3754
      %v3756 = vsel %vm2839, %v3736, 0.0
      %3757 = vadd.xlane.f32.xlu0 %v3756
      %v3758 = vpop.xlane.xlu0 %3757
      %v3759 = vsel %vm2839, %v3738, 0.0
      %3760 = vadd.xlane.f32.xlu0 %v3759
      %v3761 = vpop.xlane.xlu0 %3760
      %v3762 = vsel %vm2839, %v3740, 0.0
      %3763 = vadd.xlane.f32.xlu0 %v3762
      %v3764 = vpop.xlane.xlu0 %3763
      %v3765 = vrcp.pop %v3743
      %v3766 = vrcp.pop %v3746
      %v3767 = vrcp.pop %v3749
      %v3768 = vrcp.pop %v3752
      %v3769 = vrcp.pop %v3755
      %v3770 = vrcp.pop %v3758
      %v3771 = vrcp.pop %v3761
      %v3772 = vrcp.pop %v3764
      %v3773 = vmul.f32 %v3726, %v3765
      %v3774 = vmul.f32 %v3728, %v3766
      %v3775 = vmul.f32 %v3730, %v3767
      %v3776 = vmul.f32 %v3732, %v3768
      %v3777 = vmul.f32 %v3734, %v3769
      %v3778 = vmul.f32 %v3736, %v3770
      %v3779 = vmul.f32 %v3738, %v3771
      %v3780 = vmul.f32 %v3740, %v3772
      %v3782 = vsel %vm2839, %v3773, 0
      %v3785 = vsel %vm2839, %v3774, 0
      %v3788 = vsel %vm2839, %v3775, 0
      %v3791 = vsel %vm2839, %v3776, 0
      %v3794 = vsel %vm2839, %v3777, 0
      %v3797 = vsel %vm2839, %v3778, 0
      %v3800 = vsel %vm2839, %v3779, 0
      %v3803 = vsel %vm2839, %v3780, 0
      %3805 = vmatprep.subr.mxu0 0.0
      %3806 = vmatpush1.msra.mxu0 %v3494
      %3807 = vmatprep.subr.mxu0 0.0
      %3808 = vmatpush1.msra.mxu0 %v3499
      %3809 = vmatprep.subr.mxu0 0.0
      %3810 = vmatpush1.msra.mxu0 %v3504
      %3811 = vmatprep.subr.mxu0 0.0
      %3812 = vmatpush1.msra.mxu0 %v3509
      %3813 = vmatprep.subr.mxu0 0.0
      %3814 = vmatpush1.msra.mxu0 %v3514
      %3815 = vmatprep.subr.mxu0 0.0
      %3816 = vmatpush1.msra.mxu0 %v3519
      %3817 = vmatprep.subr.mxu0 0.0
      %3818 = vmatpush1.msra.mxu0 %v3524
      %3819 = vmatprep.subr.mxu0 0.0
      %3820 = vmatpush1.msra.mxu0 %v3529
      %3821 = vmatprep.subr.mxu0 0.0
      %3822 = vmatpush1.msra.mxu0 0.0
      %3823 = vmatprep.subr.mxu0 0.0
      %3824 = vmatpush1.msra.mxu0 0.0
      %3825 = vmatprep.subr.mxu0 0.0
      %3826 = vmatpush1.msra.mxu0 0.0
      %3827 = vmatprep.subr.mxu0 0.0
      %3828 = vmatpush1.msra.mxu0 0.0
      %3829 = vmatprep.subr.mxu0 0.0
      %3830 = vmatpush1.msra.mxu0 0.0
      %3831 = vmatprep.subr.mxu0 0.0
      %3832 = vmatpush1.msra.mxu0 0.0
      %3833 = vmatprep.subr.mxu0 0.0
      %3834 = vmatpush1.msra.mxu0 0.0
      %3835 = vmatprep.subr.mxu0 0.0
      %3836 = vmatpush1.msra.mxu0 0.0
      %3837 = vmatprep.subr.mxu0 0.0
      %3838 = vmatpush1.msra.mxu0 0.0
      %3839 = vmatprep.subr.mxu0 0.0
      %3840 = vmatpush1.msra.mxu0 0.0
      %3841 = vmatprep.subr.mxu0 0.0
      %3842 = vmatpush1.msra.mxu0 0.0
      %3843 = vmatprep.subr.mxu0 0.0
      %3844 = vmatpush1.msra.mxu0 0.0
      %3845 = vmatprep.subr.mxu0 0.0
      %3846 = vmatpush1.msra.mxu0 0.0
      %3847 = vmatprep.subr.mxu0 0.0
      %3848 = vmatpush1.msra.mxu0 0.0
      %3849 = vmatprep.subr.mxu0 0.0
      %3850 = vmatpush1.msra.mxu0 0.0
      %3851 = vmatprep.subr.mxu0 0.0
      %3852 = vmatpush1.msra.mxu0 0.0
      %3853 = vmatprep.subr.mxu0 0.0
      %3854 = vmatpush1.msra.mxu0 0.0
      %3855 = vmatprep.subr.mxu0 0.0
      %3856 = vmatpush1.msra.mxu0 0.0
      %3857 = vmatprep.subr.mxu0 0.0
      %3858 = vmatpush1.msra.mxu0 0.0
      %3859 = vmatprep.subr.mxu0 0.0
      %3860 = vmatpush1.msra.mxu0 0.0
      %3861 = vmatprep.subr.mxu0 0.0
      %3862 = vmatpush1.msra.mxu0 0.0
      %3863 = vmatprep.subr.mxu0 0.0
      %3864 = vmatpush1.msra.mxu0 0.0
      %3865 = vmatprep.subr.mxu0 0.0
      %3866 = vmatpush1.msra.mxu0 0.0
      %3867 = vmatprep.subr.mxu0 0.0
      %3868 = vmatpush1.msra.mxu0 0.0
      %3869 = vmatprep.mubr.f32.mxu0 0.0
      %3870 = vmatmul.mubr.f32.gmra.mrb[0].mxu0 %v3782
      %v3871 = vpop.f32.mrb[0].mxu0
      %v3872 = vadd.f32 0.0, %v3871
      %v3873 = vpop.f32.mrb[0].mxu0
      %3874 = vmatprep.mubr.f32.mxu0 0.0
      %3875 = vmatmul.mubr.f32.gmra.mrb[0].mxu0 %v3785
      %v3876 = vpop.f32.mrb[0].mxu0
      %v3877 = vadd.f32 0.0, %v3876
      %v3878 = vpop.f32.mrb[0].mxu0
      %3879 = vmatprep.mubr.f32.mxu0 0.0
      %3880 = vmatmul.mubr.f32.gmra.mrb[0].mxu0 %v3788
      %v3881 = vpop.f32.mrb[0].mxu0
      %v3882 = vadd.f32 0.0, %v3881
      %v3883 = vpop.f32.mrb[0].mxu0
      %3884 = vmatprep.mubr.f32.mxu0 0.0
      %3885 = vmatmul.mubr.f32.gmra.mrb[0].mxu0 %v3791
      %v3886 = vpop.f32.mrb[0].mxu0
      %v3887 = vadd.f32 0.0, %v3886
      %v3888 = vpop.f32.mrb[0].mxu0
      %3889 = vmatprep.mubr.f32.mxu0 0.0
      %3890 = vmatmul.mubr.f32.gmra.mrb[0].mxu0 %v3794
      %v3891 = vpop.f32.mrb[0].mxu0
      %v3892 = vadd.f32 0.0, %v3891
      %v3893 = vpop.f32.mrb[0].mxu0
      %3894 = vmatprep.mubr.f32.mxu0 0.0
      %3895 = vmatmul.mubr.f32.gmra.mrb[0].mxu0 %v3797
      %v3896 = vpop.f32.mrb[0].mxu0
      %v3897 = vadd.f32 0.0, %v3896
      %v3898 = vpop.f32.mrb[0].mxu0
      %3899 = vmatprep.mubr.f32.mxu0 0.0
      %3900 = vmatmul.mubr.f32.gmra.mrb[0].mxu0 %v3800
      %v3901 = vpop.f32.mrb[0].mxu0
      %v3902 = vadd.f32 0.0, %v3901
      %v3903 = vpop.f32.mrb[0].mxu0
      %3904 = vmatprep.mubr.f32.mxu0 0.0
      %3905 = vmatmul.mubr.f32.gmra.mrb[0].mxu0 %v3803
      %v3906 = vpop.f32.mrb[0].mxu0
      %v3907 = vadd.f32 0.0, %v3906
      %v3908 = vpop.f32.mrb[0].mxu0
      %3909 = vdwg.mxu0
      %s3910 = scalar_lea.vmem %s35, 16
      %v3911 = vld [vmem:[%s3910] sm:$0xff]
      %v3912 = vld [vmem:[%s3910 + $0x8] sm:$0xff]
      %v3914 = vsel %vm2677, %v3872, 0
      %v3917 = vsel %vm2677, %v3877, 0
      %v3920 = vsel %vm2677, %v3882, 0
      %v3923 = vsel %vm2677, %v3887, 0
      %v3926 = vsel %vm2677, %v3892, 0
      %v3929 = vsel %vm2677, %v3897, 0
      %v3932 = vsel %vm2677, %v3902, 0
      %v3935 = vsel %vm2677, %v3907, 0
      %3937 = vmatprep.subr.mxu0 0.0
      %3938 = vmatpush1.msra.mxu0 %v3911
      %3939 = vmatprep.subr.mxu0 0.0
      %3940 = vmatpush1.msra.mxu0 %v3912
      %3941 = vmatprep.subr.mxu0 0.0
      %3942 = vmatpush1.msra.mxu0 0.0
      %3943 = vmatprep.subr.mxu0 0.0
      %3944 = vmatpush1.msra.mxu0 0.0
      %3945 = vmatprep.subr.mxu0 0.0
      %3946 = vmatpush1.msra.mxu0 0.0
      %3947 = vmatprep.subr.mxu0 0.0
      %3948 = vmatpush1.msra.mxu0 0.0
      %3949 = vmatprep.subr.mxu0 0.0
      %3950 = vmatpush1.msra.mxu0 0.0
      %3951 = vmatprep.subr.mxu0 0.0
      %3952 = vmatpush1.msra.mxu0 0.0
      %3953 = vmatprep.subr.mxu0 0.0
      %3954 = vmatpush1.msra.mxu0 0.0
      %3955 = vmatprep.subr.mxu0 0.0
      %3956 = vmatpush1.msra.mxu0 0.0
      %3957 = vmatprep.subr.mxu0 0.0
      %3958 = vmatpush1.msra.mxu0 0.0
      %3959 = vmatprep.subr.mxu0 0.0
      %3960 = vmatpush1.msra.mxu0 0.0
      %3961 = vmatprep.subr.mxu0 0.0
      %3962 = vmatpush1.msra.mxu0 0.0
      %3963 = vmatprep.subr.mxu0 0.0
      %3964 = vmatpush1.msra.mxu0 0.0
      %3965 = vmatprep.subr.mxu0 0.0
      %3966 = vmatpush1.msra.mxu0 0.0
      %3967 = vmatprep.subr.mxu0 0.0
      %3968 = vmatpush1.msra.mxu0 0.0
      %3969 = vmatprep.subr.mxu0 0.0
      %3970 = vmatpush1.msra.mxu0 0.0
      %3971 = vmatprep.subr.mxu0 0.0
      %3972 = vmatpush1.msra.mxu0 0.0
      %3973 = vmatprep.subr.mxu0 0.0
      %3974 = vmatpush1.msra.mxu0 0.0
      %3975 = vmatprep.subr.mxu0 0.0
      %3976 = vmatpush1.msra.mxu0 0.0
      %3977 = vmatprep.subr.mxu0 0.0
      %3978 = vmatpush1.msra.mxu0 0.0
      %3979 = vmatprep.subr.mxu0 0.0
      %3980 = vmatpush1.msra.mxu0 0.0
      %3981 = vmatprep.subr.mxu0 0.0
      %3982 = vmatpush1.msra.mxu0 0.0
      %3983 = vmatprep.subr.mxu0 0.0
      %3984 = vmatpush1.msra.mxu0 0.0
      %3985 = vmatprep.subr.mxu0 0.0
      %3986 = vmatpush1.msra.mxu0 0.0
      %3987 = vmatprep.subr.mxu0 0.0
      %3988 = vmatpush1.msra.mxu0 0.0
      %3989 = vmatprep.subr.mxu0 0.0
      %3990 = vmatpush1.msra.mxu0 0.0
      %3991 = vmatprep.subr.mxu0 0.0
      %3992 = vmatpush1.msra.mxu0 0.0
      %3993 = vmatprep.subr.mxu0 0.0
      %3994 = vmatpush1.msra.mxu0 0.0
      %3995 = vmatprep.subr.mxu0 0.0
      %3996 = vmatpush1.msra.mxu0 0.0
      %3997 = vmatprep.subr.mxu0 0.0
      %3998 = vmatpush1.msra.mxu0 0.0
      %3999 = vmatprep.subr.mxu0 0.0
      %4000 = vmatpush1.msra.mxu0 0.0
      %4001 = vmatprep.mubr.f32.mxu0 0.0
      %4002 = vmatmul.mubr.f32.gmra.mrb[0].mxu0 %v3914
      %v4003 = vpop.f32.mrb[0].mxu0
      %v4004 = vadd.f32 0.0, %v4003
      %v4005 = vpop.f32.mrb[0].mxu0
      %4006 = vmatprep.mubr.f32.mxu0 0.0
      %4007 = vmatmul.mubr.f32.gmra.mrb[0].mxu0 %v3917
      %v4008 = vpop.f32.mrb[0].mxu0
      %v4009 = vadd.f32 0.0, %v4008
      %v4010 = vpop.f32.mrb[0].mxu0
      %4011 = vmatprep.mubr.f32.mxu0 0.0
      %4012 = vmatmul.mubr.f32.gmra.mrb[0].mxu0 %v3920
      %v4013 = vpop.f32.mrb[0].mxu0
      %v4014 = vadd.f32 0.0, %v4013
      %v4015 = vpop.f32.mrb[0].mxu0
      %4016 = vmatprep.mubr.f32.mxu0 0.0
      %4017 = vmatmul.mubr.f32.gmra.mrb[0].mxu0 %v3923
      %v4018 = vpop.f32.mrb[0].mxu0
      %v4019 = vadd.f32 0.0, %v4018
      %v4020 = vpop.f32.mrb[0].mxu0
      %4021 = vmatprep.mubr.f32.mxu0 0.0
      %4022 = vmatmul.mubr.f32.gmra.mrb[0].mxu0 %v3926
      %v4023 = vpop.f32.mrb[0].mxu0
      %v4024 = vadd.f32 0.0, %v4023
      %v4025 = vpop.f32.mrb[0].mxu0
      %4026 = vmatprep.mubr.f32.mxu0 0.0
      %4027 = vmatmul.mubr.f32.gmra.mrb[0].mxu0 %v3929
      %v4028 = vpop.f32.mrb[0].mxu0
      %v4029 = vadd.f32 0.0, %v4028
      %v4030 = vpop.f32.mrb[0].mxu0
      %4031 = vmatprep.mubr.f32.mxu0 0.0
      %4032 = vmatmul.mubr.f32.gmra.mrb[0].mxu0 %v3932
      %v4033 = vpop.f32.mrb[0].mxu0
      %v4034 = vadd.f32 0.0, %v4033
      %v4035 = vpop.f32.mrb[0].mxu0
      %4036 = vmatprep.mubr.f32.mxu0 0.0
      %4037 = vmatmul.mubr.f32.gmra.mrb[0].mxu0 %v3935
      %v4038 = vpop.f32.mrb[0].mxu0
      %v4039 = vadd.f32 0.0, %v4038
      %v4040 = vpop.f32.mrb[0].mxu0
      %4041 = vdwg.mxu0
      %v4042 = vadd.f32 %v3194, %v4004
      %v4043 = vadd.f32 %v3195, %v4009
      %v4044 = vadd.f32 %v3196, %v4014
      %v4045 = vadd.f32 %v3197, %v4019
      %v4046 = vadd.f32 %v3198, %v4024
      %v4047 = vadd.f32 %v3199, %v4029
      %v4048 = vadd.f32 %v3200, %v4034
      %v4049 = vadd.f32 %v3201, %v4039
      %v4050 = vadd.f32 %v1666, %v4042
      %v4051 = vadd.f32 %v1667, %v4043
      %v4052 = vadd.f32 %v1668, %v4044
      %v4053 = vadd.f32 %v1669, %v4045
      %v4054 = vadd.f32 %v1670, %v4046
      %v4055 = vadd.f32 %v1671, %v4047
      %v4056 = vadd.f32 %v1672, %v4048
      %v4057 = vadd.f32 %v1673, %v4049
      %v4058 = vld [vmem:[%s39] sm:$0x1]
      %v4059 = vld [vmem:[%s41] sm:$0x1]
      %v4060 = vsel %vm1074, %v4050, 0.0
      %4061 = vadd.xlane.f32.xlu0 %v4060
      %v4062 = vpop.xlane.xlu0 %4061
      %v4063 = vsel %vm1074, %v4051, 0.0
      %4064 = vadd.xlane.f32.xlu0 %v4063
      %v4065 = vpop.xlane.xlu0 %4064
      %v4066 = vsel %vm1074, %v4052, 0.0
      %4067 = vadd.xlane.f32.xlu0 %v4066
      %v4068 = vpop.xlane.xlu0 %4067
      %v4069 = vsel %vm1074, %v4053, 0.0
      %4070 = vadd.xlane.f32.xlu0 %v4069
      %v4071 = vpop.xlane.xlu0 %4070
      %v4072 = vsel %vm1074, %v4054, 0.0
      %4073 = vadd.xlane.f32.xlu0 %v4072
      %v4074 = vpop.xlane.xlu0 %4073
      %v4075 = vsel %vm1074, %v4055, 0.0
      %4076 = vadd.xlane.f32.xlu0 %v4075
      %v4077 = vpop.xlane.xlu0 %4076
      %v4078 = vsel %vm1074, %v4056, 0.0
      %4079 = vadd.xlane.f32.xlu0 %v4078
      %v4080 = vpop.xlane.xlu0 %4079
      %v4081 = vsel %vm1074, %v4057, 0.0
      %4082 = vadd.xlane.f32.xlu0 %v4081
      %v4083 = vpop.xlane.xlu0 %4082
      %v4084 = vmul.f32 %v4062, %v2216
      %v4085 = vmul.f32 %v4065, %v2216
      %v4086 = vmul.f32 %v4068, %v2216
      %v4087 = vmul.f32 %v4071, %v2216
      %v4088 = vmul.f32 %v4074, %v2216
      %v4089 = vmul.f32 %v4077, %v2216
      %v4090 = vmul.f32 %v4080, %v2216
      %v4091 = vmul.f32 %v4083, %v2216
      %v4092 = vsub.f32 %v4050, %v4084
      %v4093 = vsub.f32 %v4051, %v4085
      %v4094 = vsub.f32 %v4052, %v4086
      %v4095 = vsub.f32 %v4053, %v4087
      %v4096 = vsub.f32 %v4054, %v4088
      %v4097 = vsub.f32 %v4055, %v4089
      %v4098 = vsub.f32 %v4056, %v4090
      %v4099 = vsub.f32 %v4057, %v4091
      %v4100 = vmul.f32 %v4092, %v4092
      %v4101 = vmul.f32 %v4093, %v4093
      %v4102 = vmul.f32 %v4094, %v4094
      %v4103 = vmul.f32 %v4095, %v4095
      %v4104 = vmul.f32 %v4096, %v4096
      %v4105 = vmul.f32 %v4097, %v4097
      %v4106 = vmul.f32 %v4098, %v4098
      %v4107 = vmul.f32 %v4099, %v4099
      %v4108 = vsel %vm1074, %v4100, 0.0
      %4109 = vadd.xlane.f32.xlu0 %v4108
      %v4110 = vpop.xlane.xlu0 %4109
      %v4111 = vsel %vm1074, %v4101, 0.0
      %4112 = vadd.xlane.f32.xlu0 %v4111
      %v4113 = vpop.xlane.xlu0 %4112
      %v4114 = vsel %vm1074, %v4102, 0.0
      %4115 = vadd.xlane.f32.xlu0 %v4114
      %v4116 = vpop.xlane.xlu0 %4115
      %v4117 = vsel %vm1074, %v4103, 0.0
      %4118 = vadd.xlane.f32.xlu0 %v4117
      %v4119 = vpop.xlane.xlu0 %4118
      %v4120 = vsel %vm1074, %v4104, 0.0
      %4121 = vadd.xlane.f32.xlu0 %v4120
      %v4122 = vpop.xlane.xlu0 %4121
      %v4123 = vsel %vm1074, %v4105, 0.0
      %4124 = vadd.xlane.f32.xlu0 %v4123
      %v4125 = vpop.xlane.xlu0 %4124
      %v4126 = vsel %vm1074, %v4106, 0.0
      %4127 = vadd.xlane.f32.xlu0 %v4126
      %v4128 = vpop.xlane.xlu0 %4127
      %v4129 = vsel %vm1074, %v4107, 0.0
      %4130 = vadd.xlane.f32.xlu0 %v4129
      %v4131 = vpop.xlane.xlu0 %4130
      %v4132 = vmul.f32 %v4110, %v2216
      %v4133 = vmul.f32 %v4113, %v2216
      %v4134 = vmul.f32 %v4116, %v2216
      %v4135 = vmul.f32 %v4119, %v2216
      %v4136 = vmul.f32 %v4122, %v2216
      %v4137 = vmul.f32 %v4125, %v2216
      %v4138 = vmul.f32 %v4128, %v2216
      %v4139 = vmul.f32 %v4131, %v2216
      %v4140 = vadd.f32 %v4132, 1e-05
      %v4141 = vadd.f32 %v4133, 1e-05
      %v4142 = vadd.f32 %v4134, 1e-05
      %v4143 = vadd.f32 %v4135, 1e-05
      %v4144 = vadd.f32 %v4136, 1e-05
      %v4145 = vadd.f32 %v4137, 1e-05
      %v4146 = vadd.f32 %v4138, 1e-05
      %v4147 = vadd.f32 %v4139, 1e-05
      %v4148 = vrsqrt.pop %v4140
      %v4149 = vrsqrt.pop %v4141
      %v4150 = vrsqrt.pop %v4142
      %v4151 = vrsqrt.pop %v4143
      %v4152 = vrsqrt.pop %v4144
      %v4153 = vrsqrt.pop %v4145
      %v4154 = vrsqrt.pop %v4146
      %v4155 = vrsqrt.pop %v4147
      %v4156 = vmul.f32 %v4092, %v4148
      %v4157 = vmul.f32 %v4093, %v4149
      %v4158 = vmul.f32 %v4094, %v4150
      %v4159 = vmul.f32 %v4095, %v4151
      %v4160 = vmul.f32 %v4096, %v4152
      %v4161 = vmul.f32 %v4097, %v4153
      %v4162 = vmul.f32 %v4098, %v4154
      %v4163 = vmul.f32 %v4099, %v4155
      %v4165 = vlaneseq
      %v4166 = vshrl.u32 %v4165, 7
      %v4167 = vsub.s32 0, %v4166
      %v4168 = vrot.slane %v4058, %v4167
      %v4170 = vmul.f32 %v4156, %v4168
      %v4171 = vmul.f32 %v4157, %v4168
      %v4172 = vmul.f32 %v4158, %v4168
      %v4173 = vmul.f32 %v4159, %v4168
      %v4174 = vmul.f32 %v4160, %v4168
      %v4175 = vmul.f32 %v4161, %v4168
      %v4176 = vmul.f32 %v4162, %v4168
      %v4177 = vmul.f32 %v4163, %v4168
      %v4179 = vlaneseq
      %v4180 = vshrl.u32 %v4179, 7
      %v4181 = vsub.s32 0, %v4180
      %v4182 = vrot.slane %v4059, %v4181
      %v4184 = vadd.f32 %v4170, %v4182
      %v4185 = vadd.f32 %v4171, %v4182
      %v4186 = vadd.f32 %v4172, %v4182
      %v4187 = vadd.f32 %v4173, %v4182
      %v4188 = vadd.f32 %v4174, %v4182
      %v4189 = vadd.f32 %v4175, %v4182
      %v4190 = vadd.f32 %v4176, %v4182
      %v4191 = vadd.f32 %v4177, %v4182
      %v4192 = vld [vmem:[%s51] sm:$0x1]
      %v4193 = vld [vmem:[%s43] sm:$0xff]
      %v4194 = vld [vmem:[%s43 + $0x8] sm:$0xff]
      %v4195 = vld [vmem:[%s43 + $0x10] sm:$0xff]
      %v4196 = vld [vmem:[%s43 + $0x18] sm:$0xff]
      %v4198 = vsel %vm1074, %v4184, 0
      %v4201 = vsel %vm1074, %v4185, 0
      %v4204 = vsel %vm1074, %v4186, 0
      %v4207 = vsel %vm1074, %v4187, 0
      %v4210 = vsel %vm1074, %v4188, 0
      %v4213 = vsel %vm1074, %v4189, 0
      %v4216 = vsel %vm1074, %v4190, 0
      %v4219 = vsel %vm1074, %v4191, 0
      %4221 = vmatprep.subr.mxu0 0.0
      %4222 = vmatpush1.msra.mxu0 %v4193
      %4223 = vmatprep.subr.mxu0 0.0
      %4224 = vmatpush1.msra.mxu0 %v4194
      %4225 = vmatprep.subr.mxu0 0.0
      %4226 = vmatpush1.msra.mxu0 %v4195
      %4227 = vmatprep.subr.mxu0 0.0
      %4228 = vmatpush1.msra.mxu0 %v4196
      %4229 = vmatprep.subr.mxu0 0.0
      %4230 = vmatpush1.msra.mxu0 0.0
      %4231 = vmatprep.subr.mxu0 0.0
      %4232 = vmatpush1.msra.mxu0 0.0
      %4233 = vmatprep.subr.mxu0 0.0
      %4234 = vmatpush1.msra.mxu0 0.0
      %4235 = vmatprep.subr.mxu0 0.0
      %4236 = vmatpush1.msra.mxu0 0.0
      %4237 = vmatprep.subr.mxu0 0.0
      %4238 = vmatpush1.msra.mxu0 0.0
      %4239 = vmatprep.subr.mxu0 0.0
      %4240 = vmatpush1.msra.mxu0 0.0
      %4241 = vmatprep.subr.mxu0 0.0
      %4242 = vmatpush1.msra.mxu0 0.0
      %4243 = vmatprep.subr.mxu0 0.0
      %4244 = vmatpush1.msra.mxu0 0.0
      %4245 = vmatprep.subr.mxu0 0.0
      %4246 = vmatpush1.msra.mxu0 0.0
      %4247 = vmatprep.subr.mxu0 0.0
      %4248 = vmatpush1.msra.mxu0 0.0
      %4249 = vmatprep.subr.mxu0 0.0
      %4250 = vmatpush1.msra.mxu0 0.0
      %4251 = vmatprep.subr.mxu0 0.0
      %4252 = vmatpush1.msra.mxu0 0.0
      %4253 = vmatprep.subr.mxu0 0.0
      %4254 = vmatpush1.msra.mxu0 0.0
      %4255 = vmatprep.subr.mxu0 0.0
      %4256 = vmatpush1.msra.mxu0 0.0
      %4257 = vmatprep.subr.mxu0 0.0
      %4258 = vmatpush1.msra.mxu0 0.0
      %4259 = vmatprep.subr.mxu0 0.0
      %4260 = vmatpush1.msra.mxu0 0.0
      %4261 = vmatprep.subr.mxu0 0.0
      %4262 = vmatpush1.msra.mxu0 0.0
      %4263 = vmatprep.subr.mxu0 0.0
      %4264 = vmatpush1.msra.mxu0 0.0
      %4265 = vmatprep.subr.mxu0 0.0
      %4266 = vmatpush1.msra.mxu0 0.0
      %4267 = vmatprep.subr.mxu0 0.0
      %4268 = vmatpush1.msra.mxu0 0.0
      %4269 = vmatprep.subr.mxu0 0.0
      %4270 = vmatpush1.msra.mxu0 0.0
      %4271 = vmatprep.subr.mxu0 0.0
      %4272 = vmatpush1.msra.mxu0 0.0
      %4273 = vmatprep.subr.mxu0 0.0
      %4274 = vmatpush1.msra.mxu0 0.0
      %4275 = vmatprep.subr.mxu0 0.0
      %4276 = vmatpush1.msra.mxu0 0.0
      %4277 = vmatprep.subr.mxu0 0.0
      %4278 = vmatpush1.msra.mxu0 0.0
      %4279 = vmatprep.subr.mxu0 0.0
      %4280 = vmatpush1.msra.mxu0 0.0
      %4281 = vmatprep.subr.mxu0 0.0
      %4282 = vmatpush1.msra.mxu0 0.0
      %4283 = vmatprep.subr.mxu0 0.0
      %4284 = vmatpush1.msra.mxu0 0.0
      %4285 = vmatprep.mubr.f32.mxu0 0.0
      %4286 = vmatmul.mubr.f32.gmra.mrb[0].mxu0 %v4198
      %v4287 = vpop.f32.mrb[0].mxu0
      %v4288 = vadd.f32 0.0, %v4287
      %v4289 = vpop.f32.mrb[0].mxu0
      %4290 = vmatprep.mubr.f32.mxu0 0.0
      %4291 = vmatmul.mubr.f32.gmra.mrb[0].mxu0 %v4201
      %v4292 = vpop.f32.mrb[0].mxu0
      %v4293 = vadd.f32 0.0, %v4292
      %v4294 = vpop.f32.mrb[0].mxu0
      %4295 = vmatprep.mubr.f32.mxu0 0.0
      %4296 = vmatmul.mubr.f32.gmra.mrb[0].mxu0 %v4204
      %v4297 = vpop.f32.mrb[0].mxu0
      %v4298 = vadd.f32 0.0, %v4297
      %v4299 = vpop.f32.mrb[0].mxu0
      %4300 = vmatprep.mubr.f32.mxu0 0.0
      %4301 = vmatmul.mubr.f32.gmra.mrb[0].mxu0 %v4207
      %v4302 = vpop.f32.mrb[0].mxu0
      %v4303 = vadd.f32 0.0, %v4302
      %v4304 = vpop.f32.mrb[0].mxu0
      %4305 = vmatprep.mubr.f32.mxu0 0.0
      %4306 = vmatmul.mubr.f32.gmra.mrb[0].mxu0 %v4210
      %v4307 = vpop.f32.mrb[0].mxu0
      %v4308 = vadd.f32 0.0, %v4307
      %v4309 = vpop.f32.mrb[0].mxu0
      %4310 = vmatprep.mubr.f32.mxu0 0.0
      %4311 = vmatmul.mubr.f32.gmra.mrb[0].mxu0 %v4213
      %v4312 = vpop.f32.mrb[0].mxu0
      %v4313 = vadd.f32 0.0, %v4312
      %v4314 = vpop.f32.mrb[0].mxu0
      %4315 = vmatprep.mubr.f32.mxu0 0.0
      %4316 = vmatmul.mubr.f32.gmra.mrb[0].mxu0 %v4216
      %v4317 = vpop.f32.mrb[0].mxu0
      %v4318 = vadd.f32 0.0, %v4317
      %v4319 = vpop.f32.mrb[0].mxu0
      %4320 = vmatprep.mubr.f32.mxu0 0.0
      %4321 = vmatmul.mubr.f32.gmra.mrb[0].mxu0 %v4219
      %v4322 = vpop.f32.mrb[0].mxu0
      %v4323 = vadd.f32 0.0, %v4322
      %v4324 = vpop.f32.mrb[0].mxu0
      %4325 = vdwg.mxu0
      %v4326 = vld [vmem:[%s45] sm:$0xff]
      %v4328 = vsel %vm1831, %v2182, 0
      %v4331 = vsel %vm1831, %v2183, 0
      %v4334 = vsel %vm1831, %v2184, 0
      %v4337 = vsel %vm1831, %v2185, 0
      %v4340 = vsel %vm1831, %v2186, 0
      %v4343 = vsel %vm1831, %v2187, 0
      %v4346 = vsel %vm1831, %v2188, 0
      %v4349 = vsel %vm1831, %v2189, 0
      %4351 = vmatprep.subr.mxu0 0.0
      %4352 = vmatpush1.msra.mxu0 %v4326
      %4353 = vmatprep.subr.mxu0 0.0
      %4354 = vmatpush1.msra.mxu0 0.0
      %4355 = vmatprep.subr.mxu0 0.0
      %4356 = vmatpush1.msra.mxu0 0.0
      %4357 = vmatprep.subr.mxu0 0.0
      %4358 = vmatpush1.msra.mxu0 0.0
      %4359 = vmatprep.subr.mxu0 0.0
      %4360 = vmatpush1.msra.mxu0 0.0
      %4361 = vmatprep.subr.mxu0 0.0
      %4362 = vmatpush1.msra.mxu0 0.0
      %4363 = vmatprep.subr.mxu0 0.0
      %4364 = vmatpush1.msra.mxu0 0.0
      %4365 = vmatprep.subr.mxu0 0.0
      %4366 = vmatpush1.msra.mxu0 0.0
      %4367 = vmatprep.subr.mxu0 0.0
      %4368 = vmatpush1.msra.mxu0 0.0
      %4369 = vmatprep.subr.mxu0 0.0
      %4370 = vmatpush1.msra.mxu0 0.0
      %4371 = vmatprep.subr.mxu0 0.0
      %4372 = vmatpush1.msra.mxu0 0.0
      %4373 = vmatprep.subr.mxu0 0.0
      %4374 = vmatpush1.msra.mxu0 0.0
      %4375 = vmatprep.subr.mxu0 0.0
      %4376 = vmatpush1.msra.mxu0 0.0
      %4377 = vmatprep.subr.mxu0 0.0
      %4378 = vmatpush1.msra.mxu0 0.0
      %4379 = vmatprep.subr.mxu0 0.0
      %4380 = vmatpush1.msra.mxu0 0.0
      %4381 = vmatprep.subr.mxu0 0.0
      %4382 = vmatpush1.msra.mxu0 0.0
      %4383 = vmatprep.subr.mxu0 0.0
      %4384 = vmatpush1.msra.mxu0 0.0
      %4385 = vmatprep.subr.mxu0 0.0
      %4386 = vmatpush1.msra.mxu0 0.0
      %4387 = vmatprep.subr.mxu0 0.0
      %4388 = vmatpush1.msra.mxu0 0.0
      %4389 = vmatprep.subr.mxu0 0.0
      %4390 = vmatpush1.msra.mxu0 0.0
      %4391 = vmatprep.subr.mxu0 0.0
      %4392 = vmatpush1.msra.mxu0 0.0
      %4393 = vmatprep.subr.mxu0 0.0
      %4394 = vmatpush1.msra.mxu0 0.0
      %4395 = vmatprep.subr.mxu0 0.0
      %4396 = vmatpush1.msra.mxu0 0.0
      %4397 = vmatprep.subr.mxu0 0.0
      %4398 = vmatpush1.msra.mxu0 0.0
      %4399 = vmatprep.subr.mxu0 0.0
      %4400 = vmatpush1.msra.mxu0 0.0
      %4401 = vmatprep.subr.mxu0 0.0
      %4402 = vmatpush1.msra.mxu0 0.0
      %4403 = vmatprep.subr.mxu0 0.0
      %4404 = vmatpush1.msra.mxu0 0.0
      %4405 = vmatprep.subr.mxu0 0.0
      %4406 = vmatpush1.msra.mxu0 0.0
      %4407 = vmatprep.subr.mxu0 0.0
      %4408 = vmatpush1.msra.mxu0 0.0
      %4409 = vmatprep.subr.mxu0 0.0
      %4410 = vmatpush1.msra.mxu0 0.0
      %4411 = vmatprep.subr.mxu0 0.0
      %4412 = vmatpush1.msra.mxu0 0.0
      %4413 = vmatprep.subr.mxu0 0.0
      %4414 = vmatpush1.msra.mxu0 0.0
      %4415 = vmatprep.mubr.f32.mxu0 0.0
      %4416 = vmatmul.mubr.f32.gmra.mrb[0].mxu0 %v4328
      %v4417 = vpop.f32.mrb[0].mxu0
      %v4418 = vadd.f32 0.0, %v4417
      %v4419 = vpop.f32.mrb[0].mxu0
      %4420 = vmatprep.mubr.f32.mxu0 0.0
      %4421 = vmatmul.mubr.f32.gmra.mrb[0].mxu0 %v4331
      %v4422 = vpop.f32.mrb[0].mxu0
      %v4423 = vadd.f32 0.0, %v4422
      %v4424 = vpop.f32.mrb[0].mxu0
      %4425 = vmatprep.mubr.f32.mxu0 0.0
      %4426 = vmatmul.mubr.f32.gmra.mrb[0].mxu0 %v4334
      %v4427 = vpop.f32.mrb[0].mxu0
      %v4428 = vadd.f32 0.0, %v4427
      %v4429 = vpop.f32.mrb[0].mxu0
      %4430 = vmatprep.mubr.f32.mxu0 0.0
      %4431 = vmatmul.mubr.f32.gmra.mrb[0].mxu0 %v4337
      %v4432 = vpop.f32.mrb[0].mxu0
      %v4433 = vadd.f32 0.0, %v4432
      %v4434 = vpop.f32.mrb[0].mxu0
      %4435 = vmatprep.mubr.f32.mxu0 0.0
      %4436 = vmatmul.mubr.f32.gmra.mrb[0].mxu0 %v4340
      %v4437 = vpop.f32.mrb[0].mxu0
      %v4438 = vadd.f32 0.0, %v4437
      %v4439 = vpop.f32.mrb[0].mxu0
      %4440 = vmatprep.mubr.f32.mxu0 0.0
      %4441 = vmatmul.mubr.f32.gmra.mrb[0].mxu0 %v4343
      %v4442 = vpop.f32.mrb[0].mxu0
      %v4443 = vadd.f32 0.0, %v4442
      %v4444 = vpop.f32.mrb[0].mxu0
      %4445 = vmatprep.mubr.f32.mxu0 0.0
      %4446 = vmatmul.mubr.f32.gmra.mrb[0].mxu0 %v4346
      %v4447 = vpop.f32.mrb[0].mxu0
      %v4448 = vadd.f32 0.0, %v4447
      %v4449 = vpop.f32.mrb[0].mxu0
      %4450 = vmatprep.mubr.f32.mxu0 0.0
      %4451 = vmatmul.mubr.f32.gmra.mrb[0].mxu0 %v4349
      %v4452 = vpop.f32.mrb[0].mxu0
      %v4453 = vadd.f32 0.0, %v4452
      %v4454 = vpop.f32.mrb[0].mxu0
      %4455 = vdwg.mxu0
      %v4456 = vld [vmem:[%s47] sm:$0xff]
      %4457 = vmatprep.subr.mxu0 0.0
      %4458 = vmatpush1.msra.mxu0 %v4456
      %4459 = vmatprep.subr.mxu0 0.0
      %4460 = vmatpush1.msra.mxu0 0.0
      %4461 = vmatprep.subr.mxu0 0.0
      %4462 = vmatpush1.msra.mxu0 0.0
      %4463 = vmatprep.subr.mxu0 0.0
      %4464 = vmatpush1.msra.mxu0 0.0
      %4465 = vmatprep.subr.mxu0 0.0
      %4466 = vmatpush1.msra.mxu0 0.0
      %4467 = vmatprep.subr.mxu0 0.0
      %4468 = vmatpush1.msra.mxu0 0.0
      %4469 = vmatprep.subr.mxu0 0.0
      %4470 = vmatpush1.msra.mxu0 0.0
      %4471 = vmatprep.subr.mxu0 0.0
      %4472 = vmatpush1.msra.mxu0 0.0
      %4473 = vmatprep.subr.mxu0 0.0
      %4474 = vmatpush1.msra.mxu0 0.0
      %4475 = vmatprep.subr.mxu0 0.0
      %4476 = vmatpush1.msra.mxu0 0.0
      %4477 = vmatprep.subr.mxu0 0.0
      %4478 = vmatpush1.msra.mxu0 0.0
      %4479 = vmatprep.subr.mxu0 0.0
      %4480 = vmatpush1.msra.mxu0 0.0
      %4481 = vmatprep.subr.mxu0 0.0
      %4482 = vmatpush1.msra.mxu0 0.0
      %4483 = vmatprep.subr.mxu0 0.0
      %4484 = vmatpush1.msra.mxu0 0.0
      %4485 = vmatprep.subr.mxu0 0.0
      %4486 = vmatpush1.msra.mxu0 0.0
      %4487 = vmatprep.subr.mxu0 0.0
      %4488 = vmatpush1.msra.mxu0 0.0
      %4489 = vmatprep.subr.mxu0 0.0
      %4490 = vmatpush1.msra.mxu0 0.0
      %4491 = vmatprep.subr.mxu0 0.0
      %4492 = vmatpush1.msra.mxu0 0.0
      %4493 = vmatprep.subr.mxu0 0.0
      %4494 = vmatpush1.msra.mxu0 0.0
      %4495 = vmatprep.subr.mxu0 0.0
      %4496 = vmatpush1.msra.mxu0 0.0
      %4497 = vmatprep.subr.mxu0 0.0
      %4498 = vmatpush1.msra.mxu0 0.0
      %4499 = vmatprep.subr.mxu0 0.0
      %4500 = vmatpush1.msra.mxu0 0.0
      %4501 = vmatprep.subr.mxu0 0.0
      %4502 = vmatpush1.msra.mxu0 0.0
      %4503 = vmatprep.subr.mxu0 0.0
      %4504 = vmatpush1.msra.mxu0 0.0
      %4505 = vmatprep.subr.mxu0 0.0
      %4506 = vmatpush1.msra.mxu0 0.0
      %4507 = vmatprep.subr.mxu0 0.0
      %4508 = vmatpush1.msra.mxu0 0.0
      %4509 = vmatprep.subr.mxu0 0.0
      %4510 = vmatpush1.msra.mxu0 0.0
      %4511 = vmatprep.subr.mxu0 0.0
      %4512 = vmatpush1.msra.mxu0 0.0
      %4513 = vmatprep.subr.mxu0 0.0
      %4514 = vmatpush1.msra.mxu0 0.0
      %4515 = vmatprep.subr.mxu0 0.0
      %4516 = vmatpush1.msra.mxu0 0.0
      %4517 = vmatprep.subr.mxu0 0.0
      %4518 = vmatpush1.msra.mxu0 0.0
      %4519 = vmatprep.subr.mxu0 0.0
      %4520 = vmatpush1.msra.mxu0 0.0
      %4521 = vmatprep.mubr.f32.mxu0 0.0
      %4522 = vmatmul.mubr.f32.gmra.mrb[0].mxu0 %v4328
      %v4523 = vpop.f32.mrb[0].mxu0
      %v4524 = vadd.f32 0.0, %v4523
      %v4525 = vpop.f32.mrb[0].mxu0
      %4526 = vmatprep.mubr.f32.mxu0 0.0
      %4527 = vmatmul.mubr.f32.gmra.mrb[0].mxu0 %v4331
      %v4528 = vpop.f32.mrb[0].mxu0
      %v4529 = vadd.f32 0.0, %v4528
      %v4530 = vpop.f32.mrb[0].mxu0
      %4531 = vmatprep.mubr.f32.mxu0 0.0
      %4532 = vmatmul.mubr.f32.gmra.mrb[0].mxu0 %v4334
      %v4533 = vpop.f32.mrb[0].mxu0
      %v4534 = vadd.f32 0.0, %v4533
      %v4535 = vpop.f32.mrb[0].mxu0
      %4536 = vmatprep.mubr.f32.mxu0 0.0
      %4537 = vmatmul.mubr.f32.gmra.mrb[0].mxu0 %v4337
      %v4538 = vpop.f32.mrb[0].mxu0
      %v4539 = vadd.f32 0.0, %v4538
      %v4540 = vpop.f32.mrb[0].mxu0
      %4541 = vmatprep.mubr.f32.mxu0 0.0
      %4542 = vmatmul.mubr.f32.gmra.mrb[0].mxu0 %v4340
      %v4543 = vpop.f32.mrb[0].mxu0
      %v4544 = vadd.f32 0.0, %v4543
      %v4545 = vpop.f32.mrb[0].mxu0
      %4546 = vmatprep.mubr.f32.mxu0 0.0
      %4547 = vmatmul.mubr.f32.gmra.mrb[0].mxu0 %v4343
      %v4548 = vpop.f32.mrb[0].mxu0
      %v4549 = vadd.f32 0.0, %v4548
      %v4550 = vpop.f32.mrb[0].mxu0
      %4551 = vmatprep.mubr.f32.mxu0 0.0
      %4552 = vmatmul.mubr.f32.gmra.mrb[0].mxu0 %v4346
      %v4553 = vpop.f32.mrb[0].mxu0
      %v4554 = vadd.f32 0.0, %v4553
      %v4555 = vpop.f32.mrb[0].mxu0
      %4556 = vmatprep.mubr.f32.mxu0 0.0
      %4557 = vmatmul.mubr.f32.gmra.mrb[0].mxu0 %v4349
      %v4558 = vpop.f32.mrb[0].mxu0
      %v4559 = vadd.f32 0.0, %v4558
      %v4560 = vpop.f32.mrb[0].mxu0
      %4561 = vdwg.mxu0
      %v4563 = vsel %vm2677, %v4288, 0
      %v4566 = vsel %vm2677, %v4293, 0
      %v4569 = vsel %vm2677, %v4298, 0
      %v4572 = vsel %vm2677, %v4303, 0
      %v4575 = vsel %vm2677, %v4308, 0
      %v4578 = vsel %vm2677, %v4313, 0
      %v4581 = vsel %vm2677, %v4318, 0
      %v4584 = vsel %vm2677, %v4323, 0
      %v4587 = vsel %vm2677, %v4418, 0
      %v4590 = vsel %vm2677, %v4423, 0
      %v4593 = vsel %vm2677, %v4428, 0
      %v4596 = vsel %vm2677, %v4433, 0
      %v4599 = vsel %vm2677, %v4438, 0
      %v4602 = vsel %vm2677, %v4443, 0
      %v4605 = vsel %vm2677, %v4448, 0
      %v4608 = vsel %vm2677, %v4453, 0
      %4610 = vmatprep.subr.mxu0 0.0
      %4611 = vmatpush1.xpose.msra.mxu0 %v4587
      %4612 = vmatprep.subr.mxu0 0.0
      %4613 = vmatpush1.xpose.msra.mxu0 %v4590
      %4614 = vmatprep.subr.mxu0 0.0
      %4615 = vmatpush1.xpose.msra.mxu0 %v4593
      %4616 = vmatprep.subr.mxu0 0.0
      %4617 = vmatpush1.xpose.msra.mxu0 %v4596
      %4618 = vmatprep.subr.mxu0 0.0
      %4619 = vmatpush1.xpose.msra.mxu0 %v4599
      %4620 = vmatprep.subr.mxu0 0.0
      %4621 = vmatpush1.xpose.msra.mxu0 %v4602
      %4622 = vmatprep.subr.mxu0 0.0
      %4623 = vmatpush1.xpose.msra.mxu0 %v4605
      %4624 = vmatprep.subr.mxu0 0.0
      %4625 = vmatpush1.xpose.msra.mxu0 %v4608
      %4626 = vmatprep.subr.mxu0 0.0
      %4627 = vmatpush1.xpose.msra.mxu0 0.0
      %4628 = vmatprep.subr.mxu0 0.0
      %4629 = vmatpush1.xpose.msra.mxu0 0.0
      %4630 = vmatprep.subr.mxu0 0.0
      %4631 = vmatpush1.xpose.msra.mxu0 0.0
      %4632 = vmatprep.subr.mxu0 0.0
      %4633 = vmatpush1.xpose.msra.mxu0 0.0
      %4634 = vmatprep.subr.mxu0 0.0
      %4635 = vmatpush1.xpose.msra.mxu0 0.0
      %4636 = vmatprep.subr.mxu0 0.0
      %4637 = vmatpush1.xpose.msra.mxu0 0.0
      %4638 = vmatprep.subr.mxu0 0.0
      %4639 = vmatpush1.xpose.msra.mxu0 0.0
      %4640 = vmatprep.subr.mxu0 0.0
      %4641 = vmatpush1.xpose.msra.mxu0 0.0
      %4642 = vmatprep.subr.mxu0 0.0
      %4643 = vmatpush1.xpose.msra.mxu0 0.0
      %4644 = vmatprep.subr.mxu0 0.0
      %4645 = vmatpush1.xpose.msra.mxu0 0.0
      %4646 = vmatprep.subr.mxu0 0.0
      %4647 = vmatpush1.xpose.msra.mxu0 0.0
      %4648 = vmatprep.subr.mxu0 0.0
      %4649 = vmatpush1.xpose.msra.mxu0 0.0
      %4650 = vmatprep.subr.mxu0 0.0
      %4651 = vmatpush1.xpose.msra.mxu0 0.0
      %4652 = vmatprep.subr.mxu0 0.0
      %4653 = vmatpush1.xpose.msra.mxu0 0.0
      %4654 = vmatprep.subr.mxu0 0.0
      %4655 = vmatpush1.xpose.msra.mxu0 0.0
      %4656 = vmatprep.subr.mxu0 0.0
      %4657 = vmatpush1.xpose.msra.mxu0 0.0
      %4658 = vmatprep.subr.mxu0 0.0
      %4659 = vmatpush1.xpose.msra.mxu0 0.0
      %4660 = vmatprep.subr.mxu0 0.0
      %4661 = vmatpush1.xpose.msra.mxu0 0.0
      %4662 = vmatprep.subr.mxu0 0.0
      %4663 = vmatpush1.xpose.msra.mxu0 0.0
      %4664 = vmatprep.subr.mxu0 0.0
      %4665 = vmatpush1.xpose.msra.mxu0 0.0
      %4666 = vmatprep.subr.mxu0 0.0
      %4667 = vmatpush1.xpose.msra.mxu0 0.0
      %4668 = vmatprep.subr.mxu0 0.0
      %4669 = vmatpush1.xpose.msra.mxu0 0.0
      %4670 = vmatprep.subr.mxu0 0.0
      %4671 = vmatpush1.xpose.msra.mxu0 0.0
      %4672 = vmatprep.subr.mxu0 0.0
      %4673 = vmatpush1.xpose.msra.mxu0 0.0
      %4674 = vmatprep.mubr.f32.mxu0 0.0
      %4675 = vmatmul.mubr.f32.gmra.mrb[0].mxu0 %v4563
      %v4676 = vpop.f32.mrb[0].mxu0
      %v4677 = vadd.f32 0.0, %v4676
      %v4678 = vpop.f32.mrb[0].mxu0
      %4679 = vmatprep.mubr.f32.mxu0 0.0
      %4680 = vmatmul.mubr.f32.gmra.mrb[0].mxu0 %v4566
      %v4681 = vpop.f32.mrb[0].mxu0
      %v4682 = vadd.f32 0.0, %v4681
      %v4683 = vpop.f32.mrb[0].mxu0
      %4684 = vmatprep.mubr.f32.mxu0 0.0
      %4685 = vmatmul.mubr.f32.gmra.mrb[0].mxu0 %v4569
      %v4686 = vpop.f32.mrb[0].mxu0
      %v4687 = vadd.f32 0.0, %v4686
      %v4688 = vpop.f32.mrb[0].mxu0
      %4689 = vmatprep.mubr.f32.mxu0 0.0
      %4690 = vmatmul.mubr.f32.gmra.mrb[0].mxu0 %v4572
      %v4691 = vpop.f32.mrb[0].mxu0
      %v4692 = vadd.f32 0.0, %v4691
      %v4693 = vpop.f32.mrb[0].mxu0
      %4694 = vmatprep.mubr.f32.mxu0 0.0
      %4695 = vmatmul.mubr.f32.gmra.mrb[0].mxu0 %v4575
      %v4696 = vpop.f32.mrb[0].mxu0
      %v4697 = vadd.f32 0.0, %v4696
      %v4698 = vpop.f32.mrb[0].mxu0
      %4699 = vmatprep.mubr.f32.mxu0 0.0
      %4700 = vmatmul.mubr.f32.gmra.mrb[0].mxu0 %v4578
      %v4701 = vpop.f32.mrb[0].mxu0
      %v4702 = vadd.f32 0.0, %v4701
      %v4703 = vpop.f32.mrb[0].mxu0
      %4704 = vmatprep.mubr.f32.mxu0 0.0
      %4705 = vmatmul.mubr.f32.gmra.mrb[0].mxu0 %v4581
      %v4706 = vpop.f32.mrb[0].mxu0
      %v4707 = vadd.f32 0.0, %v4706
      %v4708 = vpop.f32.mrb[0].mxu0
      %4709 = vmatprep.mubr.f32.mxu0 0.0
      %4710 = vmatmul.mubr.f32.gmra.mrb[0].mxu0 %v4584
      %v4711 = vpop.f32.mrb[0].mxu0
      %v4712 = vadd.f32 0.0, %v4711
      %v4713 = vpop.f32.mrb[0].mxu0
      %4714 = vdwg.mxu0
      %v4715 = vmul.f32 %v4677, 0.25
      %v4716 = vmul.f32 %v4682, 0.25
      %v4717 = vmul.f32 %v4687, 0.25
      %v4718 = vmul.f32 %v4692, 0.25
      %v4719 = vmul.f32 %v4697, 0.25
      %v4720 = vmul.f32 %v4702, 0.25
      %v4721 = vmul.f32 %v4707, 0.25
      %v4722 = vmul.f32 %v4712, 0.25
      %v4723 = vsel %vm2839, %v4715, -inf
      %4724 = vmax.xlane.f32.xlu0 %v4723
      %v4725 = vpop.xlane.xlu0 %4724
      %v4726 = vsel %vm2839, %v4716, -inf
      %4727 = vmax.xlane.f32.xlu0 %v4726
      %v4728 = vpop.xlane.xlu0 %4727
      %v4729 = vsel %vm2839, %v4717, -inf
      %4730 = vmax.xlane.f32.xlu0 %v4729
      %v4731 = vpop.xlane.xlu0 %4730
      %v4732 = vsel %vm2839, %v4718, -inf
      %4733 = vmax.xlane.f32.xlu0 %v4732
      %v4734 = vpop.xlane.xlu0 %4733
      %v4735 = vsel %vm2839, %v4719, -inf
      %4736 = vmax.xlane.f32.xlu0 %v4735
      %v4737 = vpop.xlane.xlu0 %4736
      %v4738 = vsel %vm2839, %v4720, -inf
      %4739 = vmax.xlane.f32.xlu0 %v4738
      %v4740 = vpop.xlane.xlu0 %4739
      %v4741 = vsel %vm2839, %v4721, -inf
      %4742 = vmax.xlane.f32.xlu0 %v4741
      %v4743 = vpop.xlane.xlu0 %4742
      %v4744 = vsel %vm2839, %v4722, -inf
      %4745 = vmax.xlane.f32.xlu0 %v4744
      %v4746 = vpop.xlane.xlu0 %4745
      %v4747 = vsub.f32 %v4715, %v4725
      %v4748 = vsub.f32 %v4716, %v4728
      %v4749 = vsub.f32 %v4717, %v4731
      %v4750 = vsub.f32 %v4718, %v4734
      %v4751 = vsub.f32 %v4719, %v4737
      %v4752 = vsub.f32 %v4720, %v4740
      %v4753 = vsub.f32 %v4721, %v4743
      %v4754 = vsub.f32 %v4722, %v4746
      %v4755 = vmul.f32 %v4747, 1.442695
      %v4756 = vpow.pop %v4755
      %v4757 = vmul.f32 %v4748, 1.442695
      %v4758 = vpow.pop %v4757
      %v4759 = vmul.f32 %v4749, 1.442695
      %v4760 = vpow.pop %v4759
      %v4761 = vmul.f32 %v4750, 1.442695
      %v4762 = vpow.pop %v4761
      %v4763 = vmul.f32 %v4751, 1.442695
      %v4764 = vpow.pop %v4763
      %v4765 = vmul.f32 %v4752, 1.442695
      %v4766 = vpow.pop %v4765
      %v4767 = vmul.f32 %v4753, 1.442695
      %v4768 = vpow.pop %v4767
      %v4769 = vmul.f32 %v4754, 1.442695
      %v4770 = vpow.pop %v4769
      %v4771 = vsel %vm2839, %v4756, 0.0
      %4772 = vadd.xlane.f32.xlu0 %v4771
      %v4773 = vpop.xlane.xlu0 %4772
      %v4774 = vsel %vm2839, %v4758, 0.0
      %4775 = vadd.xlane.f32.xlu0 %v4774
      %v4776 = vpop.xlane.xlu0 %4775
      %v4777 = vsel %vm2839, %v4760, 0.0
      %4778 = vadd.xlane.f32.xlu0 %v4777
      %v4779 = vpop.xlane.xlu0 %4778
      %v4780 = vsel %vm2839, %v4762, 0.0
      %4781 = vadd.xlane.f32.xlu0 %v4780
      %v4782 = vpop.xlane.xlu0 %4781
      %v4783 = vsel %vm2839, %v4764, 0.0
      %4784 = vadd.xlane.f32.xlu0 %v4783
      %v4785 = vpop.xlane.xlu0 %4784
      %v4786 = vsel %vm2839, %v4766, 0.0
      %4787 = vadd.xlane.f32.xlu0 %v4786
      %v4788 = vpop.xlane.xlu0 %4787
      %v4789 = vsel %vm2839, %v4768, 0.0
      %4790 = vadd.xlane.f32.xlu0 %v4789
      %v4791 = vpop.xlane.xlu0 %4790
      %v4792 = vsel %vm2839, %v4770, 0.0
      %4793 = vadd.xlane.f32.xlu0 %v4792
      %v4794 = vpop.xlane.xlu0 %4793
      %v4795 = vrcp.pop %v4773
      %v4796 = vrcp.pop %v4776
      %v4797 = vrcp.pop %v4779
      %v4798 = vrcp.pop %v4782
      %v4799 = vrcp.pop %v4785
      %v4800 = vrcp.pop %v4788
      %v4801 = vrcp.pop %v4791
      %v4802 = vrcp.pop %v4794
      %v4803 = vmul.f32 %v4756, %v4795
      %v4804 = vmul.f32 %v4758, %v4796
      %v4805 = vmul.f32 %v4760, %v4797
      %v4806 = vmul.f32 %v4762, %v4798
      %v4807 = vmul.f32 %v4764, %v4799
      %v4808 = vmul.f32 %v4766, %v4800
      %v4809 = vmul.f32 %v4768, %v4801
      %v4810 = vmul.f32 %v4770, %v4802
      %v4812 = vsel %vm2839, %v4803, 0
      %v4815 = vsel %vm2839, %v4804, 0
      %v4818 = vsel %vm2839, %v4805, 0
      %v4821 = vsel %vm2839, %v4806, 0
      %v4824 = vsel %vm2839, %v4807, 0
      %v4827 = vsel %vm2839, %v4808, 0
      %v4830 = vsel %vm2839, %v4809, 0
      %v4833 = vsel %vm2839, %v4810, 0
      %4835 = vmatprep.subr.mxu0 0.0
      %4836 = vmatpush1.msra.mxu0 %v4524
      %4837 = vmatprep.subr.mxu0 0.0
      %4838 = vmatpush1.msra.mxu0 %v4529
      %4839 = vmatprep.subr.mxu0 0.0
      %4840 = vmatpush1.msra.mxu0 %v4534
      %4841 = vmatprep.subr.mxu0 0.0
      %4842 = vmatpush1.msra.mxu0 %v4539
      %4843 = vmatprep.subr.mxu0 0.0
      %4844 = vmatpush1.msra.mxu0 %v4544
      %4845 = vmatprep.subr.mxu0 0.0
      %4846 = vmatpush1.msra.mxu0 %v4549
      %4847 = vmatprep.subr.mxu0 0.0
      %4848 = vmatpush1.msra.mxu0 %v4554
      %4849 = vmatprep.subr.mxu0 0.0
      %4850 = vmatpush1.msra.mxu0 %v4559
      %4851 = vmatprep.subr.mxu0 0.0
      %4852 = vmatpush1.msra.mxu0 0.0
      %4853 = vmatprep.subr.mxu0 0.0
      %4854 = vmatpush1.msra.mxu0 0.0
      %4855 = vmatprep.subr.mxu0 0.0
      %4856 = vmatpush1.msra.mxu0 0.0
      %4857 = vmatprep.subr.mxu0 0.0
      %4858 = vmatpush1.msra.mxu0 0.0
      %4859 = vmatprep.subr.mxu0 0.0
      %4860 = vmatpush1.msra.mxu0 0.0
      %4861 = vmatprep.subr.mxu0 0.0
      %4862 = vmatpush1.msra.mxu0 0.0
      %4863 = vmatprep.subr.mxu0 0.0
      %4864 = vmatpush1.msra.mxu0 0.0
      %4865 = vmatprep.subr.mxu0 0.0
      %4866 = vmatpush1.msra.mxu0 0.0
      %4867 = vmatprep.subr.mxu0 0.0
      %4868 = vmatpush1.msra.mxu0 0.0
      %4869 = vmatprep.subr.mxu0 0.0
      %4870 = vmatpush1.msra.mxu0 0.0
      %4871 = vmatprep.subr.mxu0 0.0
      %4872 = vmatpush1.msra.mxu0 0.0
      %4873 = vmatprep.subr.mxu0 0.0
      %4874 = vmatpush1.msra.mxu0 0.0
      %4875 = vmatprep.subr.mxu0 0.0
      %4876 = vmatpush1.msra.mxu0 0.0
      %4877 = vmatprep.subr.mxu0 0.0
      %4878 = vmatpush1.msra.mxu0 0.0
      %4879 = vmatprep.subr.mxu0 0.0
      %4880 = vmatpush1.msra.mxu0 0.0
      %4881 = vmatprep.subr.mxu0 0.0
      %4882 = vmatpush1.msra.mxu0 0.0
      %4883 = vmatprep.subr.mxu0 0.0
      %4884 = vmatpush1.msra.mxu0 0.0
      %4885 = vmatprep.subr.mxu0 0.0
      %4886 = vmatpush1.msra.mxu0 0.0
      %4887 = vmatprep.subr.mxu0 0.0
      %4888 = vmatpush1.msra.mxu0 0.0
      %4889 = vmatprep.subr.mxu0 0.0
      %4890 = vmatpush1.msra.mxu0 0.0
      %4891 = vmatprep.subr.mxu0 0.0
      %4892 = vmatpush1.msra.mxu0 0.0
      %4893 = vmatprep.subr.mxu0 0.0
      %4894 = vmatpush1.msra.mxu0 0.0
      %4895 = vmatprep.subr.mxu0 0.0
      %4896 = vmatpush1.msra.mxu0 0.0
      %4897 = vmatprep.subr.mxu0 0.0
      %4898 = vmatpush1.msra.mxu0 0.0
      %4899 = vmatprep.mubr.f32.mxu0 0.0
      %4900 = vmatmul.mubr.f32.gmra.mrb[0].mxu0 %v4812
      %v4901 = vpop.f32.mrb[0].mxu0
      %v4902 = vadd.f32 0.0, %v4901
      %v4903 = vpop.f32.mrb[0].mxu0
      %4904 = vmatprep.mubr.f32.mxu0 0.0
      %4905 = vmatmul.mubr.f32.gmra.mrb[0].mxu0 %v4815
      %v4906 = vpop.f32.mrb[0].mxu0
      %v4907 = vadd.f32 0.0, %v4906
      %v4908 = vpop.f32.mrb[0].mxu0
      %4909 = vmatprep.mubr.f32.mxu0 0.0
      %4910 = vmatmul.mubr.f32.gmra.mrb[0].mxu0 %v4818
      %v4911 = vpop.f32.mrb[0].mxu0
      %v4912 = vadd.f32 0.0, %v4911
      %v4913 = vpop.f32.mrb[0].mxu0
      %4914 = vmatprep.mubr.f32.mxu0 0.0
      %4915 = vmatmul.mubr.f32.gmra.mrb[0].mxu0 %v4821
      %v4916 = vpop.f32.mrb[0].mxu0
      %v4917 = vadd.f32 0.0, %v4916
      %v4918 = vpop.f32.mrb[0].mxu0
      %4919 = vmatprep.mubr.f32.mxu0 0.0
      %4920 = vmatmul.mubr.f32.gmra.mrb[0].mxu0 %v4824
      %v4921 = vpop.f32.mrb[0].mxu0
      %v4922 = vadd.f32 0.0, %v4921
      %v4923 = vpop.f32.mrb[0].mxu0
      %4924 = vmatprep.mubr.f32.mxu0 0.0
      %4925 = vmatmul.mubr.f32.gmra.mrb[0].mxu0 %v4827
      %v4926 = vpop.f32.mrb[0].mxu0
      %v4927 = vadd.f32 0.0, %v4926
      %v4928 = vpop.f32.mrb[0].mxu0
      %4929 = vmatprep.mubr.f32.mxu0 0.0
      %4930 = vmatmul.mubr.f32.gmra.mrb[0].mxu0 %v4830
      %v4931 = vpop.f32.mrb[0].mxu0
      %v4932 = vadd.f32 0.0, %v4931
      %v4933 = vpop.f32.mrb[0].mxu0
      %4934 = vmatprep.mubr.f32.mxu0 0.0
      %4935 = vmatmul.mubr.f32.gmra.mrb[0].mxu0 %v4833
      %v4936 = vpop.f32.mrb[0].mxu0
      %v4937 = vadd.f32 0.0, %v4936
      %v4938 = vpop.f32.mrb[0].mxu0
      %4939 = vdwg.mxu0
      %v4940 = vld [vmem:[%s49] sm:$0xff]
      %v4941 = vld [vmem:[%s49 + $0x8] sm:$0xff]
      %v4943 = vsel %vm2677, %v4902, 0
      %v4946 = vsel %vm2677, %v4907, 0
      %v4949 = vsel %vm2677, %v4912, 0
      %v4952 = vsel %vm2677, %v4917, 0
      %v4955 = vsel %vm2677, %v4922, 0
      %v4958 = vsel %vm2677, %v4927, 0
      %v4961 = vsel %vm2677, %v4932, 0
      %v4964 = vsel %vm2677, %v4937, 0
      %4966 = vmatprep.subr.mxu0 0.0
      %4967 = vmatpush1.msra.mxu0 %v4940
      %4968 = vmatprep.subr.mxu0 0.0
      %4969 = vmatpush1.msra.mxu0 %v4941
      %4970 = vmatprep.subr.mxu0 0.0
      %4971 = vmatpush1.msra.mxu0 0.0
      %4972 = vmatprep.subr.mxu0 0.0
      %4973 = vmatpush1.msra.mxu0 0.0
      %4974 = vmatprep.subr.mxu0 0.0
      %4975 = vmatpush1.msra.mxu0 0.0
      %4976 = vmatprep.subr.mxu0 0.0
      %4977 = vmatpush1.msra.mxu0 0.0
      %4978 = vmatprep.subr.mxu0 0.0
      %4979 = vmatpush1.msra.mxu0 0.0
      %4980 = vmatprep.subr.mxu0 0.0
      %4981 = vmatpush1.msra.mxu0 0.0
      %4982 = vmatprep.subr.mxu0 0.0
      %4983 = vmatpush1.msra.mxu0 0.0
      %4984 = vmatprep.subr.mxu0 0.0
      %4985 = vmatpush1.msra.mxu0 0.0
      %4986 = vmatprep.subr.mxu0 0.0
      %4987 = vmatpush1.msra.mxu0 0.0
      %4988 = vmatprep.subr.mxu0 0.0
      %4989 = vmatpush1.msra.mxu0 0.0
      %4990 = vmatprep.subr.mxu0 0.0
      %4991 = vmatpush1.msra.mxu0 0.0
      %4992 = vmatprep.subr.mxu0 0.0
      %4993 = vmatpush1.msra.mxu0 0.0
      %4994 = vmatprep.subr.mxu0 0.0
      %4995 = vmatpush1.msra.mxu0 0.0
      %4996 = vmatprep.subr.mxu0 0.0
      %4997 = vmatpush1.msra.mxu0 0.0
      %4998 = vmatprep.subr.mxu0 0.0
      %4999 = vmatpush1.msra.mxu0 0.0
      %5000 = vmatprep.subr.mxu0 0.0
      %5001 = vmatpush1.msra.mxu0 0.0
      %5002 = vmatprep.subr.mxu0 0.0
      %5003 = vmatpush1.msra.mxu0 0.0
      %5004 = vmatprep.subr.mxu0 0.0
      %5005 = vmatpush1.msra.mxu0 0.0
      %5006 = vmatprep.subr.mxu0 0.0
      %5007 = vmatpush1.msra.mxu0 0.0
      %5008 = vmatprep.subr.mxu0 0.0
      %5009 = vmatpush1.msra.mxu0 0.0
      %5010 = vmatprep.subr.mxu0 0.0
      %5011 = vmatpush1.msra.mxu0 0.0
      %5012 = vmatprep.subr.mxu0 0.0
      %5013 = vmatpush1.msra.mxu0 0.0
      %5014 = vmatprep.subr.mxu0 0.0
      %5015 = vmatpush1.msra.mxu0 0.0
      %5016 = vmatprep.subr.mxu0 0.0
      %5017 = vmatpush1.msra.mxu0 0.0
      %5018 = vmatprep.subr.mxu0 0.0
      %5019 = vmatpush1.msra.mxu0 0.0
      %5020 = vmatprep.subr.mxu0 0.0
      %5021 = vmatpush1.msra.mxu0 0.0
      %5022 = vmatprep.subr.mxu0 0.0
      %5023 = vmatpush1.msra.mxu0 0.0
      %5024 = vmatprep.subr.mxu0 0.0
      %5025 = vmatpush1.msra.mxu0 0.0
      %5026 = vmatprep.subr.mxu0 0.0
      %5027 = vmatpush1.msra.mxu0 0.0
      %5028 = vmatprep.subr.mxu0 0.0
      %5029 = vmatpush1.msra.mxu0 0.0
      %5030 = vmatprep.mubr.f32.mxu0 0.0
      %5031 = vmatmul.mubr.f32.gmra.mrb[0].mxu0 %v4943
      %v5032 = vpop.f32.mrb[0].mxu0
      %v5033 = vadd.f32 0.0, %v5032
      %v5034 = vpop.f32.mrb[0].mxu0
      %5035 = vmatprep.mubr.f32.mxu0 0.0
      %5036 = vmatmul.mubr.f32.gmra.mrb[0].mxu0 %v4946
      %v5037 = vpop.f32.mrb[0].mxu0
      %v5038 = vadd.f32 0.0, %v5037
      %v5039 = vpop.f32.mrb[0].mxu0
      %5040 = vmatprep.mubr.f32.mxu0 0.0
      %5041 = vmatmul.mubr.f32.gmra.mrb[0].mxu0 %v4949
      %v5042 = vpop.f32.mrb[0].mxu0
      %v5043 = vadd.f32 0.0, %v5042
      %v5044 = vpop.f32.mrb[0].mxu0
      %5045 = vmatprep.mubr.f32.mxu0 0.0
      %5046 = vmatmul.mubr.f32.gmra.mrb[0].mxu0 %v4952
      %v5047 = vpop.f32.mrb[0].mxu0
      %v5048 = vadd.f32 0.0, %v5047
      %v5049 = vpop.f32.mrb[0].mxu0
      %5050 = vmatprep.mubr.f32.mxu0 0.0
      %5051 = vmatmul.mubr.f32.gmra.mrb[0].mxu0 %v4955
      %v5052 = vpop.f32.mrb[0].mxu0
      %v5053 = vadd.f32 0.0, %v5052
      %v5054 = vpop.f32.mrb[0].mxu0
      %5055 = vmatprep.mubr.f32.mxu0 0.0
      %5056 = vmatmul.mubr.f32.gmra.mrb[0].mxu0 %v4958
      %v5057 = vpop.f32.mrb[0].mxu0
      %v5058 = vadd.f32 0.0, %v5057
      %v5059 = vpop.f32.mrb[0].mxu0
      %5060 = vmatprep.mubr.f32.mxu0 0.0
      %5061 = vmatmul.mubr.f32.gmra.mrb[0].mxu0 %v4961
      %v5062 = vpop.f32.mrb[0].mxu0
      %v5063 = vadd.f32 0.0, %v5062
      %v5064 = vpop.f32.mrb[0].mxu0
      %5065 = vmatprep.mubr.f32.mxu0 0.0
      %5066 = vmatmul.mubr.f32.gmra.mrb[0].mxu0 %v4964
      %v5067 = vpop.f32.mrb[0].mxu0
      %v5068 = vadd.f32 0.0, %v5067
      %v5069 = vpop.f32.mrb[0].mxu0
      %5070 = vdwg.mxu0
      %v5072 = vlaneseq
      %v5073 = vshrl.u32 %v5072, 7
      %v5074 = vsub.s32 0, %v5073
      %v5075 = vrot.slane %v4192, %v5074
      %v5077 = vadd.f32 %v5075, %v5033
      %v5078 = vadd.f32 %v5075, %v5038
      %v5079 = vadd.f32 %v5075, %v5043
      %v5080 = vadd.f32 %v5075, %v5048
      %v5081 = vadd.f32 %v5075, %v5053
      %v5082 = vadd.f32 %v5075, %v5058
      %v5083 = vadd.f32 %v5075, %v5063
      %v5084 = vadd.f32 %v5075, %v5068
      %s5085 = scalar_lea.vmem %s43, 32
      %v5086 = vld [vmem:[%s5085] sm:$0xff]
      %v5087 = vld [vmem:[%s5085 + $0x8] sm:$0xff]
      %v5088 = vld [vmem:[%s5085 + $0x10] sm:$0xff]
      %v5089 = vld [vmem:[%s5085 + $0x18] sm:$0xff]
      %5090 = vmatprep.subr.mxu0 0.0
      %5091 = vmatpush1.msra.mxu0 %v5086
      %5092 = vmatprep.subr.mxu0 0.0
      %5093 = vmatpush1.msra.mxu0 %v5087
      %5094 = vmatprep.subr.mxu0 0.0
      %5095 = vmatpush1.msra.mxu0 %v5088
      %5096 = vmatprep.subr.mxu0 0.0
      %5097 = vmatpush1.msra.mxu0 %v5089
      %5098 = vmatprep.subr.mxu0 0.0
      %5099 = vmatpush1.msra.mxu0 0.0
      %5100 = vmatprep.subr.mxu0 0.0
      %5101 = vmatpush1.msra.mxu0 0.0
      %5102 = vmatprep.subr.mxu0 0.0
      %5103 = vmatpush1.msra.mxu0 0.0
      %5104 = vmatprep.subr.mxu0 0.0
      %5105 = vmatpush1.msra.mxu0 0.0
      %5106 = vmatprep.subr.mxu0 0.0
      %5107 = vmatpush1.msra.mxu0 0.0
      %5108 = vmatprep.subr.mxu0 0.0
      %5109 = vmatpush1.msra.mxu0 0.0
      %5110 = vmatprep.subr.mxu0 0.0
      %5111 = vmatpush1.msra.mxu0 0.0
      %5112 = vmatprep.subr.mxu0 0.0
      %5113 = vmatpush1.msra.mxu0 0.0
      %5114 = vmatprep.subr.mxu0 0.0
      %5115 = vmatpush1.msra.mxu0 0.0
      %5116 = vmatprep.subr.mxu0 0.0
      %5117 = vmatpush1.msra.mxu0 0.0
      %5118 = vmatprep.subr.mxu0 0.0
      %5119 = vmatpush1.msra.mxu0 0.0
      %5120 = vmatprep.subr.mxu0 0.0
      %5121 = vmatpush1.msra.mxu0 0.0
      %5122 = vmatprep.subr.mxu0 0.0
      %5123 = vmatpush1.msra.mxu0 0.0
      %5124 = vmatprep.subr.mxu0 0.0
      %5125 = vmatpush1.msra.mxu0 0.0
      %5126 = vmatprep.subr.mxu0 0.0
      %5127 = vmatpush1.msra.mxu0 0.0
      %5128 = vmatprep.subr.mxu0 0.0
      %5129 = vmatpush1.msra.mxu0 0.0
      %5130 = vmatprep.subr.mxu0 0.0
      %5131 = vmatpush1.msra.mxu0 0.0
      %5132 = vmatprep.subr.mxu0 0.0
      %5133 = vmatpush1.msra.mxu0 0.0
      %5134 = vmatprep.subr.mxu0 0.0
      %5135 = vmatpush1.msra.mxu0 0.0
      %5136 = vmatprep.subr.mxu0 0.0
      %5137 = vmatpush1.msra.mxu0 0.0
      %5138 = vmatprep.subr.mxu0 0.0
      %5139 = vmatpush1.msra.mxu0 0.0
      %5140 = vmatprep.subr.mxu0 0.0
      %5141 = vmatpush1.msra.mxu0 0.0
      %5142 = vmatprep.subr.mxu0 0.0
      %5143 = vmatpush1.msra.mxu0 0.0
      %5144 = vmatprep.subr.mxu0 0.0
      %5145 = vmatpush1.msra.mxu0 0.0
      %5146 = vmatprep.subr.mxu0 0.0
      %5147 = vmatpush1.msra.mxu0 0.0
      %5148 = vmatprep.subr.mxu0 0.0
      %5149 = vmatpush1.msra.mxu0 0.0
      %5150 = vmatprep.subr.mxu0 0.0
      %5151 = vmatpush1.msra.mxu0 0.0
      %5152 = vmatprep.subr.mxu0 0.0
      %5153 = vmatpush1.msra.mxu0 0.0
      %5154 = vmatprep.mubr.f32.mxu0 0.0
      %5155 = vmatmul.mubr.f32.gmra.mrb[0].mxu0 %v4198
      %v5156 = vpop.f32.mrb[0].mxu0
      %v5157 = vadd.f32 0.0, %v5156
      %v5158 = vpop.f32.mrb[0].mxu0
      %5159 = vmatprep.mubr.f32.mxu0 0.0
      %5160 = vmatmul.mubr.f32.gmra.mrb[0].mxu0 %v4201
      %v5161 = vpop.f32.mrb[0].mxu0
      %v5162 = vadd.f32 0.0, %v5161
      %v5163 = vpop.f32.mrb[0].mxu0
      %5164 = vmatprep.mubr.f32.mxu0 0.0
      %5165 = vmatmul.mubr.f32.gmra.mrb[0].mxu0 %v4204
      %v5166 = vpop.f32.mrb[0].mxu0
      %v5167 = vadd.f32 0.0, %v5166
      %v5168 = vpop.f32.mrb[0].mxu0
      %5169 = vmatprep.mubr.f32.mxu0 0.0
      %5170 = vmatmul.mubr.f32.gmra.mrb[0].mxu0 %v4207
      %v5171 = vpop.f32.mrb[0].mxu0
      %v5172 = vadd.f32 0.0, %v5171
      %v5173 = vpop.f32.mrb[0].mxu0
      %5174 = vmatprep.mubr.f32.mxu0 0.0
      %5175 = vmatmul.mubr.f32.gmra.mrb[0].mxu0 %v4210
      %v5176 = vpop.f32.mrb[0].mxu0
      %v5177 = vadd.f32 0.0, %v5176
      %v5178 = vpop.f32.mrb[0].mxu0
      %5179 = vmatprep.mubr.f32.mxu0 0.0
      %5180 = vmatmul.mubr.f32.gmra.mrb[0].mxu0 %v4213
      %v5181 = vpop.f32.mrb[0].mxu0
      %v5182 = vadd.f32 0.0, %v5181
      %v5183 = vpop.f32.mrb[0].mxu0
      %5184 = vmatprep.mubr.f32.mxu0 0.0
      %5185 = vmatmul.mubr.f32.gmra.mrb[0].mxu0 %v4216
      %v5186 = vpop.f32.mrb[0].mxu0
      %v5187 = vadd.f32 0.0, %v5186
      %v5188 = vpop.f32.mrb[0].mxu0
      %5189 = vmatprep.mubr.f32.mxu0 0.0
      %5190 = vmatmul.mubr.f32.gmra.mrb[0].mxu0 %v4219
      %v5191 = vpop.f32.mrb[0].mxu0
      %v5192 = vadd.f32 0.0, %v5191
      %v5193 = vpop.f32.mrb[0].mxu0
      %5194 = vdwg.mxu0
      %s5195 = scalar_lea.vmem %s45, 8
      %v5196 = vld [vmem:[%s5195] sm:$0xff]
      %5197 = vmatprep.subr.mxu0 0.0
      %5198 = vmatpush1.msra.mxu0 %v5196
      %5199 = vmatprep.subr.mxu0 0.0
      %5200 = vmatpush1.msra.mxu0 0.0
      %5201 = vmatprep.subr.mxu0 0.0
      %5202 = vmatpush1.msra.mxu0 0.0
      %5203 = vmatprep.subr.mxu0 0.0
      %5204 = vmatpush1.msra.mxu0 0.0
      %5205 = vmatprep.subr.mxu0 0.0
      %5206 = vmatpush1.msra.mxu0 0.0
      %5207 = vmatprep.subr.mxu0 0.0
      %5208 = vmatpush1.msra.mxu0 0.0
      %5209 = vmatprep.subr.mxu0 0.0
      %5210 = vmatpush1.msra.mxu0 0.0
      %5211 = vmatprep.subr.mxu0 0.0
      %5212 = vmatpush1.msra.mxu0 0.0
      %5213 = vmatprep.subr.mxu0 0.0
      %5214 = vmatpush1.msra.mxu0 0.0
      %5215 = vmatprep.subr.mxu0 0.0
      %5216 = vmatpush1.msra.mxu0 0.0
      %5217 = vmatprep.subr.mxu0 0.0
      %5218 = vmatpush1.msra.mxu0 0.0
      %5219 = vmatprep.subr.mxu0 0.0
      %5220 = vmatpush1.msra.mxu0 0.0
      %5221 = vmatprep.subr.mxu0 0.0
      %5222 = vmatpush1.msra.mxu0 0.0
      %5223 = vmatprep.subr.mxu0 0.0
      %5224 = vmatpush1.msra.mxu0 0.0
      %5225 = vmatprep.subr.mxu0 0.0
      %5226 = vmatpush1.msra.mxu0 0.0
      %5227 = vmatprep.subr.mxu0 0.0
      %5228 = vmatpush1.msra.mxu0 0.0
      %5229 = vmatprep.subr.mxu0 0.0
      %5230 = vmatpush1.msra.mxu0 0.0
      %5231 = vmatprep.subr.mxu0 0.0
      %5232 = vmatpush1.msra.mxu0 0.0
      %5233 = vmatprep.subr.mxu0 0.0
      %5234 = vmatpush1.msra.mxu0 0.0
      %5235 = vmatprep.subr.mxu0 0.0
      %5236 = vmatpush1.msra.mxu0 0.0
      %5237 = vmatprep.subr.mxu0 0.0
      %5238 = vmatpush1.msra.mxu0 0.0
      %5239 = vmatprep.subr.mxu0 0.0
      %5240 = vmatpush1.msra.mxu0 0.0
      %5241 = vmatprep.subr.mxu0 0.0
      %5242 = vmatpush1.msra.mxu0 0.0
      %5243 = vmatprep.subr.mxu0 0.0
      %5244 = vmatpush1.msra.mxu0 0.0
      %5245 = vmatprep.subr.mxu0 0.0
      %5246 = vmatpush1.msra.mxu0 0.0
      %5247 = vmatprep.subr.mxu0 0.0
      %5248 = vmatpush1.msra.mxu0 0.0
      %5249 = vmatprep.subr.mxu0 0.0
      %5250 = vmatpush1.msra.mxu0 0.0
      %5251 = vmatprep.subr.mxu0 0.0
      %5252 = vmatpush1.msra.mxu0 0.0
      %5253 = vmatprep.subr.mxu0 0.0
      %5254 = vmatpush1.msra.mxu0 0.0
      %5255 = vmatprep.subr.mxu0 0.0
      %5256 = vmatpush1.msra.mxu0 0.0
      %5257 = vmatprep.subr.mxu0 0.0
      %5258 = vmatpush1.msra.mxu0 0.0
      %5259 = vmatprep.subr.mxu0 0.0
      %5260 = vmatpush1.msra.mxu0 0.0
      %5261 = vmatprep.mubr.f32.mxu0 0.0
      %5262 = vmatmul.mubr.f32.gmra.mrb[0].mxu0 %v4328
      %v5263 = vpop.f32.mrb[0].mxu0
      %v5264 = vadd.f32 0.0, %v5263
      %v5265 = vpop.f32.mrb[0].mxu0
      %5266 = vmatprep.mubr.f32.mxu0 0.0
      %5267 = vmatmul.mubr.f32.gmra.mrb[0].mxu0 %v4331
      %v5268 = vpop.f32.mrb[0].mxu0
      %v5269 = vadd.f32 0.0, %v5268
      %v5270 = vpop.f32.mrb[0].mxu0
      %5271 = vmatprep.mubr.f32.mxu0 0.0
      %5272 = vmatmul.mubr.f32.gmra.mrb[0].mxu0 %v4334
      %v5273 = vpop.f32.mrb[0].mxu0
      %v5274 = vadd.f32 0.0, %v5273
      %v5275 = vpop.f32.mrb[0].mxu0
      %5276 = vmatprep.mubr.f32.mxu0 0.0
      %5277 = vmatmul.mubr.f32.gmra.mrb[0].mxu0 %v4337
      %v5278 = vpop.f32.mrb[0].mxu0
      %v5279 = vadd.f32 0.0, %v5278
      %v5280 = vpop.f32.mrb[0].mxu0
      %5281 = vmatprep.mubr.f32.mxu0 0.0
      %5282 = vmatmul.mubr.f32.gmra.mrb[0].mxu0 %v4340
      %v5283 = vpop.f32.mrb[0].mxu0
      %v5284 = vadd.f32 0.0, %v5283
      %v5285 = vpop.f32.mrb[0].mxu0
      %5286 = vmatprep.mubr.f32.mxu0 0.0
      %5287 = vmatmul.mubr.f32.gmra.mrb[0].mxu0 %v4343
      %v5288 = vpop.f32.mrb[0].mxu0
      %v5289 = vadd.f32 0.0, %v5288
      %v5290 = vpop.f32.mrb[0].mxu0
      %5291 = vmatprep.mubr.f32.mxu0 0.0
      %5292 = vmatmul.mubr.f32.gmra.mrb[0].mxu0 %v4346
      %v5293 = vpop.f32.mrb[0].mxu0
      %v5294 = vadd.f32 0.0, %v5293
      %v5295 = vpop.f32.mrb[0].mxu0
      %5296 = vmatprep.mubr.f32.mxu0 0.0
      %5297 = vmatmul.mubr.f32.gmra.mrb[0].mxu0 %v4349
      %v5298 = vpop.f32.mrb[0].mxu0
      %v5299 = vadd.f32 0.0, %v5298
      %v5300 = vpop.f32.mrb[0].mxu0
      %5301 = vdwg.mxu0
      %s5302 = scalar_lea.vmem %s47, 8
      %v5303 = vld [vmem:[%s5302] sm:$0xff]
      %5304 = vmatprep.subr.mxu0 0.0
      %5305 = vmatpush1.msra.mxu0 %v5303
      %5306 = vmatprep.subr.mxu0 0.0
      %5307 = vmatpush1.msra.mxu0 0.0
      %5308 = vmatprep.subr.mxu0 0.0
      %5309 = vmatpush1.msra.mxu0 0.0
      %5310 = vmatprep.subr.mxu0 0.0
      %5311 = vmatpush1.msra.mxu0 0.0
      %5312 = vmatprep.subr.mxu0 0.0
      %5313 = vmatpush1.msra.mxu0 0.0
      %5314 = vmatprep.subr.mxu0 0.0
      %5315 = vmatpush1.msra.mxu0 0.0
      %5316 = vmatprep.subr.mxu0 0.0
      %5317 = vmatpush1.msra.mxu0 0.0
      %5318 = vmatprep.subr.mxu0 0.0
      %5319 = vmatpush1.msra.mxu0 0.0
      %5320 = vmatprep.subr.mxu0 0.0
      %5321 = vmatpush1.msra.mxu0 0.0
      %5322 = vmatprep.subr.mxu0 0.0
      %5323 = vmatpush1.msra.mxu0 0.0
      %5324 = vmatprep.subr.mxu0 0.0
      %5325 = vmatpush1.msra.mxu0 0.0
      %5326 = vmatprep.subr.mxu0 0.0
      %5327 = vmatpush1.msra.mxu0 0.0
      %5328 = vmatprep.subr.mxu0 0.0
      %5329 = vmatpush1.msra.mxu0 0.0
      %5330 = vmatprep.subr.mxu0 0.0
      %5331 = vmatpush1.msra.mxu0 0.0
      %5332 = vmatprep.subr.mxu0 0.0
      %5333 = vmatpush1.msra.mxu0 0.0
      %5334 = vmatprep.subr.mxu0 0.0
      %5335 = vmatpush1.msra.mxu0 0.0
      %5336 = vmatprep.subr.mxu0 0.0
      %5337 = vmatpush1.msra.mxu0 0.0
      %5338 = vmatprep.subr.mxu0 0.0
      %5339 = vmatpush1.msra.mxu0 0.0
      %5340 = vmatprep.subr.mxu0 0.0
      %5341 = vmatpush1.msra.mxu0 0.0
      %5342 = vmatprep.subr.mxu0 0.0
      %5343 = vmatpush1.msra.mxu0 0.0
      %5344 = vmatprep.subr.mxu0 0.0
      %5345 = vmatpush1.msra.mxu0 0.0
      %5346 = vmatprep.subr.mxu0 0.0
      %5347 = vmatpush1.msra.mxu0 0.0
      %5348 = vmatprep.subr.mxu0 0.0
      %5349 = vmatpush1.msra.mxu0 0.0
      %5350 = vmatprep.subr.mxu0 0.0
      %5351 = vmatpush1.msra.mxu0 0.0
      %5352 = vmatprep.subr.mxu0 0.0
      %5353 = vmatpush1.msra.mxu0 0.0
      %5354 = vmatprep.subr.mxu0 0.0
      %5355 = vmatpush1.msra.mxu0 0.0
      %5356 = vmatprep.subr.mxu0 0.0
      %5357 = vmatpush1.msra.mxu0 0.0
      %5358 = vmatprep.subr.mxu0 0.0
      %5359 = vmatpush1.msra.mxu0 0.0
      %5360 = vmatprep.subr.mxu0 0.0
      %5361 = vmatpush1.msra.mxu0 0.0
      %5362 = vmatprep.subr.mxu0 0.0
      %5363 = vmatpush1.msra.mxu0 0.0
      %5364 = vmatprep.subr.mxu0 0.0
      %5365 = vmatpush1.msra.mxu0 0.0
      %5366 = vmatprep.subr.mxu0 0.0
      %5367 = vmatpush1.msra.mxu0 0.0
      %5368 = vmatprep.mubr.f32.mxu0 0.0
      %5369 = vmatmul.mubr.f32.gmra.mrb[0].mxu0 %v4328
      %v5370 = vpop.f32.mrb[0].mxu0
      %v5371 = vadd.f32 0.0, %v5370
      %v5372 = vpop.f32.mrb[0].mxu0
      %5373 = vmatprep.mubr.f32.mxu0 0.0
      %5374 = vmatmul.mubr.f32.gmra.mrb[0].mxu0 %v4331
      %v5375 = vpop.f32.mrb[0].mxu0
      %v5376 = vadd.f32 0.0, %v5375
      %v5377 = vpop.f32.mrb[0].mxu0
      %5378 = vmatprep.mubr.f32.mxu0 0.0
      %5379 = vmatmul.mubr.f32.gmra.mrb[0].mxu0 %v4334
      %v5380 = vpop.f32.mrb[0].mxu0
      %v5381 = vadd.f32 0.0, %v5380
      %v5382 = vpop.f32.mrb[0].mxu0
      %5383 = vmatprep.mubr.f32.mxu0 0.0
      %5384 = vmatmul.mubr.f32.gmra.mrb[0].mxu0 %v4337
      %v5385 = vpop.f32.mrb[0].mxu0
      %v5386 = vadd.f32 0.0, %v5385
      %v5387 = vpop.f32.mrb[0].mxu0
      %5388 = vmatprep.mubr.f32.mxu0 0.0
      %5389 = vmatmul.mubr.f32.gmra.mrb[0].mxu0 %v4340
      %v5390 = vpop.f32.mrb[0].mxu0
      %v5391 = vadd.f32 0.0, %v5390
      %v5392 = vpop.f32.mrb[0].mxu0
      %5393 = vmatprep.mubr.f32.mxu0 0.0
      %5394 = vmatmul.mubr.f32.gmra.mrb[0].mxu0 %v4343
      %v5395 = vpop.f32.mrb[0].mxu0
      %v5396 = vadd.f32 0.0, %v5395
      %v5397 = vpop.f32.mrb[0].mxu0
      %5398 = vmatprep.mubr.f32.mxu0 0.0
      %5399 = vmatmul.mubr.f32.gmra.mrb[0].mxu0 %v4346
      %v5400 = vpop.f32.mrb[0].mxu0
      %v5401 = vadd.f32 0.0, %v5400
      %v5402 = vpop.f32.mrb[0].mxu0
      %5403 = vmatprep.mubr.f32.mxu0 0.0
      %5404 = vmatmul.mubr.f32.gmra.mrb[0].mxu0 %v4349
      %v5405 = vpop.f32.mrb[0].mxu0
      %v5406 = vadd.f32 0.0, %v5405
      %v5407 = vpop.f32.mrb[0].mxu0
      %5408 = vdwg.mxu0
      %v5410 = vsel %vm2677, %v5157, 0
      %v5413 = vsel %vm2677, %v5162, 0
      %v5416 = vsel %vm2677, %v5167, 0
      %v5419 = vsel %vm2677, %v5172, 0
      %v5422 = vsel %vm2677, %v5177, 0
      %v5425 = vsel %vm2677, %v5182, 0
      %v5428 = vsel %vm2677, %v5187, 0
      %v5431 = vsel %vm2677, %v5192, 0
      %v5434 = vsel %vm2677, %v5264, 0
      %v5437 = vsel %vm2677, %v5269, 0
      %v5440 = vsel %vm2677, %v5274, 0
      %v5443 = vsel %vm2677, %v5279, 0
      %v5446 = vsel %vm2677, %v5284, 0
      %v5449 = vsel %vm2677, %v5289, 0
      %v5452 = vsel %vm2677, %v5294, 0
      %v5455 = vsel %vm2677, %v5299, 0
      %5457 = vmatprep.subr.mxu0 0.0
      %5458 = vmatpush1.xpose.msra.mxu0 %v5434
      %5459 = vmatprep.subr.mxu0 0.0
      %5460 = vmatpush1.xpose.msra.mxu0 %v5437
      %5461 = vmatprep.subr.mxu0 0.0
      %5462 = vmatpush1.xpose.msra.mxu0 %v5440
      %5463 = vmatprep.subr.mxu0 0.0
      %5464 = vmatpush1.xpose.msra.mxu0 %v5443
      %5465 = vmatprep.subr.mxu0 0.0
      %5466 = vmatpush1.xpose.msra.mxu0 %v5446
      %5467 = vmatprep.subr.mxu0 0.0
      %5468 = vmatpush1.xpose.msra.mxu0 %v5449
      %5469 = vmatprep.subr.mxu0 0.0
      %5470 = vmatpush1.xpose.msra.mxu0 %v5452
      %5471 = vmatprep.subr.mxu0 0.0
      %5472 = vmatpush1.xpose.msra.mxu0 %v5455
      %5473 = vmatprep.subr.mxu0 0.0
      %5474 = vmatpush1.xpose.msra.mxu0 0.0
      %5475 = vmatprep.subr.mxu0 0.0
      %5476 = vmatpush1.xpose.msra.mxu0 0.0
      %5477 = vmatprep.subr.mxu0 0.0
      %5478 = vmatpush1.xpose.msra.mxu0 0.0
      %5479 = vmatprep.subr.mxu0 0.0
      %5480 = vmatpush1.xpose.msra.mxu0 0.0
      %5481 = vmatprep.subr.mxu0 0.0
      %5482 = vmatpush1.xpose.msra.mxu0 0.0
      %5483 = vmatprep.subr.mxu0 0.0
      %5484 = vmatpush1.xpose.msra.mxu0 0.0
      %5485 = vmatprep.subr.mxu0 0.0
      %5486 = vmatpush1.xpose.msra.mxu0 0.0
      %5487 = vmatprep.subr.mxu0 0.0
      %5488 = vmatpush1.xpose.msra.mxu0 0.0
      %5489 = vmatprep.subr.mxu0 0.0
      %5490 = vmatpush1.xpose.msra.mxu0 0.0
      %5491 = vmatprep.subr.mxu0 0.0
      %5492 = vmatpush1.xpose.msra.mxu0 0.0
      %5493 = vmatprep.subr.mxu0 0.0
      %5494 = vmatpush1.xpose.msra.mxu0 0.0
      %5495 = vmatprep.subr.mxu0 0.0
      %5496 = vmatpush1.xpose.msra.mxu0 0.0
      %5497 = vmatprep.subr.mxu0 0.0
      %5498 = vmatpush1.xpose.msra.mxu0 0.0
      %5499 = vmatprep.subr.mxu0 0.0
      %5500 = vmatpush1.xpose.msra.mxu0 0.0
      %5501 = vmatprep.subr.mxu0 0.0
      %5502 = vmatpush1.xpose.msra.mxu0 0.0
      %5503 = vmatprep.subr.mxu0 0.0
      %5504 = vmatpush1.xpose.msra.mxu0 0.0
      %5505 = vmatprep.subr.mxu0 0.0
      %5506 = vmatpush1.xpose.msra.mxu0 0.0
      %5507 = vmatprep.subr.mxu0 0.0
      %5508 = vmatpush1.xpose.msra.mxu0 0.0
      %5509 = vmatprep.subr.mxu0 0.0
      %5510 = vmatpush1.xpose.msra.mxu0 0.0
      %5511 = vmatprep.subr.mxu0 0.0
      %5512 = vmatpush1.xpose.msra.mxu0 0.0
      %5513 = vmatprep.subr.mxu0 0.0
      %5514 = vmatpush1.xpose.msra.mxu0 0.0
      %5515 = vmatprep.subr.mxu0 0.0
      %5516 = vmatpush1.xpose.msra.mxu0 0.0
      %5517 = vmatprep.subr.mxu0 0.0
      %5518 = vmatpush1.xpose.msra.mxu0 0.0
      %5519 = vmatprep.subr.mxu0 0.0
      %5520 = vmatpush1.xpose.msra.mxu0 0.0
      %5521 = vmatprep.mubr.f32.mxu0 0.0
      %5522 = vmatmul.mubr.f32.gmra.mrb[0].mxu0 %v5410
      %v5523 = vpop.f32.mrb[0].mxu0
      %v5524 = vadd.f32 0.0, %v5523
      %v5525 = vpop.f32.mrb[0].mxu0
      %5526 = vmatprep.mubr.f32.mxu0 0.0
      %5527 = vmatmul.mubr.f32.gmra.mrb[0].mxu0 %v5413
      %v5528 = vpop.f32.mrb[0].mxu0
      %v5529 = vadd.f32 0.0, %v5528
      %v5530 = vpop.f32.mrb[0].mxu0
      %5531 = vmatprep.mubr.f32.mxu0 0.0
      %5532 = vmatmul.mubr.f32.gmra.mrb[0].mxu0 %v5416
      %v5533 = vpop.f32.mrb[0].mxu0
      %v5534 = vadd.f32 0.0, %v5533
      %v5535 = vpop.f32.mrb[0].mxu0
      %5536 = vmatprep.mubr.f32.mxu0 0.0
      %5537 = vmatmul.mubr.f32.gmra.mrb[0].mxu0 %v5419
      %v5538 = vpop.f32.mrb[0].mxu0
      %v5539 = vadd.f32 0.0, %v5538
      %v5540 = vpop.f32.mrb[0].mxu0
      %5541 = vmatprep.mubr.f32.mxu0 0.0
      %5542 = vmatmul.mubr.f32.gmra.mrb[0].mxu0 %v5422
      %v5543 = vpop.f32.mrb[0].mxu0
      %v5544 = vadd.f32 0.0, %v5543
      %v5545 = vpop.f32.mrb[0].mxu0
      %5546 = vmatprep.mubr.f32.mxu0 0.0
      %5547 = vmatmul.mubr.f32.gmra.mrb[0].mxu0 %v5425
      %v5548 = vpop.f32.mrb[0].mxu0
      %v5549 = vadd.f32 0.0, %v5548
      %v5550 = vpop.f32.mrb[0].mxu0
      %5551 = vmatprep.mubr.f32.mxu0 0.0
      %5552 = vmatmul.mubr.f32.gmra.mrb[0].mxu0 %v5428
      %v5553 = vpop.f32.mrb[0].mxu0
      %v5554 = vadd.f32 0.0, %v5553
      %v5555 = vpop.f32.mrb[0].mxu0
      %5556 = vmatprep.mubr.f32.mxu0 0.0
      %5557 = vmatmul.mubr.f32.gmra.mrb[0].mxu0 %v5431
      %v5558 = vpop.f32.mrb[0].mxu0
      %v5559 = vadd.f32 0.0, %v5558
      %v5560 = vpop.f32.mrb[0].mxu0
      %5561 = vdwg.mxu0
      %v5562 = vmul.f32 %v5524, 0.25
      %v5563 = vmul.f32 %v5529, 0.25
      %v5564 = vmul.f32 %v5534, 0.25
      %v5565 = vmul.f32 %v5539, 0.25
      %v5566 = vmul.f32 %v5544, 0.25
      %v5567 = vmul.f32 %v5549, 0.25
      %v5568 = vmul.f32 %v5554, 0.25
      %v5569 = vmul.f32 %v5559, 0.25
      %v5570 = vsel %vm2839, %v5562, -inf
      %5571 = vmax.xlane.f32.xlu0 %v5570
      %v5572 = vpop.xlane.xlu0 %5571
      %v5573 = vsel %vm2839, %v5563, -inf
      %5574 = vmax.xlane.f32.xlu0 %v5573
      %v5575 = vpop.xlane.xlu0 %5574
      %v5576 = vsel %vm2839, %v5564, -inf
      %5577 = vmax.xlane.f32.xlu0 %v5576
      %v5578 = vpop.xlane.xlu0 %5577
      %v5579 = vsel %vm2839, %v5565, -inf
      %5580 = vmax.xlane.f32.xlu0 %v5579
      %v5581 = vpop.xlane.xlu0 %5580
      %v5582 = vsel %vm2839, %v5566, -inf
      %5583 = vmax.xlane.f32.xlu0 %v5582
      %v5584 = vpop.xlane.xlu0 %5583
      %v5585 = vsel %vm2839, %v5567, -inf
      %5586 = vmax.xlane.f32.xlu0 %v5585
      %v5587 = vpop.xlane.xlu0 %5586
      %v5588 = vsel %vm2839, %v5568, -inf
      %5589 = vmax.xlane.f32.xlu0 %v5588
      %v5590 = vpop.xlane.xlu0 %5589
      %v5591 = vsel %vm2839, %v5569, -inf
      %5592 = vmax.xlane.f32.xlu0 %v5591
      %v5593 = vpop.xlane.xlu0 %5592
      %v5594 = vsub.f32 %v5562, %v5572
      %v5595 = vsub.f32 %v5563, %v5575
      %v5596 = vsub.f32 %v5564, %v5578
      %v5597 = vsub.f32 %v5565, %v5581
      %v5598 = vsub.f32 %v5566, %v5584
      %v5599 = vsub.f32 %v5567, %v5587
      %v5600 = vsub.f32 %v5568, %v5590
      %v5601 = vsub.f32 %v5569, %v5593
      %v5602 = vmul.f32 %v5594, 1.442695
      %v5603 = vpow.pop %v5602
      %v5604 = vmul.f32 %v5595, 1.442695
      %v5605 = vpow.pop %v5604
      %v5606 = vmul.f32 %v5596, 1.442695
      %v5607 = vpow.pop %v5606
      %v5608 = vmul.f32 %v5597, 1.442695
      %v5609 = vpow.pop %v5608
      %v5610 = vmul.f32 %v5598, 1.442695
      %v5611 = vpow.pop %v5610
      %v5612 = vmul.f32 %v5599, 1.442695
      %v5613 = vpow.pop %v5612
      %v5614 = vmul.f32 %v5600, 1.442695
      %v5615 = vpow.pop %v5614
      %v5616 = vmul.f32 %v5601, 1.442695
      %v5617 = vpow.pop %v5616
      %v5618 = vsel %vm2839, %v5603, 0.0
      %5619 = vadd.xlane.f32.xlu0 %v5618
      %v5620 = vpop.xlane.xlu0 %5619
      %v5621 = vsel %vm2839, %v5605, 0.0
      %5622 = vadd.xlane.f32.xlu0 %v5621
      %v5623 = vpop.xlane.xlu0 %5622
      %v5624 = vsel %vm2839, %v5607, 0.0
      %5625 = vadd.xlane.f32.xlu0 %v5624
      %v5626 = vpop.xlane.xlu0 %5625
      %v5627 = vsel %vm2839, %v5609, 0.0
      %5628 = vadd.xlane.f32.xlu0 %v5627
      %v5629 = vpop.xlane.xlu0 %5628
      %v5630 = vsel %vm2839, %v5611, 0.0
      %5631 = vadd.xlane.f32.xlu0 %v5630
      %v5632 = vpop.xlane.xlu0 %5631
      %v5633 = vsel %vm2839, %v5613, 0.0
      %5634 = vadd.xlane.f32.xlu0 %v5633
      %v5635 = vpop.xlane.xlu0 %5634
      %v5636 = vsel %vm2839, %v5615, 0.0
      %5637 = vadd.xlane.f32.xlu0 %v5636
      %v5638 = vpop.xlane.xlu0 %5637
      %v5639 = vsel %vm2839, %v5617, 0.0
      %5640 = vadd.xlane.f32.xlu0 %v5639
      %v5641 = vpop.xlane.xlu0 %5640
      %v5642 = vrcp.pop %v5620
      %v5643 = vrcp.pop %v5623
      %v5644 = vrcp.pop %v5626
      %v5645 = vrcp.pop %v5629
      %v5646 = vrcp.pop %v5632
      %v5647 = vrcp.pop %v5635
      %v5648 = vrcp.pop %v5638
      %v5649 = vrcp.pop %v5641
      %v5650 = vmul.f32 %v5603, %v5642
      %v5651 = vmul.f32 %v5605, %v5643
      %v5652 = vmul.f32 %v5607, %v5644
      %v5653 = vmul.f32 %v5609, %v5645
      %v5654 = vmul.f32 %v5611, %v5646
      %v5655 = vmul.f32 %v5613, %v5647
      %v5656 = vmul.f32 %v5615, %v5648
      %v5657 = vmul.f32 %v5617, %v5649
      %v5659 = vsel %vm2839, %v5650, 0
      %v5662 = vsel %vm2839, %v5651, 0
      %v5665 = vsel %vm2839, %v5652, 0
      %v5668 = vsel %vm2839, %v5653, 0
      %v5671 = vsel %vm2839, %v5654, 0
      %v5674 = vsel %vm2839, %v5655, 0
      %v5677 = vsel %vm2839, %v5656, 0
      %v5680 = vsel %vm2839, %v5657, 0
      %5682 = vmatprep.subr.mxu0 0.0
      %5683 = vmatpush1.msra.mxu0 %v5371
      %5684 = vmatprep.subr.mxu0 0.0
      %5685 = vmatpush1.msra.mxu0 %v5376
      %5686 = vmatprep.subr.mxu0 0.0
      %5687 = vmatpush1.msra.mxu0 %v5381
      %5688 = vmatprep.subr.mxu0 0.0
      %5689 = vmatpush1.msra.mxu0 %v5386
      %5690 = vmatprep.subr.mxu0 0.0
      %5691 = vmatpush1.msra.mxu0 %v5391
      %5692 = vmatprep.subr.mxu0 0.0
      %5693 = vmatpush1.msra.mxu0 %v5396
      %5694 = vmatprep.subr.mxu0 0.0
      %5695 = vmatpush1.msra.mxu0 %v5401
      %5696 = vmatprep.subr.mxu0 0.0
      %5697 = vmatpush1.msra.mxu0 %v5406
      %5698 = vmatprep.subr.mxu0 0.0
      %5699 = vmatpush1.msra.mxu0 0.0
      %5700 = vmatprep.subr.mxu0 0.0
      %5701 = vmatpush1.msra.mxu0 0.0
      %5702 = vmatprep.subr.mxu0 0.0
      %5703 = vmatpush1.msra.mxu0 0.0
      %5704 = vmatprep.subr.mxu0 0.0
      %5705 = vmatpush1.msra.mxu0 0.0
      %5706 = vmatprep.subr.mxu0 0.0
      %5707 = vmatpush1.msra.mxu0 0.0
      %5708 = vmatprep.subr.mxu0 0.0
      %5709 = vmatpush1.msra.mxu0 0.0
      %5710 = vmatprep.subr.mxu0 0.0
      %5711 = vmatpush1.msra.mxu0 0.0
      %5712 = vmatprep.subr.mxu0 0.0
      %5713 = vmatpush1.msra.mxu0 0.0
      %5714 = vmatprep.subr.mxu0 0.0
      %5715 = vmatpush1.msra.mxu0 0.0
      %5716 = vmatprep.subr.mxu0 0.0
      %5717 = vmatpush1.msra.mxu0 0.0
      %5718 = vmatprep.subr.mxu0 0.0
      %5719 = vmatpush1.msra.mxu0 0.0
      %5720 = vmatprep.subr.mxu0 0.0
      %5721 = vmatpush1.msra.mxu0 0.0
      %5722 = vmatprep.subr.mxu0 0.0
      %5723 = vmatpush1.msra.mxu0 0.0
      %5724 = vmatprep.subr.mxu0 0.0
      %5725 = vmatpush1.msra.mxu0 0.0
      %5726 = vmatprep.subr.mxu0 0.0
      %5727 = vmatpush1.msra.mxu0 0.0
      %5728 = vmatprep.subr.mxu0 0.0
      %5729 = vmatpush1.msra.mxu0 0.0
      %5730 = vmatprep.subr.mxu0 0.0
      %5731 = vmatpush1.msra.mxu0 0.0
      %5732 = vmatprep.subr.mxu0 0.0
      %5733 = vmatpush1.msra.mxu0 0.0
      %5734 = vmatprep.subr.mxu0 0.0
      %5735 = vmatpush1.msra.mxu0 0.0
      %5736 = vmatprep.subr.mxu0 0.0
      %5737 = vmatpush1.msra.mxu0 0.0
      %5738 = vmatprep.subr.mxu0 0.0
      %5739 = vmatpush1.msra.mxu0 0.0
      %5740 = vmatprep.subr.mxu0 0.0
      %5741 = vmatpush1.msra.mxu0 0.0
      %5742 = vmatprep.subr.mxu0 0.0
      %5743 = vmatpush1.msra.mxu0 0.0
      %5744 = vmatprep.subr.mxu0 0.0
      %5745 = vmatpush1.msra.mxu0 0.0
      %5746 = vmatprep.mubr.f32.mxu0 0.0
      %5747 = vmatmul.mubr.f32.gmra.mrb[0].mxu0 %v5659
      %v5748 = vpop.f32.mrb[0].mxu0
      %v5749 = vadd.f32 0.0, %v5748
      %v5750 = vpop.f32.mrb[0].mxu0
      %5751 = vmatprep.mubr.f32.mxu0 0.0
      %5752 = vmatmul.mubr.f32.gmra.mrb[0].mxu0 %v5662
      %v5753 = vpop.f32.mrb[0].mxu0
      %v5754 = vadd.f32 0.0, %v5753
      %v5755 = vpop.f32.mrb[0].mxu0
      %5756 = vmatprep.mubr.f32.mxu0 0.0
      %5757 = vmatmul.mubr.f32.gmra.mrb[0].mxu0 %v5665
      %v5758 = vpop.f32.mrb[0].mxu0
      %v5759 = vadd.f32 0.0, %v5758
      %v5760 = vpop.f32.mrb[0].mxu0
      %5761 = vmatprep.mubr.f32.mxu0 0.0
      %5762 = vmatmul.mubr.f32.gmra.mrb[0].mxu0 %v5668
      %v5763 = vpop.f32.mrb[0].mxu0
      %v5764 = vadd.f32 0.0, %v5763
      %v5765 = vpop.f32.mrb[0].mxu0
      %5766 = vmatprep.mubr.f32.mxu0 0.0
      %5767 = vmatmul.mubr.f32.gmra.mrb[0].mxu0 %v5671
      %v5768 = vpop.f32.mrb[0].mxu0
      %v5769 = vadd.f32 0.0, %v5768
      %v5770 = vpop.f32.mrb[0].mxu0
      %5771 = vmatprep.mubr.f32.mxu0 0.0
      %5772 = vmatmul.mubr.f32.gmra.mrb[0].mxu0 %v5674
      %v5773 = vpop.f32.mrb[0].mxu0
      %v5774 = vadd.f32 0.0, %v5773
      %v5775 = vpop.f32.mrb[0].mxu0
      %5776 = vmatprep.mubr.f32.mxu0 0.0
      %5777 = vmatmul.mubr.f32.gmra.mrb[0].mxu0 %v5677
      %v5778 = vpop.f32.mrb[0].mxu0
      %v5779 = vadd.f32 0.0, %v5778
      %v5780 = vpop.f32.mrb[0].mxu0
      %5781 = vmatprep.mubr.f32.mxu0 0.0
      %5782 = vmatmul.mubr.f32.gmra.mrb[0].mxu0 %v5680
      %v5783 = vpop.f32.mrb[0].mxu0
      %v5784 = vadd.f32 0.0, %v5783
      %v5785 = vpop.f32.mrb[0].mxu0
      %5786 = vdwg.mxu0
      %s5787 = scalar_lea.vmem %s49, 16
      %v5788 = vld [vmem:[%s5787] sm:$0xff]
      %v5789 = vld [vmem:[%s5787 + $0x8] sm:$0xff]
      %v5791 = vsel %vm2677, %v5749, 0
      %v5794 = vsel %vm2677, %v5754, 0
      %v5797 = vsel %vm2677, %v5759, 0
      %v5800 = vsel %vm2677, %v5764, 0
      %v5803 = vsel %vm2677, %v5769, 0
      %v5806 = vsel %vm2677, %v5774, 0
      %v5809 = vsel %vm2677, %v5779, 0
      %v5812 = vsel %vm2677, %v5784, 0
      %5814 = vmatprep.subr.mxu0 0.0
      %5815 = vmatpush1.msra.mxu0 %v5788
      %5816 = vmatprep.subr.mxu0 0.0
      %5817 = vmatpush1.msra.mxu0 %v5789
      %5818 = vmatprep.subr.mxu0 0.0
      %5819 = vmatpush1.msra.mxu0 0.0
      %5820 = vmatprep.subr.mxu0 0.0
      %5821 = vmatpush1.msra.mxu0 0.0
      %5822 = vmatprep.subr.mxu0 0.0
      %5823 = vmatpush1.msra.mxu0 0.0
      %5824 = vmatprep.subr.mxu0 0.0
      %5825 = vmatpush1.msra.mxu0 0.0
      %5826 = vmatprep.subr.mxu0 0.0
      %5827 = vmatpush1.msra.mxu0 0.0
      %5828 = vmatprep.subr.mxu0 0.0
      %5829 = vmatpush1.msra.mxu0 0.0
      %5830 = vmatprep.subr.mxu0 0.0
      %5831 = vmatpush1.msra.mxu0 0.0
      %5832 = vmatprep.subr.mxu0 0.0
      %5833 = vmatpush1.msra.mxu0 0.0
      %5834 = vmatprep.subr.mxu0 0.0
      %5835 = vmatpush1.msra.mxu0 0.0
      %5836 = vmatprep.subr.mxu0 0.0
      %5837 = vmatpush1.msra.mxu0 0.0
      %5838 = vmatprep.subr.mxu0 0.0
      %5839 = vmatpush1.msra.mxu0 0.0
      %5840 = vmatprep.subr.mxu0 0.0
      %5841 = vmatpush1.msra.mxu0 0.0
      %5842 = vmatprep.subr.mxu0 0.0
      %5843 = vmatpush1.msra.mxu0 0.0
      %5844 = vmatprep.subr.mxu0 0.0
      %5845 = vmatpush1.msra.mxu0 0.0
      %5846 = vmatprep.subr.mxu0 0.0
      %5847 = vmatpush1.msra.mxu0 0.0
      %5848 = vmatprep.subr.mxu0 0.0
      %5849 = vmatpush1.msra.mxu0 0.0
      %5850 = vmatprep.subr.mxu0 0.0
      %5851 = vmatpush1.msra.mxu0 0.0
      %5852 = vmatprep.subr.mxu0 0.0
      %5853 = vmatpush1.msra.mxu0 0.0
      %5854 = vmatprep.subr.mxu0 0.0
      %5855 = vmatpush1.msra.mxu0 0.0
      %5856 = vmatprep.subr.mxu0 0.0
      %5857 = vmatpush1.msra.mxu0 0.0
      %5858 = vmatprep.subr.mxu0 0.0
      %5859 = vmatpush1.msra.mxu0 0.0
      %5860 = vmatprep.subr.mxu0 0.0
      %5861 = vmatpush1.msra.mxu0 0.0
      %5862 = vmatprep.subr.mxu0 0.0
      %5863 = vmatpush1.msra.mxu0 0.0
      %5864 = vmatprep.subr.mxu0 0.0
      %5865 = vmatpush1.msra.mxu0 0.0
      %5866 = vmatprep.subr.mxu0 0.0
      %5867 = vmatpush1.msra.mxu0 0.0
      %5868 = vmatprep.subr.mxu0 0.0
      %5869 = vmatpush1.msra.mxu0 0.0
      %5870 = vmatprep.subr.mxu0 0.0
      %5871 = vmatpush1.msra.mxu0 0.0
      %5872 = vmatprep.subr.mxu0 0.0
      %5873 = vmatpush1.msra.mxu0 0.0
      %5874 = vmatprep.subr.mxu0 0.0
      %5875 = vmatpush1.msra.mxu0 0.0
      %5876 = vmatprep.subr.mxu0 0.0
      %5877 = vmatpush1.msra.mxu0 0.0
      %5878 = vmatprep.mubr.f32.mxu0 0.0
      %5879 = vmatmul.mubr.f32.gmra.mrb[0].mxu0 %v5791
      %v5880 = vpop.f32.mrb[0].mxu0
      %v5881 = vadd.f32 0.0, %v5880
      %v5882 = vpop.f32.mrb[0].mxu0
      %5883 = vmatprep.mubr.f32.mxu0 0.0
      %5884 = vmatmul.mubr.f32.gmra.mrb[0].mxu0 %v5794
      %v5885 = vpop.f32.mrb[0].mxu0
      %v5886 = vadd.f32 0.0, %v5885
      %v5887 = vpop.f32.mrb[0].mxu0
      %5888 = vmatprep.mubr.f32.mxu0 0.0
      %5889 = vmatmul.mubr.f32.gmra.mrb[0].mxu0 %v5797
      %v5890 = vpop.f32.mrb[0].mxu0
      %v5891 = vadd.f32 0.0, %v5890
      %v5892 = vpop.f32.mrb[0].mxu0
      %5893 = vmatprep.mubr.f32.mxu0 0.0
      %5894 = vmatmul.mubr.f32.gmra.mrb[0].mxu0 %v5800
      %v5895 = vpop.f32.mrb[0].mxu0
      %v5896 = vadd.f32 0.0, %v5895
      %v5897 = vpop.f32.mrb[0].mxu0
      %5898 = vmatprep.mubr.f32.mxu0 0.0
      %5899 = vmatmul.mubr.f32.gmra.mrb[0].mxu0 %v5803
      %v5900 = vpop.f32.mrb[0].mxu0
      %v5901 = vadd.f32 0.0, %v5900
      %v5902 = vpop.f32.mrb[0].mxu0
      %5903 = vmatprep.mubr.f32.mxu0 0.0
      %5904 = vmatmul.mubr.f32.gmra.mrb[0].mxu0 %v5806
      %v5905 = vpop.f32.mrb[0].mxu0
      %v5906 = vadd.f32 0.0, %v5905
      %v5907 = vpop.f32.mrb[0].mxu0
      %5908 = vmatprep.mubr.f32.mxu0 0.0
      %5909 = vmatmul.mubr.f32.gmra.mrb[0].mxu0 %v5809
      %v5910 = vpop.f32.mrb[0].mxu0
      %v5911 = vadd.f32 0.0, %v5910
      %v5912 = vpop.f32.mrb[0].mxu0
      %5913 = vmatprep.mubr.f32.mxu0 0.0
      %5914 = vmatmul.mubr.f32.gmra.mrb[0].mxu0 %v5812
      %v5915 = vpop.f32.mrb[0].mxu0
      %v5916 = vadd.f32 0.0, %v5915
      %v5917 = vpop.f32.mrb[0].mxu0
      %5918 = vdwg.mxu0
      %v5919 = vadd.f32 %v5077, %v5881
      %v5920 = vadd.f32 %v5078, %v5886
      %v5921 = vadd.f32 %v5079, %v5891
      %v5922 = vadd.f32 %v5080, %v5896
      %v5923 = vadd.f32 %v5081, %v5901
      %v5924 = vadd.f32 %v5082, %v5906
      %v5925 = vadd.f32 %v5083, %v5911
      %v5926 = vadd.f32 %v5084, %v5916
      %v5927 = vadd.f32 %v4050, %v5919
      %v5928 = vadd.f32 %v4051, %v5920
      %v5929 = vadd.f32 %v4052, %v5921
      %v5930 = vadd.f32 %v4053, %v5922
      %v5931 = vadd.f32 %v4054, %v5923
      %v5932 = vadd.f32 %v4055, %v5924
      %v5933 = vadd.f32 %v4056, %v5925
      %v5934 = vadd.f32 %v4057, %v5926
      %v5935 = vld [vmem:[%s53] sm:$0x1]
      %v5936 = vld [vmem:[%s55] sm:$0x1]
      %v5937 = vsel %vm1074, %v5927, 0.0
      %5938 = vadd.xlane.f32.xlu0 %v5937
      %v5939 = vpop.xlane.xlu0 %5938
      %v5940 = vsel %vm1074, %v5928, 0.0
      %5941 = vadd.xlane.f32.xlu0 %v5940
      %v5942 = vpop.xlane.xlu0 %5941
      %v5943 = vsel %vm1074, %v5929, 0.0
      %5944 = vadd.xlane.f32.xlu0 %v5943
      %v5945 = vpop.xlane.xlu0 %5944
      %v5946 = vsel %vm1074, %v5930, 0.0
      %5947 = vadd.xlane.f32.xlu0 %v5946
      %v5948 = vpop.xlane.xlu0 %5947
      %v5949 = vsel %vm1074, %v5931, 0.0
      %5950 = vadd.xlane.f32.xlu0 %v5949
      %v5951 = vpop.xlane.xlu0 %5950
      %v5952 = vsel %vm1074, %v5932, 0.0
      %5953 = vadd.xlane.f32.xlu0 %v5952
      %v5954 = vpop.xlane.xlu0 %5953
      %v5955 = vsel %vm1074, %v5933, 0.0
      %5956 = vadd.xlane.f32.xlu0 %v5955
      %v5957 = vpop.xlane.xlu0 %5956
      %v5958 = vsel %vm1074, %v5934, 0.0
      %5959 = vadd.xlane.f32.xlu0 %v5958
      %v5960 = vpop.xlane.xlu0 %5959
      %v5961 = vmul.f32 %v5939, %v2216
      %v5962 = vmul.f32 %v5942, %v2216
      %v5963 = vmul.f32 %v5945, %v2216
      %v5964 = vmul.f32 %v5948, %v2216
      %v5965 = vmul.f32 %v5951, %v2216
      %v5966 = vmul.f32 %v5954, %v2216
      %v5967 = vmul.f32 %v5957, %v2216
      %v5968 = vmul.f32 %v5960, %v2216
      %v5969 = vsub.f32 %v5927, %v5961
      %v5970 = vsub.f32 %v5928, %v5962
      %v5971 = vsub.f32 %v5929, %v5963
      %v5972 = vsub.f32 %v5930, %v5964
      %v5973 = vsub.f32 %v5931, %v5965
      %v5974 = vsub.f32 %v5932, %v5966
      %v5975 = vsub.f32 %v5933, %v5967
      %v5976 = vsub.f32 %v5934, %v5968
      %v5977 = vmul.f32 %v5969, %v5969
      %v5978 = vmul.f32 %v5970, %v5970
      %v5979 = vmul.f32 %v5971, %v5971
      %v5980 = vmul.f32 %v5972, %v5972
      %v5981 = vmul.f32 %v5973, %v5973
      %v5982 = vmul.f32 %v5974, %v5974
      %v5983 = vmul.f32 %v5975, %v5975
      %v5984 = vmul.f32 %v5976, %v5976
      %v5985 = vsel %vm1074, %v5977, 0.0
      %5986 = vadd.xlane.f32.xlu0 %v5985
      %v5987 = vpop.xlane.xlu0 %5986
      %v5988 = vsel %vm1074, %v5978, 0.0
      %5989 = vadd.xlane.f32.xlu0 %v5988
      %v5990 = vpop.xlane.xlu0 %5989
      %v5991 = vsel %vm1074, %v5979, 0.0
      %5992 = vadd.xlane.f32.xlu0 %v5991
      %v5993 = vpop.xlane.xlu0 %5992
      %v5994 = vsel %vm1074, %v5980, 0.0
      %5995 = vadd.xlane.f32.xlu0 %v5994
      %v5996 = vpop.xlane.xlu0 %5995
      %v5997 = vsel %vm1074, %v5981, 0.0
      %5998 = vadd.xlane.f32.xlu0 %v5997
      %v5999 = vpop.xlane.xlu0 %5998
      %v6000 = vsel %vm1074, %v5982, 0.0
      %6001 = vadd.xlane.f32.xlu0 %v6000
      %v6002 = vpop.xlane.xlu0 %6001
      %v6003 = vsel %vm1074, %v5983, 0.0
      %6004 = vadd.xlane.f32.xlu0 %v6003
      %v6005 = vpop.xlane.xlu0 %6004
      %v6006 = vsel %vm1074, %v5984, 0.0
      %6007 = vadd.xlane.f32.xlu0 %v6006
      %v6008 = vpop.xlane.xlu0 %6007
      %v6009 = vmul.f32 %v5987, %v2216
      %v6010 = vmul.f32 %v5990, %v2216
      %v6011 = vmul.f32 %v5993, %v2216
      %v6012 = vmul.f32 %v5996, %v2216
      %v6013 = vmul.f32 %v5999, %v2216
      %v6014 = vmul.f32 %v6002, %v2216
      %v6015 = vmul.f32 %v6005, %v2216
      %v6016 = vmul.f32 %v6008, %v2216
      %v6017 = vadd.f32 %v6009, 1e-05
      %v6018 = vadd.f32 %v6010, 1e-05
      %v6019 = vadd.f32 %v6011, 1e-05
      %v6020 = vadd.f32 %v6012, 1e-05
      %v6021 = vadd.f32 %v6013, 1e-05
      %v6022 = vadd.f32 %v6014, 1e-05
      %v6023 = vadd.f32 %v6015, 1e-05
      %v6024 = vadd.f32 %v6016, 1e-05
      %v6025 = vrsqrt.pop %v6017
      %v6026 = vrsqrt.pop %v6018
      %v6027 = vrsqrt.pop %v6019
      %v6028 = vrsqrt.pop %v6020
      %v6029 = vrsqrt.pop %v6021
      %v6030 = vrsqrt.pop %v6022
      %v6031 = vrsqrt.pop %v6023
      %v6032 = vrsqrt.pop %v6024
      %v6033 = vmul.f32 %v5969, %v6025
      %v6034 = vmul.f32 %v5970, %v6026
      %v6035 = vmul.f32 %v5971, %v6027
      %v6036 = vmul.f32 %v5972, %v6028
      %v6037 = vmul.f32 %v5973, %v6029
      %v6038 = vmul.f32 %v5974, %v6030
      %v6039 = vmul.f32 %v5975, %v6031
      %v6040 = vmul.f32 %v5976, %v6032
      %v6042 = vlaneseq
      %v6043 = vshrl.u32 %v6042, 7
      %v6044 = vsub.s32 0, %v6043
      %v6045 = vrot.slane %v5935, %v6044
      %v6047 = vmul.f32 %v6033, %v6045
      %v6048 = vmul.f32 %v6034, %v6045
      %v6049 = vmul.f32 %v6035, %v6045
      %v6050 = vmul.f32 %v6036, %v6045
      %v6051 = vmul.f32 %v6037, %v6045
      %v6052 = vmul.f32 %v6038, %v6045
      %v6053 = vmul.f32 %v6039, %v6045
      %v6054 = vmul.f32 %v6040, %v6045
      %v6056 = vlaneseq
      %v6057 = vshrl.u32 %v6056, 7
      %v6058 = vsub.s32 0, %v6057
      %v6059 = vrot.slane %v5936, %v6058
      %v6061 = vadd.f32 %v6047, %v6059
      %v6062 = vadd.f32 %v6048, %v6059
      %v6063 = vadd.f32 %v6049, %v6059
      %v6064 = vadd.f32 %v6050, %v6059
      %v6065 = vadd.f32 %v6051, %v6059
      %v6066 = vadd.f32 %v6052, %v6059
      %v6067 = vadd.f32 %v6053, %v6059
      %v6068 = vadd.f32 %v6054, %v6059
      %v6069 = vld [vmem:[%s57] sm:$0xff]
      %v6070 = vld [vmem:[%s57 + $0x8] sm:$0xff]
      %v6071 = vld [vmem:[%s57 + $0x10] sm:$0xff]
      %v6072 = vld [vmem:[%s57 + $0x18] sm:$0xff]
      %v6073 = vld [vmem:[%s57 + $0x20] sm:$0xff]
      %v6074 = vld [vmem:[%s57 + $0x28] sm:$0xff]
      %v6075 = vld [vmem:[%s57 + $0x30] sm:$0xff]
      %v6076 = vld [vmem:[%s57 + $0x38] sm:$0xff]
      %v6077 = vld [vmem:[%s59] sm:$0x3]
      %v6079 = vlaneseq
      %v6080 = vshrl.u32 %v6079, 7
      %v6081 = vsub.s32 0, %v6080
      %v6082 = vrot.slane %v6077, %v6081
      %v6083 = vlaneseq
      %v6084 = vshrl.u32 %v6083, 7
      %v6085 = vsub.s32 1, %v6084
      %v6086 = vrot.slane %v6077, %v6085
      %v6090 = vsel %vm1074, %v6061, 0
      %v6093 = vsel %vm1074, %v6062, 0
      %v6096 = vsel %vm1074, %v6063, 0
      %v6099 = vsel %vm1074, %v6064, 0
      %v6102 = vsel %vm1074, %v6065, 0
      %v6105 = vsel %vm1074, %v6066, 0
      %v6108 = vsel %vm1074, %v6067, 0
      %v6111 = vsel %vm1074, %v6068, 0
      %6113 = vmatprep.subr.mxu0 %v6070
      %6114 = vmatpush1.msra.mxu0 %v6069
      %6115 = vmatprep.subr.mxu0 %v6072
      %6116 = vmatpush1.msra.mxu0 %v6071
      %6117 = vmatprep.subr.mxu0 %v6074
      %6118 = vmatpush1.msra.mxu0 %v6073
      %6119 = vmatprep.subr.mxu0 %v6076
      %6120 = vmatpush1.msra.mxu0 %v6075
      %6121 = vmatprep.subr.mxu0 0.0
      %6122 = vmatpush1.msra.mxu0 0.0
      %6123 = vmatprep.subr.mxu0 0.0
      %6124 = vmatpush1.msra.mxu0 0.0
      %6125 = vmatprep.subr.mxu0 0.0
      %6126 = vmatpush1.msra.mxu0 0.0
      %6127 = vmatprep.subr.mxu0 0.0
      %6128 = vmatpush1.msra.mxu0 0.0
      %6129 = vmatprep.subr.mxu0 0.0
      %6130 = vmatpush1.msra.mxu0 0.0
      %6131 = vmatprep.subr.mxu0 0.0
      %6132 = vmatpush1.msra.mxu0 0.0
      %6133 = vmatprep.subr.mxu0 0.0
      %6134 = vmatpush1.msra.mxu0 0.0
      %6135 = vmatprep.subr.mxu0 0.0
      %6136 = vmatpush1.msra.mxu0 0.0
      %6137 = vmatprep.subr.mxu0 0.0
      %6138 = vmatpush1.msra.mxu0 0.0
      %6139 = vmatprep.subr.mxu0 0.0
      %6140 = vmatpush1.msra.mxu0 0.0
      %6141 = vmatprep.subr.mxu0 0.0
      %6142 = vmatpush1.msra.mxu0 0.0
      %6143 = vmatprep.subr.mxu0 0.0
      %6144 = vmatpush1.msra.mxu0 0.0
      %6145 = vmatprep.subr.mxu0 0.0
      %6146 = vmatpush1.msra.mxu0 0.0
      %6147 = vmatprep.subr.mxu0 0.0
      %6148 = vmatpush1.msra.mxu0 0.0
      %6149 = vmatprep.subr.mxu0 0.0
      %6150 = vmatpush1.msra.mxu0 0.0
      %6151 = vmatprep.subr.mxu0 0.0
      %6152 = vmatpush1.msra.mxu0 0.0
      %6153 = vmatprep.subr.mxu0 0.0
      %6154 = vmatpush1.msra.mxu0 0.0
      %6155 = vmatprep.subr.mxu0 0.0
      %6156 = vmatpush1.msra.mxu0 0.0
      %6157 = vmatprep.subr.mxu0 0.0
      %6158 = vmatpush1.msra.mxu0 0.0
      %6159 = vmatprep.subr.mxu0 0.0
      %6160 = vmatpush1.msra.mxu0 0.0
      %6161 = vmatprep.subr.mxu0 0.0
      %6162 = vmatpush1.msra.mxu0 0.0
      %6163 = vmatprep.subr.mxu0 0.0
      %6164 = vmatpush1.msra.mxu0 0.0
      %6165 = vmatprep.subr.mxu0 0.0
      %6166 = vmatpush1.msra.mxu0 0.0
      %6167 = vmatprep.subr.mxu0 0.0
      %6168 = vmatpush1.msra.mxu0 0.0
      %6169 = vmatprep.subr.mxu0 0.0
      %6170 = vmatpush1.msra.mxu0 0.0
      %6171 = vmatprep.subr.mxu0 0.0
      %6172 = vmatpush1.msra.mxu0 0.0
      %6173 = vmatprep.subr.mxu0 0.0
      %6174 = vmatpush1.msra.mxu0 0.0
      %6175 = vmatprep.subr.mxu0 0.0
      %6176 = vmatpush1.msra.mxu0 0.0
      %6177 = vmatprep.mubr.f32.mxu0 0.0
      %6178 = vmatmul.mubr.f32.gmra.mrb[0].mxu0 %v6090
      %v6179 = vpop.f32.mrb[0].mxu0
      %v6180 = vadd.f32 %v6082, %v6179
      %v6181 = vpop.f32.mrb[0].mxu0
      %v6182 = vadd.f32 %v6086, %v6181
      %6183 = vmatprep.mubr.f32.mxu0 0.0
      %6184 = vmatmul.mubr.f32.gmra.mrb[0].mxu0 %v6093
      %v6185 = vpop.f32.mrb[0].mxu0
      %v6186 = vadd.f32 %v6082, %v6185
      %v6187 = vpop.f32.mrb[0].mxu0
      %v6188 = vadd.f32 %v6086, %v6187
      %6189 = vmatprep.mubr.f32.mxu0 0.0
      %6190 = vmatmul.mubr.f32.gmra.mrb[0].mxu0 %v6096
      %v6191 = vpop.f32.mrb[0].mxu0
      %v6192 = vadd.f32 %v6082, %v6191
      %v6193 = vpop.f32.mrb[0].mxu0
      %v6194 = vadd.f32 %v6086, %v6193
      %6195 = vmatprep.mubr.f32.mxu0 0.0
      %6196 = vmatmul.mubr.f32.gmra.mrb[0].mxu0 %v6099
      %v6197 = vpop.f32.mrb[0].mxu0
      %v6198 = vadd.f32 %v6082, %v6197
      %v6199 = vpop.f32.mrb[0].mxu0
      %v6200 = vadd.f32 %v6086, %v6199
      %6201 = vmatprep.mubr.f32.mxu0 0.0
      %6202 = vmatmul.mubr.f32.gmra.mrb[0].mxu0 %v6102
      %v6203 = vpop.f32.mrb[0].mxu0
      %v6204 = vadd.f32 %v6082, %v6203
      %v6205 = vpop.f32.mrb[0].mxu0
      %v6206 = vadd.f32 %v6086, %v6205
      %6207 = vmatprep.mubr.f32.mxu0 0.0
      %6208 = vmatmul.mubr.f32.gmra.mrb[0].mxu0 %v6105
      %v6209 = vpop.f32.mrb[0].mxu0
      %v6210 = vadd.f32 %v6082, %v6209
      %v6211 = vpop.f32.mrb[0].mxu0
      %v6212 = vadd.f32 %v6086, %v6211
      %6213 = vmatprep.mubr.f32.mxu0 0.0
      %6214 = vmatmul.mubr.f32.gmra.mrb[0].mxu0 %v6108
      %v6215 = vpop.f32.mrb[0].mxu0
      %v6216 = vadd.f32 %v6082, %v6215
      %v6217 = vpop.f32.mrb[0].mxu0
      %v6218 = vadd.f32 %v6086, %v6217
      %6219 = vmatprep.mubr.f32.mxu0 0.0
      %6220 = vmatmul.mubr.f32.gmra.mrb[0].mxu0 %v6111
      %v6221 = vpop.f32.mrb[0].mxu0
      %v6222 = vadd.f32 %v6082, %v6221
      %v6223 = vpop.f32.mrb[0].mxu0
      %v6224 = vadd.f32 %v6086, %v6223
      %6225 = vdwg.mxu0
      %v6226 = vmul.f32 %v6182, 0.5
      %v6227 = vmul.f32 %v6188, 0.5
      %v6228 = vmul.f32 %v6194, 0.5
      %v6229 = vmul.f32 %v6200, 0.5
      %v6230 = vmul.f32 %v6206, 0.5
      %v6231 = vmul.f32 %v6212, 0.5
      %v6232 = vmul.f32 %v6218, 0.5
      %v6233 = vmul.f32 %v6224, 0.5
      %v6234 = vmul.f32 %v6182, 0.70710677
      %v6235 = vmul.f32 %v6188, 0.70710677
      %v6236 = vmul.f32 %v6194, 0.70710677
      %v6237 = vmul.f32 %v6200, 0.70710677
      %v6238 = vmul.f32 %v6206, 0.70710677
      %v6239 = vmul.f32 %v6212, 0.70710677
      %v6240 = vmul.f32 %v6218, 0.70710677
      %v6241 = vmul.f32 %v6224, 0.70710677
      %v6242 = verf.f32.pop %v6234
      %v6243 = verf.f32.pop %v6235
      %v6244 = verf.f32.pop %v6236
      %v6245 = verf.f32.pop %v6237
      %v6246 = verf.f32.pop %v6238
      %v6247 = verf.f32.pop %v6239
      %v6248 = verf.f32.pop %v6240
      %v6249 = verf.f32.pop %v6241
      %v6250 = vadd.f32 %v6242, 1.0
      %v6251 = vadd.f32 %v6243, 1.0
      %v6252 = vadd.f32 %v6244, 1.0
      %v6253 = vadd.f32 %v6245, 1.0
      %v6254 = vadd.f32 %v6246, 1.0
      %v6255 = vadd.f32 %v6247, 1.0
      %v6256 = vadd.f32 %v6248, 1.0
      %v6257 = vadd.f32 %v6249, 1.0
      %v6258 = vmul.f32 %v6226, %v6250
      %v6259 = vmul.f32 %v6227, %v6251
      %v6260 = vmul.f32 %v6228, %v6252
      %v6261 = vmul.f32 %v6229, %v6253
      %v6262 = vmul.f32 %v6230, %v6254
      %v6263 = vmul.f32 %v6231, %v6255
      %v6264 = vmul.f32 %v6232, %v6256
      %v6265 = vmul.f32 %v6233, %v6257
      %v6266 = vmul.f32 %v6180, %v6258
      %v6267 = vmul.f32 %v6186, %v6259
      %v6268 = vmul.f32 %v6192, %v6260
      %v6269 = vmul.f32 %v6198, %v6261
      %v6270 = vmul.f32 %v6204, %v6262
      %v6271 = vmul.f32 %v6210, %v6263
      %v6272 = vmul.f32 %v6216, %v6264
      %v6273 = vmul.f32 %v6222, %v6265
      %v6274 = vld [vmem:[%s61] sm:$0xff]
      %v6275 = vld [vmem:[%s61 + $0x8] sm:$0xff]
      %v6276 = vld [vmem:[%s61 + $0x10] sm:$0xff]
      %v6277 = vld [vmem:[%s61 + $0x18] sm:$0xff]
      %v6278 = vld [vmem:[%s61 + $0x20] sm:$0xff]
      %v6279 = vld [vmem:[%s61 + $0x28] sm:$0xff]
      %v6280 = vld [vmem:[%s61 + $0x30] sm:$0xff]
      %v6281 = vld [vmem:[%s61 + $0x38] sm:$0xff]
      %v6282 = vld [vmem:[%s61 + $0x40] sm:$0xff]
      %v6283 = vld [vmem:[%s61 + $0x48] sm:$0xff]
      %v6284 = vld [vmem:[%s61 + $0x50] sm:$0xff]
      %v6285 = vld [vmem:[%s61 + $0x58] sm:$0xff]
      %v6286 = vld [vmem:[%s61 + $0x60] sm:$0xff]
      %v6287 = vld [vmem:[%s61 + $0x68] sm:$0xff]
      %v6288 = vld [vmem:[%s61 + $0x70] sm:$0xff]
      %v6289 = vld [vmem:[%s61 + $0x78] sm:$0xff]
      %6290 = vmatprep.subr.mxu0 0.0
      %6291 = vmatpush1.msra.mxu0 %v6274
      %6292 = vmatprep.subr.mxu0 0.0
      %6293 = vmatpush1.msra.mxu0 %v6275
      %6294 = vmatprep.subr.mxu0 0.0
      %6295 = vmatpush1.msra.mxu0 %v6276
      %6296 = vmatprep.subr.mxu0 0.0
      %6297 = vmatpush1.msra.mxu0 %v6277
      %6298 = vmatprep.subr.mxu0 0.0
      %6299 = vmatpush1.msra.mxu0 %v6278
      %6300 = vmatprep.subr.mxu0 0.0
      %6301 = vmatpush1.msra.mxu0 %v6279
      %6302 = vmatprep.subr.mxu0 0.0
      %6303 = vmatpush1.msra.mxu0 %v6280
      %6304 = vmatprep.subr.mxu0 0.0
      %6305 = vmatpush1.msra.mxu0 %v6281
      %6306 = vmatprep.subr.mxu0 0.0
      %6307 = vmatpush1.msra.mxu0 %v6282
      %6308 = vmatprep.subr.mxu0 0.0
      %6309 = vmatpush1.msra.mxu0 %v6283
      %6310 = vmatprep.subr.mxu0 0.0
      %6311 = vmatpush1.msra.mxu0 %v6284
      %6312 = vmatprep.subr.mxu0 0.0
      %6313 = vmatpush1.msra.mxu0 %v6285
      %6314 = vmatprep.subr.mxu0 0.0
      %6315 = vmatpush1.msra.mxu0 %v6286
      %6316 = vmatprep.subr.mxu0 0.0
      %6317 = vmatpush1.msra.mxu0 %v6287
      %6318 = vmatprep.subr.mxu0 0.0
      %6319 = vmatpush1.msra.mxu0 %v6288
      %6320 = vmatprep.subr.mxu0 0.0
      %6321 = vmatpush1.msra.mxu0 %v6289
      %6322 = vmatprep.subr.mxu0 0.0
      %6323 = vmatpush1.msra.mxu0 0.0
      %6324 = vmatprep.subr.mxu0 0.0
      %6325 = vmatpush1.msra.mxu0 0.0
      %6326 = vmatprep.subr.mxu0 0.0
      %6327 = vmatpush1.msra.mxu0 0.0
      %6328 = vmatprep.subr.mxu0 0.0
      %6329 = vmatpush1.msra.mxu0 0.0
      %6330 = vmatprep.subr.mxu0 0.0
      %6331 = vmatpush1.msra.mxu0 0.0
      %6332 = vmatprep.subr.mxu0 0.0
      %6333 = vmatpush1.msra.mxu0 0.0
      %6334 = vmatprep.subr.mxu0 0.0
      %6335 = vmatpush1.msra.mxu0 0.0
      %6336 = vmatprep.subr.mxu0 0.0
      %6337 = vmatpush1.msra.mxu0 0.0
      %6338 = vmatprep.subr.mxu0 0.0
      %6339 = vmatpush1.msra.mxu0 0.0
      %6340 = vmatprep.subr.mxu0 0.0
      %6341 = vmatpush1.msra.mxu0 0.0
      %6342 = vmatprep.subr.mxu0 0.0
      %6343 = vmatpush1.msra.mxu0 0.0
      %6344 = vmatprep.subr.mxu0 0.0
      %6345 = vmatpush1.msra.mxu0 0.0
      %6346 = vmatprep.subr.mxu0 0.0
      %6347 = vmatpush1.msra.mxu0 0.0
      %6348 = vmatprep.subr.mxu0 0.0
      %6349 = vmatpush1.msra.mxu0 0.0
      %6350 = vmatprep.subr.mxu0 0.0
      %6351 = vmatpush1.msra.mxu0 0.0
      %6352 = vmatprep.subr.mxu0 0.0
      %6353 = vmatpush1.msra.mxu0 0.0
      %6354 = vmatprep.mubr.f32.mxu0 0.0
      %6355 = vmatmul.mubr.f32.gmra.mrb[0].mxu0 %v6266
      %v6356 = vpop.f32.mrb[0].mxu0
      %v6357 = vadd.f32 0.0, %v6356
      %v6358 = vpop.f32.mrb[0].mxu0
      %6359 = vmatprep.mubr.f32.mxu0 0.0
      %6360 = vmatmul.mubr.f32.gmra.mrb[0].mxu0 %v6267
      %v6361 = vpop.f32.mrb[0].mxu0
      %v6362 = vadd.f32 0.0, %v6361
      %v6363 = vpop.f32.mrb[0].mxu0
      %6364 = vmatprep.mubr.f32.mxu0 0.0
      %6365 = vmatmul.mubr.f32.gmra.mrb[0].mxu0 %v6268
      %v6366 = vpop.f32.mrb[0].mxu0
      %v6367 = vadd.f32 0.0, %v6366
      %v6368 = vpop.f32.mrb[0].mxu0
      %6369 = vmatprep.mubr.f32.mxu0 0.0
      %6370 = vmatmul.mubr.f32.gmra.mrb[0].mxu0 %v6269
      %v6371 = vpop.f32.mrb[0].mxu0
      %v6372 = vadd.f32 0.0, %v6371
      %v6373 = vpop.f32.mrb[0].mxu0
      %6374 = vmatprep.mubr.f32.mxu0 0.0
      %6375 = vmatmul.mubr.f32.gmra.mrb[0].mxu0 %v6270
      %v6376 = vpop.f32.mrb[0].mxu0
      %v6377 = vadd.f32 0.0, %v6376
      %v6378 = vpop.f32.mrb[0].mxu0
      %6379 = vmatprep.mubr.f32.mxu0 0.0
      %6380 = vmatmul.mubr.f32.gmra.mrb[0].mxu0 %v6271
      %v6381 = vpop.f32.mrb[0].mxu0
      %v6382 = vadd.f32 0.0, %v6381
      %v6383 = vpop.f32.mrb[0].mxu0
      %6384 = vmatprep.mubr.f32.mxu0 0.0
      %6385 = vmatmul.mubr.f32.gmra.mrb[0].mxu0 %v6272
      %v6386 = vpop.f32.mrb[0].mxu0
      %v6387 = vadd.f32 0.0, %v6386
      %v6388 = vpop.f32.mrb[0].mxu0
      %6389 = vmatprep.mubr.f32.mxu0 0.0
      %6390 = vmatmul.mubr.f32.gmra.mrb[0].mxu0 %v6273
      %v6391 = vpop.f32.mrb[0].mxu0
      %v6392 = vadd.f32 0.0, %v6391
      %v6393 = vpop.f32.mrb[0].mxu0
      %6394 = vdwg.mxu0
      %v6395 = vadd.f32 %v5927, %v6357
      %v6396 = vadd.f32 %v5928, %v6362
      %v6397 = vadd.f32 %v5929, %v6367
      %v6398 = vadd.f32 %v5930, %v6372
      %v6399 = vadd.f32 %v5931, %v6377
      %v6400 = vadd.f32 %v5932, %v6382
      %v6401 = vadd.f32 %v5933, %v6387
      %v6402 = vadd.f32 %v5934, %v6392
      %v6403 = vld [vmem:[%s63] sm:$0x1]
      %v6405 = vlaneseq
      %v6406 = vshrl.u32 %v6405, 7
      %v6407 = vsub.s32 0, %v6406
      %v6408 = vrot.slane %v6403, %v6407
      %v6410 = vadd.f32 %v6395, %v6408
      %v6411 = vadd.f32 %v6396, %v6408
      %v6412 = vadd.f32 %v6397, %v6408
      %v6413 = vadd.f32 %v6398, %v6408
      %v6414 = vadd.f32 %v6399, %v6408
      %v6415 = vadd.f32 %v6400, %v6408
      %v6416 = vadd.f32 %v6401, %v6408
      %v6417 = vadd.f32 %v6402, %v6408
      %6418 = vst.msk [vmem:[%s1006] sm:$0xff] %vm1074, %v6410
      %6419 = vst.msk [vmem:[%s1006 + $0x8] sm:$0xff] %vm1074, %v6411
      %6420 = vst.msk [vmem:[%s1006 + $0x10] sm:$0xff] %vm1074, %v6412
      %6421 = vst.msk [vmem:[%s1006 + $0x18] sm:$0xff] %vm1074, %v6413
      %6422 = vst.msk [vmem:[%s1006 + $0x20] sm:$0xff] %vm1074, %v6414
      %6423 = vst.msk [vmem:[%s1006 + $0x28] sm:$0xff] %vm1074, %v6415
      %6424 = vst.msk [vmem:[%s1006 + $0x30] sm:$0xff] %vm1074, %v6416
      %6425 = vst.msk [vmem:[%s1006 + $0x38] sm:$0xff] %vm1074, %v6417
      %p6426 = scmp.lt.s32.totalorder %s76, 1
      %s6427 = scalar_select %p6426, %s76, 1
      %s6428 = smul.addr %s6427, 8
      %s6429 = smul.addr %s6428, 8
      %s6430 = scalar_lea.vmem %s65, %s6429
      // Predicated region
      $region149: #{sd_attention_block.2} parent=147 // pred_check
        %p6431 = pneg %p776
      $region150: #{sd_attention_block.2} parent=147 // pred_check_branch
        %6433 = sbr.rel (%p6431) target = $region152
      $region151: #{sd_attention_block.2} parent=147 // pred_region
        _
      $region152: #{sd_attention_block.2} parent=147 // pred_fallthru
        _
    $region148: #{sd_attention_block.2} parent=5 // pred_fallthru
      _
    %p6434 = scmp.le.s32.totalorder 2, %s71
    // Predicated region
    $region153: #{sd_attention_block.2} parent=5 // pred_check
      %p6435 = pneg %p6434
    $region154: #{sd_attention_block.2} parent=5 // pred_check_branch
      %6437 = sbr.rel (%p6435) target = $region156
    $region155: #{sd_attention_block.2} parent=5 // pred_region
      %s6438 = ssub.s32 %s71, 2
      // Predicated region
      $region157: #{sd_attention_block.2} parent=155 // pred_check
        %p6439 = pneg %p782
      $region158: #{sd_attention_block.2} parent=155 // pred_check_branch
        %6441 = sbr.rel (%p6439) target = $region160
      $region159: #{sd_attention_block.2} parent=155 // pred_region
        %p6442 = scmp.lt.s32.totalorder %s77, 1
        %s6443 = scalar_select %p6442, %s77, 1
        %s6444 = smul.addr %s6443, 8
        %s6445 = smul.addr %s6444, 8
        %s6446 = scalar_lea.vmem %s65, %s6445
      $region160: #{sd_attention_block.2} parent=155 // pred_fallthru
        _
    $region156: #{sd_attention_block.2} parent=5 // pred_fallthru
      _
  $region6: #{sd_attention_block.2} parent=0 // loop_footer
    %s75 = sadd.s32 1, %s71
  $region7: #{sd_attention_block.2} parent=0 // loop_footer_branch
    %70 = sbr.rel target = $region3
  $region8: #{sd_attention_block.2} parent=0 // loop_exit
    _

</llo_original>
